<compile_context>
chip_gen: v7x
topology: tpu7x:2x2x1
jax: 0.10.0
libtpu: 0.0.40
codegen_flags: <defaults>
</compile_context>

<pallas_src>
import math

import jax
import jax.numpy as jnp
from jax.experimental import pallas as pl
from jax.experimental.pallas import tpu as pltpu

# ----------------------------------------------------------------------------
# Module hyper-parameters (consistent with the surrounding H2ViTnet config)
# ----------------------------------------------------------------------------
EMBED_DIM = 16
NUM_HEADS = 8
HEAD_DIM = EMBED_DIM // NUM_HEADS   # 2
BATCH = 2
SEQ_LEN = 64


# ----------------------------------------------------------------------------
# Pallas kernel: fused multi-head attention (whole batch, single invocation)
# ----------------------------------------------------------------------------
def mha_kernel(q_ref, k_ref, v_ref,
               wq_ref, bq_ref, wk_ref, bk_ref, wv_ref, bv_ref,
               wo_ref, bo_ref,
               o_ref, ctx_ref):
    B, Sq, E = q_ref.shape
    Sk = k_ref.shape[1]
    NH = NUM_HEADS
    D = E // NH
    scale = 1.0 / math.sqrt(D)

    # ---- fused full-embed-dim projections: (B*S, E) @ (E, E) on the MXU ----
    q2 = q_ref[...].reshape(B * Sq, E)
    k2 = k_ref[...].reshape(B * Sk, E)
    v2 = v_ref[...].reshape(B * Sk, E)

    Q = jnp.dot(q2, wq_ref[...], preferred_element_type=jnp.float32) + bq_ref[...]
    K = jnp.dot(k2, wk_ref[...], preferred_element_type=jnp.float32) + bk_ref[...]
    V = jnp.dot(v2, wv_ref[...], preferred_element_type=jnp.float32) + bv_ref[...]

    Q3 = Q.reshape(B, Sq, E)
    K3 = K.reshape(B, Sk, E)
    V3 = V.reshape(B, Sk, E)

    # ---- per-head scaled dot-product attention, batched over B ----
    for h in range(NH):                       # static unroll; heads are column slices
        lo, hi = h * D, (h + 1) * D
        qh = Q3[:, :, lo:hi]                  # (B, Sq, D)
        kh = K3[:, :, lo:hi]                  # (B, Sk, D)
        vh = V3[:, :, lo:hi]                  # (B, Sk, D)

        s = jnp.einsum('bqd,bkd->bqk', qh, kh,
                       preferred_element_type=jnp.float32) * scale   # (B, Sq, Sk)
        s = s - jnp.max(s, axis=-1, keepdims=True)
        p = jnp.exp(s)
        p = p * pl.reciprocal(jnp.sum(p, axis=-1, keepdims=True), approx=True)

        oh = jnp.einsum('bqk,bkd->bqd', p, vh,
                        preferred_element_type=jnp.float32)          # (B, Sq, D)
        ctx_ref[:, lo:hi] = oh.reshape(B * Sq, D)

    # ---- single output projection on the concatenated heads ----
    out = jnp.dot(ctx_ref[...], wo_ref[...],
                  preferred_element_type=jnp.float32) + bo_ref[...]   # (B*Sq, E)
    o_ref[...] = out.reshape(B, Sq, E)


# ----------------------------------------------------------------------------
# pallas_call wrapper
# ----------------------------------------------------------------------------
def multi_head_attention(query, key, value, params):
    B, Sq, E = query.shape
    vmem = pltpu.MemorySpace.VMEM
    return pl.pallas_call(
        mha_kernel,
        out_shape=jax.ShapeDtypeStruct((B, Sq, E), jnp.float32),
        in_specs=[pl.BlockSpec(memory_space=vmem)] * 11,
        out_specs=pl.BlockSpec(memory_space=vmem),
        scratch_shapes=[pltpu.VMEM((B * Sq, E), jnp.float32)],
    )(query, key, value,
      params['wq'], params['bq'], params['wk'], params['bk'],
      params['wv'], params['bv'], params['wo'], params['bo'])


# ----------------------------------------------------------------------------
# deterministic synthetic parameters (nn.Linear weights stored as (in, out))
# ----------------------------------------------------------------------------
def init_params(key):
    E = EMBED_DIM
    bound = 1.0 / math.sqrt(E)          # nn.Linear default init range
    keys = jax.random.split(key, 8)

    def uni(k, shape):
        return jax.random.uniform(k, shape, jnp.float32, -bound, bound)

    return dict(
        wq=uni(keys[0], (E, E)), bq=uni(keys[1], (1, E)),
        wk=uni(keys[2], (E, E)), bk=uni(keys[3], (1, E)),
        wv=uni(keys[4], (E, E)), bv=uni(keys[5], (1, E)),
        wo=uni(keys[6], (E, E)), bo=uni(keys[7], (1, E)),
    )


# ----------------------------------------------------------------------------
# pure-JAX reference (mirrors the PyTorch module exactly)
# ----------------------------------------------------------------------------
def mha_reference(query, key, value, params):
    B, Sq, E = query.shape
    NH, D = NUM_HEADS, E // NUM_HEADS
    Q = query @ params['wq'] + params['bq']
    K = key @ params['wk'] + params['bk']
    V = value @ params['wv'] + params['bv']
    Qh = Q.reshape(B, Sq, NH, D).transpose(0, 2, 1, 3)
    Kh = K.reshape(B, -1, NH, D).transpose(0, 2, 1, 3)
    Vh = V.reshape(B, -1, NH, D).transpose(0, 2, 1, 3)
    s = jnp.einsum('bhqd,bhkd->bhqk', Qh, Kh) / math.sqrt(D)
    p = jax.nn.softmax(s, axis=-1)
    oh = jnp.einsum('bhqk,bhkd->bhqd', p, Vh)
    ctx = oh.transpose(0, 2, 1, 3).reshape(B, Sq, E)
    return ctx @ params['wo'] + params['bo']


# ----------------------------------------------------------------------------
if __name__ == "__main__":
    key = jax.random.PRNGKey(0)
    kp, kq, kk, kv = jax.random.split(key, 4)
    params = init_params(kp)

    q = jax.random.normal(kq, (BATCH, SEQ_LEN, EMBED_DIM), dtype=jnp.float32)
    k = jax.random.normal(kk, (BATCH, SEQ_LEN, EMBED_DIM), dtype=jnp.float32)
    v = jax.random.normal(kv, (BATCH, SEQ_LEN, EMBED_DIM), dtype=jnp.float32)

    out = jax.jit(multi_head_attention)(q, k, v, params)
    out = jax.block_until_ready(out)

    assert out.shape == (BATCH, SEQ_LEN, EMBED_DIM), out.shape
    assert bool(jnp.all(jnp.isfinite(out)))

    # loose tolerance: approx reciprocal in the softmax + f32 accumulation order
    ref = mha_reference(q, k, v, params)
    max_err = float(jnp.max(jnp.abs(out - ref)))
    assert max_err < 5e-2, f"max abs error vs reference: {max_err}"

    print("KERNEL_OK")
</pallas_src>

<mosaic_0001>
module attributes {stable_mosaic.version = 11 : i64} {
  func.func @mha_kernel(%arg0: memref<2x64x16xf32, #tpu.memory_space<vmem>>, %arg1: memref<2x64x16xf32, #tpu.memory_space<vmem>>, %arg2: memref<2x64x16xf32, #tpu.memory_space<vmem>>, %arg3: memref<16x16xf32, #tpu.memory_space<vmem>>, %arg4: memref<1x16xf32, #tpu.memory_space<vmem>>, %arg5: memref<16x16xf32, #tpu.memory_space<vmem>>, %arg6: memref<1x16xf32, #tpu.memory_space<vmem>>, %arg7: memref<16x16xf32, #tpu.memory_space<vmem>>, %arg8: memref<1x16xf32, #tpu.memory_space<vmem>>, %arg9: memref<16x16xf32, #tpu.memory_space<vmem>>, %arg10: memref<1x16xf32, #tpu.memory_space<vmem>>, %arg11: memref<2x64x16xf32, #tpu.memory_space<vmem>>, %arg12: memref<128x16xf32, #tpu.memory_space<vmem>>) attributes {dimension_semantics = [], scalar_prefetch = 0 : i64, scratch_operands = 1 : i64, tpu.core_type = #tpu.core_type<tc>} {
    %c0 = arith.constant 0 : index
    %c0_0 = arith.constant 0 : index
    %c0_1 = arith.constant 0 : index
    %0 = vector.load %arg0[%c0, %c0_0, %c0_1] : memref<2x64x16xf32, #tpu.memory_space<vmem>>, vector<2x64x16xf32>
    %1 = vector.shape_cast %0 : vector<2x64x16xf32> to vector<128x16xf32>
    %c0_2 = arith.constant 0 : index
    %c0_3 = arith.constant 0 : index
    %c0_4 = arith.constant 0 : index
    %2 = vector.load %arg1[%c0_2, %c0_3, %c0_4] : memref<2x64x16xf32, #tpu.memory_space<vmem>>, vector<2x64x16xf32>
    %3 = vector.shape_cast %2 : vector<2x64x16xf32> to vector<128x16xf32>
    %c0_5 = arith.constant 0 : index
    %c0_6 = arith.constant 0 : index
    %c0_7 = arith.constant 0 : index
    %4 = vector.load %arg2[%c0_5, %c0_6, %c0_7] : memref<2x64x16xf32, #tpu.memory_space<vmem>>, vector<2x64x16xf32>
    %5 = vector.shape_cast %4 : vector<2x64x16xf32> to vector<128x16xf32>
    %c0_8 = arith.constant 0 : index
    %c0_9 = arith.constant 0 : index
    %6 = vector.load %arg3[%c0_8, %c0_9] : memref<16x16xf32, #tpu.memory_space<vmem>>, vector<16x16xf32>
    %cst = arith.constant dense<0.000000e+00> : vector<128x16xf32>
    %7 = tpu.matmul %1, %6, %cst {dimension_numbers = #tpu.dot_dimension_numbers<[1], [0], [0], [1], [0, 0, 1, 1], [], []>} : vector<128x16xf32>, vector<16x16xf32>, vector<128x16xf32> -> vector<128x16xf32>
    %c0_10 = arith.constant 0 : index
    %c0_11 = arith.constant 0 : index
    %8 = vector.load %arg4[%c0_10, %c0_11] : memref<1x16xf32, #tpu.memory_space<vmem>>, vector<1x16xf32>
    %9 = vector.broadcast %8 : vector<1x16xf32> to vector<128x16xf32>
    %10 = arith.addf %7, %9 : vector<128x16xf32>
    %c0_12 = arith.constant 0 : index
    %c0_13 = arith.constant 0 : index
    %11 = vector.load %arg5[%c0_12, %c0_13] : memref<16x16xf32, #tpu.memory_space<vmem>>, vector<16x16xf32>
    %cst_14 = arith.constant dense<0.000000e+00> : vector<128x16xf32>
    %12 = tpu.matmul %3, %11, %cst_14 {dimension_numbers = #tpu.dot_dimension_numbers<[1], [0], [0], [1], [0, 0, 1, 1], [], []>} : vector<128x16xf32>, vector<16x16xf32>, vector<128x16xf32> -> vector<128x16xf32>
    %c0_15 = arith.constant 0 : index
    %c0_16 = arith.constant 0 : index
    %13 = vector.load %arg6[%c0_15, %c0_16] : memref<1x16xf32, #tpu.memory_space<vmem>>, vector<1x16xf32>
    %14 = vector.broadcast %13 : vector<1x16xf32> to vector<128x16xf32>
    %15 = arith.addf %12, %14 : vector<128x16xf32>
    %c0_17 = arith.constant 0 : index
    %c0_18 = arith.constant 0 : index
    %16 = vector.load %arg7[%c0_17, %c0_18] : memref<16x16xf32, #tpu.memory_space<vmem>>, vector<16x16xf32>
    %cst_19 = arith.constant dense<0.000000e+00> : vector<128x16xf32>
    %17 = tpu.matmul %5, %16, %cst_19 {dimension_numbers = #tpu.dot_dimension_numbers<[1], [0], [0], [1], [0, 0, 1, 1], [], []>} : vector<128x16xf32>, vector<16x16xf32>, vector<128x16xf32> -> vector<128x16xf32>
    %c0_20 = arith.constant 0 : index
    %c0_21 = arith.constant 0 : index
    %18 = vector.load %arg8[%c0_20, %c0_21] : memref<1x16xf32, #tpu.memory_space<vmem>>, vector<1x16xf32>
    %19 = vector.broadcast %18 : vector<1x16xf32> to vector<128x16xf32>
    %20 = arith.addf %17, %19 : vector<128x16xf32>
    %21 = vector.shape_cast %10 : vector<128x16xf32> to vector<2x64x16xf32>
    %22 = vector.shape_cast %15 : vector<128x16xf32> to vector<2x64x16xf32>
    %23 = vector.shape_cast %20 : vector<128x16xf32> to vector<2x64x16xf32>
    %24 = vector.extract_strided_slice %21 {offsets = [0, 0, 0], sizes = [2, 64, 2], strides = [1, 1, 1]} : vector<2x64x16xf32> to vector<2x64x2xf32>
    %25 = vector.extract_strided_slice %22 {offsets = [0, 0, 0], sizes = [2, 64, 2], strides = [1, 1, 1]} : vector<2x64x16xf32> to vector<2x64x2xf32>
    %26 = vector.extract_strided_slice %23 {offsets = [0, 0, 0], sizes = [2, 64, 2], strides = [1, 1, 1]} : vector<2x64x16xf32> to vector<2x64x2xf32>
    "tpu.trace_start"() <{level = 10 : i32, message = "bqd,bkd->bqk"}> : () -> ()
    %cst_22 = arith.constant dense<0.000000e+00> : vector<2x64x64xf32>
    %27 = tpu.matmul %24, %25, %cst_22 {dimension_numbers = #tpu.dot_dimension_numbers<[2], [2], [1], [1], [0, 0, 0, 1, 1, 1], [0], [0]>} : vector<2x64x2xf32>, vector<2x64x2xf32>, vector<2x64x64xf32> -> vector<2x64x64xf32>
    "tpu.trace_stop"() : () -> ()
    %cst_23 = arith.constant 0.707106769 : f32
    %28 = vector.broadcast %cst_23 : f32 to vector<2x64x64xf32>
    %29 = arith.mulf %27, %28 : vector<2x64x64xf32>
    %cst_24 = arith.constant dense<0xFF800000> : vector<2x64xf32>
    %30 = vector.multi_reduction <maximumf>, %29, %cst_24 [2] : vector<2x64x64xf32> to vector<2x64xf32>
    %31 = vector.shape_cast %30 : vector<2x64xf32> to vector<2x64x1xf32>
    %32 = vector.broadcast %31 : vector<2x64x1xf32> to vector<2x64x64xf32>
    %33 = arith.subf %29, %32 : vector<2x64x64xf32>
    %34 = math.exp %33 : vector<2x64x64xf32>
    %cst_25 = arith.constant dense<0.000000e+00> : vector<2x64xf32>
    %35 = vector.multi_reduction <add>, %34, %cst_25 [2] : vector<2x64x64xf32> to vector<2x64xf32>
    %36 = vector.shape_cast %35 : vector<2x64xf32> to vector<2x64x1xf32>
    %37 = tpu.reciprocal %36 {approx = true} : vector<2x64x1xf32> -> vector<2x64x1xf32>
    %38 = vector.broadcast %37 : vector<2x64x1xf32> to vector<2x64x64xf32>
    %39 = arith.mulf %34, %38 : vector<2x64x64xf32>
    "tpu.trace_start"() <{level = 10 : i32, message = "bqk,bkd->bqd"}> : () -> ()
    %cst_26 = arith.constant dense<0.000000e+00> : vector<2x64x2xf32>
    %40 = tpu.matmul %39, %26, %cst_26 {dimension_numbers = #tpu.dot_dimension_numbers<[2], [1], [1], [2], [0, 0, 0, 1, 1, 2], [0], [0]>} : vector<2x64x64xf32>, vector<2x64x2xf32>, vector<2x64x2xf32> -> vector<2x64x2xf32>
    "tpu.trace_stop"() : () -> ()
    %41 = vector.shape_cast %40 : vector<2x64x2xf32> to vector<128x2xf32>
    %c0_27 = arith.constant 0 : index
    %c0_28 = arith.constant 0 : index
    %42 = vector.load %arg12[%c0_27, %c0_28] : memref<128x16xf32, #tpu.memory_space<vmem>>, vector<128x2xf32>
    tpu.vector_store %arg12[%c0_27, %c0_28], %41 {strides = array<i32>} : memref<128x16xf32, #tpu.memory_space<vmem>>, vector<128x2xf32>,
    %43 = vector.extract_strided_slice %21 {offsets = [0, 0, 2], sizes = [2, 64, 2], strides = [1, 1, 1]} : vector<2x64x16xf32> to vector<2x64x2xf32>
    %44 = vector.extract_strided_slice %22 {offsets = [0, 0, 2], sizes = [2, 64, 2], strides = [1, 1, 1]} : vector<2x64x16xf32> to vector<2x64x2xf32>
    %45 = vector.extract_strided_slice %23 {offsets = [0, 0, 2], sizes = [2, 64, 2], strides = [1, 1, 1]} : vector<2x64x16xf32> to vector<2x64x2xf32>
    "tpu.trace_start"() <{level = 10 : i32, message = "bqd,bkd->bqk"}> : () -> ()
    %cst_29 = arith.constant dense<0.000000e+00> : vector<2x64x64xf32>
    %46 = tpu.matmul %43, %44, %cst_29 {dimension_numbers = #tpu.dot_dimension_numbers<[2], [2], [1], [1], [0, 0, 0, 1, 1, 1], [0], [0]>} : vector<2x64x2xf32>, vector<2x64x2xf32>, vector<2x64x64xf32> -> vector<2x64x64xf32>
    "tpu.trace_stop"() : () -> ()
    %cst_30 = arith.constant 0.707106769 : f32
    %47 = vector.broadcast %cst_30 : f32 to vector<2x64x64xf32>
    %48 = arith.mulf %46, %47 : vector<2x64x64xf32>
    %cst_31 = arith.constant dense<0xFF800000> : vector<2x64xf32>
    %49 = vector.multi_reduction <maximumf>, %48, %cst_31 [2] : vector<2x64x64xf32> to vector<2x64xf32>
    %50 = vector.shape_cast %49 : vector<2x64xf32> to vector<2x64x1xf32>
    %51 = vector.broadcast %50 : vector<2x64x1xf32> to vector<2x64x64xf32>
    %52 = arith.subf %48, %51 : vector<2x64x64xf32>
    %53 = math.exp %52 : vector<2x64x64xf32>
    %cst_32 = arith.constant dense<0.000000e+00> : vector<2x64xf32>
    %54 = vector.multi_reduction <add>, %53, %cst_32 [2] : vector<2x64x64xf32> to vector<2x64xf32>
    %55 = vector.shape_cast %54 : vector<2x64xf32> to vector<2x64x1xf32>
    %56 = tpu.reciprocal %55 {approx = true} : vector<2x64x1xf32> -> vector<2x64x1xf32>
    %57 = vector.broadcast %56 : vector<2x64x1xf32> to vector<2x64x64xf32>
    %58 = arith.mulf %53, %57 : vector<2x64x64xf32>
    "tpu.trace_start"() <{level = 10 : i32, message = "bqk,bkd->bqd"}> : () -> ()
    %cst_33 = arith.constant dense<0.000000e+00> : vector<2x64x2xf32>
    %59 = tpu.matmul %58, %45, %cst_33 {dimension_numbers = #tpu.dot_dimension_numbers<[2], [1], [1], [2], [0, 0, 0, 1, 1, 2], [0], [0]>} : vector<2x64x64xf32>, vector<2x64x2xf32>, vector<2x64x2xf32> -> vector<2x64x2xf32>
    "tpu.trace_stop"() : () -> ()
    %60 = vector.shape_cast %59 : vector<2x64x2xf32> to vector<128x2xf32>
    %c0_34 = arith.constant 0 : index
    %c2 = arith.constant 2 : index
    %61 = vector.load %arg12[%c0_34, %c2] : memref<128x16xf32, #tpu.memory_space<vmem>>, vector<128x2xf32>
    tpu.vector_store %arg12[%c0_34, %c2], %60 {strides = array<i32>} : memref<128x16xf32, #tpu.memory_space<vmem>>, vector<128x2xf32>,
    %62 = vector.extract_strided_slice %21 {offsets = [0, 0, 4], sizes = [2, 64, 2], strides = [1, 1, 1]} : vector<2x64x16xf32> to vector<2x64x2xf32>
    %63 = vector.extract_strided_slice %22 {offsets = [0, 0, 4], sizes = [2, 64, 2], strides = [1, 1, 1]} : vector<2x64x16xf32> to vector<2x64x2xf32>
    %64 = vector.extract_strided_slice %23 {offsets = [0, 0, 4], sizes = [2, 64, 2], strides = [1, 1, 1]} : vector<2x64x16xf32> to vector<2x64x2xf32>
    "tpu.trace_start"() <{level = 10 : i32, message = "bqd,bkd->bqk"}> : () -> ()
    %cst_35 = arith.constant dense<0.000000e+00> : vector<2x64x64xf32>
    %65 = tpu.matmul %62, %63, %cst_35 {dimension_numbers = #tpu.dot_dimension_numbers<[2], [2], [1], [1], [0, 0, 0, 1, 1, 1], [0], [0]>} : vector<2x64x2xf32>, vector<2x64x2xf32>, vector<2x64x64xf32> -> vector<2x64x64xf32>
    "tpu.trace_stop"() : () -> ()
    %cst_36 = arith.constant 0.707106769 : f32
    %66 = vector.broadcast %cst_36 : f32 to vector<2x64x64xf32>
    %67 = arith.mulf %65, %66 : vector<2x64x64xf32>
    %cst_37 = arith.constant dense<0xFF800000> : vector<2x64xf32>
    %68 = vector.multi_reduction <maximumf>, %67, %cst_37 [2] : vector<2x64x64xf32> to vector<2x64xf32>
    %69 = vector.shape_cast %68 : vector<2x64xf32> to vector<2x64x1xf32>
    %70 = vector.broadcast %69 : vector<2x64x1xf32> to vector<2x64x64xf32>
    %71 = arith.subf %67, %70 : vector<2x64x64xf32>
    %72 = math.exp %71 : vector<2x64x64xf32>
    %cst_38 = arith.constant dense<0.000000e+00> : vector<2x64xf32>
    %73 = vector.multi_reduction <add>, %72, %cst_38 [2] : vector<2x64x64xf32> to vector<2x64xf32>
    %74 = vector.shape_cast %73 : vector<2x64xf32> to vector<2x64x1xf32>
    %75 = tpu.reciprocal %74 {approx = true} : vector<2x64x1xf32> -> vector<2x64x1xf32>
    %76 = vector.broadcast %75 : vector<2x64x1xf32> to vector<2x64x64xf32>
    %77 = arith.mulf %72, %76 : vector<2x64x64xf32>
    "tpu.trace_start"() <{level = 10 : i32, message = "bqk,bkd->bqd"}> : () -> ()
    %cst_39 = arith.constant dense<0.000000e+00> : vector<2x64x2xf32>
    %78 = tpu.matmul %77, %64, %cst_39 {dimension_numbers = #tpu.dot_dimension_numbers<[2], [1], [1], [2], [0, 0, 0, 1, 1, 2], [0], [0]>} : vector<2x64x64xf32>, vector<2x64x2xf32>, vector<2x64x2xf32> -> vector<2x64x2xf32>
    "tpu.trace_stop"() : () -> ()
    %79 = vector.shape_cast %78 : vector<2x64x2xf32> to vector<128x2xf32>
    %c0_40 = arith.constant 0 : index
    %c4 = arith.constant 4 : index
    %80 = vector.load %arg12[%c0_40, %c4] : memref<128x16xf32, #tpu.memory_space<vmem>>, vector<128x2xf32>
    tpu.vector_store %arg12[%c0_40, %c4], %79 {strides = array<i32>} : memref<128x16xf32, #tpu.memory_space<vmem>>, vector<128x2xf32>,
    %81 = vector.extract_strided_slice %21 {offsets = [0, 0, 6], sizes = [2, 64, 2], strides = [1, 1, 1]} : vector<2x64x16xf32> to vector<2x64x2xf32>
    %82 = vector.extract_strided_slice %22 {offsets = [0, 0, 6], sizes = [2, 64, 2], strides = [1, 1, 1]} : vector<2x64x16xf32> to vector<2x64x2xf32>
    %83 = vector.extract_strided_slice %23 {offsets = [0, 0, 6], sizes = [2, 64, 2], strides = [1, 1, 1]} : vector<2x64x16xf32> to vector<2x64x2xf32>
    "tpu.trace_start"() <{level = 10 : i32, message = "bqd,bkd->bqk"}> : () -> ()
    %cst_41 = arith.constant dense<0.000000e+00> : vector<2x64x64xf32>
    %84 = tpu.matmul %81, %82, %cst_41 {dimension_numbers = #tpu.dot_dimension_numbers<[2], [2], [1], [1], [0, 0, 0, 1, 1, 1], [0], [0]>} : vector<2x64x2xf32>, vector<2x64x2xf32>, vector<2x64x64xf32> -> vector<2x64x64xf32>
    "tpu.trace_stop"() : () -> ()
    %cst_42 = arith.constant 0.707106769 : f32
    %85 = vector.broadcast %cst_42 : f32 to vector<2x64x64xf32>
    %86 = arith.mulf %84, %85 : vector<2x64x64xf32>
    %cst_43 = arith.constant dense<0xFF800000> : vector<2x64xf32>
    %87 = vector.multi_reduction <maximumf>, %86, %cst_43 [2] : vector<2x64x64xf32> to vector<2x64xf32>
    %88 = vector.shape_cast %87 : vector<2x64xf32> to vector<2x64x1xf32>
    %89 = vector.broadcast %88 : vector<2x64x1xf32> to vector<2x64x64xf32>
    %90 = arith.subf %86, %89 : vector<2x64x64xf32>
    %91 = math.exp %90 : vector<2x64x64xf32>
    %cst_44 = arith.constant dense<0.000000e+00> : vector<2x64xf32>
    %92 = vector.multi_reduction <add>, %91, %cst_44 [2] : vector<2x64x64xf32> to vector<2x64xf32>
    %93 = vector.shape_cast %92 : vector<2x64xf32> to vector<2x64x1xf32>
    %94 = tpu.reciprocal %93 {approx = true} : vector<2x64x1xf32> -> vector<2x64x1xf32>
    %95 = vector.broadcast %94 : vector<2x64x1xf32> to vector<2x64x64xf32>
    %96 = arith.mulf %91, %95 : vector<2x64x64xf32>
    "tpu.trace_start"() <{level = 10 : i32, message = "bqk,bkd->bqd"}> : () -> ()
    %cst_45 = arith.constant dense<0.000000e+00> : vector<2x64x2xf32>
    %97 = tpu.matmul %96, %83, %cst_45 {dimension_numbers = #tpu.dot_dimension_numbers<[2], [1], [1], [2], [0, 0, 0, 1, 1, 2], [0], [0]>} : vector<2x64x64xf32>, vector<2x64x2xf32>, vector<2x64x2xf32> -> vector<2x64x2xf32>
    "tpu.trace_stop"() : () -> ()
    %98 = vector.shape_cast %97 : vector<2x64x2xf32> to vector<128x2xf32>
    %c0_46 = arith.constant 0 : index
    %c6 = arith.constant 6 : index
    %99 = vector.load %arg12[%c0_46, %c6] : memref<128x16xf32, #tpu.memory_space<vmem>>, vector<128x2xf32>
    tpu.vector_store %arg12[%c0_46, %c6], %98 {strides = array<i32>} : memref<128x16xf32, #tpu.memory_space<vmem>>, vector<128x2xf32>,
    %100 = vector.extract_strided_slice %21 {offsets = [0, 0, 8], sizes = [2, 64, 2], strides = [1, 1, 1]} : vector<2x64x16xf32> to vector<2x64x2xf32>
    %101 = vector.extract_strided_slice %22 {offsets = [0, 0, 8], sizes = [2, 64, 2], strides = [1, 1, 1]} : vector<2x64x16xf32> to vector<2x64x2xf32>
    %102 = vector.extract_strided_slice %23 {offsets = [0, 0, 8], sizes = [2, 64, 2], strides = [1, 1, 1]} : vector<2x64x16xf32> to vector<2x64x2xf32>
    "tpu.trace_start"() <{level = 10 : i32, message = "bqd,bkd->bqk"}> : () -> ()
    %cst_47 = arith.constant dense<0.000000e+00> : vector<2x64x64xf32>
    %103 = tpu.matmul %100, %101, %cst_47 {dimension_numbers = #tpu.dot_dimension_numbers<[2], [2], [1], [1], [0, 0, 0, 1, 1, 1], [0], [0]>} : vector<2x64x2xf32>, vector<2x64x2xf32>, vector<2x64x64xf32> -> vector<2x64x64xf32>
    "tpu.trace_stop"() : () -> ()
    %cst_48 = arith.constant 0.707106769 : f32
    %104 = vector.broadcast %cst_48 : f32 to vector<2x64x64xf32>
    %105 = arith.mulf %103, %104 : vector<2x64x64xf32>
    %cst_49 = arith.constant dense<0xFF800000> : vector<2x64xf32>
    %106 = vector.multi_reduction <maximumf>, %105, %cst_49 [2] : vector<2x64x64xf32> to vector<2x64xf32>
    %107 = vector.shape_cast %106 : vector<2x64xf32> to vector<2x64x1xf32>
    %108 = vector.broadcast %107 : vector<2x64x1xf32> to vector<2x64x64xf32>
    %109 = arith.subf %105, %108 : vector<2x64x64xf32>
    %110 = math.exp %109 : vector<2x64x64xf32>
    %cst_50 = arith.constant dense<0.000000e+00> : vector<2x64xf32>
    %111 = vector.multi_reduction <add>, %110, %cst_50 [2] : vector<2x64x64xf32> to vector<2x64xf32>
    %112 = vector.shape_cast %111 : vector<2x64xf32> to vector<2x64x1xf32>
    %113 = tpu.reciprocal %112 {approx = true} : vector<2x64x1xf32> -> vector<2x64x1xf32>
    %114 = vector.broadcast %113 : vector<2x64x1xf32> to vector<2x64x64xf32>
    %115 = arith.mulf %110, %114 : vector<2x64x64xf32>
    "tpu.trace_start"() <{level = 10 : i32, message = "bqk,bkd->bqd"}> : () -> ()
    %cst_51 = arith.constant dense<0.000000e+00> : vector<2x64x2xf32>
    %116 = tpu.matmul %115, %102, %cst_51 {dimension_numbers = #tpu.dot_dimension_numbers<[2], [1], [1], [2], [0, 0, 0, 1, 1, 2], [0], [0]>} : vector<2x64x64xf32>, vector<2x64x2xf32>, vector<2x64x2xf32> -> vector<2x64x2xf32>
    "tpu.trace_stop"() : () -> ()
    %117 = vector.shape_cast %116 : vector<2x64x2xf32> to vector<128x2xf32>
    %c0_52 = arith.constant 0 : index
    %c8 = arith.constant 8 : index
    %118 = vector.load %arg12[%c0_52, %c8] : memref<128x16xf32, #tpu.memory_space<vmem>>, vector<128x2xf32>
    tpu.vector_store %arg12[%c0_52, %c8], %117 {strides = array<i32>} : memref<128x16xf32, #tpu.memory_space<vmem>>, vector<128x2xf32>,
    %119 = vector.extract_strided_slice %21 {offsets = [0, 0, 10], sizes = [2, 64, 2], strides = [1, 1, 1]} : vector<2x64x16xf32> to vector<2x64x2xf32>
    %120 = vector.extract_strided_slice %22 {offsets = [0, 0, 10], sizes = [2, 64, 2], strides = [1, 1, 1]} : vector<2x64x16xf32> to vector<2x64x2xf32>
    %121 = vector.extract_strided_slice %23 {offsets = [0, 0, 10], sizes = [2, 64, 2], strides = [1, 1, 1]} : vector<2x64x16xf32> to vector<2x64x2xf32>
    "tpu.trace_start"() <{level = 10 : i32, message = "bqd,bkd->bqk"}> : () -> ()
    %cst_53 = arith.constant dense<0.000000e+00> : vector<2x64x64xf32>
    %122 = tpu.matmul %119, %120, %cst_53 {dimension_numbers = #tpu.dot_dimension_numbers<[2], [2], [1], [1], [0, 0, 0, 1, 1, 1], [0], [0]>} : vector<2x64x2xf32>, vector<2x64x2xf32>, vector<2x64x64xf32> -> vector<2x64x64xf32>
    "tpu.trace_stop"() : () -> ()
    %cst_54 = arith.constant 0.707106769 : f32
    %123 = vector.broadcast %cst_54 : f32 to vector<2x64x64xf32>
    %124 = arith.mulf %122, %123 : vector<2x64x64xf32>
    %cst_55 = arith.constant dense<0xFF800000> : vector<2x64xf32>
    %125 = vector.multi_reduction <maximumf>, %124, %cst_55 [2] : vector<2x64x64xf32> to vector<2x64xf32>
    %126 = vector.shape_cast %125 : vector<2x64xf32> to vector<2x64x1xf32>
    %127 = vector.broadcast %126 : vector<2x64x1xf32> to vector<2x64x64xf32>
    %128 = arith.subf %124, %127 : vector<2x64x64xf32>
    %129 = math.exp %128 : vector<2x64x64xf32>
    %cst_56 = arith.constant dense<0.000000e+00> : vector<2x64xf32>
    %130 = vector.multi_reduction <add>, %129, %cst_56 [2] : vector<2x64x64xf32> to vector<2x64xf32>
    %131 = vector.shape_cast %130 : vector<2x64xf32> to vector<2x64x1xf32>
    %132 = tpu.reciprocal %131 {approx = true} : vector<2x64x1xf32> -> vector<2x64x1xf32>
    %133 = vector.broadcast %132 : vector<2x64x1xf32> to vector<2x64x64xf32>
    %134 = arith.mulf %129, %133 : vector<2x64x64xf32>
    "tpu.trace_start"() <{level = 10 : i32, message = "bqk,bkd->bqd"}> : () -> ()
    %cst_57 = arith.constant dense<0.000000e+00> : vector<2x64x2xf32>
    %135 = tpu.matmul %134, %121, %cst_57 {dimension_numbers = #tpu.dot_dimension_numbers<[2], [1], [1], [2], [0, 0, 0, 1, 1, 2], [0], [0]>} : vector<2x64x64xf32>, vector<2x64x2xf32>, vector<2x64x2xf32> -> vector<2x64x2xf32>
    "tpu.trace_stop"() : () -> ()
    %136 = vector.shape_cast %135 : vector<2x64x2xf32> to vector<128x2xf32>
    %c0_58 = arith.constant 0 : index
    %c10 = arith.constant 10 : index
    %137 = vector.load %arg12[%c0_58, %c10] : memref<128x16xf32, #tpu.memory_space<vmem>>, vector<128x2xf32>
    tpu.vector_store %arg12[%c0_58, %c10], %136 {strides = array<i32>} : memref<128x16xf32, #tpu.memory_space<vmem>>, vector<128x2xf32>,
    %138 = vector.extract_strided_slice %21 {offsets = [0, 0, 12], sizes = [2, 64, 2], strides = [1, 1, 1]} : vector<2x64x16xf32> to vector<2x64x2xf32>
    %139 = vector.extract_strided_slice %22 {offsets = [0, 0, 12], sizes = [2, 64, 2], strides = [1, 1, 1]} : vector<2x64x16xf32> to vector<2x64x2xf32>
    %140 = vector.extract_strided_slice %23 {offsets = [0, 0, 12], sizes = [2, 64, 2], strides = [1, 1, 1]} : vector<2x64x16xf32> to vector<2x64x2xf32>
    "tpu.trace_start"() <{level = 10 : i32, message = "bqd,bkd->bqk"}> : () -> ()
    %cst_59 = arith.constant dense<0.000000e+00> : vector<2x64x64xf32>
    %141 = tpu.matmul %138, %139, %cst_59 {dimension_numbers = #tpu.dot_dimension_numbers<[2], [2], [1], [1], [0, 0, 0, 1, 1, 1], [0], [0]>} : vector<2x64x2xf32>, vector<2x64x2xf32>, vector<2x64x64xf32> -> vector<2x64x64xf32>
    "tpu.trace_stop"() : () -> ()
    %cst_60 = arith.constant 0.707106769 : f32
    %142 = vector.broadcast %cst_60 : f32 to vector<2x64x64xf32>
    %143 = arith.mulf %141, %142 : vector<2x64x64xf32>
    %cst_61 = arith.constant dense<0xFF800000> : vector<2x64xf32>
    %144 = vector.multi_reduction <maximumf>, %143, %cst_61 [2] : vector<2x64x64xf32> to vector<2x64xf32>
    %145 = vector.shape_cast %144 : vector<2x64xf32> to vector<2x64x1xf32>
    %146 = vector.broadcast %145 : vector<2x64x1xf32> to vector<2x64x64xf32>
    %147 = arith.subf %143, %146 : vector<2x64x64xf32>
    %148 = math.exp %147 : vector<2x64x64xf32>
    %cst_62 = arith.constant dense<0.000000e+00> : vector<2x64xf32>
    %149 = vector.multi_reduction <add>, %148, %cst_62 [2] : vector<2x64x64xf32> to vector<2x64xf32>
    %150 = vector.shape_cast %149 : vector<2x64xf32> to vector<2x64x1xf32>
    %151 = tpu.reciprocal %150 {approx = true} : vector<2x64x1xf32> -> vector<2x64x1xf32>
    %152 = vector.broadcast %151 : vector<2x64x1xf32> to vector<2x64x64xf32>
    %153 = arith.mulf %148, %152 : vector<2x64x64xf32>
    "tpu.trace_start"() <{level = 10 : i32, message = "bqk,bkd->bqd"}> : () -> ()
    %cst_63 = arith.constant dense<0.000000e+00> : vector<2x64x2xf32>
    %154 = tpu.matmul %153, %140, %cst_63 {dimension_numbers = #tpu.dot_dimension_numbers<[2], [1], [1], [2], [0, 0, 0, 1, 1, 2], [0], [0]>} : vector<2x64x64xf32>, vector<2x64x2xf32>, vector<2x64x2xf32> -> vector<2x64x2xf32>
    "tpu.trace_stop"() : () -> ()
    %155 = vector.shape_cast %154 : vector<2x64x2xf32> to vector<128x2xf32>
    %c0_64 = arith.constant 0 : index
    %c12 = arith.constant 12 : index
    %156 = vector.load %arg12[%c0_64, %c12] : memref<128x16xf32, #tpu.memory_space<vmem>>, vector<128x2xf32>
    tpu.vector_store %arg12[%c0_64, %c12], %155 {strides = array<i32>} : memref<128x16xf32, #tpu.memory_space<vmem>>, vector<128x2xf32>,
    %157 = vector.extract_strided_slice %21 {offsets = [0, 0, 14], sizes = [2, 64, 2], strides = [1, 1, 1]} : vector<2x64x16xf32> to vector<2x64x2xf32>
    %158 = vector.extract_strided_slice %22 {offsets = [0, 0, 14], sizes = [2, 64, 2], strides = [1, 1, 1]} : vector<2x64x16xf32> to vector<2x64x2xf32>
    %159 = vector.extract_strided_slice %23 {offsets = [0, 0, 14], sizes = [2, 64, 2], strides = [1, 1, 1]} : vector<2x64x16xf32> to vector<2x64x2xf32>
    "tpu.trace_start"() <{level = 10 : i32, message = "bqd,bkd->bqk"}> : () -> ()
    %cst_65 = arith.constant dense<0.000000e+00> : vector<2x64x64xf32>
    %160 = tpu.matmul %157, %158, %cst_65 {dimension_numbers = #tpu.dot_dimension_numbers<[2], [2], [1], [1], [0, 0, 0, 1, 1, 1], [0], [0]>} : vector<2x64x2xf32>, vector<2x64x2xf32>, vector<2x64x64xf32> -> vector<2x64x64xf32>
    "tpu.trace_stop"() : () -> ()
    %cst_66 = arith.constant 0.707106769 : f32
    %161 = vector.broadcast %cst_66 : f32 to vector<2x64x64xf32>
    %162 = arith.mulf %160, %161 : vector<2x64x64xf32>
    %cst_67 = arith.constant dense<0xFF800000> : vector<2x64xf32>
    %163 = vector.multi_reduction <maximumf>, %162, %cst_67 [2] : vector<2x64x64xf32> to vector<2x64xf32>
    %164 = vector.shape_cast %163 : vector<2x64xf32> to vector<2x64x1xf32>
    %165 = vector.broadcast %164 : vector<2x64x1xf32> to vector<2x64x64xf32>
    %166 = arith.subf %162, %165 : vector<2x64x64xf32>
    %167 = math.exp %166 : vector<2x64x64xf32>
    %cst_68 = arith.constant dense<0.000000e+00> : vector<2x64xf32>
    %168 = vector.multi_reduction <add>, %167, %cst_68 [2] : vector<2x64x64xf32> to vector<2x64xf32>
    %169 = vector.shape_cast %168 : vector<2x64xf32> to vector<2x64x1xf32>
    %170 = tpu.reciprocal %169 {approx = true} : vector<2x64x1xf32> -> vector<2x64x1xf32>
    %171 = vector.broadcast %170 : vector<2x64x1xf32> to vector<2x64x64xf32>
    %172 = arith.mulf %167, %171 : vector<2x64x64xf32>
    "tpu.trace_start"() <{level = 10 : i32, message = "bqk,bkd->bqd"}> : () -> ()
    %cst_69 = arith.constant dense<0.000000e+00> : vector<2x64x2xf32>
    %173 = tpu.matmul %172, %159, %cst_69 {dimension_numbers = #tpu.dot_dimension_numbers<[2], [1], [1], [2], [0, 0, 0, 1, 1, 2], [0], [0]>} : vector<2x64x64xf32>, vector<2x64x2xf32>, vector<2x64x2xf32> -> vector<2x64x2xf32>
    "tpu.trace_stop"() : () -> ()
    %174 = vector.shape_cast %173 : vector<2x64x2xf32> to vector<128x2xf32>
    %c0_70 = arith.constant 0 : index
    %c14 = arith.constant 14 : index
    %175 = vector.load %arg12[%c0_70, %c14] : memref<128x16xf32, #tpu.memory_space<vmem>>, vector<128x2xf32>
    tpu.vector_store %arg12[%c0_70, %c14], %174 {strides = array<i32>} : memref<128x16xf32, #tpu.memory_space<vmem>>, vector<128x2xf32>,
    %c0_71 = arith.constant 0 : index
    %c0_72 = arith.constant 0 : index
    %176 = vector.load %arg12[%c0_71, %c0_72] : memref<128x16xf32, #tpu.memory_space<vmem>>, vector<128x16xf32>
    %c0_73 = arith.constant 0 : index
    %c0_74 = arith.constant 0 : index
    %177 = vector.load %arg9[%c0_73, %c0_74] : memref<16x16xf32, #tpu.memory_space<vmem>>, vector<16x16xf32>
    %cst_75 = arith.constant dense<0.000000e+00> : vector<128x16xf32>
    %178 = tpu.matmul %176, %177, %cst_75 {dimension_numbers = #tpu.dot_dimension_numbers<[1], [0], [0], [1], [0, 0, 1, 1], [], []>} : vector<128x16xf32>, vector<16x16xf32>, vector<128x16xf32> -> vector<128x16xf32>
    %c0_76 = arith.constant 0 : index
    %c0_77 = arith.constant 0 : index
    %179 = vector.load %arg10[%c0_76, %c0_77] : memref<1x16xf32, #tpu.memory_space<vmem>>, vector<1x16xf32>
    %180 = vector.broadcast %179 : vector<1x16xf32> to vector<128x16xf32>
    %181 = arith.addf %178, %180 : vector<128x16xf32>
    %182 = vector.shape_cast %181 : vector<128x16xf32> to vector<2x64x16xf32>
    %c0_78 = arith.constant 0 : index
    %c0_79 = arith.constant 0 : index
    %c0_80 = arith.constant 0 : index
    %183 = vector.load %arg11[%c0_78, %c0_79, %c0_80] : memref<2x64x16xf32, #tpu.memory_space<vmem>>, vector<2x64x16xf32>
    tpu.vector_store %arg11[%c0_78, %c0_79, %c0_80], %182 {strides = array<i32>} : memref<2x64x16xf32, #tpu.memory_space<vmem>>, vector<2x64x16xf32>,
    return
  }
}

</mosaic_0001>

<llo_original>
// kernel: multi_head_attention.1
$region0: #{multi_head_attention.1}
  #allocation0 [shape = 'u32[]', space=smem, size = 0x4, offset = 0x4, fixed_abs, tag = 'smem constant byte address 0x4 - core index']
  #allocation1 [shape = 'u32[144,128]{1,0:T(1,128)}', space=vmem, size = 0x12000, scoped, tag = 'internal scratch']
  #allocation2 [shape = 'f32[128,16]{1,0:T(8,128)}', space=vmem, size = 0x10000, scoped, tag = 'scratch operand']
  %s0 = inlined_call_operand.vmem [shape: f32[2,64,16], index: 0, kind: input, shape index: {}]
  %s1 = inlined_call_operand.vmem [shape: f32[2,64,16], index: 1, kind: input, shape index: {}]
  %s2 = inlined_call_operand.vmem [shape: f32[2,64,16], index: 2, kind: input, shape index: {}]
  %s3 = inlined_call_operand.vmem [shape: f32[16,16], index: 3, kind: input, shape index: {}]
  %s4 = inlined_call_operand.vmem [shape: f32[1,16], index: 4, kind: input, shape index: {}]
  %s5 = inlined_call_operand.vmem [shape: f32[16,16], index: 5, kind: input, shape index: {}]
  %s6 = inlined_call_operand.vmem [shape: f32[1,16], index: 6, kind: input, shape index: {}]
  %s7 = inlined_call_operand.vmem [shape: f32[16,16], index: 7, kind: input, shape index: {}]
  %s8 = inlined_call_operand.vmem [shape: f32[1,16], index: 8, kind: input, shape index: {}]
  %s9 = inlined_call_operand.vmem [shape: f32[16,16], index: 9, kind: input, shape index: {}]
  %s10 = inlined_call_operand.vmem [shape: f32[1,16], index: 10, kind: input, shape index: {}]
  %s11 = inlined_call_operand.vmem [shape: f32[2,64,16], index: 11, kind: output, shape index: {}]
  %s12 = sld [smem:[#allocation0]]
  $region54: #{multi_head_attention.1} parent=0
    _
  %s14 = ssub.s32 1, %s12
  %s15 = scalar_select 0, %s14, %s12
  // Predicated region
  $region2: #{multi_head_attention.1} parent=0 // pred_check
    _
  $region3: #{multi_head_attention.1} parent=0 // pred_check_branch
    %17 = sbr.rel (0) target = $region5
  $region4: #{multi_head_attention.1} parent=0 // pred_region
    _
  $region5: #{multi_head_attention.1} parent=0 // pred_fallthru
    _
  // Predicated region
  $region6: #{multi_head_attention.1} parent=0 // pred_check
    _
  $region7: #{multi_head_attention.1} parent=0 // pred_check_branch
    %19 = sbr.rel (0) target = $region9
  $region8: #{multi_head_attention.1} parent=0 // pred_region
    _
  $region9: #{multi_head_attention.1} parent=0 // pred_fallthru
    _
  // Predicated region
  $region10: #{multi_head_attention.1} parent=0 // pred_check
    _
  $region11: #{multi_head_attention.1} parent=0 // pred_check_branch
    %21 = sbr.rel (0) target = $region13
  $region12: #{multi_head_attention.1} parent=0 // pred_region
    _
  $region13: #{multi_head_attention.1} parent=0 // pred_fallthru
    _
  // Predicated region
  $region14: #{multi_head_attention.1} parent=0 // pred_check
    _
  $region15: #{multi_head_attention.1} parent=0 // pred_check_branch
    %23 = sbr.rel (0) target = $region17
  $region16: #{multi_head_attention.1} parent=0 // pred_region
    _
  $region17: #{multi_head_attention.1} parent=0 // pred_fallthru
    _
  // Predicated region
  $region18: #{multi_head_attention.1} parent=0 // pred_check
    _
  $region19: #{multi_head_attention.1} parent=0 // pred_check_branch
    %25 = sbr.rel (0) target = $region21
  $region20: #{multi_head_attention.1} parent=0 // pred_region
    _
  $region21: #{multi_head_attention.1} parent=0 // pred_fallthru
    _
  // Predicated region
  $region22: #{multi_head_attention.1} parent=0 // pred_check
    _
  $region23: #{multi_head_attention.1} parent=0 // pred_check_branch
    %27 = sbr.rel (0) target = $region25
  $region24: #{multi_head_attention.1} parent=0 // pred_region
    _
  $region25: #{multi_head_attention.1} parent=0 // pred_fallthru
    _
  // Predicated region
  $region26: #{multi_head_attention.1} parent=0 // pred_check
    _
  $region27: #{multi_head_attention.1} parent=0 // pred_check_branch
    %29 = sbr.rel (0) target = $region29
  $region28: #{multi_head_attention.1} parent=0 // pred_region
    _
  $region29: #{multi_head_attention.1} parent=0 // pred_fallthru
    _
  // Predicated region
  $region30: #{multi_head_attention.1} parent=0 // pred_check
    _
  $region31: #{multi_head_attention.1} parent=0 // pred_check_branch
    %31 = sbr.rel (0) target = $region33
  $region32: #{multi_head_attention.1} parent=0 // pred_region
    _
  $region33: #{multi_head_attention.1} parent=0 // pred_fallthru
    _
  // Predicated region
  $region34: #{multi_head_attention.1} parent=0 // pred_check
    _
  $region35: #{multi_head_attention.1} parent=0 // pred_check_branch
    %33 = sbr.rel (0) target = $region37
  $region36: #{multi_head_attention.1} parent=0 // pred_region
    _
  $region37: #{multi_head_attention.1} parent=0 // pred_fallthru
    _
  // Predicated region
  $region38: #{multi_head_attention.1} parent=0 // pred_check
    _
  $region39: #{multi_head_attention.1} parent=0 // pred_check_branch
    %35 = sbr.rel (0) target = $region41
  $region40: #{multi_head_attention.1} parent=0 // pred_region
    _
  $region41: #{multi_head_attention.1} parent=0 // pred_fallthru
    _
  // Predicated region
  $region42: #{multi_head_attention.1} parent=0 // pred_check
    _
  $region43: #{multi_head_attention.1} parent=0 // pred_check_branch
    %37 = sbr.rel (0) target = $region45
  $region44: #{multi_head_attention.1} parent=0 // pred_region
    _
  $region45: #{multi_head_attention.1} parent=0 // pred_fallthru
    _
  %v38 = vld [vmem:[%s0] sm:$0xff]
  %v39 = vld [vmem:[%s0 + $0x8] sm:$0xff]
  %v40 = vld [vmem:[%s0 + $0x10] sm:$0xff]
  %v41 = vld [vmem:[%s0 + $0x18] sm:$0xff]
  %v42 = vld [vmem:[%s0 + $0x20] sm:$0xff]
  %v43 = vld [vmem:[%s0 + $0x28] sm:$0xff]
  %v44 = vld [vmem:[%s0 + $0x30] sm:$0xff]
  %v45 = vld [vmem:[%s0 + $0x38] sm:$0xff]
  %v46 = vld [vmem:[%s0 + $0x40] sm:$0xff]
  %v47 = vld [vmem:[%s0 + $0x48] sm:$0xff]
  %v48 = vld [vmem:[%s0 + $0x50] sm:$0xff]
  %v49 = vld [vmem:[%s0 + $0x58] sm:$0xff]
  %v50 = vld [vmem:[%s0 + $0x60] sm:$0xff]
  %v51 = vld [vmem:[%s0 + $0x68] sm:$0xff]
  %v52 = vld [vmem:[%s0 + $0x70] sm:$0xff]
  %v53 = vld [vmem:[%s0 + $0x78] sm:$0xff]
  %v54 = vld [vmem:[%s1] sm:$0xff]
  %v55 = vld [vmem:[%s1 + $0x8] sm:$0xff]
  %v56 = vld [vmem:[%s1 + $0x10] sm:$0xff]
  %v57 = vld [vmem:[%s1 + $0x18] sm:$0xff]
  %v58 = vld [vmem:[%s1 + $0x20] sm:$0xff]
  %v59 = vld [vmem:[%s1 + $0x28] sm:$0xff]
  %v60 = vld [vmem:[%s1 + $0x30] sm:$0xff]
  %v61 = vld [vmem:[%s1 + $0x38] sm:$0xff]
  %v62 = vld [vmem:[%s1 + $0x40] sm:$0xff]
  %v63 = vld [vmem:[%s1 + $0x48] sm:$0xff]
  %v64 = vld [vmem:[%s1 + $0x50] sm:$0xff]
  %v65 = vld [vmem:[%s1 + $0x58] sm:$0xff]
  %v66 = vld [vmem:[%s1 + $0x60] sm:$0xff]
  %v67 = vld [vmem:[%s1 + $0x68] sm:$0xff]
  %v68 = vld [vmem:[%s1 + $0x70] sm:$0xff]
  %v69 = vld [vmem:[%s1 + $0x78] sm:$0xff]
  %v70 = vld [vmem:[%s2] sm:$0xff]
  %v71 = vld [vmem:[%s2 + $0x8] sm:$0xff]
  %v72 = vld [vmem:[%s2 + $0x10] sm:$0xff]
  %v73 = vld [vmem:[%s2 + $0x18] sm:$0xff]
  %v74 = vld [vmem:[%s2 + $0x20] sm:$0xff]
  %v75 = vld [vmem:[%s2 + $0x28] sm:$0xff]
  %v76 = vld [vmem:[%s2 + $0x30] sm:$0xff]
  %v77 = vld [vmem:[%s2 + $0x38] sm:$0xff]
  %v78 = vld [vmem:[%s2 + $0x40] sm:$0xff]
  %v79 = vld [vmem:[%s2 + $0x48] sm:$0xff]
  %v80 = vld [vmem:[%s2 + $0x50] sm:$0xff]
  %v81 = vld [vmem:[%s2 + $0x58] sm:$0xff]
  %v82 = vld [vmem:[%s2 + $0x60] sm:$0xff]
  %v83 = vld [vmem:[%s2 + $0x68] sm:$0xff]
  %v84 = vld [vmem:[%s2 + $0x70] sm:$0xff]
  %v85 = vld [vmem:[%s2 + $0x78] sm:$0xff]
  %v86 = vld [vmem:[%s3] sm:$0xff]
  %v87 = vld [vmem:[%s3 + $0x8] sm:$0xff]
  %v88 = vld [vmem:[%s4] sm:$0x1]
  %v90 = vlaneseq
  %v91 = vshrl.u32 %v90, 7
  %v92 = vsub.s32 0, %v91
  %v93 = vrot.slane %v88, %v92
  %vm95 = vcmask 130048
  %v97 = vsel %vm95, %v38, 0
  %v100 = vsel %vm95, %v39, 0
  %v103 = vsel %vm95, %v40, 0
  %v106 = vsel %vm95, %v41, 0
  %v109 = vsel %vm95, %v42, 0
  %v112 = vsel %vm95, %v43, 0
  %v115 = vsel %vm95, %v44, 0
  %v118 = vsel %vm95, %v45, 0
  %v121 = vsel %vm95, %v46, 0
  %v124 = vsel %vm95, %v47, 0
  %v127 = vsel %vm95, %v48, 0
  %v130 = vsel %vm95, %v49, 0
  %v133 = vsel %vm95, %v50, 0
  %v136 = vsel %vm95, %v51, 0
  %v139 = vsel %vm95, %v52, 0
  %v142 = vsel %vm95, %v53, 0
  %144 = vmatprep.subr.mxu0 0.0
  %145 = vmatpush1.msra.mxu0 %v86
  %146 = vmatprep.subr.mxu0 0.0
  %147 = vmatpush1.msra.mxu0 %v87
  %148 = vmatprep.subr.mxu0 0.0
  %149 = vmatpush1.msra.mxu0 0.0
  %150 = vmatprep.subr.mxu0 0.0
  %151 = vmatpush1.msra.mxu0 0.0
  %152 = vmatprep.subr.mxu0 0.0
  %153 = vmatpush1.msra.mxu0 0.0
  %154 = vmatprep.subr.mxu0 0.0
  %155 = vmatpush1.msra.mxu0 0.0
  %156 = vmatprep.subr.mxu0 0.0
  %157 = vmatpush1.msra.mxu0 0.0
  %158 = vmatprep.subr.mxu0 0.0
  %159 = vmatpush1.msra.mxu0 0.0
  %160 = vmatprep.subr.mxu0 0.0
  %161 = vmatpush1.msra.mxu0 0.0
  %162 = vmatprep.subr.mxu0 0.0
  %163 = vmatpush1.msra.mxu0 0.0
  %164 = vmatprep.subr.mxu0 0.0
  %165 = vmatpush1.msra.mxu0 0.0
  %166 = vmatprep.subr.mxu0 0.0
  %167 = vmatpush1.msra.mxu0 0.0
  %168 = vmatprep.subr.mxu0 0.0
  %169 = vmatpush1.msra.mxu0 0.0
  %170 = vmatprep.subr.mxu0 0.0
  %171 = vmatpush1.msra.mxu0 0.0
  %172 = vmatprep.subr.mxu0 0.0
  %173 = vmatpush1.msra.mxu0 0.0
  %174 = vmatprep.subr.mxu0 0.0
  %175 = vmatpush1.msra.mxu0 0.0
  %176 = vmatprep.subr.mxu0 0.0
  %177 = vmatpush1.msra.mxu0 0.0
  %178 = vmatprep.subr.mxu0 0.0
  %179 = vmatpush1.msra.mxu0 0.0
  %180 = vmatprep.subr.mxu0 0.0
  %181 = vmatpush1.msra.mxu0 0.0
  %182 = vmatprep.subr.mxu0 0.0
  %183 = vmatpush1.msra.mxu0 0.0
  %184 = vmatprep.subr.mxu0 0.0
  %185 = vmatpush1.msra.mxu0 0.0
  %186 = vmatprep.subr.mxu0 0.0
  %187 = vmatpush1.msra.mxu0 0.0
  %188 = vmatprep.subr.mxu0 0.0
  %189 = vmatpush1.msra.mxu0 0.0
  %190 = vmatprep.subr.mxu0 0.0
  %191 = vmatpush1.msra.mxu0 0.0
  %192 = vmatprep.subr.mxu0 0.0
  %193 = vmatpush1.msra.mxu0 0.0
  %194 = vmatprep.subr.mxu0 0.0
  %195 = vmatpush1.msra.mxu0 0.0
  %196 = vmatprep.subr.mxu0 0.0
  %197 = vmatpush1.msra.mxu0 0.0
  %198 = vmatprep.subr.mxu0 0.0
  %199 = vmatpush1.msra.mxu0 0.0
  %200 = vmatprep.subr.mxu0 0.0
  %201 = vmatpush1.msra.mxu0 0.0
  %202 = vmatprep.subr.mxu0 0.0
  %203 = vmatpush1.msra.mxu0 0.0
  %204 = vmatprep.subr.mxu0 0.0
  %205 = vmatpush1.msra.mxu0 0.0
  %206 = vmatprep.subr.mxu0 0.0
  %207 = vmatpush1.msra.mxu0 0.0
  %208 = vmatprep.mubr.f32.mxu0 0.0
  %209 = vmatmul.mubr.f32.gmra.mrb[0].mxu0 %v97
  %v210 = vpop.f32.mrb[0].mxu0
  %v211 = vadd.f32 %v93, %v210
  %v212 = vpop.f32.mrb[0].mxu0
  %213 = vmatprep.mubr.f32.mxu0 0.0
  %214 = vmatmul.mubr.f32.gmra.mrb[0].mxu0 %v100
  %v215 = vpop.f32.mrb[0].mxu0
  %v216 = vadd.f32 %v93, %v215
  %v217 = vpop.f32.mrb[0].mxu0
  %218 = vmatprep.mubr.f32.mxu0 0.0
  %219 = vmatmul.mubr.f32.gmra.mrb[0].mxu0 %v103
  %v220 = vpop.f32.mrb[0].mxu0
  %v221 = vadd.f32 %v93, %v220
  %v222 = vpop.f32.mrb[0].mxu0
  %223 = vmatprep.mubr.f32.mxu0 0.0
  %224 = vmatmul.mubr.f32.gmra.mrb[0].mxu0 %v106
  %v225 = vpop.f32.mrb[0].mxu0
  %v226 = vadd.f32 %v93, %v225
  %v227 = vpop.f32.mrb[0].mxu0
  %228 = vmatprep.mubr.f32.mxu0 0.0
  %229 = vmatmul.mubr.f32.gmra.mrb[0].mxu0 %v109
  %v230 = vpop.f32.mrb[0].mxu0
  %v231 = vadd.f32 %v93, %v230
  %v232 = vpop.f32.mrb[0].mxu0
  %233 = vmatprep.mubr.f32.mxu0 0.0
  %234 = vmatmul.mubr.f32.gmra.mrb[0].mxu0 %v112
  %v235 = vpop.f32.mrb[0].mxu0
  %v236 = vadd.f32 %v93, %v235
  %v237 = vpop.f32.mrb[0].mxu0
  %238 = vmatprep.mubr.f32.mxu0 0.0
  %239 = vmatmul.mubr.f32.gmra.mrb[0].mxu0 %v115
  %v240 = vpop.f32.mrb[0].mxu0
  %v241 = vadd.f32 %v93, %v240
  %v242 = vpop.f32.mrb[0].mxu0
  %243 = vmatprep.mubr.f32.mxu0 0.0
  %244 = vmatmul.mubr.f32.gmra.mrb[0].mxu0 %v118
  %v245 = vpop.f32.mrb[0].mxu0
  %v246 = vadd.f32 %v93, %v245
  %v247 = vpop.f32.mrb[0].mxu0
  %248 = vmatprep.mubr.f32.mxu0 0.0
  %249 = vmatmul.mubr.f32.gmra.mrb[0].mxu0 %v121
  %v250 = vpop.f32.mrb[0].mxu0
  %v251 = vadd.f32 %v93, %v250
  %v252 = vpop.f32.mrb[0].mxu0
  %253 = vmatprep.mubr.f32.mxu0 0.0
  %254 = vmatmul.mubr.f32.gmra.mrb[0].mxu0 %v124
  %v255 = vpop.f32.mrb[0].mxu0
  %v256 = vadd.f32 %v93, %v255
  %v257 = vpop.f32.mrb[0].mxu0
  %258 = vmatprep.mubr.f32.mxu0 0.0
  %259 = vmatmul.mubr.f32.gmra.mrb[0].mxu0 %v127
  %v260 = vpop.f32.mrb[0].mxu0
  %v261 = vadd.f32 %v93, %v260
  %v262 = vpop.f32.mrb[0].mxu0
  %263 = vmatprep.mubr.f32.mxu0 0.0
  %264 = vmatmul.mubr.f32.gmra.mrb[0].mxu0 %v130
  %v265 = vpop.f32.mrb[0].mxu0
  %v266 = vadd.f32 %v93, %v265
  %v267 = vpop.f32.mrb[0].mxu0
  %268 = vmatprep.mubr.f32.mxu0 0.0
  %269 = vmatmul.mubr.f32.gmra.mrb[0].mxu0 %v133
  %v270 = vpop.f32.mrb[0].mxu0
  %v271 = vadd.f32 %v93, %v270
  %v272 = vpop.f32.mrb[0].mxu0
  %273 = vmatprep.mubr.f32.mxu0 0.0
  %274 = vmatmul.mubr.f32.gmra.mrb[0].mxu0 %v136
  %v275 = vpop.f32.mrb[0].mxu0
  %v276 = vadd.f32 %v93, %v275
  %v277 = vpop.f32.mrb[0].mxu0
  %278 = vmatprep.mubr.f32.mxu0 0.0
  %279 = vmatmul.mubr.f32.gmra.mrb[0].mxu0 %v139
  %v280 = vpop.f32.mrb[0].mxu0
  %v281 = vadd.f32 %v93, %v280
  %v282 = vpop.f32.mrb[0].mxu0
  %283 = vmatprep.mubr.f32.mxu0 0.0
  %284 = vmatmul.mubr.f32.gmra.mrb[0].mxu0 %v142
  %v285 = vpop.f32.mrb[0].mxu0
  %v286 = vadd.f32 %v93, %v285
  %v287 = vpop.f32.mrb[0].mxu0
  %288 = vdwg.mxu0
  %v289 = vld [vmem:[%s5] sm:$0xff]
  %v290 = vld [vmem:[%s5 + $0x8] sm:$0xff]
  %v291 = vld [vmem:[%s6] sm:$0x1]
  %v293 = vlaneseq
  %v294 = vshrl.u32 %v293, 7
  %v295 = vsub.s32 0, %v294
  %v296 = vrot.slane %v291, %v295
  %v299 = vsel %vm95, %v54, 0
  %v302 = vsel %vm95, %v55, 0
  %v305 = vsel %vm95, %v56, 0
  %v308 = vsel %vm95, %v57, 0
  %v311 = vsel %vm95, %v58, 0
  %v314 = vsel %vm95, %v59, 0
  %v317 = vsel %vm95, %v60, 0
  %v320 = vsel %vm95, %v61, 0
  %v323 = vsel %vm95, %v62, 0
  %v326 = vsel %vm95, %v63, 0
  %v329 = vsel %vm95, %v64, 0
  %v332 = vsel %vm95, %v65, 0
  %v335 = vsel %vm95, %v66, 0
  %v338 = vsel %vm95, %v67, 0
  %v341 = vsel %vm95, %v68, 0
  %v344 = vsel %vm95, %v69, 0
  %346 = vmatprep.subr.mxu0 0.0
  %347 = vmatpush1.msra.mxu0 %v289
  %348 = vmatprep.subr.mxu0 0.0
  %349 = vmatpush1.msra.mxu0 %v290
  %350 = vmatprep.subr.mxu0 0.0
  %351 = vmatpush1.msra.mxu0 0.0
  %352 = vmatprep.subr.mxu0 0.0
  %353 = vmatpush1.msra.mxu0 0.0
  %354 = vmatprep.subr.mxu0 0.0
  %355 = vmatpush1.msra.mxu0 0.0
  %356 = vmatprep.subr.mxu0 0.0
  %357 = vmatpush1.msra.mxu0 0.0
  %358 = vmatprep.subr.mxu0 0.0
  %359 = vmatpush1.msra.mxu0 0.0
  %360 = vmatprep.subr.mxu0 0.0
  %361 = vmatpush1.msra.mxu0 0.0
  %362 = vmatprep.subr.mxu0 0.0
  %363 = vmatpush1.msra.mxu0 0.0
  %364 = vmatprep.subr.mxu0 0.0
  %365 = vmatpush1.msra.mxu0 0.0
  %366 = vmatprep.subr.mxu0 0.0
  %367 = vmatpush1.msra.mxu0 0.0
  %368 = vmatprep.subr.mxu0 0.0
  %369 = vmatpush1.msra.mxu0 0.0
  %370 = vmatprep.subr.mxu0 0.0
  %371 = vmatpush1.msra.mxu0 0.0
  %372 = vmatprep.subr.mxu0 0.0
  %373 = vmatpush1.msra.mxu0 0.0
  %374 = vmatprep.subr.mxu0 0.0
  %375 = vmatpush1.msra.mxu0 0.0
  %376 = vmatprep.subr.mxu0 0.0
  %377 = vmatpush1.msra.mxu0 0.0
  %378 = vmatprep.subr.mxu0 0.0
  %379 = vmatpush1.msra.mxu0 0.0
  %380 = vmatprep.subr.mxu0 0.0
  %381 = vmatpush1.msra.mxu0 0.0
  %382 = vmatprep.subr.mxu0 0.0
  %383 = vmatpush1.msra.mxu0 0.0
  %384 = vmatprep.subr.mxu0 0.0
  %385 = vmatpush1.msra.mxu0 0.0
  %386 = vmatprep.subr.mxu0 0.0
  %387 = vmatpush1.msra.mxu0 0.0
  %388 = vmatprep.subr.mxu0 0.0
  %389 = vmatpush1.msra.mxu0 0.0
  %390 = vmatprep.subr.mxu0 0.0
  %391 = vmatpush1.msra.mxu0 0.0
  %392 = vmatprep.subr.mxu0 0.0
  %393 = vmatpush1.msra.mxu0 0.0
  %394 = vmatprep.subr.mxu0 0.0
  %395 = vmatpush1.msra.mxu0 0.0
  %396 = vmatprep.subr.mxu0 0.0
  %397 = vmatpush1.msra.mxu0 0.0
  %398 = vmatprep.subr.mxu0 0.0
  %399 = vmatpush1.msra.mxu0 0.0
  %400 = vmatprep.subr.mxu0 0.0
  %401 = vmatpush1.msra.mxu0 0.0
  %402 = vmatprep.subr.mxu0 0.0
  %403 = vmatpush1.msra.mxu0 0.0
  %404 = vmatprep.subr.mxu0 0.0
  %405 = vmatpush1.msra.mxu0 0.0
  %406 = vmatprep.subr.mxu0 0.0
  %407 = vmatpush1.msra.mxu0 0.0
  %408 = vmatprep.subr.mxu0 0.0
  %409 = vmatpush1.msra.mxu0 0.0
  %410 = vmatprep.mubr.f32.mxu0 0.0
  %411 = vmatmul.mubr.f32.gmra.mrb[0].mxu0 %v299
  %v412 = vpop.f32.mrb[0].mxu0
  %v413 = vadd.f32 %v296, %v412
  %v414 = vpop.f32.mrb[0].mxu0
  %415 = vmatprep.mubr.f32.mxu0 0.0
  %416 = vmatmul.mubr.f32.gmra.mrb[0].mxu0 %v302
  %v417 = vpop.f32.mrb[0].mxu0
  %v418 = vadd.f32 %v296, %v417
  %v419 = vpop.f32.mrb[0].mxu0
  %420 = vmatprep.mubr.f32.mxu0 0.0
  %421 = vmatmul.mubr.f32.gmra.mrb[0].mxu0 %v305
  %v422 = vpop.f32.mrb[0].mxu0
  %v423 = vadd.f32 %v296, %v422
  %v424 = vpop.f32.mrb[0].mxu0
  %425 = vmatprep.mubr.f32.mxu0 0.0
  %426 = vmatmul.mubr.f32.gmra.mrb[0].mxu0 %v308
  %v427 = vpop.f32.mrb[0].mxu0
  %v428 = vadd.f32 %v296, %v427
  %v429 = vpop.f32.mrb[0].mxu0
  %430 = vmatprep.mubr.f32.mxu0 0.0
  %431 = vmatmul.mubr.f32.gmra.mrb[0].mxu0 %v311
  %v432 = vpop.f32.mrb[0].mxu0
  %v433 = vadd.f32 %v296, %v432
  %v434 = vpop.f32.mrb[0].mxu0
  %435 = vmatprep.mubr.f32.mxu0 0.0
  %436 = vmatmul.mubr.f32.gmra.mrb[0].mxu0 %v314
  %v437 = vpop.f32.mrb[0].mxu0
  %v438 = vadd.f32 %v296, %v437
  %v439 = vpop.f32.mrb[0].mxu0
  %440 = vmatprep.mubr.f32.mxu0 0.0
  %441 = vmatmul.mubr.f32.gmra.mrb[0].mxu0 %v317
  %v442 = vpop.f32.mrb[0].mxu0
  %v443 = vadd.f32 %v296, %v442
  %v444 = vpop.f32.mrb[0].mxu0
  %445 = vmatprep.mubr.f32.mxu0 0.0
  %446 = vmatmul.mubr.f32.gmra.mrb[0].mxu0 %v320
  %v447 = vpop.f32.mrb[0].mxu0
  %v448 = vadd.f32 %v296, %v447
  %v449 = vpop.f32.mrb[0].mxu0
  %450 = vmatprep.mubr.f32.mxu0 0.0
  %451 = vmatmul.mubr.f32.gmra.mrb[0].mxu0 %v323
  %v452 = vpop.f32.mrb[0].mxu0
  %v453 = vadd.f32 %v296, %v452
  %v454 = vpop.f32.mrb[0].mxu0
  %455 = vmatprep.mubr.f32.mxu0 0.0
  %456 = vmatmul.mubr.f32.gmra.mrb[0].mxu0 %v326
  %v457 = vpop.f32.mrb[0].mxu0
  %v458 = vadd.f32 %v296, %v457
  %v459 = vpop.f32.mrb[0].mxu0
  %460 = vmatprep.mubr.f32.mxu0 0.0
  %461 = vmatmul.mubr.f32.gmra.mrb[0].mxu0 %v329
  %v462 = vpop.f32.mrb[0].mxu0
  %v463 = vadd.f32 %v296, %v462
  %v464 = vpop.f32.mrb[0].mxu0
  %465 = vmatprep.mubr.f32.mxu0 0.0
  %466 = vmatmul.mubr.f32.gmra.mrb[0].mxu0 %v332
  %v467 = vpop.f32.mrb[0].mxu0
  %v468 = vadd.f32 %v296, %v467
  %v469 = vpop.f32.mrb[0].mxu0
  %470 = vmatprep.mubr.f32.mxu0 0.0
  %471 = vmatmul.mubr.f32.gmra.mrb[0].mxu0 %v335
  %v472 = vpop.f32.mrb[0].mxu0
  %v473 = vadd.f32 %v296, %v472
  %v474 = vpop.f32.mrb[0].mxu0
  %475 = vmatprep.mubr.f32.mxu0 0.0
  %476 = vmatmul.mubr.f32.gmra.mrb[0].mxu0 %v338
  %v477 = vpop.f32.mrb[0].mxu0
  %v478 = vadd.f32 %v296, %v477
  %v479 = vpop.f32.mrb[0].mxu0
  %480 = vmatprep.mubr.f32.mxu0 0.0
  %481 = vmatmul.mubr.f32.gmra.mrb[0].mxu0 %v341
  %v482 = vpop.f32.mrb[0].mxu0
  %v483 = vadd.f32 %v296, %v482
  %v484 = vpop.f32.mrb[0].mxu0
  %485 = vmatprep.mubr.f32.mxu0 0.0
  %486 = vmatmul.mubr.f32.gmra.mrb[0].mxu0 %v344
  %v487 = vpop.f32.mrb[0].mxu0
  %v488 = vadd.f32 %v296, %v487
  %v489 = vpop.f32.mrb[0].mxu0
  %490 = vdwg.mxu0
  %v491 = vld [vmem:[%s7] sm:$0xff]
  %v492 = vld [vmem:[%s7 + $0x8] sm:$0xff]
  %v493 = vld [vmem:[%s8] sm:$0x1]
  %v495 = vlaneseq
  %v496 = vshrl.u32 %v495, 7
  %v497 = vsub.s32 0, %v496
  %v498 = vrot.slane %v493, %v497
  %v501 = vsel %vm95, %v70, 0
  %v504 = vsel %vm95, %v71, 0
  %v507 = vsel %vm95, %v72, 0
  %v510 = vsel %vm95, %v73, 0
  %v513 = vsel %vm95, %v74, 0
  %v516 = vsel %vm95, %v75, 0
  %v519 = vsel %vm95, %v76, 0
  %v522 = vsel %vm95, %v77, 0
  %v525 = vsel %vm95, %v78, 0
  %v528 = vsel %vm95, %v79, 0
  %v531 = vsel %vm95, %v80, 0
  %v534 = vsel %vm95, %v81, 0
  %v537 = vsel %vm95, %v82, 0
  %v540 = vsel %vm95, %v83, 0
  %v543 = vsel %vm95, %v84, 0
  %v546 = vsel %vm95, %v85, 0
  %548 = vmatprep.subr.mxu0 0.0
  %549 = vmatpush1.msra.mxu0 %v491
  %550 = vmatprep.subr.mxu0 0.0
  %551 = vmatpush1.msra.mxu0 %v492
  %552 = vmatprep.subr.mxu0 0.0
  %553 = vmatpush1.msra.mxu0 0.0
  %554 = vmatprep.subr.mxu0 0.0
  %555 = vmatpush1.msra.mxu0 0.0
  %556 = vmatprep.subr.mxu0 0.0
  %557 = vmatpush1.msra.mxu0 0.0
  %558 = vmatprep.subr.mxu0 0.0
  %559 = vmatpush1.msra.mxu0 0.0
  %560 = vmatprep.subr.mxu0 0.0
  %561 = vmatpush1.msra.mxu0 0.0
  %562 = vmatprep.subr.mxu0 0.0
  %563 = vmatpush1.msra.mxu0 0.0
  %564 = vmatprep.subr.mxu0 0.0
  %565 = vmatpush1.msra.mxu0 0.0
  %566 = vmatprep.subr.mxu0 0.0
  %567 = vmatpush1.msra.mxu0 0.0
  %568 = vmatprep.subr.mxu0 0.0
  %569 = vmatpush1.msra.mxu0 0.0
  %570 = vmatprep.subr.mxu0 0.0
  %571 = vmatpush1.msra.mxu0 0.0
  %572 = vmatprep.subr.mxu0 0.0
  %573 = vmatpush1.msra.mxu0 0.0
  %574 = vmatprep.subr.mxu0 0.0
  %575 = vmatpush1.msra.mxu0 0.0
  %576 = vmatprep.subr.mxu0 0.0
  %577 = vmatpush1.msra.mxu0 0.0
  %578 = vmatprep.subr.mxu0 0.0
  %579 = vmatpush1.msra.mxu0 0.0
  %580 = vmatprep.subr.mxu0 0.0
  %581 = vmatpush1.msra.mxu0 0.0
  %582 = vmatprep.subr.mxu0 0.0
  %583 = vmatpush1.msra.mxu0 0.0
  %584 = vmatprep.subr.mxu0 0.0
  %585 = vmatpush1.msra.mxu0 0.0
  %586 = vmatprep.subr.mxu0 0.0
  %587 = vmatpush1.msra.mxu0 0.0
  %588 = vmatprep.subr.mxu0 0.0
  %589 = vmatpush1.msra.mxu0 0.0
  %590 = vmatprep.subr.mxu0 0.0
  %591 = vmatpush1.msra.mxu0 0.0
  %592 = vmatprep.subr.mxu0 0.0
  %593 = vmatpush1.msra.mxu0 0.0
  %594 = vmatprep.subr.mxu0 0.0
  %595 = vmatpush1.msra.mxu0 0.0
  %596 = vmatprep.subr.mxu0 0.0
  %597 = vmatpush1.msra.mxu0 0.0
  %598 = vmatprep.subr.mxu0 0.0
  %599 = vmatpush1.msra.mxu0 0.0
  %600 = vmatprep.subr.mxu0 0.0
  %601 = vmatpush1.msra.mxu0 0.0
  %602 = vmatprep.subr.mxu0 0.0
  %603 = vmatpush1.msra.mxu0 0.0
  %604 = vmatprep.subr.mxu0 0.0
  %605 = vmatpush1.msra.mxu0 0.0
  %606 = vmatprep.subr.mxu0 0.0
  %607 = vmatpush1.msra.mxu0 0.0
  %608 = vmatprep.subr.mxu0 0.0
  %609 = vmatpush1.msra.mxu0 0.0
  %610 = vmatprep.subr.mxu0 0.0
  %611 = vmatpush1.msra.mxu0 0.0
  %612 = vmatprep.mubr.f32.mxu0 0.0
  %613 = vmatmul.mubr.f32.gmra.mrb[0].mxu0 %v501
  %v614 = vpop.f32.mrb[0].mxu0
  %v615 = vadd.f32 %v498, %v614
  %v616 = vpop.f32.mrb[0].mxu0
  %617 = vmatprep.mubr.f32.mxu0 0.0
  %618 = vmatmul.mubr.f32.gmra.mrb[0].mxu0 %v504
  %v619 = vpop.f32.mrb[0].mxu0
  %v620 = vadd.f32 %v498, %v619
  %v621 = vpop.f32.mrb[0].mxu0
  %622 = vmatprep.mubr.f32.mxu0 0.0
  %623 = vmatmul.mubr.f32.gmra.mrb[0].mxu0 %v507
  %v624 = vpop.f32.mrb[0].mxu0
  %v625 = vadd.f32 %v498, %v624
  %v626 = vpop.f32.mrb[0].mxu0
  %627 = vmatprep.mubr.f32.mxu0 0.0
  %628 = vmatmul.mubr.f32.gmra.mrb[0].mxu0 %v510
  %v629 = vpop.f32.mrb[0].mxu0
  %v630 = vadd.f32 %v498, %v629
  %v631 = vpop.f32.mrb[0].mxu0
  %632 = vmatprep.mubr.f32.mxu0 0.0
  %633 = vmatmul.mubr.f32.gmra.mrb[0].mxu0 %v513
  %v634 = vpop.f32.mrb[0].mxu0
  %v635 = vadd.f32 %v498, %v634
  %v636 = vpop.f32.mrb[0].mxu0
  %637 = vmatprep.mubr.f32.mxu0 0.0
  %638 = vmatmul.mubr.f32.gmra.mrb[0].mxu0 %v516
  %v639 = vpop.f32.mrb[0].mxu0
  %v640 = vadd.f32 %v498, %v639
  %v641 = vpop.f32.mrb[0].mxu0
  %642 = vmatprep.mubr.f32.mxu0 0.0
  %643 = vmatmul.mubr.f32.gmra.mrb[0].mxu0 %v519
  %v644 = vpop.f32.mrb[0].mxu0
  %v645 = vadd.f32 %v498, %v644
  %v646 = vpop.f32.mrb[0].mxu0
  %647 = vmatprep.mubr.f32.mxu0 0.0
  %648 = vmatmul.mubr.f32.gmra.mrb[0].mxu0 %v522
  %v649 = vpop.f32.mrb[0].mxu0
  %v650 = vadd.f32 %v498, %v649
  %v651 = vpop.f32.mrb[0].mxu0
  %652 = vmatprep.mubr.f32.mxu0 0.0
  %653 = vmatmul.mubr.f32.gmra.mrb[0].mxu0 %v525
  %v654 = vpop.f32.mrb[0].mxu0
  %v655 = vadd.f32 %v498, %v654
  %v656 = vpop.f32.mrb[0].mxu0
  %657 = vmatprep.mubr.f32.mxu0 0.0
  %658 = vmatmul.mubr.f32.gmra.mrb[0].mxu0 %v528
  %v659 = vpop.f32.mrb[0].mxu0
  %v660 = vadd.f32 %v498, %v659
  %v661 = vpop.f32.mrb[0].mxu0
  %662 = vmatprep.mubr.f32.mxu0 0.0
  %663 = vmatmul.mubr.f32.gmra.mrb[0].mxu0 %v531
  %v664 = vpop.f32.mrb[0].mxu0
  %v665 = vadd.f32 %v498, %v664
  %v666 = vpop.f32.mrb[0].mxu0
  %667 = vmatprep.mubr.f32.mxu0 0.0
  %668 = vmatmul.mubr.f32.gmra.mrb[0].mxu0 %v534
  %v669 = vpop.f32.mrb[0].mxu0
  %v670 = vadd.f32 %v498, %v669
  %v671 = vpop.f32.mrb[0].mxu0
  %672 = vmatprep.mubr.f32.mxu0 0.0
  %673 = vmatmul.mubr.f32.gmra.mrb[0].mxu0 %v537
  %v674 = vpop.f32.mrb[0].mxu0
  %v675 = vadd.f32 %v498, %v674
  %v676 = vpop.f32.mrb[0].mxu0
  %677 = vmatprep.mubr.f32.mxu0 0.0
  %678 = vmatmul.mubr.f32.gmra.mrb[0].mxu0 %v540
  %v679 = vpop.f32.mrb[0].mxu0
  %v680 = vadd.f32 %v498, %v679
  %v681 = vpop.f32.mrb[0].mxu0
  %682 = vmatprep.mubr.f32.mxu0 0.0
  %683 = vmatmul.mubr.f32.gmra.mrb[0].mxu0 %v543
  %v684 = vpop.f32.mrb[0].mxu0
  %v685 = vadd.f32 %v498, %v684
  %v686 = vpop.f32.mrb[0].mxu0
  %687 = vmatprep.mubr.f32.mxu0 0.0
  %688 = vmatmul.mubr.f32.gmra.mrb[0].mxu0 %v546
  %v689 = vpop.f32.mrb[0].mxu0
  %v690 = vadd.f32 %v498, %v689
  %v691 = vpop.f32.mrb[0].mxu0
  %692 = vdwg.mxu0
  %vm693 = vcmask 15360
  %v695 = vsel %vm693, %v211, 0
  %v698 = vsel %vm693, %v216, 0
  %v701 = vsel %vm693, %v221, 0
  %v704 = vsel %vm693, %v226, 0
  %v707 = vsel %vm693, %v231, 0
  %v710 = vsel %vm693, %v236, 0
  %v713 = vsel %vm693, %v241, 0
  %v716 = vsel %vm693, %v246, 0
  %v719 = vsel %vm693, %v413, 0
  %v722 = vsel %vm693, %v418, 0
  %v725 = vsel %vm693, %v423, 0
  %v728 = vsel %vm693, %v428, 0
  %v731 = vsel %vm693, %v433, 0
  %v734 = vsel %vm693, %v438, 0
  %v737 = vsel %vm693, %v443, 0
  %v740 = vsel %vm693, %v448, 0
  %742 = vmatprep.subr.mxu0 0.0
  %743 = vmatpush1.xpose.msra.mxu0 %v719
  %744 = vmatprep.subr.mxu0 0.0
  %745 = vmatpush1.xpose.msra.mxu0 %v722
  %746 = vmatprep.subr.mxu0 0.0
  %747 = vmatpush1.xpose.msra.mxu0 %v725
  %748 = vmatprep.subr.mxu0 0.0
  %749 = vmatpush1.xpose.msra.mxu0 %v728
  %750 = vmatprep.subr.mxu0 0.0
  %751 = vmatpush1.xpose.msra.mxu0 %v731
  %752 = vmatprep.subr.mxu0 0.0
  %753 = vmatpush1.xpose.msra.mxu0 %v734
  %754 = vmatprep.subr.mxu0 0.0
  %755 = vmatpush1.xpose.msra.mxu0 %v737
  %756 = vmatprep.subr.mxu0 0.0
  %757 = vmatpush1.xpose.msra.mxu0 %v740
  %758 = vmatprep.subr.mxu0 0.0
  %759 = vmatpush1.xpose.msra.mxu0 0.0
  %760 = vmatprep.subr.mxu0 0.0
  %761 = vmatpush1.xpose.msra.mxu0 0.0
  %762 = vmatprep.subr.mxu0 0.0
  %763 = vmatpush1.xpose.msra.mxu0 0.0
  %764 = vmatprep.subr.mxu0 0.0
  %765 = vmatpush1.xpose.msra.mxu0 0.0
  %766 = vmatprep.subr.mxu0 0.0
  %767 = vmatpush1.xpose.msra.mxu0 0.0
  %768 = vmatprep.subr.mxu0 0.0
  %769 = vmatpush1.xpose.msra.mxu0 0.0
  %770 = vmatprep.subr.mxu0 0.0
  %771 = vmatpush1.xpose.msra.mxu0 0.0
  %772 = vmatprep.subr.mxu0 0.0
  %773 = vmatpush1.xpose.msra.mxu0 0.0
  %774 = vmatprep.subr.mxu0 0.0
  %775 = vmatpush1.xpose.msra.mxu0 0.0
  %776 = vmatprep.subr.mxu0 0.0
  %777 = vmatpush1.xpose.msra.mxu0 0.0
  %778 = vmatprep.subr.mxu0 0.0
  %779 = vmatpush1.xpose.msra.mxu0 0.0
  %780 = vmatprep.subr.mxu0 0.0
  %781 = vmatpush1.xpose.msra.mxu0 0.0
  %782 = vmatprep.subr.mxu0 0.0
  %783 = vmatpush1.xpose.msra.mxu0 0.0
  %784 = vmatprep.subr.mxu0 0.0
  %785 = vmatpush1.xpose.msra.mxu0 0.0
  %786 = vmatprep.subr.mxu0 0.0
  %787 = vmatpush1.xpose.msra.mxu0 0.0
  %788 = vmatprep.subr.mxu0 0.0
  %789 = vmatpush1.xpose.msra.mxu0 0.0
  %790 = vmatprep.subr.mxu0 0.0
  %791 = vmatpush1.xpose.msra.mxu0 0.0
  %792 = vmatprep.subr.mxu0 0.0
  %793 = vmatpush1.xpose.msra.mxu0 0.0
  %794 = vmatprep.subr.mxu0 0.0
  %795 = vmatpush1.xpose.msra.mxu0 0.0
  %796 = vmatprep.subr.mxu0 0.0
  %797 = vmatpush1.xpose.msra.mxu0 0.0
  %798 = vmatprep.subr.mxu0 0.0
  %799 = vmatpush1.xpose.msra.mxu0 0.0
  %800 = vmatprep.subr.mxu0 0.0
  %801 = vmatpush1.xpose.msra.mxu0 0.0
  %802 = vmatprep.subr.mxu0 0.0
  %803 = vmatpush1.xpose.msra.mxu0 0.0
  %804 = vmatprep.subr.mxu0 0.0
  %805 = vmatpush1.xpose.msra.mxu0 0.0
  %806 = vmatprep.mubr.f32.mxu0 0.0
  %807 = vmatmul.mubr.f32.gmra.mrb[0].mxu0 %v695
  %v808 = vpop.f32.mrb[0].mxu0
  %v809 = vadd.f32 0.0, %v808
  %v810 = vpop.f32.mrb[0].mxu0
  %811 = vmatprep.mubr.f32.mxu0 0.0
  %812 = vmatmul.mubr.f32.gmra.mrb[0].mxu0 %v698
  %v813 = vpop.f32.mrb[0].mxu0
  %v814 = vadd.f32 0.0, %v813
  %v815 = vpop.f32.mrb[0].mxu0
  %816 = vmatprep.mubr.f32.mxu0 0.0
  %817 = vmatmul.mubr.f32.gmra.mrb[0].mxu0 %v701
  %v818 = vpop.f32.mrb[0].mxu0
  %v819 = vadd.f32 0.0, %v818
  %v820 = vpop.f32.mrb[0].mxu0
  %821 = vmatprep.mubr.f32.mxu0 0.0
  %822 = vmatmul.mubr.f32.gmra.mrb[0].mxu0 %v704
  %v823 = vpop.f32.mrb[0].mxu0
  %v824 = vadd.f32 0.0, %v823
  %v825 = vpop.f32.mrb[0].mxu0
  %826 = vmatprep.mubr.f32.mxu0 0.0
  %827 = vmatmul.mubr.f32.gmra.mrb[0].mxu0 %v707
  %v828 = vpop.f32.mrb[0].mxu0
  %v829 = vadd.f32 0.0, %v828
  %v830 = vpop.f32.mrb[0].mxu0
  %831 = vmatprep.mubr.f32.mxu0 0.0
  %832 = vmatmul.mubr.f32.gmra.mrb[0].mxu0 %v710
  %v833 = vpop.f32.mrb[0].mxu0
  %v834 = vadd.f32 0.0, %v833
  %v835 = vpop.f32.mrb[0].mxu0
  %836 = vmatprep.mubr.f32.mxu0 0.0
  %837 = vmatmul.mubr.f32.gmra.mrb[0].mxu0 %v713
  %v838 = vpop.f32.mrb[0].mxu0
  %v839 = vadd.f32 0.0, %v838
  %v840 = vpop.f32.mrb[0].mxu0
  %841 = vmatprep.mubr.f32.mxu0 0.0
  %842 = vmatmul.mubr.f32.gmra.mrb[0].mxu0 %v716
  %v843 = vpop.f32.mrb[0].mxu0
  %v844 = vadd.f32 0.0, %v843
  %v845 = vpop.f32.mrb[0].mxu0
  %846 = vdwg.mxu0
  %v848 = vsel %vm693, %v251, 0
  %v851 = vsel %vm693, %v256, 0
  %v854 = vsel %vm693, %v261, 0
  %v857 = vsel %vm693, %v266, 0
  %v860 = vsel %vm693, %v271, 0
  %v863 = vsel %vm693, %v276, 0
  %v866 = vsel %vm693, %v281, 0
  %v869 = vsel %vm693, %v286, 0
  %v872 = vsel %vm693, %v453, 0
  %v875 = vsel %vm693, %v458, 0
  %v878 = vsel %vm693, %v463, 0
  %v881 = vsel %vm693, %v468, 0
  %v884 = vsel %vm693, %v473, 0
  %v887 = vsel %vm693, %v478, 0
  %v890 = vsel %vm693, %v483, 0
  %v893 = vsel %vm693, %v488, 0
  %895 = vmatprep.subr.mxu0 0.0
  %896 = vmatpush1.xpose.msra.mxu0 %v872
  %897 = vmatprep.subr.mxu0 0.0
  %898 = vmatpush1.xpose.msra.mxu0 %v875
  %899 = vmatprep.subr.mxu0 0.0
  %900 = vmatpush1.xpose.msra.mxu0 %v878
  %901 = vmatprep.subr.mxu0 0.0
  %902 = vmatpush1.xpose.msra.mxu0 %v881
  %903 = vmatprep.subr.mxu0 0.0
  %904 = vmatpush1.xpose.msra.mxu0 %v884
  %905 = vmatprep.subr.mxu0 0.0
  %906 = vmatpush1.xpose.msra.mxu0 %v887
  %907 = vmatprep.subr.mxu0 0.0
  %908 = vmatpush1.xpose.msra.mxu0 %v890
  %909 = vmatprep.subr.mxu0 0.0
  %910 = vmatpush1.xpose.msra.mxu0 %v893
  %911 = vmatprep.subr.mxu0 0.0
  %912 = vmatpush1.xpose.msra.mxu0 0.0
  %913 = vmatprep.subr.mxu0 0.0
  %914 = vmatpush1.xpose.msra.mxu0 0.0
  %915 = vmatprep.subr.mxu0 0.0
  %916 = vmatpush1.xpose.msra.mxu0 0.0
  %917 = vmatprep.subr.mxu0 0.0
  %918 = vmatpush1.xpose.msra.mxu0 0.0
  %919 = vmatprep.subr.mxu0 0.0
  %920 = vmatpush1.xpose.msra.mxu0 0.0
  %921 = vmatprep.subr.mxu0 0.0
  %922 = vmatpush1.xpose.msra.mxu0 0.0
  %923 = vmatprep.subr.mxu0 0.0
  %924 = vmatpush1.xpose.msra.mxu0 0.0
  %925 = vmatprep.subr.mxu0 0.0
  %926 = vmatpush1.xpose.msra.mxu0 0.0
  %927 = vmatprep.subr.mxu0 0.0
  %928 = vmatpush1.xpose.msra.mxu0 0.0
  %929 = vmatprep.subr.mxu0 0.0
  %930 = vmatpush1.xpose.msra.mxu0 0.0
  %931 = vmatprep.subr.mxu0 0.0
  %932 = vmatpush1.xpose.msra.mxu0 0.0
  %933 = vmatprep.subr.mxu0 0.0
  %934 = vmatpush1.xpose.msra.mxu0 0.0
  %935 = vmatprep.subr.mxu0 0.0
  %936 = vmatpush1.xpose.msra.mxu0 0.0
  %937 = vmatprep.subr.mxu0 0.0
  %938 = vmatpush1.xpose.msra.mxu0 0.0
  %939 = vmatprep.subr.mxu0 0.0
  %940 = vmatpush1.xpose.msra.mxu0 0.0
  %941 = vmatprep.subr.mxu0 0.0
  %942 = vmatpush1.xpose.msra.mxu0 0.0
  %943 = vmatprep.subr.mxu0 0.0
  %944 = vmatpush1.xpose.msra.mxu0 0.0
  %945 = vmatprep.subr.mxu0 0.0
  %946 = vmatpush1.xpose.msra.mxu0 0.0
  %947 = vmatprep.subr.mxu0 0.0
  %948 = vmatpush1.xpose.msra.mxu0 0.0
  %949 = vmatprep.subr.mxu0 0.0
  %950 = vmatpush1.xpose.msra.mxu0 0.0
  %951 = vmatprep.subr.mxu0 0.0
  %952 = vmatpush1.xpose.msra.mxu0 0.0
  %953 = vmatprep.subr.mxu0 0.0
  %954 = vmatpush1.xpose.msra.mxu0 0.0
  %955 = vmatprep.subr.mxu0 0.0
  %956 = vmatpush1.xpose.msra.mxu0 0.0
  %957 = vmatprep.subr.mxu0 0.0
  %958 = vmatpush1.xpose.msra.mxu0 0.0
  %959 = vmatprep.mubr.f32.mxu0 0.0
  %960 = vmatmul.mubr.f32.gmra.mrb[0].mxu0 %v848
  %v961 = vpop.f32.mrb[0].mxu0
  %v962 = vadd.f32 0.0, %v961
  %v963 = vpop.f32.mrb[0].mxu0
  %964 = vmatprep.mubr.f32.mxu0 0.0
  %965 = vmatmul.mubr.f32.gmra.mrb[0].mxu0 %v851
  %v966 = vpop.f32.mrb[0].mxu0
  %v967 = vadd.f32 0.0, %v966
  %v968 = vpop.f32.mrb[0].mxu0
  %969 = vmatprep.mubr.f32.mxu0 0.0
  %970 = vmatmul.mubr.f32.gmra.mrb[0].mxu0 %v854
  %v971 = vpop.f32.mrb[0].mxu0
  %v972 = vadd.f32 0.0, %v971
  %v973 = vpop.f32.mrb[0].mxu0
  %974 = vmatprep.mubr.f32.mxu0 0.0
  %975 = vmatmul.mubr.f32.gmra.mrb[0].mxu0 %v857
  %v976 = vpop.f32.mrb[0].mxu0
  %v977 = vadd.f32 0.0, %v976
  %v978 = vpop.f32.mrb[0].mxu0
  %979 = vmatprep.mubr.f32.mxu0 0.0
  %980 = vmatmul.mubr.f32.gmra.mrb[0].mxu0 %v860
  %v981 = vpop.f32.mrb[0].mxu0
  %v982 = vadd.f32 0.0, %v981
  %v983 = vpop.f32.mrb[0].mxu0
  %984 = vmatprep.mubr.f32.mxu0 0.0
  %985 = vmatmul.mubr.f32.gmra.mrb[0].mxu0 %v863
  %v986 = vpop.f32.mrb[0].mxu0
  %v987 = vadd.f32 0.0, %v986
  %v988 = vpop.f32.mrb[0].mxu0
  %989 = vmatprep.mubr.f32.mxu0 0.0
  %990 = vmatmul.mubr.f32.gmra.mrb[0].mxu0 %v866
  %v991 = vpop.f32.mrb[0].mxu0
  %v992 = vadd.f32 0.0, %v991
  %v993 = vpop.f32.mrb[0].mxu0
  %994 = vmatprep.mubr.f32.mxu0 0.0
  %995 = vmatmul.mubr.f32.gmra.mrb[0].mxu0 %v869
  %v996 = vpop.f32.mrb[0].mxu0
  %v997 = vadd.f32 0.0, %v996
  %v998 = vpop.f32.mrb[0].mxu0
  %999 = vdwg.mxu0
  %v1000 = vmul.f32 %v809, 0.70710677
  %v1001 = vmul.f32 %v814, 0.70710677
  %v1002 = vmul.f32 %v819, 0.70710677
  %v1003 = vmul.f32 %v824, 0.70710677
  %v1004 = vmul.f32 %v829, 0.70710677
  %v1005 = vmul.f32 %v834, 0.70710677
  %v1006 = vmul.f32 %v839, 0.70710677
  %v1007 = vmul.f32 %v844, 0.70710677
  %v1008 = vmul.f32 %v962, 0.70710677
  %v1009 = vmul.f32 %v967, 0.70710677
  %v1010 = vmul.f32 %v972, 0.70710677
  %v1011 = vmul.f32 %v977, 0.70710677
  %v1012 = vmul.f32 %v982, 0.70710677
  %v1013 = vmul.f32 %v987, 0.70710677
  %v1014 = vmul.f32 %v992, 0.70710677
  %v1015 = vmul.f32 %v997, 0.70710677
  %vm1016 = vcmask 523264
  %v1017 = vsel %vm1016, %v1000, -inf
  %1018 = vmax.xlane.f32.xlu0 %v1017
  %v1019 = vpop.xlane.xlu0 %1018
  %v1020 = vsel %vm1016, %v1001, -inf
  %1021 = vmax.xlane.f32.xlu0 %v1020
  %v1022 = vpop.xlane.xlu0 %1021
  %v1023 = vsel %vm1016, %v1002, -inf
  %1024 = vmax.xlane.f32.xlu0 %v1023
  %v1025 = vpop.xlane.xlu0 %1024
  %v1026 = vsel %vm1016, %v1003, -inf
  %1027 = vmax.xlane.f32.xlu0 %v1026
  %v1028 = vpop.xlane.xlu0 %1027
  %v1029 = vsel %vm1016, %v1004, -inf
  %1030 = vmax.xlane.f32.xlu0 %v1029
  %v1031 = vpop.xlane.xlu0 %1030
  %v1032 = vsel %vm1016, %v1005, -inf
  %1033 = vmax.xlane.f32.xlu0 %v1032
  %v1034 = vpop.xlane.xlu0 %1033
  %v1035 = vsel %vm1016, %v1006, -inf
  %1036 = vmax.xlane.f32.xlu0 %v1035
  %v1037 = vpop.xlane.xlu0 %1036
  %v1038 = vsel %vm1016, %v1007, -inf
  %1039 = vmax.xlane.f32.xlu0 %v1038
  %v1040 = vpop.xlane.xlu0 %1039
  %v1041 = vsel %vm1016, %v1008, -inf
  %1042 = vmax.xlane.f32.xlu0 %v1041
  %v1043 = vpop.xlane.xlu0 %1042
  %v1044 = vsel %vm1016, %v1009, -inf
  %1045 = vmax.xlane.f32.xlu0 %v1044
  %v1046 = vpop.xlane.xlu0 %1045
  %v1047 = vsel %vm1016, %v1010, -inf
  %1048 = vmax.xlane.f32.xlu0 %v1047
  %v1049 = vpop.xlane.xlu0 %1048
  %v1050 = vsel %vm1016, %v1011, -inf
  %1051 = vmax.xlane.f32.xlu0 %v1050
  %v1052 = vpop.xlane.xlu0 %1051
  %v1053 = vsel %vm1016, %v1012, -inf
  %1054 = vmax.xlane.f32.xlu0 %v1053
  %v1055 = vpop.xlane.xlu0 %1054
  %v1056 = vsel %vm1016, %v1013, -inf
  %1057 = vmax.xlane.f32.xlu0 %v1056
  %v1058 = vpop.xlane.xlu0 %1057
  %v1059 = vsel %vm1016, %v1014, -inf
  %1060 = vmax.xlane.f32.xlu0 %v1059
  %v1061 = vpop.xlane.xlu0 %1060
  %v1062 = vsel %vm1016, %v1015, -inf
  %1063 = vmax.xlane.f32.xlu0 %v1062
  %v1064 = vpop.xlane.xlu0 %1063
  %v1065 = vsub.f32 %v1000, %v1019
  %v1066 = vsub.f32 %v1001, %v1022
  %v1067 = vsub.f32 %v1002, %v1025
  %v1068 = vsub.f32 %v1003, %v1028
  %v1069 = vsub.f32 %v1004, %v1031
  %v1070 = vsub.f32 %v1005, %v1034
  %v1071 = vsub.f32 %v1006, %v1037
  %v1072 = vsub.f32 %v1007, %v1040
  %v1073 = vsub.f32 %v1008, %v1043
  %v1074 = vsub.f32 %v1009, %v1046
  %v1075 = vsub.f32 %v1010, %v1049
  %v1076 = vsub.f32 %v1011, %v1052
  %v1077 = vsub.f32 %v1012, %v1055
  %v1078 = vsub.f32 %v1013, %v1058
  %v1079 = vsub.f32 %v1014, %v1061
  %v1080 = vsub.f32 %v1015, %v1064
  %v1081 = vmul.f32 %v1065, 1.442695
  %v1082 = vpow.pop %v1081
  %v1083 = vmul.f32 %v1066, 1.442695
  %v1084 = vpow.pop %v1083
  %v1085 = vmul.f32 %v1067, 1.442695
  %v1086 = vpow.pop %v1085
  %v1087 = vmul.f32 %v1068, 1.442695
  %v1088 = vpow.pop %v1087
  %v1089 = vmul.f32 %v1069, 1.442695
  %v1090 = vpow.pop %v1089
  %v1091 = vmul.f32 %v1070, 1.442695
  %v1092 = vpow.pop %v1091
  %v1093 = vmul.f32 %v1071, 1.442695
  %v1094 = vpow.pop %v1093
  %v1095 = vmul.f32 %v1072, 1.442695
  %v1096 = vpow.pop %v1095
  %v1097 = vmul.f32 %v1073, 1.442695
  %v1098 = vpow.pop %v1097
  %v1099 = vmul.f32 %v1074, 1.442695
  %v1100 = vpow.pop %v1099
  %v1101 = vmul.f32 %v1075, 1.442695
  %v1102 = vpow.pop %v1101
  %v1103 = vmul.f32 %v1076, 1.442695
  %v1104 = vpow.pop %v1103
  %v1105 = vmul.f32 %v1077, 1.442695
  %v1106 = vpow.pop %v1105
  %v1107 = vmul.f32 %v1078, 1.442695
  %v1108 = vpow.pop %v1107
  %v1109 = vmul.f32 %v1079, 1.442695
  %v1110 = vpow.pop %v1109
  %v1111 = vmul.f32 %v1080, 1.442695
  %v1112 = vpow.pop %v1111
  %v1113 = vsel %vm1016, %v1082, 0.0
  %1114 = vadd.xlane.f32.xlu0 %v1113
  %v1115 = vpop.xlane.xlu0 %1114
  %v1116 = vsel %vm1016, %v1084, 0.0
  %1117 = vadd.xlane.f32.xlu0 %v1116
  %v1118 = vpop.xlane.xlu0 %1117
  %v1119 = vsel %vm1016, %v1086, 0.0
  %1120 = vadd.xlane.f32.xlu0 %v1119
  %v1121 = vpop.xlane.xlu0 %1120
  %v1122 = vsel %vm1016, %v1088, 0.0
  %1123 = vadd.xlane.f32.xlu0 %v1122
  %v1124 = vpop.xlane.xlu0 %1123
  %v1125 = vsel %vm1016, %v1090, 0.0
  %1126 = vadd.xlane.f32.xlu0 %v1125
  %v1127 = vpop.xlane.xlu0 %1126
  %v1128 = vsel %vm1016, %v1092, 0.0
  %1129 = vadd.xlane.f32.xlu0 %v1128
  %v1130 = vpop.xlane.xlu0 %1129
  %v1131 = vsel %vm1016, %v1094, 0.0
  %1132 = vadd.xlane.f32.xlu0 %v1131
  %v1133 = vpop.xlane.xlu0 %1132
  %v1134 = vsel %vm1016, %v1096, 0.0
  %1135 = vadd.xlane.f32.xlu0 %v1134
  %v1136 = vpop.xlane.xlu0 %1135
  %v1137 = vsel %vm1016, %v1098, 0.0
  %1138 = vadd.xlane.f32.xlu0 %v1137
  %v1139 = vpop.xlane.xlu0 %1138
  %v1140 = vsel %vm1016, %v1100, 0.0
  %1141 = vadd.xlane.f32.xlu0 %v1140
  %v1142 = vpop.xlane.xlu0 %1141
  %v1143 = vsel %vm1016, %v1102, 0.0
  %1144 = vadd.xlane.f32.xlu0 %v1143
  %v1145 = vpop.xlane.xlu0 %1144
  %v1146 = vsel %vm1016, %v1104, 0.0
  %1147 = vadd.xlane.f32.xlu0 %v1146
  %v1148 = vpop.xlane.xlu0 %1147
  %v1149 = vsel %vm1016, %v1106, 0.0
  %1150 = vadd.xlane.f32.xlu0 %v1149
  %v1151 = vpop.xlane.xlu0 %1150
  %v1152 = vsel %vm1016, %v1108, 0.0
  %1153 = vadd.xlane.f32.xlu0 %v1152
  %v1154 = vpop.xlane.xlu0 %1153
  %v1155 = vsel %vm1016, %v1110, 0.0
  %1156 = vadd.xlane.f32.xlu0 %v1155
  %v1157 = vpop.xlane.xlu0 %1156
  %v1158 = vsel %vm1016, %v1112, 0.0
  %1159 = vadd.xlane.f32.xlu0 %v1158
  %v1160 = vpop.xlane.xlu0 %1159
  %v1161 = vrcp.pop %v1115
  %v1162 = vrcp.pop %v1118
  %v1163 = vrcp.pop %v1121
  %v1164 = vrcp.pop %v1124
  %v1165 = vrcp.pop %v1127
  %v1166 = vrcp.pop %v1130
  %v1167 = vrcp.pop %v1133
  %v1168 = vrcp.pop %v1136
  %v1169 = vrcp.pop %v1139
  %v1170 = vrcp.pop %v1142
  %v1171 = vrcp.pop %v1145
  %v1172 = vrcp.pop %v1148
  %v1173 = vrcp.pop %v1151
  %v1174 = vrcp.pop %v1154
  %v1175 = vrcp.pop %v1157
  %v1176 = vrcp.pop %v1160
  %v1177 = vmul.f32 %v1082, %v1161
  %v1178 = vmul.f32 %v1084, %v1162
  %v1179 = vmul.f32 %v1086, %v1163
  %v1180 = vmul.f32 %v1088, %v1164
  %v1181 = vmul.f32 %v1090, %v1165
  %v1182 = vmul.f32 %v1092, %v1166
  %v1183 = vmul.f32 %v1094, %v1167
  %v1184 = vmul.f32 %v1096, %v1168
  %v1185 = vmul.f32 %v1098, %v1169
  %v1186 = vmul.f32 %v1100, %v1170
  %v1187 = vmul.f32 %v1102, %v1171
  %v1188 = vmul.f32 %v1104, %v1172
  %v1189 = vmul.f32 %v1106, %v1173
  %v1190 = vmul.f32 %v1108, %v1174
  %v1191 = vmul.f32 %v1110, %v1175
  %v1192 = vmul.f32 %v1112, %v1176
  %v1194 = vsel %vm1016, %v1177, 0
  %v1197 = vsel %vm1016, %v1178, 0
  %v1200 = vsel %vm1016, %v1179, 0
  %v1203 = vsel %vm1016, %v1180, 0
  %v1206 = vsel %vm1016, %v1181, 0
  %v1209 = vsel %vm1016, %v1182, 0
  %v1212 = vsel %vm1016, %v1183, 0
  %v1215 = vsel %vm1016, %v1184, 0
  %1217 = vmatprep.subr.mxu0 0.0
  %1218 = vmatpush1.msra.mxu0 %v615
  %1219 = vmatprep.subr.mxu0 0.0
  %1220 = vmatpush1.msra.mxu0 %v620
  %1221 = vmatprep.subr.mxu0 0.0
  %1222 = vmatpush1.msra.mxu0 %v625
  %1223 = vmatprep.subr.mxu0 0.0
  %1224 = vmatpush1.msra.mxu0 %v630
  %1225 = vmatprep.subr.mxu0 0.0
  %1226 = vmatpush1.msra.mxu0 %v635
  %1227 = vmatprep.subr.mxu0 0.0
  %1228 = vmatpush1.msra.mxu0 %v640
  %1229 = vmatprep.subr.mxu0 0.0
  %1230 = vmatpush1.msra.mxu0 %v645
  %1231 = vmatprep.subr.mxu0 0.0
  %1232 = vmatpush1.msra.mxu0 %v650
  %1233 = vmatprep.subr.mxu0 0.0
  %1234 = vmatpush1.msra.mxu0 0.0
  %1235 = vmatprep.subr.mxu0 0.0
  %1236 = vmatpush1.msra.mxu0 0.0
  %1237 = vmatprep.subr.mxu0 0.0
  %1238 = vmatpush1.msra.mxu0 0.0
  %1239 = vmatprep.subr.mxu0 0.0
  %1240 = vmatpush1.msra.mxu0 0.0
  %1241 = vmatprep.subr.mxu0 0.0
  %1242 = vmatpush1.msra.mxu0 0.0
  %1243 = vmatprep.subr.mxu0 0.0
  %1244 = vmatpush1.msra.mxu0 0.0
  %1245 = vmatprep.subr.mxu0 0.0
  %1246 = vmatpush1.msra.mxu0 0.0
  %1247 = vmatprep.subr.mxu0 0.0
  %1248 = vmatpush1.msra.mxu0 0.0
  %1249 = vmatprep.subr.mxu0 0.0
  %1250 = vmatpush1.msra.mxu0 0.0
  %1251 = vmatprep.subr.mxu0 0.0
  %1252 = vmatpush1.msra.mxu0 0.0
  %1253 = vmatprep.subr.mxu0 0.0
  %1254 = vmatpush1.msra.mxu0 0.0
  %1255 = vmatprep.subr.mxu0 0.0
  %1256 = vmatpush1.msra.mxu0 0.0
  %1257 = vmatprep.subr.mxu0 0.0
  %1258 = vmatpush1.msra.mxu0 0.0
  %1259 = vmatprep.subr.mxu0 0.0
  %1260 = vmatpush1.msra.mxu0 0.0
  %1261 = vmatprep.subr.mxu0 0.0
  %1262 = vmatpush1.msra.mxu0 0.0
  %1263 = vmatprep.subr.mxu0 0.0
  %1264 = vmatpush1.msra.mxu0 0.0
  %1265 = vmatprep.subr.mxu0 0.0
  %1266 = vmatpush1.msra.mxu0 0.0
  %1267 = vmatprep.subr.mxu0 0.0
  %1268 = vmatpush1.msra.mxu0 0.0
  %1269 = vmatprep.subr.mxu0 0.0
  %1270 = vmatpush1.msra.mxu0 0.0
  %1271 = vmatprep.subr.mxu0 0.0
  %1272 = vmatpush1.msra.mxu0 0.0
  %1273 = vmatprep.subr.mxu0 0.0
  %1274 = vmatpush1.msra.mxu0 0.0
  %1275 = vmatprep.subr.mxu0 0.0
  %1276 = vmatpush1.msra.mxu0 0.0
  %1277 = vmatprep.subr.mxu0 0.0
  %1278 = vmatpush1.msra.mxu0 0.0
  %1279 = vmatprep.subr.mxu0 0.0
  %1280 = vmatpush1.msra.mxu0 0.0
  %1281 = vmatprep.mubr.f32.mxu0 0.0
  %1282 = vmatmul.mubr.f32.gmra.mrb[0].mxu0 %v1194
  %v1283 = vpop.f32.mrb[0].mxu0
  %v1284 = vadd.f32 0.0, %v1283
  %v1285 = vpop.f32.mrb[0].mxu0
  %1286 = vmatprep.mubr.f32.mxu0 0.0
  %1287 = vmatmul.mubr.f32.gmra.mrb[0].mxu0 %v1197
  %v1288 = vpop.f32.mrb[0].mxu0
  %v1289 = vadd.f32 0.0, %v1288
  %v1290 = vpop.f32.mrb[0].mxu0
  %1291 = vmatprep.mubr.f32.mxu0 0.0
  %1292 = vmatmul.mubr.f32.gmra.mrb[0].mxu0 %v1200
  %v1293 = vpop.f32.mrb[0].mxu0
  %v1294 = vadd.f32 0.0, %v1293
  %v1295 = vpop.f32.mrb[0].mxu0
  %1296 = vmatprep.mubr.f32.mxu0 0.0
  %1297 = vmatmul.mubr.f32.gmra.mrb[0].mxu0 %v1203
  %v1298 = vpop.f32.mrb[0].mxu0
  %v1299 = vadd.f32 0.0, %v1298
  %v1300 = vpop.f32.mrb[0].mxu0
  %1301 = vmatprep.mubr.f32.mxu0 0.0
  %1302 = vmatmul.mubr.f32.gmra.mrb[0].mxu0 %v1206
  %v1303 = vpop.f32.mrb[0].mxu0
  %v1304 = vadd.f32 0.0, %v1303
  %v1305 = vpop.f32.mrb[0].mxu0
  %1306 = vmatprep.mubr.f32.mxu0 0.0
  %1307 = vmatmul.mubr.f32.gmra.mrb[0].mxu0 %v1209
  %v1308 = vpop.f32.mrb[0].mxu0
  %v1309 = vadd.f32 0.0, %v1308
  %v1310 = vpop.f32.mrb[0].mxu0
  %1311 = vmatprep.mubr.f32.mxu0 0.0
  %1312 = vmatmul.mubr.f32.gmra.mrb[0].mxu0 %v1212
  %v1313 = vpop.f32.mrb[0].mxu0
  %v1314 = vadd.f32 0.0, %v1313
  %v1315 = vpop.f32.mrb[0].mxu0
  %1316 = vmatprep.mubr.f32.mxu0 0.0
  %1317 = vmatmul.mubr.f32.gmra.mrb[0].mxu0 %v1215
  %v1318 = vpop.f32.mrb[0].mxu0
  %v1319 = vadd.f32 0.0, %v1318
  %v1320 = vpop.f32.mrb[0].mxu0
  %1321 = vdwg.mxu0
  %v1323 = vsel %vm1016, %v1185, 0
  %v1326 = vsel %vm1016, %v1186, 0
  %v1329 = vsel %vm1016, %v1187, 0
  %v1332 = vsel %vm1016, %v1188, 0
  %v1335 = vsel %vm1016, %v1189, 0
  %v1338 = vsel %vm1016, %v1190, 0
  %v1341 = vsel %vm1016, %v1191, 0
  %v1344 = vsel %vm1016, %v1192, 0
  %1346 = vmatprep.subr.mxu0 0.0
  %1347 = vmatpush1.msra.mxu0 %v655
  %1348 = vmatprep.subr.mxu0 0.0
  %1349 = vmatpush1.msra.mxu0 %v660
  %1350 = vmatprep.subr.mxu0 0.0
  %1351 = vmatpush1.msra.mxu0 %v665
  %1352 = vmatprep.subr.mxu0 0.0
  %1353 = vmatpush1.msra.mxu0 %v670
  %1354 = vmatprep.subr.mxu0 0.0
  %1355 = vmatpush1.msra.mxu0 %v675
  %1356 = vmatprep.subr.mxu0 0.0
  %1357 = vmatpush1.msra.mxu0 %v680
  %1358 = vmatprep.subr.mxu0 0.0
  %1359 = vmatpush1.msra.mxu0 %v685
  %1360 = vmatprep.subr.mxu0 0.0
  %1361 = vmatpush1.msra.mxu0 %v690
  %1362 = vmatprep.subr.mxu0 0.0
  %1363 = vmatpush1.msra.mxu0 0.0
  %1364 = vmatprep.subr.mxu0 0.0
  %1365 = vmatpush1.msra.mxu0 0.0
  %1366 = vmatprep.subr.mxu0 0.0
  %1367 = vmatpush1.msra.mxu0 0.0
  %1368 = vmatprep.subr.mxu0 0.0
  %1369 = vmatpush1.msra.mxu0 0.0
  %1370 = vmatprep.subr.mxu0 0.0
  %1371 = vmatpush1.msra.mxu0 0.0
  %1372 = vmatprep.subr.mxu0 0.0
  %1373 = vmatpush1.msra.mxu0 0.0
  %1374 = vmatprep.subr.mxu0 0.0
  %1375 = vmatpush1.msra.mxu0 0.0
  %1376 = vmatprep.subr.mxu0 0.0
  %1377 = vmatpush1.msra.mxu0 0.0
  %1378 = vmatprep.subr.mxu0 0.0
  %1379 = vmatpush1.msra.mxu0 0.0
  %1380 = vmatprep.subr.mxu0 0.0
  %1381 = vmatpush1.msra.mxu0 0.0
  %1382 = vmatprep.subr.mxu0 0.0
  %1383 = vmatpush1.msra.mxu0 0.0
  %1384 = vmatprep.subr.mxu0 0.0
  %1385 = vmatpush1.msra.mxu0 0.0
  %1386 = vmatprep.subr.mxu0 0.0
  %1387 = vmatpush1.msra.mxu0 0.0
  %1388 = vmatprep.subr.mxu0 0.0
  %1389 = vmatpush1.msra.mxu0 0.0
  %1390 = vmatprep.subr.mxu0 0.0
  %1391 = vmatpush1.msra.mxu0 0.0
  %1392 = vmatprep.subr.mxu0 0.0
  %1393 = vmatpush1.msra.mxu0 0.0
  %1394 = vmatprep.subr.mxu0 0.0
  %1395 = vmatpush1.msra.mxu0 0.0
  %1396 = vmatprep.subr.mxu0 0.0
  %1397 = vmatpush1.msra.mxu0 0.0
  %1398 = vmatprep.subr.mxu0 0.0
  %1399 = vmatpush1.msra.mxu0 0.0
  %1400 = vmatprep.subr.mxu0 0.0
  %1401 = vmatpush1.msra.mxu0 0.0
  %1402 = vmatprep.subr.mxu0 0.0
  %1403 = vmatpush1.msra.mxu0 0.0
  %1404 = vmatprep.subr.mxu0 0.0
  %1405 = vmatpush1.msra.mxu0 0.0
  %1406 = vmatprep.subr.mxu0 0.0
  %1407 = vmatpush1.msra.mxu0 0.0
  %1408 = vmatprep.subr.mxu0 0.0
  %1409 = vmatpush1.msra.mxu0 0.0
  %1410 = vmatprep.mubr.f32.mxu0 0.0
  %1411 = vmatmul.mubr.f32.gmra.mrb[0].mxu0 %v1323
  %v1412 = vpop.f32.mrb[0].mxu0
  %v1413 = vadd.f32 0.0, %v1412
  %v1414 = vpop.f32.mrb[0].mxu0
  %1415 = vmatprep.mubr.f32.mxu0 0.0
  %1416 = vmatmul.mubr.f32.gmra.mrb[0].mxu0 %v1326
  %v1417 = vpop.f32.mrb[0].mxu0
  %v1418 = vadd.f32 0.0, %v1417
  %v1419 = vpop.f32.mrb[0].mxu0
  %1420 = vmatprep.mubr.f32.mxu0 0.0
  %1421 = vmatmul.mubr.f32.gmra.mrb[0].mxu0 %v1329
  %v1422 = vpop.f32.mrb[0].mxu0
  %v1423 = vadd.f32 0.0, %v1422
  %v1424 = vpop.f32.mrb[0].mxu0
  %1425 = vmatprep.mubr.f32.mxu0 0.0
  %1426 = vmatmul.mubr.f32.gmra.mrb[0].mxu0 %v1332
  %v1427 = vpop.f32.mrb[0].mxu0
  %v1428 = vadd.f32 0.0, %v1427
  %v1429 = vpop.f32.mrb[0].mxu0
  %1430 = vmatprep.mubr.f32.mxu0 0.0
  %1431 = vmatmul.mubr.f32.gmra.mrb[0].mxu0 %v1335
  %v1432 = vpop.f32.mrb[0].mxu0
  %v1433 = vadd.f32 0.0, %v1432
  %v1434 = vpop.f32.mrb[0].mxu0
  %1435 = vmatprep.mubr.f32.mxu0 0.0
  %1436 = vmatmul.mubr.f32.gmra.mrb[0].mxu0 %v1338
  %v1437 = vpop.f32.mrb[0].mxu0
  %v1438 = vadd.f32 0.0, %v1437
  %v1439 = vpop.f32.mrb[0].mxu0
  %1440 = vmatprep.mubr.f32.mxu0 0.0
  %1441 = vmatmul.mubr.f32.gmra.mrb[0].mxu0 %v1341
  %v1442 = vpop.f32.mrb[0].mxu0
  %v1443 = vadd.f32 0.0, %v1442
  %v1444 = vpop.f32.mrb[0].mxu0
  %1445 = vmatprep.mubr.f32.mxu0 0.0
  %1446 = vmatmul.mubr.f32.gmra.mrb[0].mxu0 %v1344
  %v1447 = vpop.f32.mrb[0].mxu0
  %v1448 = vadd.f32 0.0, %v1447
  %v1449 = vpop.f32.mrb[0].mxu0
  %1450 = vdwg.mxu0
  %1451 = vst.msk [vmem:[#allocation2] sm:$0xff] %vm693, %v1284
  %1452 = vst.msk [vmem:[#allocation2 + $0x8] sm:$0xff] %vm693, %v1289
  %1453 = vst.msk [vmem:[#allocation2 + $0x10] sm:$0xff] %vm693, %v1294
  %1454 = vst.msk [vmem:[#allocation2 + $0x18] sm:$0xff] %vm693, %v1299
  %1455 = vst.msk [vmem:[#allocation2 + $0x20] sm:$0xff] %vm693, %v1304
  %1456 = vst.msk [vmem:[#allocation2 + $0x28] sm:$0xff] %vm693, %v1309
  %1457 = vst.msk [vmem:[#allocation2 + $0x30] sm:$0xff] %vm693, %v1314
  %1458 = vst.msk [vmem:[#allocation2 + $0x38] sm:$0xff] %vm693, %v1319
  %1459 = vst.msk [vmem:[#allocation2 + $0x40] sm:$0xff] %vm693, %v1413
  %1460 = vst.msk [vmem:[#allocation2 + $0x48] sm:$0xff] %vm693, %v1418
  %1461 = vst.msk [vmem:[#allocation2 + $0x50] sm:$0xff] %vm693, %v1423
  %1462 = vst.msk [vmem:[#allocation2 + $0x58] sm:$0xff] %vm693, %v1428
  %1463 = vst.msk [vmem:[#allocation2 + $0x60] sm:$0xff] %vm693, %v1433
  %1464 = vst.msk [vmem:[#allocation2 + $0x68] sm:$0xff] %vm693, %v1438
  %1465 = vst.msk [vmem:[#allocation2 + $0x70] sm:$0xff] %vm693, %v1443
  %1466 = vst.msk [vmem:[#allocation2 + $0x78] sm:$0xff] %vm693, %v1448
  %1467 = vrot.lane.b32.xlu0 %v211, 126
  %v1468 = vpop.permute.xlu0 %1467
  %1469 = vrot.lane.b32.xlu0 %v216, 126
  %v1470 = vpop.permute.xlu0 %1469
  %1471 = vrot.lane.b32.xlu0 %v221, 126
  %v1472 = vpop.permute.xlu0 %1471
  %1473 = vrot.lane.b32.xlu0 %v226, 126
  %v1474 = vpop.permute.xlu0 %1473
  %1475 = vrot.lane.b32.xlu0 %v231, 126
  %v1476 = vpop.permute.xlu0 %1475
  %1477 = vrot.lane.b32.xlu0 %v236, 126
  %v1478 = vpop.permute.xlu0 %1477
  %1479 = vrot.lane.b32.xlu0 %v241, 126
  %v1480 = vpop.permute.xlu0 %1479
  %1481 = vrot.lane.b32.xlu0 %v246, 126
  %v1482 = vpop.permute.xlu0 %1481
  %1483 = vrot.lane.b32.xlu0 %v413, 126
  %v1484 = vpop.permute.xlu0 %1483
  %1485 = vrot.lane.b32.xlu0 %v418, 126
  %v1486 = vpop.permute.xlu0 %1485
  %1487 = vrot.lane.b32.xlu0 %v423, 126
  %v1488 = vpop.permute.xlu0 %1487
  %1489 = vrot.lane.b32.xlu0 %v428, 126
  %v1490 = vpop.permute.xlu0 %1489
  %1491 = vrot.lane.b32.xlu0 %v433, 126
  %v1492 = vpop.permute.xlu0 %1491
  %1493 = vrot.lane.b32.xlu0 %v438, 126
  %v1494 = vpop.permute.xlu0 %1493
  %1495 = vrot.lane.b32.xlu0 %v443, 126
  %v1496 = vpop.permute.xlu0 %1495
  %1497 = vrot.lane.b32.xlu0 %v448, 126
  %v1498 = vpop.permute.xlu0 %1497
  %v1499 = vsel %vm693, %v1468, 0
  %v1501 = vsel %vm693, %v1470, 0
  %v1503 = vsel %vm693, %v1472, 0
  %v1505 = vsel %vm693, %v1474, 0
  %v1507 = vsel %vm693, %v1476, 0
  %v1509 = vsel %vm693, %v1478, 0
  %v1511 = vsel %vm693, %v1480, 0
  %v1513 = vsel %vm693, %v1482, 0
  %v1515 = vsel %vm693, %v1484, 0
  %v1517 = vsel %vm693, %v1486, 0
  %v1519 = vsel %vm693, %v1488, 0
  %v1521 = vsel %vm693, %v1490, 0
  %v1523 = vsel %vm693, %v1492, 0
  %v1525 = vsel %vm693, %v1494, 0
  %v1527 = vsel %vm693, %v1496, 0
  %v1529 = vsel %vm693, %v1498, 0
  %1531 = vmatprep.subr.mxu0 0.0
  %1532 = vmatpush1.xpose.msra.mxu0 %v1515
  %1533 = vmatprep.subr.mxu0 0.0
  %1534 = vmatpush1.xpose.msra.mxu0 %v1517
  %1535 = vmatprep.subr.mxu0 0.0
  %1536 = vmatpush1.xpose.msra.mxu0 %v1519
  %1537 = vmatprep.subr.mxu0 0.0
  %1538 = vmatpush1.xpose.msra.mxu0 %v1521
  %1539 = vmatprep.subr.mxu0 0.0
  %1540 = vmatpush1.xpose.msra.mxu0 %v1523
  %1541 = vmatprep.subr.mxu0 0.0
  %1542 = vmatpush1.xpose.msra.mxu0 %v1525
  %1543 = vmatprep.subr.mxu0 0.0
  %1544 = vmatpush1.xpose.msra.mxu0 %v1527
  %1545 = vmatprep.subr.mxu0 0.0
  %1546 = vmatpush1.xpose.msra.mxu0 %v1529
  %1547 = vmatprep.subr.mxu0 0.0
  %1548 = vmatpush1.xpose.msra.mxu0 0.0
  %1549 = vmatprep.subr.mxu0 0.0
  %1550 = vmatpush1.xpose.msra.mxu0 0.0
  %1551 = vmatprep.subr.mxu0 0.0
  %1552 = vmatpush1.xpose.msra.mxu0 0.0
  %1553 = vmatprep.subr.mxu0 0.0
  %1554 = vmatpush1.xpose.msra.mxu0 0.0
  %1555 = vmatprep.subr.mxu0 0.0
  %1556 = vmatpush1.xpose.msra.mxu0 0.0
  %1557 = vmatprep.subr.mxu0 0.0
  %1558 = vmatpush1.xpose.msra.mxu0 0.0
  %1559 = vmatprep.subr.mxu0 0.0
  %1560 = vmatpush1.xpose.msra.mxu0 0.0
  %1561 = vmatprep.subr.mxu0 0.0
  %1562 = vmatpush1.xpose.msra.mxu0 0.0
  %1563 = vmatprep.subr.mxu0 0.0
  %1564 = vmatpush1.xpose.msra.mxu0 0.0
  %1565 = vmatprep.subr.mxu0 0.0
  %1566 = vmatpush1.xpose.msra.mxu0 0.0
  %1567 = vmatprep.subr.mxu0 0.0
  %1568 = vmatpush1.xpose.msra.mxu0 0.0
  %1569 = vmatprep.subr.mxu0 0.0
  %1570 = vmatpush1.xpose.msra.mxu0 0.0
  %1571 = vmatprep.subr.mxu0 0.0
  %1572 = vmatpush1.xpose.msra.mxu0 0.0
  %1573 = vmatprep.subr.mxu0 0.0
  %1574 = vmatpush1.xpose.msra.mxu0 0.0
  %1575 = vmatprep.subr.mxu0 0.0
  %1576 = vmatpush1.xpose.msra.mxu0 0.0
  %1577 = vmatprep.subr.mxu0 0.0
  %1578 = vmatpush1.xpose.msra.mxu0 0.0
  %1579 = vmatprep.subr.mxu0 0.0
  %1580 = vmatpush1.xpose.msra.mxu0 0.0
  %1581 = vmatprep.subr.mxu0 0.0
  %1582 = vmatpush1.xpose.msra.mxu0 0.0
  %1583 = vmatprep.subr.mxu0 0.0
  %1584 = vmatpush1.xpose.msra.mxu0 0.0
  %1585 = vmatprep.subr.mxu0 0.0
  %1586 = vmatpush1.xpose.msra.mxu0 0.0
  %1587 = vmatprep.subr.mxu0 0.0
  %1588 = vmatpush1.xpose.msra.mxu0 0.0
  %1589 = vmatprep.subr.mxu0 0.0
  %1590 = vmatpush1.xpose.msra.mxu0 0.0
  %1591 = vmatprep.subr.mxu0 0.0
  %1592 = vmatpush1.xpose.msra.mxu0 0.0
  %1593 = vmatprep.subr.mxu0 0.0
  %1594 = vmatpush1.xpose.msra.mxu0 0.0
  %1595 = vmatprep.mubr.f32.mxu0 0.0
  %1596 = vmatmul.mubr.f32.gmra.mrb[0].mxu0 %v1499
  %v1597 = vpop.f32.mrb[0].mxu0
  %v1598 = vadd.f32 0.0, %v1597
  %v1599 = vpop.f32.mrb[0].mxu0
  %1600 = vmatprep.mubr.f32.mxu0 0.0
  %1601 = vmatmul.mubr.f32.gmra.mrb[0].mxu0 %v1501
  %v1602 = vpop.f32.mrb[0].mxu0
  %v1603 = vadd.f32 0.0, %v1602
  %v1604 = vpop.f32.mrb[0].mxu0
  %1605 = vmatprep.mubr.f32.mxu0 0.0
  %1606 = vmatmul.mubr.f32.gmra.mrb[0].mxu0 %v1503
  %v1607 = vpop.f32.mrb[0].mxu0
  %v1608 = vadd.f32 0.0, %v1607
  %v1609 = vpop.f32.mrb[0].mxu0
  %1610 = vmatprep.mubr.f32.mxu0 0.0
  %1611 = vmatmul.mubr.f32.gmra.mrb[0].mxu0 %v1505
  %v1612 = vpop.f32.mrb[0].mxu0
  %v1613 = vadd.f32 0.0, %v1612
  %v1614 = vpop.f32.mrb[0].mxu0
  %1615 = vmatprep.mubr.f32.mxu0 0.0
  %1616 = vmatmul.mubr.f32.gmra.mrb[0].mxu0 %v1507
  %v1617 = vpop.f32.mrb[0].mxu0
  %v1618 = vadd.f32 0.0, %v1617
  %v1619 = vpop.f32.mrb[0].mxu0
  %1620 = vmatprep.mubr.f32.mxu0 0.0
  %1621 = vmatmul.mubr.f32.gmra.mrb[0].mxu0 %v1509
  %v1622 = vpop.f32.mrb[0].mxu0
  %v1623 = vadd.f32 0.0, %v1622
  %v1624 = vpop.f32.mrb[0].mxu0
  %1625 = vmatprep.mubr.f32.mxu0 0.0
  %1626 = vmatmul.mubr.f32.gmra.mrb[0].mxu0 %v1511
  %v1627 = vpop.f32.mrb[0].mxu0
  %v1628 = vadd.f32 0.0, %v1627
  %v1629 = vpop.f32.mrb[0].mxu0
  %1630 = vmatprep.mubr.f32.mxu0 0.0
  %1631 = vmatmul.mubr.f32.gmra.mrb[0].mxu0 %v1513
  %v1632 = vpop.f32.mrb[0].mxu0
  %v1633 = vadd.f32 0.0, %v1632
  %v1634 = vpop.f32.mrb[0].mxu0
  %1635 = vdwg.mxu0
  %1636 = vrot.lane.b32.xlu0 %v251, 126
  %v1637 = vpop.permute.xlu0 %1636
  %1638 = vrot.lane.b32.xlu0 %v256, 126
  %v1639 = vpop.permute.xlu0 %1638
  %1640 = vrot.lane.b32.xlu0 %v261, 126
  %v1641 = vpop.permute.xlu0 %1640
  %1642 = vrot.lane.b32.xlu0 %v266, 126
  %v1643 = vpop.permute.xlu0 %1642
  %1644 = vrot.lane.b32.xlu0 %v271, 126
  %v1645 = vpop.permute.xlu0 %1644
  %1646 = vrot.lane.b32.xlu0 %v276, 126
  %v1647 = vpop.permute.xlu0 %1646
  %1648 = vrot.lane.b32.xlu0 %v281, 126
  %v1649 = vpop.permute.xlu0 %1648
  %1650 = vrot.lane.b32.xlu0 %v286, 126
  %v1651 = vpop.permute.xlu0 %1650
  %1652 = vrot.lane.b32.xlu0 %v453, 126
  %v1653 = vpop.permute.xlu0 %1652
  %1654 = vrot.lane.b32.xlu0 %v458, 126
  %v1655 = vpop.permute.xlu0 %1654
  %1656 = vrot.lane.b32.xlu0 %v463, 126
  %v1657 = vpop.permute.xlu0 %1656
  %1658 = vrot.lane.b32.xlu0 %v468, 126
  %v1659 = vpop.permute.xlu0 %1658
  %1660 = vrot.lane.b32.xlu0 %v473, 126
  %v1661 = vpop.permute.xlu0 %1660
  %1662 = vrot.lane.b32.xlu0 %v478, 126
  %v1663 = vpop.permute.xlu0 %1662
  %1664 = vrot.lane.b32.xlu0 %v483, 126
  %v1665 = vpop.permute.xlu0 %1664
  %1666 = vrot.lane.b32.xlu0 %v488, 126
  %v1667 = vpop.permute.xlu0 %1666
  %v1668 = vsel %vm693, %v1637, 0
  %v1670 = vsel %vm693, %v1639, 0
  %v1672 = vsel %vm693, %v1641, 0
  %v1674 = vsel %vm693, %v1643, 0
  %v1676 = vsel %vm693, %v1645, 0
  %v1678 = vsel %vm693, %v1647, 0
  %v1680 = vsel %vm693, %v1649, 0
  %v1682 = vsel %vm693, %v1651, 0
  %v1684 = vsel %vm693, %v1653, 0
  %v1686 = vsel %vm693, %v1655, 0
  %v1688 = vsel %vm693, %v1657, 0
  %v1690 = vsel %vm693, %v1659, 0
  %v1692 = vsel %vm693, %v1661, 0
  %v1694 = vsel %vm693, %v1663, 0
  %v1696 = vsel %vm693, %v1665, 0
  %v1698 = vsel %vm693, %v1667, 0
  %1700 = vmatprep.subr.mxu0 0.0
  %1701 = vmatpush1.xpose.msra.mxu0 %v1684
  %1702 = vmatprep.subr.mxu0 0.0
  %1703 = vmatpush1.xpose.msra.mxu0 %v1686
  %1704 = vmatprep.subr.mxu0 0.0
  %1705 = vmatpush1.xpose.msra.mxu0 %v1688
  %1706 = vmatprep.subr.mxu0 0.0
  %1707 = vmatpush1.xpose.msra.mxu0 %v1690
  %1708 = vmatprep.subr.mxu0 0.0
  %1709 = vmatpush1.xpose.msra.mxu0 %v1692
  %1710 = vmatprep.subr.mxu0 0.0
  %1711 = vmatpush1.xpose.msra.mxu0 %v1694
  %1712 = vmatprep.subr.mxu0 0.0
  %1713 = vmatpush1.xpose.msra.mxu0 %v1696
  %1714 = vmatprep.subr.mxu0 0.0
  %1715 = vmatpush1.xpose.msra.mxu0 %v1698
  %1716 = vmatprep.subr.mxu0 0.0
  %1717 = vmatpush1.xpose.msra.mxu0 0.0
  %1718 = vmatprep.subr.mxu0 0.0
  %1719 = vmatpush1.xpose.msra.mxu0 0.0
  %1720 = vmatprep.subr.mxu0 0.0
  %1721 = vmatpush1.xpose.msra.mxu0 0.0
  %1722 = vmatprep.subr.mxu0 0.0
  %1723 = vmatpush1.xpose.msra.mxu0 0.0
  %1724 = vmatprep.subr.mxu0 0.0
  %1725 = vmatpush1.xpose.msra.mxu0 0.0
  %1726 = vmatprep.subr.mxu0 0.0
  %1727 = vmatpush1.xpose.msra.mxu0 0.0
  %1728 = vmatprep.subr.mxu0 0.0
  %1729 = vmatpush1.xpose.msra.mxu0 0.0
  %1730 = vmatprep.subr.mxu0 0.0
  %1731 = vmatpush1.xpose.msra.mxu0 0.0
  %1732 = vmatprep.subr.mxu0 0.0
  %1733 = vmatpush1.xpose.msra.mxu0 0.0
  %1734 = vmatprep.subr.mxu0 0.0
  %1735 = vmatpush1.xpose.msra.mxu0 0.0
  %1736 = vmatprep.subr.mxu0 0.0
  %1737 = vmatpush1.xpose.msra.mxu0 0.0
  %1738 = vmatprep.subr.mxu0 0.0
  %1739 = vmatpush1.xpose.msra.mxu0 0.0
  %1740 = vmatprep.subr.mxu0 0.0
  %1741 = vmatpush1.xpose.msra.mxu0 0.0
  %1742 = vmatprep.subr.mxu0 0.0
  %1743 = vmatpush1.xpose.msra.mxu0 0.0
  %1744 = vmatprep.subr.mxu0 0.0
  %1745 = vmatpush1.xpose.msra.mxu0 0.0
  %1746 = vmatprep.subr.mxu0 0.0
  %1747 = vmatpush1.xpose.msra.mxu0 0.0
  %1748 = vmatprep.subr.mxu0 0.0
  %1749 = vmatpush1.xpose.msra.mxu0 0.0
  %1750 = vmatprep.subr.mxu0 0.0
  %1751 = vmatpush1.xpose.msra.mxu0 0.0
  %1752 = vmatprep.subr.mxu0 0.0
  %1753 = vmatpush1.xpose.msra.mxu0 0.0
  %1754 = vmatprep.subr.mxu0 0.0
  %1755 = vmatpush1.xpose.msra.mxu0 0.0
  %1756 = vmatprep.subr.mxu0 0.0
  %1757 = vmatpush1.xpose.msra.mxu0 0.0
  %1758 = vmatprep.subr.mxu0 0.0
  %1759 = vmatpush1.xpose.msra.mxu0 0.0
  %1760 = vmatprep.subr.mxu0 0.0
  %1761 = vmatpush1.xpose.msra.mxu0 0.0
  %1762 = vmatprep.subr.mxu0 0.0
  %1763 = vmatpush1.xpose.msra.mxu0 0.0
  %1764 = vmatprep.mubr.f32.mxu0 0.0
  %1765 = vmatmul.mubr.f32.gmra.mrb[0].mxu0 %v1668
  %v1766 = vpop.f32.mrb[0].mxu0
  %v1767 = vadd.f32 0.0, %v1766
  %v1768 = vpop.f32.mrb[0].mxu0
  %1769 = vmatprep.mubr.f32.mxu0 0.0
  %1770 = vmatmul.mubr.f32.gmra.mrb[0].mxu0 %v1670
  %v1771 = vpop.f32.mrb[0].mxu0
  %v1772 = vadd.f32 0.0, %v1771
  %v1773 = vpop.f32.mrb[0].mxu0
  %1774 = vmatprep.mubr.f32.mxu0 0.0
  %1775 = vmatmul.mubr.f32.gmra.mrb[0].mxu0 %v1672
  %v1776 = vpop.f32.mrb[0].mxu0
  %v1777 = vadd.f32 0.0, %v1776
  %v1778 = vpop.f32.mrb[0].mxu0
  %1779 = vmatprep.mubr.f32.mxu0 0.0
  %1780 = vmatmul.mubr.f32.gmra.mrb[0].mxu0 %v1674
  %v1781 = vpop.f32.mrb[0].mxu0
  %v1782 = vadd.f32 0.0, %v1781
  %v1783 = vpop.f32.mrb[0].mxu0
  %1784 = vmatprep.mubr.f32.mxu0 0.0
  %1785 = vmatmul.mubr.f32.gmra.mrb[0].mxu0 %v1676
  %v1786 = vpop.f32.mrb[0].mxu0
  %v1787 = vadd.f32 0.0, %v1786
  %v1788 = vpop.f32.mrb[0].mxu0
  %1789 = vmatprep.mubr.f32.mxu0 0.0
  %1790 = vmatmul.mubr.f32.gmra.mrb[0].mxu0 %v1678
  %v1791 = vpop.f32.mrb[0].mxu0
  %v1792 = vadd.f32 0.0, %v1791
  %v1793 = vpop.f32.mrb[0].mxu0
  %1794 = vmatprep.mubr.f32.mxu0 0.0
  %1795 = vmatmul.mubr.f32.gmra.mrb[0].mxu0 %v1680
  %v1796 = vpop.f32.mrb[0].mxu0
  %v1797 = vadd.f32 0.0, %v1796
  %v1798 = vpop.f32.mrb[0].mxu0
  %1799 = vmatprep.mubr.f32.mxu0 0.0
  %1800 = vmatmul.mubr.f32.gmra.mrb[0].mxu0 %v1682
  %v1801 = vpop.f32.mrb[0].mxu0
  %v1802 = vadd.f32 0.0, %v1801
  %v1803 = vpop.f32.mrb[0].mxu0
  %1804 = vdwg.mxu0
  %v1805 = vmul.f32 %v1598, 0.70710677
  %v1806 = vmul.f32 %v1603, 0.70710677
  %v1807 = vmul.f32 %v1608, 0.70710677
  %v1808 = vmul.f32 %v1613, 0.70710677
  %v1809 = vmul.f32 %v1618, 0.70710677
  %v1810 = vmul.f32 %v1623, 0.70710677
  %v1811 = vmul.f32 %v1628, 0.70710677
  %v1812 = vmul.f32 %v1633, 0.70710677
  %v1813 = vmul.f32 %v1767, 0.70710677
  %v1814 = vmul.f32 %v1772, 0.70710677
  %v1815 = vmul.f32 %v1777, 0.70710677
  %v1816 = vmul.f32 %v1782, 0.70710677
  %v1817 = vmul.f32 %v1787, 0.70710677
  %v1818 = vmul.f32 %v1792, 0.70710677
  %v1819 = vmul.f32 %v1797, 0.70710677
  %v1820 = vmul.f32 %v1802, 0.70710677
  %v1821 = vsel %vm1016, %v1805, -inf
  %1822 = vmax.xlane.f32.xlu0 %v1821
  %v1823 = vpop.xlane.xlu0 %1822
  %v1824 = vsel %vm1016, %v1806, -inf
  %1825 = vmax.xlane.f32.xlu0 %v1824
  %v1826 = vpop.xlane.xlu0 %1825
  %v1827 = vsel %vm1016, %v1807, -inf
  %1828 = vmax.xlane.f32.xlu0 %v1827
  %v1829 = vpop.xlane.xlu0 %1828
  %v1830 = vsel %vm1016, %v1808, -inf
  %1831 = vmax.xlane.f32.xlu0 %v1830
  %v1832 = vpop.xlane.xlu0 %1831
  %v1833 = vsel %vm1016, %v1809, -inf
  %1834 = vmax.xlane.f32.xlu0 %v1833
  %v1835 = vpop.xlane.xlu0 %1834
  %v1836 = vsel %vm1016, %v1810, -inf
  %1837 = vmax.xlane.f32.xlu0 %v1836
  %v1838 = vpop.xlane.xlu0 %1837
  %v1839 = vsel %vm1016, %v1811, -inf
  %1840 = vmax.xlane.f32.xlu0 %v1839
  %v1841 = vpop.xlane.xlu0 %1840
  %v1842 = vsel %vm1016, %v1812, -inf
  %1843 = vmax.xlane.f32.xlu0 %v1842
  %v1844 = vpop.xlane.xlu0 %1843
  %v1845 = vsel %vm1016, %v1813, -inf
  %1846 = vmax.xlane.f32.xlu0 %v1845
  %v1847 = vpop.xlane.xlu0 %1846
  %v1848 = vsel %vm1016, %v1814, -inf
  %1849 = vmax.xlane.f32.xlu0 %v1848
  %v1850 = vpop.xlane.xlu0 %1849
  %v1851 = vsel %vm1016, %v1815, -inf
  %1852 = vmax.xlane.f32.xlu0 %v1851
  %v1853 = vpop.xlane.xlu0 %1852
  %v1854 = vsel %vm1016, %v1816, -inf
  %1855 = vmax.xlane.f32.xlu0 %v1854
  %v1856 = vpop.xlane.xlu0 %1855
  %v1857 = vsel %vm1016, %v1817, -inf
  %1858 = vmax.xlane.f32.xlu0 %v1857
  %v1859 = vpop.xlane.xlu0 %1858
  %v1860 = vsel %vm1016, %v1818, -inf
  %1861 = vmax.xlane.f32.xlu0 %v1860
  %v1862 = vpop.xlane.xlu0 %1861
  %v1863 = vsel %vm1016, %v1819, -inf
  %1864 = vmax.xlane.f32.xlu0 %v1863
  %v1865 = vpop.xlane.xlu0 %1864
  %v1866 = vsel %vm1016, %v1820, -inf
  %1867 = vmax.xlane.f32.xlu0 %v1866
  %v1868 = vpop.xlane.xlu0 %1867
  %v1869 = vsub.f32 %v1805, %v1823
  %v1870 = vsub.f32 %v1806, %v1826
  %v1871 = vsub.f32 %v1807, %v1829
  %v1872 = vsub.f32 %v1808, %v1832
  %v1873 = vsub.f32 %v1809, %v1835
  %v1874 = vsub.f32 %v1810, %v1838
  %v1875 = vsub.f32 %v1811, %v1841
  %v1876 = vsub.f32 %v1812, %v1844
  %v1877 = vsub.f32 %v1813, %v1847
  %v1878 = vsub.f32 %v1814, %v1850
  %v1879 = vsub.f32 %v1815, %v1853
  %v1880 = vsub.f32 %v1816, %v1856
  %v1881 = vsub.f32 %v1817, %v1859
  %v1882 = vsub.f32 %v1818, %v1862
  %v1883 = vsub.f32 %v1819, %v1865
  %v1884 = vsub.f32 %v1820, %v1868
  %v1885 = vmul.f32 %v1869, 1.442695
  %v1886 = vpow.pop %v1885
  %v1887 = vmul.f32 %v1870, 1.442695
  %v1888 = vpow.pop %v1887
  %v1889 = vmul.f32 %v1871, 1.442695
  %v1890 = vpow.pop %v1889
  %v1891 = vmul.f32 %v1872, 1.442695
  %v1892 = vpow.pop %v1891
  %v1893 = vmul.f32 %v1873, 1.442695
  %v1894 = vpow.pop %v1893
  %v1895 = vmul.f32 %v1874, 1.442695
  %v1896 = vpow.pop %v1895
  %v1897 = vmul.f32 %v1875, 1.442695
  %v1898 = vpow.pop %v1897
  %v1899 = vmul.f32 %v1876, 1.442695
  %v1900 = vpow.pop %v1899
  %v1901 = vmul.f32 %v1877, 1.442695
  %v1902 = vpow.pop %v1901
  %v1903 = vmul.f32 %v1878, 1.442695
  %v1904 = vpow.pop %v1903
  %v1905 = vmul.f32 %v1879, 1.442695
  %v1906 = vpow.pop %v1905
  %v1907 = vmul.f32 %v1880, 1.442695
  %v1908 = vpow.pop %v1907
  %v1909 = vmul.f32 %v1881, 1.442695
  %v1910 = vpow.pop %v1909
  %v1911 = vmul.f32 %v1882, 1.442695
  %v1912 = vpow.pop %v1911
  %v1913 = vmul.f32 %v1883, 1.442695
  %v1914 = vpow.pop %v1913
  %v1915 = vmul.f32 %v1884, 1.442695
  %v1916 = vpow.pop %v1915
  %v1917 = vsel %vm1016, %v1886, 0.0
  %1918 = vadd.xlane.f32.xlu0 %v1917
  %v1919 = vpop.xlane.xlu0 %1918
  %v1920 = vsel %vm1016, %v1888, 0.0
  %1921 = vadd.xlane.f32.xlu0 %v1920
  %v1922 = vpop.xlane.xlu0 %1921
  %v1923 = vsel %vm1016, %v1890, 0.0
  %1924 = vadd.xlane.f32.xlu0 %v1923
  %v1925 = vpop.xlane.xlu0 %1924
  %v1926 = vsel %vm1016, %v1892, 0.0
  %1927 = vadd.xlane.f32.xlu0 %v1926
  %v1928 = vpop.xlane.xlu0 %1927
  %v1929 = vsel %vm1016, %v1894, 0.0
  %1930 = vadd.xlane.f32.xlu0 %v1929
  %v1931 = vpop.xlane.xlu0 %1930
  %v1932 = vsel %vm1016, %v1896, 0.0
  %1933 = vadd.xlane.f32.xlu0 %v1932
  %v1934 = vpop.xlane.xlu0 %1933
  %v1935 = vsel %vm1016, %v1898, 0.0
  %1936 = vadd.xlane.f32.xlu0 %v1935
  %v1937 = vpop.xlane.xlu0 %1936
  %v1938 = vsel %vm1016, %v1900, 0.0
  %1939 = vadd.xlane.f32.xlu0 %v1938
  %v1940 = vpop.xlane.xlu0 %1939
  %v1941 = vsel %vm1016, %v1902, 0.0
  %1942 = vadd.xlane.f32.xlu0 %v1941
  %v1943 = vpop.xlane.xlu0 %1942
  %v1944 = vsel %vm1016, %v1904, 0.0
  %1945 = vadd.xlane.f32.xlu0 %v1944
  %v1946 = vpop.xlane.xlu0 %1945
  %v1947 = vsel %vm1016, %v1906, 0.0
  %1948 = vadd.xlane.f32.xlu0 %v1947
  %v1949 = vpop.xlane.xlu0 %1948
  %v1950 = vsel %vm1016, %v1908, 0.0
  %1951 = vadd.xlane.f32.xlu0 %v1950
  %v1952 = vpop.xlane.xlu0 %1951
  %v1953 = vsel %vm1016, %v1910, 0.0
  %1954 = vadd.xlane.f32.xlu0 %v1953
  %v1955 = vpop.xlane.xlu0 %1954
  %v1956 = vsel %vm1016, %v1912, 0.0
  %1957 = vadd.xlane.f32.xlu0 %v1956
  %v1958 = vpop.xlane.xlu0 %1957
  %v1959 = vsel %vm1016, %v1914, 0.0
  %1960 = vadd.xlane.f32.xlu0 %v1959
  %v1961 = vpop.xlane.xlu0 %1960
  %v1962 = vsel %vm1016, %v1916, 0.0
  %1963 = vadd.xlane.f32.xlu0 %v1962
  %v1964 = vpop.xlane.xlu0 %1963
  %v1965 = vrcp.pop %v1919
  %v1966 = vrcp.pop %v1922
  %v1967 = vrcp.pop %v1925
  %v1968 = vrcp.pop %v1928
  %v1969 = vrcp.pop %v1931
  %v1970 = vrcp.pop %v1934
  %v1971 = vrcp.pop %v1937
  %v1972 = vrcp.pop %v1940
  %v1973 = vrcp.pop %v1943
  %v1974 = vrcp.pop %v1946
  %v1975 = vrcp.pop %v1949
  %v1976 = vrcp.pop %v1952
  %v1977 = vrcp.pop %v1955
  %v1978 = vrcp.pop %v1958
  %v1979 = vrcp.pop %v1961
  %v1980 = vrcp.pop %v1964
  %v1981 = vmul.f32 %v1886, %v1965
  %v1982 = vmul.f32 %v1888, %v1966
  %v1983 = vmul.f32 %v1890, %v1967
  %v1984 = vmul.f32 %v1892, %v1968
  %v1985 = vmul.f32 %v1894, %v1969
  %v1986 = vmul.f32 %v1896, %v1970
  %v1987 = vmul.f32 %v1898, %v1971
  %v1988 = vmul.f32 %v1900, %v1972
  %v1989 = vmul.f32 %v1902, %v1973
  %v1990 = vmul.f32 %v1904, %v1974
  %v1991 = vmul.f32 %v1906, %v1975
  %v1992 = vmul.f32 %v1908, %v1976
  %v1993 = vmul.f32 %v1910, %v1977
  %v1994 = vmul.f32 %v1912, %v1978
  %v1995 = vmul.f32 %v1914, %v1979
  %v1996 = vmul.f32 %v1916, %v1980
  %2005 = vrot.lane.b32.xlu0 %v615, 126
  %v2006 = vpop.permute.xlu0 %2005
  %2007 = vrot.lane.b32.xlu0 %v620, 126
  %v2008 = vpop.permute.xlu0 %2007
  %2009 = vrot.lane.b32.xlu0 %v625, 126
  %v2010 = vpop.permute.xlu0 %2009
  %2011 = vrot.lane.b32.xlu0 %v630, 126
  %v2012 = vpop.permute.xlu0 %2011
  %2013 = vrot.lane.b32.xlu0 %v635, 126
  %v2014 = vpop.permute.xlu0 %2013
  %2015 = vrot.lane.b32.xlu0 %v640, 126
  %v2016 = vpop.permute.xlu0 %2015
  %2017 = vrot.lane.b32.xlu0 %v645, 126
  %v2018 = vpop.permute.xlu0 %2017
  %2019 = vrot.lane.b32.xlu0 %v650, 126
  %v2020 = vpop.permute.xlu0 %2019
  %v2030 = vsel %vm1016, %v1981, 0
  %v2033 = vsel %vm1016, %v1982, 0
  %v2036 = vsel %vm1016, %v1983, 0
  %v2039 = vsel %vm1016, %v1984, 0
  %v2042 = vsel %vm1016, %v1985, 0
  %v2045 = vsel %vm1016, %v1986, 0
  %v2048 = vsel %vm1016, %v1987, 0
  %v2051 = vsel %vm1016, %v1988, 0
  %2053 = vmatprep.subr.mxu0 0.0
  %2054 = vmatpush1.msra.mxu0 %v2006
  %2055 = vmatprep.subr.mxu0 0.0
  %2056 = vmatpush1.msra.mxu0 %v2008
  %2057 = vmatprep.subr.mxu0 0.0
  %2058 = vmatpush1.msra.mxu0 %v2010
  %2059 = vmatprep.subr.mxu0 0.0
  %2060 = vmatpush1.msra.mxu0 %v2012
  %2061 = vmatprep.subr.mxu0 0.0
  %2062 = vmatpush1.msra.mxu0 %v2014
  %2063 = vmatprep.subr.mxu0 0.0
  %2064 = vmatpush1.msra.mxu0 %v2016
  %2065 = vmatprep.subr.mxu0 0.0
  %2066 = vmatpush1.msra.mxu0 %v2018
  %2067 = vmatprep.subr.mxu0 0.0
  %2068 = vmatpush1.msra.mxu0 %v2020
  %2069 = vmatprep.subr.mxu0 0.0
  %2070 = vmatpush1.msra.mxu0 0.0
  %2071 = vmatprep.subr.mxu0 0.0
  %2072 = vmatpush1.msra.mxu0 0.0
  %2073 = vmatprep.subr.mxu0 0.0
  %2074 = vmatpush1.msra.mxu0 0.0
  %2075 = vmatprep.subr.mxu0 0.0
  %2076 = vmatpush1.msra.mxu0 0.0
  %2077 = vmatprep.subr.mxu0 0.0
  %2078 = vmatpush1.msra.mxu0 0.0
  %2079 = vmatprep.subr.mxu0 0.0
  %2080 = vmatpush1.msra.mxu0 0.0
  %2081 = vmatprep.subr.mxu0 0.0
  %2082 = vmatpush1.msra.mxu0 0.0
  %2083 = vmatprep.subr.mxu0 0.0
  %2084 = vmatpush1.msra.mxu0 0.0
  %2085 = vmatprep.subr.mxu0 0.0
  %2086 = vmatpush1.msra.mxu0 0.0
  %2087 = vmatprep.subr.mxu0 0.0
  %2088 = vmatpush1.msra.mxu0 0.0
  %2089 = vmatprep.subr.mxu0 0.0
  %2090 = vmatpush1.msra.mxu0 0.0
  %2091 = vmatprep.subr.mxu0 0.0
  %2092 = vmatpush1.msra.mxu0 0.0
  %2093 = vmatprep.subr.mxu0 0.0
  %2094 = vmatpush1.msra.mxu0 0.0
  %2095 = vmatprep.subr.mxu0 0.0
  %2096 = vmatpush1.msra.mxu0 0.0
  %2097 = vmatprep.subr.mxu0 0.0
  %2098 = vmatpush1.msra.mxu0 0.0
  %2099 = vmatprep.subr.mxu0 0.0
  %2100 = vmatpush1.msra.mxu0 0.0
  %2101 = vmatprep.subr.mxu0 0.0
  %2102 = vmatpush1.msra.mxu0 0.0
  %2103 = vmatprep.subr.mxu0 0.0
  %2104 = vmatpush1.msra.mxu0 0.0
  %2105 = vmatprep.subr.mxu0 0.0
  %2106 = vmatpush1.msra.mxu0 0.0
  %2107 = vmatprep.subr.mxu0 0.0
  %2108 = vmatpush1.msra.mxu0 0.0
  %2109 = vmatprep.subr.mxu0 0.0
  %2110 = vmatpush1.msra.mxu0 0.0
  %2111 = vmatprep.subr.mxu0 0.0
  %2112 = vmatpush1.msra.mxu0 0.0
  %2113 = vmatprep.subr.mxu0 0.0
  %2114 = vmatpush1.msra.mxu0 0.0
  %2115 = vmatprep.subr.mxu0 0.0
  %2116 = vmatpush1.msra.mxu0 0.0
  %2117 = vmatprep.mubr.f32.mxu0 0.0
  %2118 = vmatmul.mubr.f32.gmra.mrb[0].mxu0 %v2030
  %v2119 = vpop.f32.mrb[0].mxu0
  %v2120 = vadd.f32 0.0, %v2119
  %v2121 = vpop.f32.mrb[0].mxu0
  %2122 = vmatprep.mubr.f32.mxu0 0.0
  %2123 = vmatmul.mubr.f32.gmra.mrb[0].mxu0 %v2033
  %v2124 = vpop.f32.mrb[0].mxu0
  %v2125 = vadd.f32 0.0, %v2124
  %v2126 = vpop.f32.mrb[0].mxu0
  %2127 = vmatprep.mubr.f32.mxu0 0.0
  %2128 = vmatmul.mubr.f32.gmra.mrb[0].mxu0 %v2036
  %v2129 = vpop.f32.mrb[0].mxu0
  %v2130 = vadd.f32 0.0, %v2129
  %v2131 = vpop.f32.mrb[0].mxu0
  %2132 = vmatprep.mubr.f32.mxu0 0.0
  %2133 = vmatmul.mubr.f32.gmra.mrb[0].mxu0 %v2039
  %v2134 = vpop.f32.mrb[0].mxu0
  %v2135 = vadd.f32 0.0, %v2134
  %v2136 = vpop.f32.mrb[0].mxu0
  %2137 = vmatprep.mubr.f32.mxu0 0.0
  %2138 = vmatmul.mubr.f32.gmra.mrb[0].mxu0 %v2042
  %v2139 = vpop.f32.mrb[0].mxu0
  %v2140 = vadd.f32 0.0, %v2139
  %v2141 = vpop.f32.mrb[0].mxu0
  %2142 = vmatprep.mubr.f32.mxu0 0.0
  %2143 = vmatmul.mubr.f32.gmra.mrb[0].mxu0 %v2045
  %v2144 = vpop.f32.mrb[0].mxu0
  %v2145 = vadd.f32 0.0, %v2144
  %v2146 = vpop.f32.mrb[0].mxu0
  %2147 = vmatprep.mubr.f32.mxu0 0.0
  %2148 = vmatmul.mubr.f32.gmra.mrb[0].mxu0 %v2048
  %v2149 = vpop.f32.mrb[0].mxu0
  %v2150 = vadd.f32 0.0, %v2149
  %v2151 = vpop.f32.mrb[0].mxu0
  %2152 = vmatprep.mubr.f32.mxu0 0.0
  %2153 = vmatmul.mubr.f32.gmra.mrb[0].mxu0 %v2051
  %v2154 = vpop.f32.mrb[0].mxu0
  %v2155 = vadd.f32 0.0, %v2154
  %v2156 = vpop.f32.mrb[0].mxu0
  %2157 = vdwg.mxu0
  %2166 = vrot.lane.b32.xlu0 %v655, 126
  %v2167 = vpop.permute.xlu0 %2166
  %2168 = vrot.lane.b32.xlu0 %v660, 126
  %v2169 = vpop.permute.xlu0 %2168
  %2170 = vrot.lane.b32.xlu0 %v665, 126
  %v2171 = vpop.permute.xlu0 %2170
  %2172 = vrot.lane.b32.xlu0 %v670, 126
  %v2173 = vpop.permute.xlu0 %2172
  %2174 = vrot.lane.b32.xlu0 %v675, 126
  %v2175 = vpop.permute.xlu0 %2174
  %2176 = vrot.lane.b32.xlu0 %v680, 126
  %v2177 = vpop.permute.xlu0 %2176
  %2178 = vrot.lane.b32.xlu0 %v685, 126
  %v2179 = vpop.permute.xlu0 %2178
  %2180 = vrot.lane.b32.xlu0 %v690, 126
  %v2181 = vpop.permute.xlu0 %2180
  %v2191 = vsel %vm1016, %v1989, 0
  %v2194 = vsel %vm1016, %v1990, 0
  %v2197 = vsel %vm1016, %v1991, 0
  %v2200 = vsel %vm1016, %v1992, 0
  %v2203 = vsel %vm1016, %v1993, 0
  %v2206 = vsel %vm1016, %v1994, 0
  %v2209 = vsel %vm1016, %v1995, 0
  %v2212 = vsel %vm1016, %v1996, 0
  %2214 = vmatprep.subr.mxu0 0.0
  %2215 = vmatpush1.msra.mxu0 %v2167
  %2216 = vmatprep.subr.mxu0 0.0
  %2217 = vmatpush1.msra.mxu0 %v2169
  %2218 = vmatprep.subr.mxu0 0.0
  %2219 = vmatpush1.msra.mxu0 %v2171
  %2220 = vmatprep.subr.mxu0 0.0
  %2221 = vmatpush1.msra.mxu0 %v2173
  %2222 = vmatprep.subr.mxu0 0.0
  %2223 = vmatpush1.msra.mxu0 %v2175
  %2224 = vmatprep.subr.mxu0 0.0
  %2225 = vmatpush1.msra.mxu0 %v2177
  %2226 = vmatprep.subr.mxu0 0.0
  %2227 = vmatpush1.msra.mxu0 %v2179
  %2228 = vmatprep.subr.mxu0 0.0
  %2229 = vmatpush1.msra.mxu0 %v2181
  %2230 = vmatprep.subr.mxu0 0.0
  %2231 = vmatpush1.msra.mxu0 0.0
  %2232 = vmatprep.subr.mxu0 0.0
  %2233 = vmatpush1.msra.mxu0 0.0
  %2234 = vmatprep.subr.mxu0 0.0
  %2235 = vmatpush1.msra.mxu0 0.0
  %2236 = vmatprep.subr.mxu0 0.0
  %2237 = vmatpush1.msra.mxu0 0.0
  %2238 = vmatprep.subr.mxu0 0.0
  %2239 = vmatpush1.msra.mxu0 0.0
  %2240 = vmatprep.subr.mxu0 0.0
  %2241 = vmatpush1.msra.mxu0 0.0
  %2242 = vmatprep.subr.mxu0 0.0
  %2243 = vmatpush1.msra.mxu0 0.0
  %2244 = vmatprep.subr.mxu0 0.0
  %2245 = vmatpush1.msra.mxu0 0.0
  %2246 = vmatprep.subr.mxu0 0.0
  %2247 = vmatpush1.msra.mxu0 0.0
  %2248 = vmatprep.subr.mxu0 0.0
  %2249 = vmatpush1.msra.mxu0 0.0
  %2250 = vmatprep.subr.mxu0 0.0
  %2251 = vmatpush1.msra.mxu0 0.0
  %2252 = vmatprep.subr.mxu0 0.0
  %2253 = vmatpush1.msra.mxu0 0.0
  %2254 = vmatprep.subr.mxu0 0.0
  %2255 = vmatpush1.msra.mxu0 0.0
  %2256 = vmatprep.subr.mxu0 0.0
  %2257 = vmatpush1.msra.mxu0 0.0
  %2258 = vmatprep.subr.mxu0 0.0
  %2259 = vmatpush1.msra.mxu0 0.0
  %2260 = vmatprep.subr.mxu0 0.0
  %2261 = vmatpush1.msra.mxu0 0.0
  %2262 = vmatprep.subr.mxu0 0.0
  %2263 = vmatpush1.msra.mxu0 0.0
  %2264 = vmatprep.subr.mxu0 0.0
  %2265 = vmatpush1.msra.mxu0 0.0
  %2266 = vmatprep.subr.mxu0 0.0
  %2267 = vmatpush1.msra.mxu0 0.0
  %2268 = vmatprep.subr.mxu0 0.0
  %2269 = vmatpush1.msra.mxu0 0.0
  %2270 = vmatprep.subr.mxu0 0.0
  %2271 = vmatpush1.msra.mxu0 0.0
  %2272 = vmatprep.subr.mxu0 0.0
  %2273 = vmatpush1.msra.mxu0 0.0
  %2274 = vmatprep.subr.mxu0 0.0
  %2275 = vmatpush1.msra.mxu0 0.0
  %2276 = vmatprep.subr.mxu0 0.0
  %2277 = vmatpush1.msra.mxu0 0.0
  %2278 = vmatprep.mubr.f32.mxu0 0.0
  %2279 = vmatmul.mubr.f32.gmra.mrb[0].mxu0 %v2191
  %v2280 = vpop.f32.mrb[0].mxu0
  %v2281 = vadd.f32 0.0, %v2280
  %v2282 = vpop.f32.mrb[0].mxu0
  %2283 = vmatprep.mubr.f32.mxu0 0.0
  %2284 = vmatmul.mubr.f32.gmra.mrb[0].mxu0 %v2194
  %v2285 = vpop.f32.mrb[0].mxu0
  %v2286 = vadd.f32 0.0, %v2285
  %v2287 = vpop.f32.mrb[0].mxu0
  %2288 = vmatprep.mubr.f32.mxu0 0.0
  %2289 = vmatmul.mubr.f32.gmra.mrb[0].mxu0 %v2197
  %v2290 = vpop.f32.mrb[0].mxu0
  %v2291 = vadd.f32 0.0, %v2290
  %v2292 = vpop.f32.mrb[0].mxu0
  %2293 = vmatprep.mubr.f32.mxu0 0.0
  %2294 = vmatmul.mubr.f32.gmra.mrb[0].mxu0 %v2200
  %v2295 = vpop.f32.mrb[0].mxu0
  %v2296 = vadd.f32 0.0, %v2295
  %v2297 = vpop.f32.mrb[0].mxu0
  %2298 = vmatprep.mubr.f32.mxu0 0.0
  %2299 = vmatmul.mubr.f32.gmra.mrb[0].mxu0 %v2203
  %v2300 = vpop.f32.mrb[0].mxu0
  %v2301 = vadd.f32 0.0, %v2300
  %v2302 = vpop.f32.mrb[0].mxu0
  %2303 = vmatprep.mubr.f32.mxu0 0.0
  %2304 = vmatmul.mubr.f32.gmra.mrb[0].mxu0 %v2206
  %v2305 = vpop.f32.mrb[0].mxu0
  %v2306 = vadd.f32 0.0, %v2305
  %v2307 = vpop.f32.mrb[0].mxu0
  %2308 = vmatprep.mubr.f32.mxu0 0.0
  %2309 = vmatmul.mubr.f32.gmra.mrb[0].mxu0 %v2209
  %v2310 = vpop.f32.mrb[0].mxu0
  %v2311 = vadd.f32 0.0, %v2310
  %v2312 = vpop.f32.mrb[0].mxu0
  %2313 = vmatprep.mubr.f32.mxu0 0.0
  %2314 = vmatmul.mubr.f32.gmra.mrb[0].mxu0 %v2212
  %v2315 = vpop.f32.mrb[0].mxu0
  %v2316 = vadd.f32 0.0, %v2315
  %v2317 = vpop.f32.mrb[0].mxu0
  %2318 = vdwg.mxu0
  %2335 = vrot.lane.b32.xlu0 %v2120, 2
  %v2336 = vpop.permute.xlu0 %2335
  %2337 = vrot.lane.b32.xlu0 %v2125, 2
  %v2338 = vpop.permute.xlu0 %2337
  %2339 = vrot.lane.b32.xlu0 %v2130, 2
  %v2340 = vpop.permute.xlu0 %2339
  %2341 = vrot.lane.b32.xlu0 %v2135, 2
  %v2342 = vpop.permute.xlu0 %2341
  %2343 = vrot.lane.b32.xlu0 %v2140, 2
  %v2344 = vpop.permute.xlu0 %2343
  %2345 = vrot.lane.b32.xlu0 %v2145, 2
  %v2346 = vpop.permute.xlu0 %2345
  %2347 = vrot.lane.b32.xlu0 %v2150, 2
  %v2348 = vpop.permute.xlu0 %2347
  %2349 = vrot.lane.b32.xlu0 %v2155, 2
  %v2350 = vpop.permute.xlu0 %2349
  %2351 = vrot.lane.b32.xlu0 %v2281, 2
  %v2352 = vpop.permute.xlu0 %2351
  %2353 = vrot.lane.b32.xlu0 %v2286, 2
  %v2354 = vpop.permute.xlu0 %2353
  %2355 = vrot.lane.b32.xlu0 %v2291, 2
  %v2356 = vpop.permute.xlu0 %2355
  %2357 = vrot.lane.b32.xlu0 %v2296, 2
  %v2358 = vpop.permute.xlu0 %2357
  %2359 = vrot.lane.b32.xlu0 %v2301, 2
  %v2360 = vpop.permute.xlu0 %2359
  %2361 = vrot.lane.b32.xlu0 %v2306, 2
  %v2362 = vpop.permute.xlu0 %2361
  %2363 = vrot.lane.b32.xlu0 %v2311, 2
  %v2364 = vpop.permute.xlu0 %2363
  %2365 = vrot.lane.b32.xlu0 %v2316, 2
  %v2366 = vpop.permute.xlu0 %2365
  %vm2383 = vcmask 31760
  %2384 = vst.msk [vmem:[#allocation2] sm:$0xff] %vm2383, %v2336
  %2385 = vst.msk [vmem:[#allocation2 + $0x8] sm:$0xff] %vm2383, %v2338
  %2386 = vst.msk [vmem:[#allocation2 + $0x10] sm:$0xff] %vm2383, %v2340
  %2387 = vst.msk [vmem:[#allocation2 + $0x18] sm:$0xff] %vm2383, %v2342
  %2388 = vst.msk [vmem:[#allocation2 + $0x20] sm:$0xff] %vm2383, %v2344
  %2389 = vst.msk [vmem:[#allocation2 + $0x28] sm:$0xff] %vm2383, %v2346
  %2390 = vst.msk [vmem:[#allocation2 + $0x30] sm:$0xff] %vm2383, %v2348
  %2391 = vst.msk [vmem:[#allocation2 + $0x38] sm:$0xff] %vm2383, %v2350
  %2392 = vst.msk [vmem:[#allocation2 + $0x40] sm:$0xff] %vm2383, %v2352
  %2393 = vst.msk [vmem:[#allocation2 + $0x48] sm:$0xff] %vm2383, %v2354
  %2394 = vst.msk [vmem:[#allocation2 + $0x50] sm:$0xff] %vm2383, %v2356
  %2395 = vst.msk [vmem:[#allocation2 + $0x58] sm:$0xff] %vm2383, %v2358
  %2396 = vst.msk [vmem:[#allocation2 + $0x60] sm:$0xff] %vm2383, %v2360
  %2397 = vst.msk [vmem:[#allocation2 + $0x68] sm:$0xff] %vm2383, %v2362
  %2398 = vst.msk [vmem:[#allocation2 + $0x70] sm:$0xff] %vm2383, %v2364
  %2399 = vst.msk [vmem:[#allocation2 + $0x78] sm:$0xff] %vm2383, %v2366
  %2400 = vrot.lane.b32.xlu0 %v211, 124
  %v2401 = vpop.permute.xlu0 %2400
  %2402 = vrot.lane.b32.xlu0 %v216, 124
  %v2403 = vpop.permute.xlu0 %2402
  %2404 = vrot.lane.b32.xlu0 %v221, 124
  %v2405 = vpop.permute.xlu0 %2404
  %2406 = vrot.lane.b32.xlu0 %v226, 124
  %v2407 = vpop.permute.xlu0 %2406
  %2408 = vrot.lane.b32.xlu0 %v231, 124
  %v2409 = vpop.permute.xlu0 %2408
  %2410 = vrot.lane.b32.xlu0 %v236, 124
  %v2411 = vpop.permute.xlu0 %2410
  %2412 = vrot.lane.b32.xlu0 %v241, 124
  %v2413 = vpop.permute.xlu0 %2412
  %2414 = vrot.lane.b32.xlu0 %v246, 124
  %v2415 = vpop.permute.xlu0 %2414
  %2416 = vrot.lane.b32.xlu0 %v413, 124
  %v2417 = vpop.permute.xlu0 %2416
  %2418 = vrot.lane.b32.xlu0 %v418, 124
  %v2419 = vpop.permute.xlu0 %2418
  %2420 = vrot.lane.b32.xlu0 %v423, 124
  %v2421 = vpop.permute.xlu0 %2420
  %2422 = vrot.lane.b32.xlu0 %v428, 124
  %v2423 = vpop.permute.xlu0 %2422
  %2424 = vrot.lane.b32.xlu0 %v433, 124
  %v2425 = vpop.permute.xlu0 %2424
  %2426 = vrot.lane.b32.xlu0 %v438, 124
  %v2427 = vpop.permute.xlu0 %2426
  %2428 = vrot.lane.b32.xlu0 %v443, 124
  %v2429 = vpop.permute.xlu0 %2428
  %2430 = vrot.lane.b32.xlu0 %v448, 124
  %v2431 = vpop.permute.xlu0 %2430
  %v2432 = vsel %vm693, %v2401, 0
  %v2434 = vsel %vm693, %v2403, 0
  %v2436 = vsel %vm693, %v2405, 0
  %v2438 = vsel %vm693, %v2407, 0
  %v2440 = vsel %vm693, %v2409, 0
  %v2442 = vsel %vm693, %v2411, 0
  %v2444 = vsel %vm693, %v2413, 0
  %v2446 = vsel %vm693, %v2415, 0
  %v2448 = vsel %vm693, %v2417, 0
  %v2450 = vsel %vm693, %v2419, 0
  %v2452 = vsel %vm693, %v2421, 0
  %v2454 = vsel %vm693, %v2423, 0
  %v2456 = vsel %vm693, %v2425, 0
  %v2458 = vsel %vm693, %v2427, 0
  %v2460 = vsel %vm693, %v2429, 0
  %v2462 = vsel %vm693, %v2431, 0
  %2464 = vmatprep.subr.mxu0 0.0
  %2465 = vmatpush1.xpose.msra.mxu0 %v2448
  %2466 = vmatprep.subr.mxu0 0.0
  %2467 = vmatpush1.xpose.msra.mxu0 %v2450
  %2468 = vmatprep.subr.mxu0 0.0
  %2469 = vmatpush1.xpose.msra.mxu0 %v2452
  %2470 = vmatprep.subr.mxu0 0.0
  %2471 = vmatpush1.xpose.msra.mxu0 %v2454
  %2472 = vmatprep.subr.mxu0 0.0
  %2473 = vmatpush1.xpose.msra.mxu0 %v2456
  %2474 = vmatprep.subr.mxu0 0.0
  %2475 = vmatpush1.xpose.msra.mxu0 %v2458
  %2476 = vmatprep.subr.mxu0 0.0
  %2477 = vmatpush1.xpose.msra.mxu0 %v2460
  %2478 = vmatprep.subr.mxu0 0.0
  %2479 = vmatpush1.xpose.msra.mxu0 %v2462
  %2480 = vmatprep.subr.mxu0 0.0
  %2481 = vmatpush1.xpose.msra.mxu0 0.0
  %2482 = vmatprep.subr.mxu0 0.0
  %2483 = vmatpush1.xpose.msra.mxu0 0.0
  %2484 = vmatprep.subr.mxu0 0.0
  %2485 = vmatpush1.xpose.msra.mxu0 0.0
  %2486 = vmatprep.subr.mxu0 0.0
  %2487 = vmatpush1.xpose.msra.mxu0 0.0
  %2488 = vmatprep.subr.mxu0 0.0
  %2489 = vmatpush1.xpose.msra.mxu0 0.0
  %2490 = vmatprep.subr.mxu0 0.0
  %2491 = vmatpush1.xpose.msra.mxu0 0.0
  %2492 = vmatprep.subr.mxu0 0.0
  %2493 = vmatpush1.xpose.msra.mxu0 0.0
  %2494 = vmatprep.subr.mxu0 0.0
  %2495 = vmatpush1.xpose.msra.mxu0 0.0
  %2496 = vmatprep.subr.mxu0 0.0
  %2497 = vmatpush1.xpose.msra.mxu0 0.0
  %2498 = vmatprep.subr.mxu0 0.0
  %2499 = vmatpush1.xpose.msra.mxu0 0.0
  %2500 = vmatprep.subr.mxu0 0.0
  %2501 = vmatpush1.xpose.msra.mxu0 0.0
  %2502 = vmatprep.subr.mxu0 0.0
  %2503 = vmatpush1.xpose.msra.mxu0 0.0
  %2504 = vmatprep.subr.mxu0 0.0
  %2505 = vmatpush1.xpose.msra.mxu0 0.0
  %2506 = vmatprep.subr.mxu0 0.0
  %2507 = vmatpush1.xpose.msra.mxu0 0.0
  %2508 = vmatprep.subr.mxu0 0.0
  %2509 = vmatpush1.xpose.msra.mxu0 0.0
  %2510 = vmatprep.subr.mxu0 0.0
  %2511 = vmatpush1.xpose.msra.mxu0 0.0
  %2512 = vmatprep.subr.mxu0 0.0
  %2513 = vmatpush1.xpose.msra.mxu0 0.0
  %2514 = vmatprep.subr.mxu0 0.0
  %2515 = vmatpush1.xpose.msra.mxu0 0.0
  %2516 = vmatprep.subr.mxu0 0.0
  %2517 = vmatpush1.xpose.msra.mxu0 0.0
  %2518 = vmatprep.subr.mxu0 0.0
  %2519 = vmatpush1.xpose.msra.mxu0 0.0
  %2520 = vmatprep.subr.mxu0 0.0
  %2521 = vmatpush1.xpose.msra.mxu0 0.0
  %2522 = vmatprep.subr.mxu0 0.0
  %2523 = vmatpush1.xpose.msra.mxu0 0.0
  %2524 = vmatprep.subr.mxu0 0.0
  %2525 = vmatpush1.xpose.msra.mxu0 0.0
  %2526 = vmatprep.subr.mxu0 0.0
  %2527 = vmatpush1.xpose.msra.mxu0 0.0
  %2528 = vmatprep.mubr.f32.mxu0 0.0
  %2529 = vmatmul.mubr.f32.gmra.mrb[0].mxu0 %v2432
  %v2530 = vpop.f32.mrb[0].mxu0
  %v2531 = vadd.f32 0.0, %v2530
  %v2532 = vpop.f32.mrb[0].mxu0
  %2533 = vmatprep.mubr.f32.mxu0 0.0
  %2534 = vmatmul.mubr.f32.gmra.mrb[0].mxu0 %v2434
  %v2535 = vpop.f32.mrb[0].mxu0
  %v2536 = vadd.f32 0.0, %v2535
  %v2537 = vpop.f32.mrb[0].mxu0
  %2538 = vmatprep.mubr.f32.mxu0 0.0
  %2539 = vmatmul.mubr.f32.gmra.mrb[0].mxu0 %v2436
  %v2540 = vpop.f32.mrb[0].mxu0
  %v2541 = vadd.f32 0.0, %v2540
  %v2542 = vpop.f32.mrb[0].mxu0
  %2543 = vmatprep.mubr.f32.mxu0 0.0
  %2544 = vmatmul.mubr.f32.gmra.mrb[0].mxu0 %v2438
  %v2545 = vpop.f32.mrb[0].mxu0
  %v2546 = vadd.f32 0.0, %v2545
  %v2547 = vpop.f32.mrb[0].mxu0
  %2548 = vmatprep.mubr.f32.mxu0 0.0
  %2549 = vmatmul.mubr.f32.gmra.mrb[0].mxu0 %v2440
  %v2550 = vpop.f32.mrb[0].mxu0
  %v2551 = vadd.f32 0.0, %v2550
  %v2552 = vpop.f32.mrb[0].mxu0
  %2553 = vmatprep.mubr.f32.mxu0 0.0
  %2554 = vmatmul.mubr.f32.gmra.mrb[0].mxu0 %v2442
  %v2555 = vpop.f32.mrb[0].mxu0
  %v2556 = vadd.f32 0.0, %v2555
  %v2557 = vpop.f32.mrb[0].mxu0
  %2558 = vmatprep.mubr.f32.mxu0 0.0
  %2559 = vmatmul.mubr.f32.gmra.mrb[0].mxu0 %v2444
  %v2560 = vpop.f32.mrb[0].mxu0
  %v2561 = vadd.f32 0.0, %v2560
  %v2562 = vpop.f32.mrb[0].mxu0
  %2563 = vmatprep.mubr.f32.mxu0 0.0
  %2564 = vmatmul.mubr.f32.gmra.mrb[0].mxu0 %v2446
  %v2565 = vpop.f32.mrb[0].mxu0
  %v2566 = vadd.f32 0.0, %v2565
  %v2567 = vpop.f32.mrb[0].mxu0
  %2568 = vdwg.mxu0
  %2569 = vrot.lane.b32.xlu0 %v251, 124
  %v2570 = vpop.permute.xlu0 %2569
  %2571 = vrot.lane.b32.xlu0 %v256, 124
  %v2572 = vpop.permute.xlu0 %2571
  %2573 = vrot.lane.b32.xlu0 %v261, 124
  %v2574 = vpop.permute.xlu0 %2573
  %2575 = vrot.lane.b32.xlu0 %v266, 124
  %v2576 = vpop.permute.xlu0 %2575
  %2577 = vrot.lane.b32.xlu0 %v271, 124
  %v2578 = vpop.permute.xlu0 %2577
  %2579 = vrot.lane.b32.xlu0 %v276, 124
  %v2580 = vpop.permute.xlu0 %2579
  %2581 = vrot.lane.b32.xlu0 %v281, 124
  %v2582 = vpop.permute.xlu0 %2581
  %2583 = vrot.lane.b32.xlu0 %v286, 124
  %v2584 = vpop.permute.xlu0 %2583
  %2585 = vrot.lane.b32.xlu0 %v453, 124
  %v2586 = vpop.permute.xlu0 %2585
  %2587 = vrot.lane.b32.xlu0 %v458, 124
  %v2588 = vpop.permute.xlu0 %2587
  %2589 = vrot.lane.b32.xlu0 %v463, 124
  %v2590 = vpop.permute.xlu0 %2589
  %2591 = vrot.lane.b32.xlu0 %v468, 124
  %v2592 = vpop.permute.xlu0 %2591
  %2593 = vrot.lane.b32.xlu0 %v473, 124
  %v2594 = vpop.permute.xlu0 %2593
  %2595 = vrot.lane.b32.xlu0 %v478, 124
  %v2596 = vpop.permute.xlu0 %2595
  %2597 = vrot.lane.b32.xlu0 %v483, 124
  %v2598 = vpop.permute.xlu0 %2597
  %2599 = vrot.lane.b32.xlu0 %v488, 124
  %v2600 = vpop.permute.xlu0 %2599
  %v2601 = vsel %vm693, %v2570, 0
  %v2603 = vsel %vm693, %v2572, 0
  %v2605 = vsel %vm693, %v2574, 0
  %v2607 = vsel %vm693, %v2576, 0
  %v2609 = vsel %vm693, %v2578, 0
  %v2611 = vsel %vm693, %v2580, 0
  %v2613 = vsel %vm693, %v2582, 0
  %v2615 = vsel %vm693, %v2584, 0
  %v2617 = vsel %vm693, %v2586, 0
  %v2619 = vsel %vm693, %v2588, 0
  %v2621 = vsel %vm693, %v2590, 0
  %v2623 = vsel %vm693, %v2592, 0
  %v2625 = vsel %vm693, %v2594, 0
  %v2627 = vsel %vm693, %v2596, 0
  %v2629 = vsel %vm693, %v2598, 0
  %v2631 = vsel %vm693, %v2600, 0
  %2633 = vmatprep.subr.mxu0 0.0
  %2634 = vmatpush1.xpose.msra.mxu0 %v2617
  %2635 = vmatprep.subr.mxu0 0.0
  %2636 = vmatpush1.xpose.msra.mxu0 %v2619
  %2637 = vmatprep.subr.mxu0 0.0
  %2638 = vmatpush1.xpose.msra.mxu0 %v2621
  %2639 = vmatprep.subr.mxu0 0.0
  %2640 = vmatpush1.xpose.msra.mxu0 %v2623
  %2641 = vmatprep.subr.mxu0 0.0
  %2642 = vmatpush1.xpose.msra.mxu0 %v2625
  %2643 = vmatprep.subr.mxu0 0.0
  %2644 = vmatpush1.xpose.msra.mxu0 %v2627
  %2645 = vmatprep.subr.mxu0 0.0
  %2646 = vmatpush1.xpose.msra.mxu0 %v2629
  %2647 = vmatprep.subr.mxu0 0.0
  %2648 = vmatpush1.xpose.msra.mxu0 %v2631
  %2649 = vmatprep.subr.mxu0 0.0
  %2650 = vmatpush1.xpose.msra.mxu0 0.0
  %2651 = vmatprep.subr.mxu0 0.0
  %2652 = vmatpush1.xpose.msra.mxu0 0.0
  %2653 = vmatprep.subr.mxu0 0.0
  %2654 = vmatpush1.xpose.msra.mxu0 0.0
  %2655 = vmatprep.subr.mxu0 0.0
  %2656 = vmatpush1.xpose.msra.mxu0 0.0
  %2657 = vmatprep.subr.mxu0 0.0
  %2658 = vmatpush1.xpose.msra.mxu0 0.0
  %2659 = vmatprep.subr.mxu0 0.0
  %2660 = vmatpush1.xpose.msra.mxu0 0.0
  %2661 = vmatprep.subr.mxu0 0.0
  %2662 = vmatpush1.xpose.msra.mxu0 0.0
  %2663 = vmatprep.subr.mxu0 0.0
  %2664 = vmatpush1.xpose.msra.mxu0 0.0
  %2665 = vmatprep.subr.mxu0 0.0
  %2666 = vmatpush1.xpose.msra.mxu0 0.0
  %2667 = vmatprep.subr.mxu0 0.0
  %2668 = vmatpush1.xpose.msra.mxu0 0.0
  %2669 = vmatprep.subr.mxu0 0.0
  %2670 = vmatpush1.xpose.msra.mxu0 0.0
  %2671 = vmatprep.subr.mxu0 0.0
  %2672 = vmatpush1.xpose.msra.mxu0 0.0
  %2673 = vmatprep.subr.mxu0 0.0
  %2674 = vmatpush1.xpose.msra.mxu0 0.0
  %2675 = vmatprep.subr.mxu0 0.0
  %2676 = vmatpush1.xpose.msra.mxu0 0.0
  %2677 = vmatprep.subr.mxu0 0.0
  %2678 = vmatpush1.xpose.msra.mxu0 0.0
  %2679 = vmatprep.subr.mxu0 0.0
  %2680 = vmatpush1.xpose.msra.mxu0 0.0
  %2681 = vmatprep.subr.mxu0 0.0
  %2682 = vmatpush1.xpose.msra.mxu0 0.0
  %2683 = vmatprep.subr.mxu0 0.0
  %2684 = vmatpush1.xpose.msra.mxu0 0.0
  %2685 = vmatprep.subr.mxu0 0.0
  %2686 = vmatpush1.xpose.msra.mxu0 0.0
  %2687 = vmatprep.subr.mxu0 0.0
  %2688 = vmatpush1.xpose.msra.mxu0 0.0
  %2689 = vmatprep.subr.mxu0 0.0
  %2690 = vmatpush1.xpose.msra.mxu0 0.0
  %2691 = vmatprep.subr.mxu0 0.0
  %2692 = vmatpush1.xpose.msra.mxu0 0.0
  %2693 = vmatprep.subr.mxu0 0.0
  %2694 = vmatpush1.xpose.msra.mxu0 0.0
  %2695 = vmatprep.subr.mxu0 0.0
  %2696 = vmatpush1.xpose.msra.mxu0 0.0
  %2697 = vmatprep.mubr.f32.mxu0 0.0
  %2698 = vmatmul.mubr.f32.gmra.mrb[0].mxu0 %v2601
  %v2699 = vpop.f32.mrb[0].mxu0
  %v2700 = vadd.f32 0.0, %v2699
  %v2701 = vpop.f32.mrb[0].mxu0
  %2702 = vmatprep.mubr.f32.mxu0 0.0
  %2703 = vmatmul.mubr.f32.gmra.mrb[0].mxu0 %v2603
  %v2704 = vpop.f32.mrb[0].mxu0
  %v2705 = vadd.f32 0.0, %v2704
  %v2706 = vpop.f32.mrb[0].mxu0
  %2707 = vmatprep.mubr.f32.mxu0 0.0
  %2708 = vmatmul.mubr.f32.gmra.mrb[0].mxu0 %v2605
  %v2709 = vpop.f32.mrb[0].mxu0
  %v2710 = vadd.f32 0.0, %v2709
  %v2711 = vpop.f32.mrb[0].mxu0
  %2712 = vmatprep.mubr.f32.mxu0 0.0
  %2713 = vmatmul.mubr.f32.gmra.mrb[0].mxu0 %v2607
  %v2714 = vpop.f32.mrb[0].mxu0
  %v2715 = vadd.f32 0.0, %v2714
  %v2716 = vpop.f32.mrb[0].mxu0
  %2717 = vmatprep.mubr.f32.mxu0 0.0
  %2718 = vmatmul.mubr.f32.gmra.mrb[0].mxu0 %v2609
  %v2719 = vpop.f32.mrb[0].mxu0
  %v2720 = vadd.f32 0.0, %v2719
  %v2721 = vpop.f32.mrb[0].mxu0
  %2722 = vmatprep.mubr.f32.mxu0 0.0
  %2723 = vmatmul.mubr.f32.gmra.mrb[0].mxu0 %v2611
  %v2724 = vpop.f32.mrb[0].mxu0
  %v2725 = vadd.f32 0.0, %v2724
  %v2726 = vpop.f32.mrb[0].mxu0
  %2727 = vmatprep.mubr.f32.mxu0 0.0
  %2728 = vmatmul.mubr.f32.gmra.mrb[0].mxu0 %v2613
  %v2729 = vpop.f32.mrb[0].mxu0
  %v2730 = vadd.f32 0.0, %v2729
  %v2731 = vpop.f32.mrb[0].mxu0
  %2732 = vmatprep.mubr.f32.mxu0 0.0
  %2733 = vmatmul.mubr.f32.gmra.mrb[0].mxu0 %v2615
  %v2734 = vpop.f32.mrb[0].mxu0
  %v2735 = vadd.f32 0.0, %v2734
  %v2736 = vpop.f32.mrb[0].mxu0
  %2737 = vdwg.mxu0
  %v2738 = vmul.f32 %v2531, 0.70710677
  %v2739 = vmul.f32 %v2536, 0.70710677
  %v2740 = vmul.f32 %v2541, 0.70710677
  %v2741 = vmul.f32 %v2546, 0.70710677
  %v2742 = vmul.f32 %v2551, 0.70710677
  %v2743 = vmul.f32 %v2556, 0.70710677
  %v2744 = vmul.f32 %v2561, 0.70710677
  %v2745 = vmul.f32 %v2566, 0.70710677
  %v2746 = vmul.f32 %v2700, 0.70710677
  %v2747 = vmul.f32 %v2705, 0.70710677
  %v2748 = vmul.f32 %v2710, 0.70710677
  %v2749 = vmul.f32 %v2715, 0.70710677
  %v2750 = vmul.f32 %v2720, 0.70710677
  %v2751 = vmul.f32 %v2725, 0.70710677
  %v2752 = vmul.f32 %v2730, 0.70710677
  %v2753 = vmul.f32 %v2735, 0.70710677
  %v2754 = vsel %vm1016, %v2738, -inf
  %2755 = vmax.xlane.f32.xlu0 %v2754
  %v2756 = vpop.xlane.xlu0 %2755
  %v2757 = vsel %vm1016, %v2739, -inf
  %2758 = vmax.xlane.f32.xlu0 %v2757
  %v2759 = vpop.xlane.xlu0 %2758
  %v2760 = vsel %vm1016, %v2740, -inf
  %2761 = vmax.xlane.f32.xlu0 %v2760
  %v2762 = vpop.xlane.xlu0 %2761
  %v2763 = vsel %vm1016, %v2741, -inf
  %2764 = vmax.xlane.f32.xlu0 %v2763
  %v2765 = vpop.xlane.xlu0 %2764
  %v2766 = vsel %vm1016, %v2742, -inf
  %2767 = vmax.xlane.f32.xlu0 %v2766
  %v2768 = vpop.xlane.xlu0 %2767
  %v2769 = vsel %vm1016, %v2743, -inf
  %2770 = vmax.xlane.f32.xlu0 %v2769
  %v2771 = vpop.xlane.xlu0 %2770
  %v2772 = vsel %vm1016, %v2744, -inf
  %2773 = vmax.xlane.f32.xlu0 %v2772
  %v2774 = vpop.xlane.xlu0 %2773
  %v2775 = vsel %vm1016, %v2745, -inf
  %2776 = vmax.xlane.f32.xlu0 %v2775
  %v2777 = vpop.xlane.xlu0 %2776
  %v2778 = vsel %vm1016, %v2746, -inf
  %2779 = vmax.xlane.f32.xlu0 %v2778
  %v2780 = vpop.xlane.xlu0 %2779
  %v2781 = vsel %vm1016, %v2747, -inf
  %2782 = vmax.xlane.f32.xlu0 %v2781
  %v2783 = vpop.xlane.xlu0 %2782
  %v2784 = vsel %vm1016, %v2748, -inf
  %2785 = vmax.xlane.f32.xlu0 %v2784
  %v2786 = vpop.xlane.xlu0 %2785
  %v2787 = vsel %vm1016, %v2749, -inf
  %2788 = vmax.xlane.f32.xlu0 %v2787
  %v2789 = vpop.xlane.xlu0 %2788
  %v2790 = vsel %vm1016, %v2750, -inf
  %2791 = vmax.xlane.f32.xlu0 %v2790
  %v2792 = vpop.xlane.xlu0 %2791
  %v2793 = vsel %vm1016, %v2751, -inf
  %2794 = vmax.xlane.f32.xlu0 %v2793
  %v2795 = vpop.xlane.xlu0 %2794
  %v2796 = vsel %vm1016, %v2752, -inf
  %2797 = vmax.xlane.f32.xlu0 %v2796
  %v2798 = vpop.xlane.xlu0 %2797
  %v2799 = vsel %vm1016, %v2753, -inf
  %2800 = vmax.xlane.f32.xlu0 %v2799
  %v2801 = vpop.xlane.xlu0 %2800
  %v2802 = vsub.f32 %v2738, %v2756
  %v2803 = vsub.f32 %v2739, %v2759
  %v2804 = vsub.f32 %v2740, %v2762
  %v2805 = vsub.f32 %v2741, %v2765
  %v2806 = vsub.f32 %v2742, %v2768
  %v2807 = vsub.f32 %v2743, %v2771
  %v2808 = vsub.f32 %v2744, %v2774
  %v2809 = vsub.f32 %v2745, %v2777
  %v2810 = vsub.f32 %v2746, %v2780
  %v2811 = vsub.f32 %v2747, %v2783
  %v2812 = vsub.f32 %v2748, %v2786
  %v2813 = vsub.f32 %v2749, %v2789
  %v2814 = vsub.f32 %v2750, %v2792
  %v2815 = vsub.f32 %v2751, %v2795
  %v2816 = vsub.f32 %v2752, %v2798
  %v2817 = vsub.f32 %v2753, %v2801
  %v2818 = vmul.f32 %v2802, 1.442695
  %v2819 = vpow.pop %v2818
  %v2820 = vmul.f32 %v2803, 1.442695
  %v2821 = vpow.pop %v2820
  %v2822 = vmul.f32 %v2804, 1.442695
  %v2823 = vpow.pop %v2822
  %v2824 = vmul.f32 %v2805, 1.442695
  %v2825 = vpow.pop %v2824
  %v2826 = vmul.f32 %v2806, 1.442695
  %v2827 = vpow.pop %v2826
  %v2828 = vmul.f32 %v2807, 1.442695
  %v2829 = vpow.pop %v2828
  %v2830 = vmul.f32 %v2808, 1.442695
  %v2831 = vpow.pop %v2830
  %v2832 = vmul.f32 %v2809, 1.442695
  %v2833 = vpow.pop %v2832
  %v2834 = vmul.f32 %v2810, 1.442695
  %v2835 = vpow.pop %v2834
  %v2836 = vmul.f32 %v2811, 1.442695
  %v2837 = vpow.pop %v2836
  %v2838 = vmul.f32 %v2812, 1.442695
  %v2839 = vpow.pop %v2838
  %v2840 = vmul.f32 %v2813, 1.442695
  %v2841 = vpow.pop %v2840
  %v2842 = vmul.f32 %v2814, 1.442695
  %v2843 = vpow.pop %v2842
  %v2844 = vmul.f32 %v2815, 1.442695
  %v2845 = vpow.pop %v2844
  %v2846 = vmul.f32 %v2816, 1.442695
  %v2847 = vpow.pop %v2846
  %v2848 = vmul.f32 %v2817, 1.442695
  %v2849 = vpow.pop %v2848
  %v2850 = vsel %vm1016, %v2819, 0.0
  %2851 = vadd.xlane.f32.xlu0 %v2850
  %v2852 = vpop.xlane.xlu0 %2851
  %v2853 = vsel %vm1016, %v2821, 0.0
  %2854 = vadd.xlane.f32.xlu0 %v2853
  %v2855 = vpop.xlane.xlu0 %2854
  %v2856 = vsel %vm1016, %v2823, 0.0
  %2857 = vadd.xlane.f32.xlu0 %v2856
  %v2858 = vpop.xlane.xlu0 %2857
  %v2859 = vsel %vm1016, %v2825, 0.0
  %2860 = vadd.xlane.f32.xlu0 %v2859
  %v2861 = vpop.xlane.xlu0 %2860
  %v2862 = vsel %vm1016, %v2827, 0.0
  %2863 = vadd.xlane.f32.xlu0 %v2862
  %v2864 = vpop.xlane.xlu0 %2863
  %v2865 = vsel %vm1016, %v2829, 0.0
  %2866 = vadd.xlane.f32.xlu0 %v2865
  %v2867 = vpop.xlane.xlu0 %2866
  %v2868 = vsel %vm1016, %v2831, 0.0
  %2869 = vadd.xlane.f32.xlu0 %v2868
  %v2870 = vpop.xlane.xlu0 %2869
  %v2871 = vsel %vm1016, %v2833, 0.0
  %2872 = vadd.xlane.f32.xlu0 %v2871
  %v2873 = vpop.xlane.xlu0 %2872
  %v2874 = vsel %vm1016, %v2835, 0.0
  %2875 = vadd.xlane.f32.xlu0 %v2874
  %v2876 = vpop.xlane.xlu0 %2875
  %v2877 = vsel %vm1016, %v2837, 0.0
  %2878 = vadd.xlane.f32.xlu0 %v2877
  %v2879 = vpop.xlane.xlu0 %2878
  %v2880 = vsel %vm1016, %v2839, 0.0
  %2881 = vadd.xlane.f32.xlu0 %v2880
  %v2882 = vpop.xlane.xlu0 %2881
  %v2883 = vsel %vm1016, %v2841, 0.0
  %2884 = vadd.xlane.f32.xlu0 %v2883
  %v2885 = vpop.xlane.xlu0 %2884
  %v2886 = vsel %vm1016, %v2843, 0.0
  %2887 = vadd.xlane.f32.xlu0 %v2886
  %v2888 = vpop.xlane.xlu0 %2887
  %v2889 = vsel %vm1016, %v2845, 0.0
  %2890 = vadd.xlane.f32.xlu0 %v2889
  %v2891 = vpop.xlane.xlu0 %2890
  %v2892 = vsel %vm1016, %v2847, 0.0
  %2893 = vadd.xlane.f32.xlu0 %v2892
  %v2894 = vpop.xlane.xlu0 %2893
  %v2895 = vsel %vm1016, %v2849, 0.0
  %2896 = vadd.xlane.f32.xlu0 %v2895
  %v2897 = vpop.xlane.xlu0 %2896
  %v2898 = vrcp.pop %v2852
  %v2899 = vrcp.pop %v2855
  %v2900 = vrcp.pop %v2858
  %v2901 = vrcp.pop %v2861
  %v2902 = vrcp.pop %v2864
  %v2903 = vrcp.pop %v2867
  %v2904 = vrcp.pop %v2870
  %v2905 = vrcp.pop %v2873
  %v2906 = vrcp.pop %v2876
  %v2907 = vrcp.pop %v2879
  %v2908 = vrcp.pop %v2882
  %v2909 = vrcp.pop %v2885
  %v2910 = vrcp.pop %v2888
  %v2911 = vrcp.pop %v2891
  %v2912 = vrcp.pop %v2894
  %v2913 = vrcp.pop %v2897
  %v2914 = vmul.f32 %v2819, %v2898
  %v2915 = vmul.f32 %v2821, %v2899
  %v2916 = vmul.f32 %v2823, %v2900
  %v2917 = vmul.f32 %v2825, %v2901
  %v2918 = vmul.f32 %v2827, %v2902
  %v2919 = vmul.f32 %v2829, %v2903
  %v2920 = vmul.f32 %v2831, %v2904
  %v2921 = vmul.f32 %v2833, %v2905
  %v2922 = vmul.f32 %v2835, %v2906
  %v2923 = vmul.f32 %v2837, %v2907
  %v2924 = vmul.f32 %v2839, %v2908
  %v2925 = vmul.f32 %v2841, %v2909
  %v2926 = vmul.f32 %v2843, %v2910
  %v2927 = vmul.f32 %v2845, %v2911
  %v2928 = vmul.f32 %v2847, %v2912
  %v2929 = vmul.f32 %v2849, %v2913
  %2930 = vrot.lane.b32.xlu0 %v615, 124
  %v2931 = vpop.permute.xlu0 %2930
  %2932 = vrot.lane.b32.xlu0 %v620, 124
  %v2933 = vpop.permute.xlu0 %2932
  %2934 = vrot.lane.b32.xlu0 %v625, 124
  %v2935 = vpop.permute.xlu0 %2934
  %2936 = vrot.lane.b32.xlu0 %v630, 124
  %v2937 = vpop.permute.xlu0 %2936
  %2938 = vrot.lane.b32.xlu0 %v635, 124
  %v2939 = vpop.permute.xlu0 %2938
  %2940 = vrot.lane.b32.xlu0 %v640, 124
  %v2941 = vpop.permute.xlu0 %2940
  %2942 = vrot.lane.b32.xlu0 %v645, 124
  %v2943 = vpop.permute.xlu0 %2942
  %2944 = vrot.lane.b32.xlu0 %v650, 124
  %v2945 = vpop.permute.xlu0 %2944
  %v2955 = vsel %vm1016, %v2914, 0
  %v2958 = vsel %vm1016, %v2915, 0
  %v2961 = vsel %vm1016, %v2916, 0
  %v2964 = vsel %vm1016, %v2917, 0
  %v2967 = vsel %vm1016, %v2918, 0
  %v2970 = vsel %vm1016, %v2919, 0
  %v2973 = vsel %vm1016, %v2920, 0
  %v2976 = vsel %vm1016, %v2921, 0
  %2978 = vmatprep.subr.mxu0 0.0
  %2979 = vmatpush1.msra.mxu0 %v2931
  %2980 = vmatprep.subr.mxu0 0.0
  %2981 = vmatpush1.msra.mxu0 %v2933
  %2982 = vmatprep.subr.mxu0 0.0
  %2983 = vmatpush1.msra.mxu0 %v2935
  %2984 = vmatprep.subr.mxu0 0.0
  %2985 = vmatpush1.msra.mxu0 %v2937
  %2986 = vmatprep.subr.mxu0 0.0
  %2987 = vmatpush1.msra.mxu0 %v2939
  %2988 = vmatprep.subr.mxu0 0.0
  %2989 = vmatpush1.msra.mxu0 %v2941
  %2990 = vmatprep.subr.mxu0 0.0
  %2991 = vmatpush1.msra.mxu0 %v2943
  %2992 = vmatprep.subr.mxu0 0.0
  %2993 = vmatpush1.msra.mxu0 %v2945
  %2994 = vmatprep.subr.mxu0 0.0
  %2995 = vmatpush1.msra.mxu0 0.0
  %2996 = vmatprep.subr.mxu0 0.0
  %2997 = vmatpush1.msra.mxu0 0.0
  %2998 = vmatprep.subr.mxu0 0.0
  %2999 = vmatpush1.msra.mxu0 0.0
  %3000 = vmatprep.subr.mxu0 0.0
  %3001 = vmatpush1.msra.mxu0 0.0
  %3002 = vmatprep.subr.mxu0 0.0
  %3003 = vmatpush1.msra.mxu0 0.0
  %3004 = vmatprep.subr.mxu0 0.0
  %3005 = vmatpush1.msra.mxu0 0.0
  %3006 = vmatprep.subr.mxu0 0.0
  %3007 = vmatpush1.msra.mxu0 0.0
  %3008 = vmatprep.subr.mxu0 0.0
  %3009 = vmatpush1.msra.mxu0 0.0
  %3010 = vmatprep.subr.mxu0 0.0
  %3011 = vmatpush1.msra.mxu0 0.0
  %3012 = vmatprep.subr.mxu0 0.0
  %3013 = vmatpush1.msra.mxu0 0.0
  %3014 = vmatprep.subr.mxu0 0.0
  %3015 = vmatpush1.msra.mxu0 0.0
  %3016 = vmatprep.subr.mxu0 0.0
  %3017 = vmatpush1.msra.mxu0 0.0
  %3018 = vmatprep.subr.mxu0 0.0
  %3019 = vmatpush1.msra.mxu0 0.0
  %3020 = vmatprep.subr.mxu0 0.0
  %3021 = vmatpush1.msra.mxu0 0.0
  %3022 = vmatprep.subr.mxu0 0.0
  %3023 = vmatpush1.msra.mxu0 0.0
  %3024 = vmatprep.subr.mxu0 0.0
  %3025 = vmatpush1.msra.mxu0 0.0
  %3026 = vmatprep.subr.mxu0 0.0
  %3027 = vmatpush1.msra.mxu0 0.0
  %3028 = vmatprep.subr.mxu0 0.0
  %3029 = vmatpush1.msra.mxu0 0.0
  %3030 = vmatprep.subr.mxu0 0.0
  %3031 = vmatpush1.msra.mxu0 0.0
  %3032 = vmatprep.subr.mxu0 0.0
  %3033 = vmatpush1.msra.mxu0 0.0
  %3034 = vmatprep.subr.mxu0 0.0
  %3035 = vmatpush1.msra.mxu0 0.0
  %3036 = vmatprep.subr.mxu0 0.0
  %3037 = vmatpush1.msra.mxu0 0.0
  %3038 = vmatprep.subr.mxu0 0.0
  %3039 = vmatpush1.msra.mxu0 0.0
  %3040 = vmatprep.subr.mxu0 0.0
  %3041 = vmatpush1.msra.mxu0 0.0
  %3042 = vmatprep.mubr.f32.mxu0 0.0
  %3043 = vmatmul.mubr.f32.gmra.mrb[0].mxu0 %v2955
  %v3044 = vpop.f32.mrb[0].mxu0
  %v3045 = vadd.f32 0.0, %v3044
  %v3046 = vpop.f32.mrb[0].mxu0
  %3047 = vmatprep.mubr.f32.mxu0 0.0
  %3048 = vmatmul.mubr.f32.gmra.mrb[0].mxu0 %v2958
  %v3049 = vpop.f32.mrb[0].mxu0
  %v3050 = vadd.f32 0.0, %v3049
  %v3051 = vpop.f32.mrb[0].mxu0
  %3052 = vmatprep.mubr.f32.mxu0 0.0
  %3053 = vmatmul.mubr.f32.gmra.mrb[0].mxu0 %v2961
  %v3054 = vpop.f32.mrb[0].mxu0
  %v3055 = vadd.f32 0.0, %v3054
  %v3056 = vpop.f32.mrb[0].mxu0
  %3057 = vmatprep.mubr.f32.mxu0 0.0
  %3058 = vmatmul.mubr.f32.gmra.mrb[0].mxu0 %v2964
  %v3059 = vpop.f32.mrb[0].mxu0
  %v3060 = vadd.f32 0.0, %v3059
  %v3061 = vpop.f32.mrb[0].mxu0
  %3062 = vmatprep.mubr.f32.mxu0 0.0
  %3063 = vmatmul.mubr.f32.gmra.mrb[0].mxu0 %v2967
  %v3064 = vpop.f32.mrb[0].mxu0
  %v3065 = vadd.f32 0.0, %v3064
  %v3066 = vpop.f32.mrb[0].mxu0
  %3067 = vmatprep.mubr.f32.mxu0 0.0
  %3068 = vmatmul.mubr.f32.gmra.mrb[0].mxu0 %v2970
  %v3069 = vpop.f32.mrb[0].mxu0
  %v3070 = vadd.f32 0.0, %v3069
  %v3071 = vpop.f32.mrb[0].mxu0
  %3072 = vmatprep.mubr.f32.mxu0 0.0
  %3073 = vmatmul.mubr.f32.gmra.mrb[0].mxu0 %v2973
  %v3074 = vpop.f32.mrb[0].mxu0
  %v3075 = vadd.f32 0.0, %v3074
  %v3076 = vpop.f32.mrb[0].mxu0
  %3077 = vmatprep.mubr.f32.mxu0 0.0
  %3078 = vmatmul.mubr.f32.gmra.mrb[0].mxu0 %v2976
  %v3079 = vpop.f32.mrb[0].mxu0
  %v3080 = vadd.f32 0.0, %v3079
  %v3081 = vpop.f32.mrb[0].mxu0
  %3082 = vdwg.mxu0
  %3083 = vrot.lane.b32.xlu0 %v655, 124
  %v3084 = vpop.permute.xlu0 %3083
  %3085 = vrot.lane.b32.xlu0 %v660, 124
  %v3086 = vpop.permute.xlu0 %3085
  %3087 = vrot.lane.b32.xlu0 %v665, 124
  %v3088 = vpop.permute.xlu0 %3087
  %3089 = vrot.lane.b32.xlu0 %v670, 124
  %v3090 = vpop.permute.xlu0 %3089
  %3091 = vrot.lane.b32.xlu0 %v675, 124
  %v3092 = vpop.permute.xlu0 %3091
  %3093 = vrot.lane.b32.xlu0 %v680, 124
  %v3094 = vpop.permute.xlu0 %3093
  %3095 = vrot.lane.b32.xlu0 %v685, 124
  %v3096 = vpop.permute.xlu0 %3095
  %3097 = vrot.lane.b32.xlu0 %v690, 124
  %v3098 = vpop.permute.xlu0 %3097
  %v3108 = vsel %vm1016, %v2922, 0
  %v3111 = vsel %vm1016, %v2923, 0
  %v3114 = vsel %vm1016, %v2924, 0
  %v3117 = vsel %vm1016, %v2925, 0
  %v3120 = vsel %vm1016, %v2926, 0
  %v3123 = vsel %vm1016, %v2927, 0
  %v3126 = vsel %vm1016, %v2928, 0
  %v3129 = vsel %vm1016, %v2929, 0
  %3131 = vmatprep.subr.mxu0 0.0
  %3132 = vmatpush1.msra.mxu0 %v3084
  %3133 = vmatprep.subr.mxu0 0.0
  %3134 = vmatpush1.msra.mxu0 %v3086
  %3135 = vmatprep.subr.mxu0 0.0
  %3136 = vmatpush1.msra.mxu0 %v3088
  %3137 = vmatprep.subr.mxu0 0.0
  %3138 = vmatpush1.msra.mxu0 %v3090
  %3139 = vmatprep.subr.mxu0 0.0
  %3140 = vmatpush1.msra.mxu0 %v3092
  %3141 = vmatprep.subr.mxu0 0.0
  %3142 = vmatpush1.msra.mxu0 %v3094
  %3143 = vmatprep.subr.mxu0 0.0
  %3144 = vmatpush1.msra.mxu0 %v3096
  %3145 = vmatprep.subr.mxu0 0.0
  %3146 = vmatpush1.msra.mxu0 %v3098
  %3147 = vmatprep.subr.mxu0 0.0
  %3148 = vmatpush1.msra.mxu0 0.0
  %3149 = vmatprep.subr.mxu0 0.0
  %3150 = vmatpush1.msra.mxu0 0.0
  %3151 = vmatprep.subr.mxu0 0.0
  %3152 = vmatpush1.msra.mxu0 0.0
  %3153 = vmatprep.subr.mxu0 0.0
  %3154 = vmatpush1.msra.mxu0 0.0
  %3155 = vmatprep.subr.mxu0 0.0
  %3156 = vmatpush1.msra.mxu0 0.0
  %3157 = vmatprep.subr.mxu0 0.0
  %3158 = vmatpush1.msra.mxu0 0.0
  %3159 = vmatprep.subr.mxu0 0.0
  %3160 = vmatpush1.msra.mxu0 0.0
  %3161 = vmatprep.subr.mxu0 0.0
  %3162 = vmatpush1.msra.mxu0 0.0
  %3163 = vmatprep.subr.mxu0 0.0
  %3164 = vmatpush1.msra.mxu0 0.0
  %3165 = vmatprep.subr.mxu0 0.0
  %3166 = vmatpush1.msra.mxu0 0.0
  %3167 = vmatprep.subr.mxu0 0.0
  %3168 = vmatpush1.msra.mxu0 0.0
  %3169 = vmatprep.subr.mxu0 0.0
  %3170 = vmatpush1.msra.mxu0 0.0
  %3171 = vmatprep.subr.mxu0 0.0
  %3172 = vmatpush1.msra.mxu0 0.0
  %3173 = vmatprep.subr.mxu0 0.0
  %3174 = vmatpush1.msra.mxu0 0.0
  %3175 = vmatprep.subr.mxu0 0.0
  %3176 = vmatpush1.msra.mxu0 0.0
  %3177 = vmatprep.subr.mxu0 0.0
  %3178 = vmatpush1.msra.mxu0 0.0
  %3179 = vmatprep.subr.mxu0 0.0
  %3180 = vmatpush1.msra.mxu0 0.0
  %3181 = vmatprep.subr.mxu0 0.0
  %3182 = vmatpush1.msra.mxu0 0.0
  %3183 = vmatprep.subr.mxu0 0.0
  %3184 = vmatpush1.msra.mxu0 0.0
  %3185 = vmatprep.subr.mxu0 0.0
  %3186 = vmatpush1.msra.mxu0 0.0
  %3187 = vmatprep.subr.mxu0 0.0
  %3188 = vmatpush1.msra.mxu0 0.0
  %3189 = vmatprep.subr.mxu0 0.0
  %3190 = vmatpush1.msra.mxu0 0.0
  %3191 = vmatprep.subr.mxu0 0.0
  %3192 = vmatpush1.msra.mxu0 0.0
  %3193 = vmatprep.subr.mxu0 0.0
  %3194 = vmatpush1.msra.mxu0 0.0
  %3195 = vmatprep.mubr.f32.mxu0 0.0
  %3196 = vmatmul.mubr.f32.gmra.mrb[0].mxu0 %v3108
  %v3197 = vpop.f32.mrb[0].mxu0
  %v3198 = vadd.f32 0.0, %v3197
  %v3199 = vpop.f32.mrb[0].mxu0
  %3200 = vmatprep.mubr.f32.mxu0 0.0
  %3201 = vmatmul.mubr.f32.gmra.mrb[0].mxu0 %v3111
  %v3202 = vpop.f32.mrb[0].mxu0
  %v3203 = vadd.f32 0.0, %v3202
  %v3204 = vpop.f32.mrb[0].mxu0
  %3205 = vmatprep.mubr.f32.mxu0 0.0
  %3206 = vmatmul.mubr.f32.gmra.mrb[0].mxu0 %v3114
  %v3207 = vpop.f32.mrb[0].mxu0
  %v3208 = vadd.f32 0.0, %v3207
  %v3209 = vpop.f32.mrb[0].mxu0
  %3210 = vmatprep.mubr.f32.mxu0 0.0
  %3211 = vmatmul.mubr.f32.gmra.mrb[0].mxu0 %v3117
  %v3212 = vpop.f32.mrb[0].mxu0
  %v3213 = vadd.f32 0.0, %v3212
  %v3214 = vpop.f32.mrb[0].mxu0
  %3215 = vmatprep.mubr.f32.mxu0 0.0
  %3216 = vmatmul.mubr.f32.gmra.mrb[0].mxu0 %v3120
  %v3217 = vpop.f32.mrb[0].mxu0
  %v3218 = vadd.f32 0.0, %v3217
  %v3219 = vpop.f32.mrb[0].mxu0
  %3220 = vmatprep.mubr.f32.mxu0 0.0
  %3221 = vmatmul.mubr.f32.gmra.mrb[0].mxu0 %v3123
  %v3222 = vpop.f32.mrb[0].mxu0
  %v3223 = vadd.f32 0.0, %v3222
  %v3224 = vpop.f32.mrb[0].mxu0
  %3225 = vmatprep.mubr.f32.mxu0 0.0
  %3226 = vmatmul.mubr.f32.gmra.mrb[0].mxu0 %v3126
  %v3227 = vpop.f32.mrb[0].mxu0
  %v3228 = vadd.f32 0.0, %v3227
  %v3229 = vpop.f32.mrb[0].mxu0
  %3230 = vmatprep.mubr.f32.mxu0 0.0
  %3231 = vmatmul.mubr.f32.gmra.mrb[0].mxu0 %v3129
  %v3232 = vpop.f32.mrb[0].mxu0
  %v3233 = vadd.f32 0.0, %v3232
  %v3234 = vpop.f32.mrb[0].mxu0
  %3235 = vdwg.mxu0
  %3252 = vrot.lane.b32.xlu0 %v3045, 4
  %v3253 = vpop.permute.xlu0 %3252
  %3254 = vrot.lane.b32.xlu0 %v3050, 4
  %v3255 = vpop.permute.xlu0 %3254
  %3256 = vrot.lane.b32.xlu0 %v3055, 4
  %v3257 = vpop.permute.xlu0 %3256
  %3258 = vrot.lane.b32.xlu0 %v3060, 4
  %v3259 = vpop.permute.xlu0 %3258
  %3260 = vrot.lane.b32.xlu0 %v3065, 4
  %v3261 = vpop.permute.xlu0 %3260
  %3262 = vrot.lane.b32.xlu0 %v3070, 4
  %v3263 = vpop.permute.xlu0 %3262
  %3264 = vrot.lane.b32.xlu0 %v3075, 4
  %v3265 = vpop.permute.xlu0 %3264
  %3266 = vrot.lane.b32.xlu0 %v3080, 4
  %v3267 = vpop.permute.xlu0 %3266
  %3268 = vrot.lane.b32.xlu0 %v3198, 4
  %v3269 = vpop.permute.xlu0 %3268
  %3270 = vrot.lane.b32.xlu0 %v3203, 4
  %v3271 = vpop.permute.xlu0 %3270
  %3272 = vrot.lane.b32.xlu0 %v3208, 4
  %v3273 = vpop.permute.xlu0 %3272
  %3274 = vrot.lane.b32.xlu0 %v3213, 4
  %v3275 = vpop.permute.xlu0 %3274
  %3276 = vrot.lane.b32.xlu0 %v3218, 4
  %v3277 = vpop.permute.xlu0 %3276
  %3278 = vrot.lane.b32.xlu0 %v3223, 4
  %v3279 = vpop.permute.xlu0 %3278
  %3280 = vrot.lane.b32.xlu0 %v3228, 4
  %v3281 = vpop.permute.xlu0 %3280
  %3282 = vrot.lane.b32.xlu0 %v3233, 4
  %v3283 = vpop.permute.xlu0 %3282
  %vm3300 = vcmask 48160
  %3301 = vst.msk [vmem:[#allocation2] sm:$0xff] %vm3300, %v3253
  %3302 = vst.msk [vmem:[#allocation2 + $0x8] sm:$0xff] %vm3300, %v3255
  %3303 = vst.msk [vmem:[#allocation2 + $0x10] sm:$0xff] %vm3300, %v3257
  %3304 = vst.msk [vmem:[#allocation2 + $0x18] sm:$0xff] %vm3300, %v3259
  %3305 = vst.msk [vmem:[#allocation2 + $0x20] sm:$0xff] %vm3300, %v3261
  %3306 = vst.msk [vmem:[#allocation2 + $0x28] sm:$0xff] %vm3300, %v3263
  %3307 = vst.msk [vmem:[#allocation2 + $0x30] sm:$0xff] %vm3300, %v3265
  %3308 = vst.msk [vmem:[#allocation2 + $0x38] sm:$0xff] %vm3300, %v3267
  %3309 = vst.msk [vmem:[#allocation2 + $0x40] sm:$0xff] %vm3300, %v3269
  %3310 = vst.msk [vmem:[#allocation2 + $0x48] sm:$0xff] %vm3300, %v3271
  %3311 = vst.msk [vmem:[#allocation2 + $0x50] sm:$0xff] %vm3300, %v3273
  %3312 = vst.msk [vmem:[#allocation2 + $0x58] sm:$0xff] %vm3300, %v3275
  %3313 = vst.msk [vmem:[#allocation2 + $0x60] sm:$0xff] %vm3300, %v3277
  %3314 = vst.msk [vmem:[#allocation2 + $0x68] sm:$0xff] %vm3300, %v3279
  %3315 = vst.msk [vmem:[#allocation2 + $0x70] sm:$0xff] %vm3300, %v3281
  %3316 = vst.msk [vmem:[#allocation2 + $0x78] sm:$0xff] %vm3300, %v3283
  %3317 = vrot.lane.b32.xlu0 %v211, 122
  %v3318 = vpop.permute.xlu0 %3317
  %3319 = vrot.lane.b32.xlu0 %v216, 122
  %v3320 = vpop.permute.xlu0 %3319
  %3321 = vrot.lane.b32.xlu0 %v221, 122
  %v3322 = vpop.permute.xlu0 %3321
  %3323 = vrot.lane.b32.xlu0 %v226, 122
  %v3324 = vpop.permute.xlu0 %3323
  %3325 = vrot.lane.b32.xlu0 %v231, 122
  %v3326 = vpop.permute.xlu0 %3325
  %3327 = vrot.lane.b32.xlu0 %v236, 122
  %v3328 = vpop.permute.xlu0 %3327
  %3329 = vrot.lane.b32.xlu0 %v241, 122
  %v3330 = vpop.permute.xlu0 %3329
  %3331 = vrot.lane.b32.xlu0 %v246, 122
  %v3332 = vpop.permute.xlu0 %3331
  %3333 = vrot.lane.b32.xlu0 %v413, 122
  %v3334 = vpop.permute.xlu0 %3333
  %3335 = vrot.lane.b32.xlu0 %v418, 122
  %v3336 = vpop.permute.xlu0 %3335
  %3337 = vrot.lane.b32.xlu0 %v423, 122
  %v3338 = vpop.permute.xlu0 %3337
  %3339 = vrot.lane.b32.xlu0 %v428, 122
  %v3340 = vpop.permute.xlu0 %3339
  %3341 = vrot.lane.b32.xlu0 %v433, 122
  %v3342 = vpop.permute.xlu0 %3341
  %3343 = vrot.lane.b32.xlu0 %v438, 122
  %v3344 = vpop.permute.xlu0 %3343
  %3345 = vrot.lane.b32.xlu0 %v443, 122
  %v3346 = vpop.permute.xlu0 %3345
  %3347 = vrot.lane.b32.xlu0 %v448, 122
  %v3348 = vpop.permute.xlu0 %3347
  %v3349 = vsel %vm693, %v3318, 0
  %v3351 = vsel %vm693, %v3320, 0
  %v3353 = vsel %vm693, %v3322, 0
  %v3355 = vsel %vm693, %v3324, 0
  %v3357 = vsel %vm693, %v3326, 0
  %v3359 = vsel %vm693, %v3328, 0
  %v3361 = vsel %vm693, %v3330, 0
  %v3363 = vsel %vm693, %v3332, 0
  %v3365 = vsel %vm693, %v3334, 0
  %v3367 = vsel %vm693, %v3336, 0
  %v3369 = vsel %vm693, %v3338, 0
  %v3371 = vsel %vm693, %v3340, 0
  %v3373 = vsel %vm693, %v3342, 0
  %v3375 = vsel %vm693, %v3344, 0
  %v3377 = vsel %vm693, %v3346, 0
  %v3379 = vsel %vm693, %v3348, 0
  %3381 = vmatprep.subr.mxu0 0.0
  %3382 = vmatpush1.xpose.msra.mxu0 %v3365
  %3383 = vmatprep.subr.mxu0 0.0
  %3384 = vmatpush1.xpose.msra.mxu0 %v3367
  %3385 = vmatprep.subr.mxu0 0.0
  %3386 = vmatpush1.xpose.msra.mxu0 %v3369
  %3387 = vmatprep.subr.mxu0 0.0
  %3388 = vmatpush1.xpose.msra.mxu0 %v3371
  %3389 = vmatprep.subr.mxu0 0.0
  %3390 = vmatpush1.xpose.msra.mxu0 %v3373
  %3391 = vmatprep.subr.mxu0 0.0
  %3392 = vmatpush1.xpose.msra.mxu0 %v3375
  %3393 = vmatprep.subr.mxu0 0.0
  %3394 = vmatpush1.xpose.msra.mxu0 %v3377
  %3395 = vmatprep.subr.mxu0 0.0
  %3396 = vmatpush1.xpose.msra.mxu0 %v3379
  %3397 = vmatprep.subr.mxu0 0.0
  %3398 = vmatpush1.xpose.msra.mxu0 0.0
  %3399 = vmatprep.subr.mxu0 0.0
  %3400 = vmatpush1.xpose.msra.mxu0 0.0
  %3401 = vmatprep.subr.mxu0 0.0
  %3402 = vmatpush1.xpose.msra.mxu0 0.0
  %3403 = vmatprep.subr.mxu0 0.0
  %3404 = vmatpush1.xpose.msra.mxu0 0.0
  %3405 = vmatprep.subr.mxu0 0.0
  %3406 = vmatpush1.xpose.msra.mxu0 0.0
  %3407 = vmatprep.subr.mxu0 0.0
  %3408 = vmatpush1.xpose.msra.mxu0 0.0
  %3409 = vmatprep.subr.mxu0 0.0
  %3410 = vmatpush1.xpose.msra.mxu0 0.0
  %3411 = vmatprep.subr.mxu0 0.0
  %3412 = vmatpush1.xpose.msra.mxu0 0.0
  %3413 = vmatprep.subr.mxu0 0.0
  %3414 = vmatpush1.xpose.msra.mxu0 0.0
  %3415 = vmatprep.subr.mxu0 0.0
  %3416 = vmatpush1.xpose.msra.mxu0 0.0
  %3417 = vmatprep.subr.mxu0 0.0
  %3418 = vmatpush1.xpose.msra.mxu0 0.0
  %3419 = vmatprep.subr.mxu0 0.0
  %3420 = vmatpush1.xpose.msra.mxu0 0.0
  %3421 = vmatprep.subr.mxu0 0.0
  %3422 = vmatpush1.xpose.msra.mxu0 0.0
  %3423 = vmatprep.subr.mxu0 0.0
  %3424 = vmatpush1.xpose.msra.mxu0 0.0
  %3425 = vmatprep.subr.mxu0 0.0
  %3426 = vmatpush1.xpose.msra.mxu0 0.0
  %3427 = vmatprep.subr.mxu0 0.0
  %3428 = vmatpush1.xpose.msra.mxu0 0.0
  %3429 = vmatprep.subr.mxu0 0.0
  %3430 = vmatpush1.xpose.msra.mxu0 0.0
  %3431 = vmatprep.subr.mxu0 0.0
  %3432 = vmatpush1.xpose.msra.mxu0 0.0
  %3433 = vmatprep.subr.mxu0 0.0
  %3434 = vmatpush1.xpose.msra.mxu0 0.0
  %3435 = vmatprep.subr.mxu0 0.0
  %3436 = vmatpush1.xpose.msra.mxu0 0.0
  %3437 = vmatprep.subr.mxu0 0.0
  %3438 = vmatpush1.xpose.msra.mxu0 0.0
  %3439 = vmatprep.subr.mxu0 0.0
  %3440 = vmatpush1.xpose.msra.mxu0 0.0
  %3441 = vmatprep.subr.mxu0 0.0
  %3442 = vmatpush1.xpose.msra.mxu0 0.0
  %3443 = vmatprep.subr.mxu0 0.0
  %3444 = vmatpush1.xpose.msra.mxu0 0.0
  %3445 = vmatprep.mubr.f32.mxu0 0.0
  %3446 = vmatmul.mubr.f32.gmra.mrb[0].mxu0 %v3349
  %v3447 = vpop.f32.mrb[0].mxu0
  %v3448 = vadd.f32 0.0, %v3447
  %v3449 = vpop.f32.mrb[0].mxu0
  %3450 = vmatprep.mubr.f32.mxu0 0.0
  %3451 = vmatmul.mubr.f32.gmra.mrb[0].mxu0 %v3351
  %v3452 = vpop.f32.mrb[0].mxu0
  %v3453 = vadd.f32 0.0, %v3452
  %v3454 = vpop.f32.mrb[0].mxu0
  %3455 = vmatprep.mubr.f32.mxu0 0.0
  %3456 = vmatmul.mubr.f32.gmra.mrb[0].mxu0 %v3353
  %v3457 = vpop.f32.mrb[0].mxu0
  %v3458 = vadd.f32 0.0, %v3457
  %v3459 = vpop.f32.mrb[0].mxu0
  %3460 = vmatprep.mubr.f32.mxu0 0.0
  %3461 = vmatmul.mubr.f32.gmra.mrb[0].mxu0 %v3355
  %v3462 = vpop.f32.mrb[0].mxu0
  %v3463 = vadd.f32 0.0, %v3462
  %v3464 = vpop.f32.mrb[0].mxu0
  %3465 = vmatprep.mubr.f32.mxu0 0.0
  %3466 = vmatmul.mubr.f32.gmra.mrb[0].mxu0 %v3357
  %v3467 = vpop.f32.mrb[0].mxu0
  %v3468 = vadd.f32 0.0, %v3467
  %v3469 = vpop.f32.mrb[0].mxu0
  %3470 = vmatprep.mubr.f32.mxu0 0.0
  %3471 = vmatmul.mubr.f32.gmra.mrb[0].mxu0 %v3359
  %v3472 = vpop.f32.mrb[0].mxu0
  %v3473 = vadd.f32 0.0, %v3472
  %v3474 = vpop.f32.mrb[0].mxu0
  %3475 = vmatprep.mubr.f32.mxu0 0.0
  %3476 = vmatmul.mubr.f32.gmra.mrb[0].mxu0 %v3361
  %v3477 = vpop.f32.mrb[0].mxu0
  %v3478 = vadd.f32 0.0, %v3477
  %v3479 = vpop.f32.mrb[0].mxu0
  %3480 = vmatprep.mubr.f32.mxu0 0.0
  %3481 = vmatmul.mubr.f32.gmra.mrb[0].mxu0 %v3363
  %v3482 = vpop.f32.mrb[0].mxu0
  %v3483 = vadd.f32 0.0, %v3482
  %v3484 = vpop.f32.mrb[0].mxu0
  %3485 = vdwg.mxu0
  %3486 = vrot.lane.b32.xlu0 %v251, 122
  %v3487 = vpop.permute.xlu0 %3486
  %3488 = vrot.lane.b32.xlu0 %v256, 122
  %v3489 = vpop.permute.xlu0 %3488
  %3490 = vrot.lane.b32.xlu0 %v261, 122
  %v3491 = vpop.permute.xlu0 %3490
  %3492 = vrot.lane.b32.xlu0 %v266, 122
  %v3493 = vpop.permute.xlu0 %3492
  %3494 = vrot.lane.b32.xlu0 %v271, 122
  %v3495 = vpop.permute.xlu0 %3494
  %3496 = vrot.lane.b32.xlu0 %v276, 122
  %v3497 = vpop.permute.xlu0 %3496
  %3498 = vrot.lane.b32.xlu0 %v281, 122
  %v3499 = vpop.permute.xlu0 %3498
  %3500 = vrot.lane.b32.xlu0 %v286, 122
  %v3501 = vpop.permute.xlu0 %3500
  %3502 = vrot.lane.b32.xlu0 %v453, 122
  %v3503 = vpop.permute.xlu0 %3502
  %3504 = vrot.lane.b32.xlu0 %v458, 122
  %v3505 = vpop.permute.xlu0 %3504
  %3506 = vrot.lane.b32.xlu0 %v463, 122
  %v3507 = vpop.permute.xlu0 %3506
  %3508 = vrot.lane.b32.xlu0 %v468, 122
  %v3509 = vpop.permute.xlu0 %3508
  %3510 = vrot.lane.b32.xlu0 %v473, 122
  %v3511 = vpop.permute.xlu0 %3510
  %3512 = vrot.lane.b32.xlu0 %v478, 122
  %v3513 = vpop.permute.xlu0 %3512
  %3514 = vrot.lane.b32.xlu0 %v483, 122
  %v3515 = vpop.permute.xlu0 %3514
  %3516 = vrot.lane.b32.xlu0 %v488, 122
  %v3517 = vpop.permute.xlu0 %3516
  %v3518 = vsel %vm693, %v3487, 0
  %v3520 = vsel %vm693, %v3489, 0
  %v3522 = vsel %vm693, %v3491, 0
  %v3524 = vsel %vm693, %v3493, 0
  %v3526 = vsel %vm693, %v3495, 0
  %v3528 = vsel %vm693, %v3497, 0
  %v3530 = vsel %vm693, %v3499, 0
  %v3532 = vsel %vm693, %v3501, 0
  %v3534 = vsel %vm693, %v3503, 0
  %v3536 = vsel %vm693, %v3505, 0
  %v3538 = vsel %vm693, %v3507, 0
  %v3540 = vsel %vm693, %v3509, 0
  %v3542 = vsel %vm693, %v3511, 0
  %v3544 = vsel %vm693, %v3513, 0
  %v3546 = vsel %vm693, %v3515, 0
  %v3548 = vsel %vm693, %v3517, 0
  %3550 = vmatprep.subr.mxu0 0.0
  %3551 = vmatpush1.xpose.msra.mxu0 %v3534
  %3552 = vmatprep.subr.mxu0 0.0
  %3553 = vmatpush1.xpose.msra.mxu0 %v3536
  %3554 = vmatprep.subr.mxu0 0.0
  %3555 = vmatpush1.xpose.msra.mxu0 %v3538
  %3556 = vmatprep.subr.mxu0 0.0
  %3557 = vmatpush1.xpose.msra.mxu0 %v3540
  %3558 = vmatprep.subr.mxu0 0.0
  %3559 = vmatpush1.xpose.msra.mxu0 %v3542
  %3560 = vmatprep.subr.mxu0 0.0
  %3561 = vmatpush1.xpose.msra.mxu0 %v3544
  %3562 = vmatprep.subr.mxu0 0.0
  %3563 = vmatpush1.xpose.msra.mxu0 %v3546
  %3564 = vmatprep.subr.mxu0 0.0
  %3565 = vmatpush1.xpose.msra.mxu0 %v3548
  %3566 = vmatprep.subr.mxu0 0.0
  %3567 = vmatpush1.xpose.msra.mxu0 0.0
  %3568 = vmatprep.subr.mxu0 0.0
  %3569 = vmatpush1.xpose.msra.mxu0 0.0
  %3570 = vmatprep.subr.mxu0 0.0
  %3571 = vmatpush1.xpose.msra.mxu0 0.0
  %3572 = vmatprep.subr.mxu0 0.0
  %3573 = vmatpush1.xpose.msra.mxu0 0.0
  %3574 = vmatprep.subr.mxu0 0.0
  %3575 = vmatpush1.xpose.msra.mxu0 0.0
  %3576 = vmatprep.subr.mxu0 0.0
  %3577 = vmatpush1.xpose.msra.mxu0 0.0
  %3578 = vmatprep.subr.mxu0 0.0
  %3579 = vmatpush1.xpose.msra.mxu0 0.0
  %3580 = vmatprep.subr.mxu0 0.0
  %3581 = vmatpush1.xpose.msra.mxu0 0.0
  %3582 = vmatprep.subr.mxu0 0.0
  %3583 = vmatpush1.xpose.msra.mxu0 0.0
  %3584 = vmatprep.subr.mxu0 0.0
  %3585 = vmatpush1.xpose.msra.mxu0 0.0
  %3586 = vmatprep.subr.mxu0 0.0
  %3587 = vmatpush1.xpose.msra.mxu0 0.0
  %3588 = vmatprep.subr.mxu0 0.0
  %3589 = vmatpush1.xpose.msra.mxu0 0.0
  %3590 = vmatprep.subr.mxu0 0.0
  %3591 = vmatpush1.xpose.msra.mxu0 0.0
  %3592 = vmatprep.subr.mxu0 0.0
  %3593 = vmatpush1.xpose.msra.mxu0 0.0
  %3594 = vmatprep.subr.mxu0 0.0
  %3595 = vmatpush1.xpose.msra.mxu0 0.0
  %3596 = vmatprep.subr.mxu0 0.0
  %3597 = vmatpush1.xpose.msra.mxu0 0.0
  %3598 = vmatprep.subr.mxu0 0.0
  %3599 = vmatpush1.xpose.msra.mxu0 0.0
  %3600 = vmatprep.subr.mxu0 0.0
  %3601 = vmatpush1.xpose.msra.mxu0 0.0
  %3602 = vmatprep.subr.mxu0 0.0
  %3603 = vmatpush1.xpose.msra.mxu0 0.0
  %3604 = vmatprep.subr.mxu0 0.0
  %3605 = vmatpush1.xpose.msra.mxu0 0.0
  %3606 = vmatprep.subr.mxu0 0.0
  %3607 = vmatpush1.xpose.msra.mxu0 0.0
  %3608 = vmatprep.subr.mxu0 0.0
  %3609 = vmatpush1.xpose.msra.mxu0 0.0
  %3610 = vmatprep.subr.mxu0 0.0
  %3611 = vmatpush1.xpose.msra.mxu0 0.0
  %3612 = vmatprep.subr.mxu0 0.0
  %3613 = vmatpush1.xpose.msra.mxu0 0.0
  %3614 = vmatprep.mubr.f32.mxu0 0.0
  %3615 = vmatmul.mubr.f32.gmra.mrb[0].mxu0 %v3518
  %v3616 = vpop.f32.mrb[0].mxu0
  %v3617 = vadd.f32 0.0, %v3616
  %v3618 = vpop.f32.mrb[0].mxu0
  %3619 = vmatprep.mubr.f32.mxu0 0.0
  %3620 = vmatmul.mubr.f32.gmra.mrb[0].mxu0 %v3520
  %v3621 = vpop.f32.mrb[0].mxu0
  %v3622 = vadd.f32 0.0, %v3621
  %v3623 = vpop.f32.mrb[0].mxu0
  %3624 = vmatprep.mubr.f32.mxu0 0.0
  %3625 = vmatmul.mubr.f32.gmra.mrb[0].mxu0 %v3522
  %v3626 = vpop.f32.mrb[0].mxu0
  %v3627 = vadd.f32 0.0, %v3626
  %v3628 = vpop.f32.mrb[0].mxu0
  %3629 = vmatprep.mubr.f32.mxu0 0.0
  %3630 = vmatmul.mubr.f32.gmra.mrb[0].mxu0 %v3524
  %v3631 = vpop.f32.mrb[0].mxu0
  %v3632 = vadd.f32 0.0, %v3631
  %v3633 = vpop.f32.mrb[0].mxu0
  %3634 = vmatprep.mubr.f32.mxu0 0.0
  %3635 = vmatmul.mubr.f32.gmra.mrb[0].mxu0 %v3526
  %v3636 = vpop.f32.mrb[0].mxu0
  %v3637 = vadd.f32 0.0, %v3636
  %v3638 = vpop.f32.mrb[0].mxu0
  %3639 = vmatprep.mubr.f32.mxu0 0.0
  %3640 = vmatmul.mubr.f32.gmra.mrb[0].mxu0 %v3528
  %v3641 = vpop.f32.mrb[0].mxu0
  %v3642 = vadd.f32 0.0, %v3641
  %v3643 = vpop.f32.mrb[0].mxu0
  %3644 = vmatprep.mubr.f32.mxu0 0.0
  %3645 = vmatmul.mubr.f32.gmra.mrb[0].mxu0 %v3530
  %v3646 = vpop.f32.mrb[0].mxu0
  %v3647 = vadd.f32 0.0, %v3646
  %v3648 = vpop.f32.mrb[0].mxu0
  %3649 = vmatprep.mubr.f32.mxu0 0.0
  %3650 = vmatmul.mubr.f32.gmra.mrb[0].mxu0 %v3532
  %v3651 = vpop.f32.mrb[0].mxu0
  %v3652 = vadd.f32 0.0, %v3651
  %v3653 = vpop.f32.mrb[0].mxu0
  %3654 = vdwg.mxu0
  %v3655 = vmul.f32 %v3448, 0.70710677
  %v3656 = vmul.f32 %v3453, 0.70710677
  %v3657 = vmul.f32 %v3458, 0.70710677
  %v3658 = vmul.f32 %v3463, 0.70710677
  %v3659 = vmul.f32 %v3468, 0.70710677
  %v3660 = vmul.f32 %v3473, 0.70710677
  %v3661 = vmul.f32 %v3478, 0.70710677
  %v3662 = vmul.f32 %v3483, 0.70710677
  %v3663 = vmul.f32 %v3617, 0.70710677
  %v3664 = vmul.f32 %v3622, 0.70710677
  %v3665 = vmul.f32 %v3627, 0.70710677
  %v3666 = vmul.f32 %v3632, 0.70710677
  %v3667 = vmul.f32 %v3637, 0.70710677
  %v3668 = vmul.f32 %v3642, 0.70710677
  %v3669 = vmul.f32 %v3647, 0.70710677
  %v3670 = vmul.f32 %v3652, 0.70710677
  %v3671 = vsel %vm1016, %v3655, -inf
  %3672 = vmax.xlane.f32.xlu0 %v3671
  %v3673 = vpop.xlane.xlu0 %3672
  %v3674 = vsel %vm1016, %v3656, -inf
  %3675 = vmax.xlane.f32.xlu0 %v3674
  %v3676 = vpop.xlane.xlu0 %3675
  %v3677 = vsel %vm1016, %v3657, -inf
  %3678 = vmax.xlane.f32.xlu0 %v3677
  %v3679 = vpop.xlane.xlu0 %3678
  %v3680 = vsel %vm1016, %v3658, -inf
  %3681 = vmax.xlane.f32.xlu0 %v3680
  %v3682 = vpop.xlane.xlu0 %3681
  %v3683 = vsel %vm1016, %v3659, -inf
  %3684 = vmax.xlane.f32.xlu0 %v3683
  %v3685 = vpop.xlane.xlu0 %3684
  %v3686 = vsel %vm1016, %v3660, -inf
  %3687 = vmax.xlane.f32.xlu0 %v3686
  %v3688 = vpop.xlane.xlu0 %3687
  %v3689 = vsel %vm1016, %v3661, -inf
  %3690 = vmax.xlane.f32.xlu0 %v3689
  %v3691 = vpop.xlane.xlu0 %3690
  %v3692 = vsel %vm1016, %v3662, -inf
  %3693 = vmax.xlane.f32.xlu0 %v3692
  %v3694 = vpop.xlane.xlu0 %3693
  %v3695 = vsel %vm1016, %v3663, -inf
  %3696 = vmax.xlane.f32.xlu0 %v3695
  %v3697 = vpop.xlane.xlu0 %3696
  %v3698 = vsel %vm1016, %v3664, -inf
  %3699 = vmax.xlane.f32.xlu0 %v3698
  %v3700 = vpop.xlane.xlu0 %3699
  %v3701 = vsel %vm1016, %v3665, -inf
  %3702 = vmax.xlane.f32.xlu0 %v3701
  %v3703 = vpop.xlane.xlu0 %3702
  %v3704 = vsel %vm1016, %v3666, -inf
  %3705 = vmax.xlane.f32.xlu0 %v3704
  %v3706 = vpop.xlane.xlu0 %3705
  %v3707 = vsel %vm1016, %v3667, -inf
  %3708 = vmax.xlane.f32.xlu0 %v3707
  %v3709 = vpop.xlane.xlu0 %3708
  %v3710 = vsel %vm1016, %v3668, -inf
  %3711 = vmax.xlane.f32.xlu0 %v3710
  %v3712 = vpop.xlane.xlu0 %3711
  %v3713 = vsel %vm1016, %v3669, -inf
  %3714 = vmax.xlane.f32.xlu0 %v3713
  %v3715 = vpop.xlane.xlu0 %3714
  %v3716 = vsel %vm1016, %v3670, -inf
  %3717 = vmax.xlane.f32.xlu0 %v3716
  %v3718 = vpop.xlane.xlu0 %3717
  %v3719 = vsub.f32 %v3655, %v3673
  %v3720 = vsub.f32 %v3656, %v3676
  %v3721 = vsub.f32 %v3657, %v3679
  %v3722 = vsub.f32 %v3658, %v3682
  %v3723 = vsub.f32 %v3659, %v3685
  %v3724 = vsub.f32 %v3660, %v3688
  %v3725 = vsub.f32 %v3661, %v3691
  %v3726 = vsub.f32 %v3662, %v3694
  %v3727 = vsub.f32 %v3663, %v3697
  %v3728 = vsub.f32 %v3664, %v3700
  %v3729 = vsub.f32 %v3665, %v3703
  %v3730 = vsub.f32 %v3666, %v3706
  %v3731 = vsub.f32 %v3667, %v3709
  %v3732 = vsub.f32 %v3668, %v3712
  %v3733 = vsub.f32 %v3669, %v3715
  %v3734 = vsub.f32 %v3670, %v3718
  %v3735 = vmul.f32 %v3719, 1.442695
  %v3736 = vpow.pop %v3735
  %v3737 = vmul.f32 %v3720, 1.442695
  %v3738 = vpow.pop %v3737
  %v3739 = vmul.f32 %v3721, 1.442695
  %v3740 = vpow.pop %v3739
  %v3741 = vmul.f32 %v3722, 1.442695
  %v3742 = vpow.pop %v3741
  %v3743 = vmul.f32 %v3723, 1.442695
  %v3744 = vpow.pop %v3743
  %v3745 = vmul.f32 %v3724, 1.442695
  %v3746 = vpow.pop %v3745
  %v3747 = vmul.f32 %v3725, 1.442695
  %v3748 = vpow.pop %v3747
  %v3749 = vmul.f32 %v3726, 1.442695
  %v3750 = vpow.pop %v3749
  %v3751 = vmul.f32 %v3727, 1.442695
  %v3752 = vpow.pop %v3751
  %v3753 = vmul.f32 %v3728, 1.442695
  %v3754 = vpow.pop %v3753
  %v3755 = vmul.f32 %v3729, 1.442695
  %v3756 = vpow.pop %v3755
  %v3757 = vmul.f32 %v3730, 1.442695
  %v3758 = vpow.pop %v3757
  %v3759 = vmul.f32 %v3731, 1.442695
  %v3760 = vpow.pop %v3759
  %v3761 = vmul.f32 %v3732, 1.442695
  %v3762 = vpow.pop %v3761
  %v3763 = vmul.f32 %v3733, 1.442695
  %v3764 = vpow.pop %v3763
  %v3765 = vmul.f32 %v3734, 1.442695
  %v3766 = vpow.pop %v3765
  %v3767 = vsel %vm1016, %v3736, 0.0
  %3768 = vadd.xlane.f32.xlu0 %v3767
  %v3769 = vpop.xlane.xlu0 %3768
  %v3770 = vsel %vm1016, %v3738, 0.0
  %3771 = vadd.xlane.f32.xlu0 %v3770
  %v3772 = vpop.xlane.xlu0 %3771
  %v3773 = vsel %vm1016, %v3740, 0.0
  %3774 = vadd.xlane.f32.xlu0 %v3773
  %v3775 = vpop.xlane.xlu0 %3774
  %v3776 = vsel %vm1016, %v3742, 0.0
  %3777 = vadd.xlane.f32.xlu0 %v3776
  %v3778 = vpop.xlane.xlu0 %3777
  %v3779 = vsel %vm1016, %v3744, 0.0
  %3780 = vadd.xlane.f32.xlu0 %v3779
  %v3781 = vpop.xlane.xlu0 %3780
  %v3782 = vsel %vm1016, %v3746, 0.0
  %3783 = vadd.xlane.f32.xlu0 %v3782
  %v3784 = vpop.xlane.xlu0 %3783
  %v3785 = vsel %vm1016, %v3748, 0.0
  %3786 = vadd.xlane.f32.xlu0 %v3785
  %v3787 = vpop.xlane.xlu0 %3786
  %v3788 = vsel %vm1016, %v3750, 0.0
  %3789 = vadd.xlane.f32.xlu0 %v3788
  %v3790 = vpop.xlane.xlu0 %3789
  %v3791 = vsel %vm1016, %v3752, 0.0
  %3792 = vadd.xlane.f32.xlu0 %v3791
  %v3793 = vpop.xlane.xlu0 %3792
  %v3794 = vsel %vm1016, %v3754, 0.0
  %3795 = vadd.xlane.f32.xlu0 %v3794
  %v3796 = vpop.xlane.xlu0 %3795
  %v3797 = vsel %vm1016, %v3756, 0.0
  %3798 = vadd.xlane.f32.xlu0 %v3797
  %v3799 = vpop.xlane.xlu0 %3798
  %v3800 = vsel %vm1016, %v3758, 0.0
  %3801 = vadd.xlane.f32.xlu0 %v3800
  %v3802 = vpop.xlane.xlu0 %3801
  %v3803 = vsel %vm1016, %v3760, 0.0
  %3804 = vadd.xlane.f32.xlu0 %v3803
  %v3805 = vpop.xlane.xlu0 %3804
  %v3806 = vsel %vm1016, %v3762, 0.0
  %3807 = vadd.xlane.f32.xlu0 %v3806
  %v3808 = vpop.xlane.xlu0 %3807
  %v3809 = vsel %vm1016, %v3764, 0.0
  %3810 = vadd.xlane.f32.xlu0 %v3809
  %v3811 = vpop.xlane.xlu0 %3810
  %v3812 = vsel %vm1016, %v3766, 0.0
  %3813 = vadd.xlane.f32.xlu0 %v3812
  %v3814 = vpop.xlane.xlu0 %3813
  %v3815 = vrcp.pop %v3769
  %v3816 = vrcp.pop %v3772
  %v3817 = vrcp.pop %v3775
  %v3818 = vrcp.pop %v3778
  %v3819 = vrcp.pop %v3781
  %v3820 = vrcp.pop %v3784
  %v3821 = vrcp.pop %v3787
  %v3822 = vrcp.pop %v3790
  %v3823 = vrcp.pop %v3793
  %v3824 = vrcp.pop %v3796
  %v3825 = vrcp.pop %v3799
  %v3826 = vrcp.pop %v3802
  %v3827 = vrcp.pop %v3805
  %v3828 = vrcp.pop %v3808
  %v3829 = vrcp.pop %v3811
  %v3830 = vrcp.pop %v3814
  %v3831 = vmul.f32 %v3736, %v3815
  %v3832 = vmul.f32 %v3738, %v3816
  %v3833 = vmul.f32 %v3740, %v3817
  %v3834 = vmul.f32 %v3742, %v3818
  %v3835 = vmul.f32 %v3744, %v3819
  %v3836 = vmul.f32 %v3746, %v3820
  %v3837 = vmul.f32 %v3748, %v3821
  %v3838 = vmul.f32 %v3750, %v3822
  %v3839 = vmul.f32 %v3752, %v3823
  %v3840 = vmul.f32 %v3754, %v3824
  %v3841 = vmul.f32 %v3756, %v3825
  %v3842 = vmul.f32 %v3758, %v3826
  %v3843 = vmul.f32 %v3760, %v3827
  %v3844 = vmul.f32 %v3762, %v3828
  %v3845 = vmul.f32 %v3764, %v3829
  %v3846 = vmul.f32 %v3766, %v3830
  %3847 = vrot.lane.b32.xlu0 %v615, 122
  %v3848 = vpop.permute.xlu0 %3847
  %3849 = vrot.lane.b32.xlu0 %v620, 122
  %v3850 = vpop.permute.xlu0 %3849
  %3851 = vrot.lane.b32.xlu0 %v625, 122
  %v3852 = vpop.permute.xlu0 %3851
  %3853 = vrot.lane.b32.xlu0 %v630, 122
  %v3854 = vpop.permute.xlu0 %3853
  %3855 = vrot.lane.b32.xlu0 %v635, 122
  %v3856 = vpop.permute.xlu0 %3855
  %3857 = vrot.lane.b32.xlu0 %v640, 122
  %v3858 = vpop.permute.xlu0 %3857
  %3859 = vrot.lane.b32.xlu0 %v645, 122
  %v3860 = vpop.permute.xlu0 %3859
  %3861 = vrot.lane.b32.xlu0 %v650, 122
  %v3862 = vpop.permute.xlu0 %3861
  %v3872 = vsel %vm1016, %v3831, 0
  %v3875 = vsel %vm1016, %v3832, 0
  %v3878 = vsel %vm1016, %v3833, 0
  %v3881 = vsel %vm1016, %v3834, 0
  %v3884 = vsel %vm1016, %v3835, 0
  %v3887 = vsel %vm1016, %v3836, 0
  %v3890 = vsel %vm1016, %v3837, 0
  %v3893 = vsel %vm1016, %v3838, 0
  %3895 = vmatprep.subr.mxu0 0.0
  %3896 = vmatpush1.msra.mxu0 %v3848
  %3897 = vmatprep.subr.mxu0 0.0
  %3898 = vmatpush1.msra.mxu0 %v3850
  %3899 = vmatprep.subr.mxu0 0.0
  %3900 = vmatpush1.msra.mxu0 %v3852
  %3901 = vmatprep.subr.mxu0 0.0
  %3902 = vmatpush1.msra.mxu0 %v3854
  %3903 = vmatprep.subr.mxu0 0.0
  %3904 = vmatpush1.msra.mxu0 %v3856
  %3905 = vmatprep.subr.mxu0 0.0
  %3906 = vmatpush1.msra.mxu0 %v3858
  %3907 = vmatprep.subr.mxu0 0.0
  %3908 = vmatpush1.msra.mxu0 %v3860
  %3909 = vmatprep.subr.mxu0 0.0
  %3910 = vmatpush1.msra.mxu0 %v3862
  %3911 = vmatprep.subr.mxu0 0.0
  %3912 = vmatpush1.msra.mxu0 0.0
  %3913 = vmatprep.subr.mxu0 0.0
  %3914 = vmatpush1.msra.mxu0 0.0
  %3915 = vmatprep.subr.mxu0 0.0
  %3916 = vmatpush1.msra.mxu0 0.0
  %3917 = vmatprep.subr.mxu0 0.0
  %3918 = vmatpush1.msra.mxu0 0.0
  %3919 = vmatprep.subr.mxu0 0.0
  %3920 = vmatpush1.msra.mxu0 0.0
  %3921 = vmatprep.subr.mxu0 0.0
  %3922 = vmatpush1.msra.mxu0 0.0
  %3923 = vmatprep.subr.mxu0 0.0
  %3924 = vmatpush1.msra.mxu0 0.0
  %3925 = vmatprep.subr.mxu0 0.0
  %3926 = vmatpush1.msra.mxu0 0.0
  %3927 = vmatprep.subr.mxu0 0.0
  %3928 = vmatpush1.msra.mxu0 0.0
  %3929 = vmatprep.subr.mxu0 0.0
  %3930 = vmatpush1.msra.mxu0 0.0
  %3931 = vmatprep.subr.mxu0 0.0
  %3932 = vmatpush1.msra.mxu0 0.0
  %3933 = vmatprep.subr.mxu0 0.0
  %3934 = vmatpush1.msra.mxu0 0.0
  %3935 = vmatprep.subr.mxu0 0.0
  %3936 = vmatpush1.msra.mxu0 0.0
  %3937 = vmatprep.subr.mxu0 0.0
  %3938 = vmatpush1.msra.mxu0 0.0
  %3939 = vmatprep.subr.mxu0 0.0
  %3940 = vmatpush1.msra.mxu0 0.0
  %3941 = vmatprep.subr.mxu0 0.0
  %3942 = vmatpush1.msra.mxu0 0.0
  %3943 = vmatprep.subr.mxu0 0.0
  %3944 = vmatpush1.msra.mxu0 0.0
  %3945 = vmatprep.subr.mxu0 0.0
  %3946 = vmatpush1.msra.mxu0 0.0
  %3947 = vmatprep.subr.mxu0 0.0
  %3948 = vmatpush1.msra.mxu0 0.0
  %3949 = vmatprep.subr.mxu0 0.0
  %3950 = vmatpush1.msra.mxu0 0.0
  %3951 = vmatprep.subr.mxu0 0.0
  %3952 = vmatpush1.msra.mxu0 0.0
  %3953 = vmatprep.subr.mxu0 0.0
  %3954 = vmatpush1.msra.mxu0 0.0
  %3955 = vmatprep.subr.mxu0 0.0
  %3956 = vmatpush1.msra.mxu0 0.0
  %3957 = vmatprep.subr.mxu0 0.0
  %3958 = vmatpush1.msra.mxu0 0.0
  %3959 = vmatprep.mubr.f32.mxu0 0.0
  %3960 = vmatmul.mubr.f32.gmra.mrb[0].mxu0 %v3872
  %v3961 = vpop.f32.mrb[0].mxu0
  %v3962 = vadd.f32 0.0, %v3961
  %v3963 = vpop.f32.mrb[0].mxu0
  %3964 = vmatprep.mubr.f32.mxu0 0.0
  %3965 = vmatmul.mubr.f32.gmra.mrb[0].mxu0 %v3875
  %v3966 = vpop.f32.mrb[0].mxu0
  %v3967 = vadd.f32 0.0, %v3966
  %v3968 = vpop.f32.mrb[0].mxu0
  %3969 = vmatprep.mubr.f32.mxu0 0.0
  %3970 = vmatmul.mubr.f32.gmra.mrb[0].mxu0 %v3878
  %v3971 = vpop.f32.mrb[0].mxu0
  %v3972 = vadd.f32 0.0, %v3971
  %v3973 = vpop.f32.mrb[0].mxu0
  %3974 = vmatprep.mubr.f32.mxu0 0.0
  %3975 = vmatmul.mubr.f32.gmra.mrb[0].mxu0 %v3881
  %v3976 = vpop.f32.mrb[0].mxu0
  %v3977 = vadd.f32 0.0, %v3976
  %v3978 = vpop.f32.mrb[0].mxu0
  %3979 = vmatprep.mubr.f32.mxu0 0.0
  %3980 = vmatmul.mubr.f32.gmra.mrb[0].mxu0 %v3884
  %v3981 = vpop.f32.mrb[0].mxu0
  %v3982 = vadd.f32 0.0, %v3981
  %v3983 = vpop.f32.mrb[0].mxu0
  %3984 = vmatprep.mubr.f32.mxu0 0.0
  %3985 = vmatmul.mubr.f32.gmra.mrb[0].mxu0 %v3887
  %v3986 = vpop.f32.mrb[0].mxu0
  %v3987 = vadd.f32 0.0, %v3986
  %v3988 = vpop.f32.mrb[0].mxu0
  %3989 = vmatprep.mubr.f32.mxu0 0.0
  %3990 = vmatmul.mubr.f32.gmra.mrb[0].mxu0 %v3890
  %v3991 = vpop.f32.mrb[0].mxu0
  %v3992 = vadd.f32 0.0, %v3991
  %v3993 = vpop.f32.mrb[0].mxu0
  %3994 = vmatprep.mubr.f32.mxu0 0.0
  %3995 = vmatmul.mubr.f32.gmra.mrb[0].mxu0 %v3893
  %v3996 = vpop.f32.mrb[0].mxu0
  %v3997 = vadd.f32 0.0, %v3996
  %v3998 = vpop.f32.mrb[0].mxu0
  %3999 = vdwg.mxu0
  %4000 = vrot.lane.b32.xlu0 %v655, 122
  %v4001 = vpop.permute.xlu0 %4000
  %4002 = vrot.lane.b32.xlu0 %v660, 122
  %v4003 = vpop.permute.xlu0 %4002
  %4004 = vrot.lane.b32.xlu0 %v665, 122
  %v4005 = vpop.permute.xlu0 %4004
  %4006 = vrot.lane.b32.xlu0 %v670, 122
  %v4007 = vpop.permute.xlu0 %4006
  %4008 = vrot.lane.b32.xlu0 %v675, 122
  %v4009 = vpop.permute.xlu0 %4008
  %4010 = vrot.lane.b32.xlu0 %v680, 122
  %v4011 = vpop.permute.xlu0 %4010
  %4012 = vrot.lane.b32.xlu0 %v685, 122
  %v4013 = vpop.permute.xlu0 %4012
  %4014 = vrot.lane.b32.xlu0 %v690, 122
  %v4015 = vpop.permute.xlu0 %4014
  %v4025 = vsel %vm1016, %v3839, 0
  %v4028 = vsel %vm1016, %v3840, 0
  %v4031 = vsel %vm1016, %v3841, 0
  %v4034 = vsel %vm1016, %v3842, 0
  %v4037 = vsel %vm1016, %v3843, 0
  %v4040 = vsel %vm1016, %v3844, 0
  %v4043 = vsel %vm1016, %v3845, 0
  %v4046 = vsel %vm1016, %v3846, 0
  %4048 = vmatprep.subr.mxu0 0.0
  %4049 = vmatpush1.msra.mxu0 %v4001
  %4050 = vmatprep.subr.mxu0 0.0
  %4051 = vmatpush1.msra.mxu0 %v4003
  %4052 = vmatprep.subr.mxu0 0.0
  %4053 = vmatpush1.msra.mxu0 %v4005
  %4054 = vmatprep.subr.mxu0 0.0
  %4055 = vmatpush1.msra.mxu0 %v4007
  %4056 = vmatprep.subr.mxu0 0.0
  %4057 = vmatpush1.msra.mxu0 %v4009
  %4058 = vmatprep.subr.mxu0 0.0
  %4059 = vmatpush1.msra.mxu0 %v4011
  %4060 = vmatprep.subr.mxu0 0.0
  %4061 = vmatpush1.msra.mxu0 %v4013
  %4062 = vmatprep.subr.mxu0 0.0
  %4063 = vmatpush1.msra.mxu0 %v4015
  %4064 = vmatprep.subr.mxu0 0.0
  %4065 = vmatpush1.msra.mxu0 0.0
  %4066 = vmatprep.subr.mxu0 0.0
  %4067 = vmatpush1.msra.mxu0 0.0
  %4068 = vmatprep.subr.mxu0 0.0
  %4069 = vmatpush1.msra.mxu0 0.0
  %4070 = vmatprep.subr.mxu0 0.0
  %4071 = vmatpush1.msra.mxu0 0.0
  %4072 = vmatprep.subr.mxu0 0.0
  %4073 = vmatpush1.msra.mxu0 0.0
  %4074 = vmatprep.subr.mxu0 0.0
  %4075 = vmatpush1.msra.mxu0 0.0
  %4076 = vmatprep.subr.mxu0 0.0
  %4077 = vmatpush1.msra.mxu0 0.0
  %4078 = vmatprep.subr.mxu0 0.0
  %4079 = vmatpush1.msra.mxu0 0.0
  %4080 = vmatprep.subr.mxu0 0.0
  %4081 = vmatpush1.msra.mxu0 0.0
  %4082 = vmatprep.subr.mxu0 0.0
  %4083 = vmatpush1.msra.mxu0 0.0
  %4084 = vmatprep.subr.mxu0 0.0
  %4085 = vmatpush1.msra.mxu0 0.0
  %4086 = vmatprep.subr.mxu0 0.0
  %4087 = vmatpush1.msra.mxu0 0.0
  %4088 = vmatprep.subr.mxu0 0.0
  %4089 = vmatpush1.msra.mxu0 0.0
  %4090 = vmatprep.subr.mxu0 0.0
  %4091 = vmatpush1.msra.mxu0 0.0
  %4092 = vmatprep.subr.mxu0 0.0
  %4093 = vmatpush1.msra.mxu0 0.0
  %4094 = vmatprep.subr.mxu0 0.0
  %4095 = vmatpush1.msra.mxu0 0.0
  %4096 = vmatprep.subr.mxu0 0.0
  %4097 = vmatpush1.msra.mxu0 0.0
  %4098 = vmatprep.subr.mxu0 0.0
  %4099 = vmatpush1.msra.mxu0 0.0
  %4100 = vmatprep.subr.mxu0 0.0
  %4101 = vmatpush1.msra.mxu0 0.0
  %4102 = vmatprep.subr.mxu0 0.0
  %4103 = vmatpush1.msra.mxu0 0.0
  %4104 = vmatprep.subr.mxu0 0.0
  %4105 = vmatpush1.msra.mxu0 0.0
  %4106 = vmatprep.subr.mxu0 0.0
  %4107 = vmatpush1.msra.mxu0 0.0
  %4108 = vmatprep.subr.mxu0 0.0
  %4109 = vmatpush1.msra.mxu0 0.0
  %4110 = vmatprep.subr.mxu0 0.0
  %4111 = vmatpush1.msra.mxu0 0.0
  %4112 = vmatprep.mubr.f32.mxu0 0.0
  %4113 = vmatmul.mubr.f32.gmra.mrb[0].mxu0 %v4025
  %v4114 = vpop.f32.mrb[0].mxu0
  %v4115 = vadd.f32 0.0, %v4114
  %v4116 = vpop.f32.mrb[0].mxu0
  %4117 = vmatprep.mubr.f32.mxu0 0.0
  %4118 = vmatmul.mubr.f32.gmra.mrb[0].mxu0 %v4028
  %v4119 = vpop.f32.mrb[0].mxu0
  %v4120 = vadd.f32 0.0, %v4119
  %v4121 = vpop.f32.mrb[0].mxu0
  %4122 = vmatprep.mubr.f32.mxu0 0.0
  %4123 = vmatmul.mubr.f32.gmra.mrb[0].mxu0 %v4031
  %v4124 = vpop.f32.mrb[0].mxu0
  %v4125 = vadd.f32 0.0, %v4124
  %v4126 = vpop.f32.mrb[0].mxu0
  %4127 = vmatprep.mubr.f32.mxu0 0.0
  %4128 = vmatmul.mubr.f32.gmra.mrb[0].mxu0 %v4034
  %v4129 = vpop.f32.mrb[0].mxu0
  %v4130 = vadd.f32 0.0, %v4129
  %v4131 = vpop.f32.mrb[0].mxu0
  %4132 = vmatprep.mubr.f32.mxu0 0.0
  %4133 = vmatmul.mubr.f32.gmra.mrb[0].mxu0 %v4037
  %v4134 = vpop.f32.mrb[0].mxu0
  %v4135 = vadd.f32 0.0, %v4134
  %v4136 = vpop.f32.mrb[0].mxu0
  %4137 = vmatprep.mubr.f32.mxu0 0.0
  %4138 = vmatmul.mubr.f32.gmra.mrb[0].mxu0 %v4040
  %v4139 = vpop.f32.mrb[0].mxu0
  %v4140 = vadd.f32 0.0, %v4139
  %v4141 = vpop.f32.mrb[0].mxu0
  %4142 = vmatprep.mubr.f32.mxu0 0.0
  %4143 = vmatmul.mubr.f32.gmra.mrb[0].mxu0 %v4043
  %v4144 = vpop.f32.mrb[0].mxu0
  %v4145 = vadd.f32 0.0, %v4144
  %v4146 = vpop.f32.mrb[0].mxu0
  %4147 = vmatprep.mubr.f32.mxu0 0.0
  %4148 = vmatmul.mubr.f32.gmra.mrb[0].mxu0 %v4046
  %v4149 = vpop.f32.mrb[0].mxu0
  %v4150 = vadd.f32 0.0, %v4149
  %v4151 = vpop.f32.mrb[0].mxu0
  %4152 = vdwg.mxu0
  %4169 = vrot.lane.b32.xlu0 %v3962, 6
  %v4170 = vpop.permute.xlu0 %4169
  %4171 = vrot.lane.b32.xlu0 %v3967, 6
  %v4172 = vpop.permute.xlu0 %4171
  %4173 = vrot.lane.b32.xlu0 %v3972, 6
  %v4174 = vpop.permute.xlu0 %4173
  %4175 = vrot.lane.b32.xlu0 %v3977, 6
  %v4176 = vpop.permute.xlu0 %4175
  %4177 = vrot.lane.b32.xlu0 %v3982, 6
  %v4178 = vpop.permute.xlu0 %4177
  %4179 = vrot.lane.b32.xlu0 %v3987, 6
  %v4180 = vpop.permute.xlu0 %4179
  %4181 = vrot.lane.b32.xlu0 %v3992, 6
  %v4182 = vpop.permute.xlu0 %4181
  %4183 = vrot.lane.b32.xlu0 %v3997, 6
  %v4184 = vpop.permute.xlu0 %4183
  %4185 = vrot.lane.b32.xlu0 %v4115, 6
  %v4186 = vpop.permute.xlu0 %4185
  %4187 = vrot.lane.b32.xlu0 %v4120, 6
  %v4188 = vpop.permute.xlu0 %4187
  %4189 = vrot.lane.b32.xlu0 %v4125, 6
  %v4190 = vpop.permute.xlu0 %4189
  %4191 = vrot.lane.b32.xlu0 %v4130, 6
  %v4192 = vpop.permute.xlu0 %4191
  %4193 = vrot.lane.b32.xlu0 %v4135, 6
  %v4194 = vpop.permute.xlu0 %4193
  %4195 = vrot.lane.b32.xlu0 %v4140, 6
  %v4196 = vpop.permute.xlu0 %4195
  %4197 = vrot.lane.b32.xlu0 %v4145, 6
  %v4198 = vpop.permute.xlu0 %4197
  %4199 = vrot.lane.b32.xlu0 %v4150, 6
  %v4200 = vpop.permute.xlu0 %4199
  %vm4217 = vcmask 64560
  %4218 = vst.msk [vmem:[#allocation2] sm:$0xff] %vm4217, %v4170
  %4219 = vst.msk [vmem:[#allocation2 + $0x8] sm:$0xff] %vm4217, %v4172
  %4220 = vst.msk [vmem:[#allocation2 + $0x10] sm:$0xff] %vm4217, %v4174
  %4221 = vst.msk [vmem:[#allocation2 + $0x18] sm:$0xff] %vm4217, %v4176
  %4222 = vst.msk [vmem:[#allocation2 + $0x20] sm:$0xff] %vm4217, %v4178
  %4223 = vst.msk [vmem:[#allocation2 + $0x28] sm:$0xff] %vm4217, %v4180
  %4224 = vst.msk [vmem:[#allocation2 + $0x30] sm:$0xff] %vm4217, %v4182
  %4225 = vst.msk [vmem:[#allocation2 + $0x38] sm:$0xff] %vm4217, %v4184
  %4226 = vst.msk [vmem:[#allocation2 + $0x40] sm:$0xff] %vm4217, %v4186
  %4227 = vst.msk [vmem:[#allocation2 + $0x48] sm:$0xff] %vm4217, %v4188
  %4228 = vst.msk [vmem:[#allocation2 + $0x50] sm:$0xff] %vm4217, %v4190
  %4229 = vst.msk [vmem:[#allocation2 + $0x58] sm:$0xff] %vm4217, %v4192
  %4230 = vst.msk [vmem:[#allocation2 + $0x60] sm:$0xff] %vm4217, %v4194
  %4231 = vst.msk [vmem:[#allocation2 + $0x68] sm:$0xff] %vm4217, %v4196
  %4232 = vst.msk [vmem:[#allocation2 + $0x70] sm:$0xff] %vm4217, %v4198
  %4233 = vst.msk [vmem:[#allocation2 + $0x78] sm:$0xff] %vm4217, %v4200
  %4234 = vrot.lane.b32.xlu0 %v211, 120
  %v4235 = vpop.permute.xlu0 %4234
  %4236 = vrot.lane.b32.xlu0 %v216, 120
  %v4237 = vpop.permute.xlu0 %4236
  %4238 = vrot.lane.b32.xlu0 %v221, 120
  %v4239 = vpop.permute.xlu0 %4238
  %4240 = vrot.lane.b32.xlu0 %v226, 120
  %v4241 = vpop.permute.xlu0 %4240
  %4242 = vrot.lane.b32.xlu0 %v231, 120
  %v4243 = vpop.permute.xlu0 %4242
  %4244 = vrot.lane.b32.xlu0 %v236, 120
  %v4245 = vpop.permute.xlu0 %4244
  %4246 = vrot.lane.b32.xlu0 %v241, 120
  %v4247 = vpop.permute.xlu0 %4246
  %4248 = vrot.lane.b32.xlu0 %v246, 120
  %v4249 = vpop.permute.xlu0 %4248
  %4250 = vrot.lane.b32.xlu0 %v413, 120
  %v4251 = vpop.permute.xlu0 %4250
  %4252 = vrot.lane.b32.xlu0 %v418, 120
  %v4253 = vpop.permute.xlu0 %4252
  %4254 = vrot.lane.b32.xlu0 %v423, 120
  %v4255 = vpop.permute.xlu0 %4254
  %4256 = vrot.lane.b32.xlu0 %v428, 120
  %v4257 = vpop.permute.xlu0 %4256
  %4258 = vrot.lane.b32.xlu0 %v433, 120
  %v4259 = vpop.permute.xlu0 %4258
  %4260 = vrot.lane.b32.xlu0 %v438, 120
  %v4261 = vpop.permute.xlu0 %4260
  %4262 = vrot.lane.b32.xlu0 %v443, 120
  %v4263 = vpop.permute.xlu0 %4262
  %4264 = vrot.lane.b32.xlu0 %v448, 120
  %v4265 = vpop.permute.xlu0 %4264
  %v4266 = vsel %vm693, %v4235, 0
  %v4268 = vsel %vm693, %v4237, 0
  %v4270 = vsel %vm693, %v4239, 0
  %v4272 = vsel %vm693, %v4241, 0
  %v4274 = vsel %vm693, %v4243, 0
  %v4276 = vsel %vm693, %v4245, 0
  %v4278 = vsel %vm693, %v4247, 0
  %v4280 = vsel %vm693, %v4249, 0
  %v4282 = vsel %vm693, %v4251, 0
  %v4284 = vsel %vm693, %v4253, 0
  %v4286 = vsel %vm693, %v4255, 0
  %v4288 = vsel %vm693, %v4257, 0
  %v4290 = vsel %vm693, %v4259, 0
  %v4292 = vsel %vm693, %v4261, 0
  %v4294 = vsel %vm693, %v4263, 0
  %v4296 = vsel %vm693, %v4265, 0
  %4298 = vmatprep.subr.mxu0 0.0
  %4299 = vmatpush1.xpose.msra.mxu0 %v4282
  %4300 = vmatprep.subr.mxu0 0.0
  %4301 = vmatpush1.xpose.msra.mxu0 %v4284
  %4302 = vmatprep.subr.mxu0 0.0
  %4303 = vmatpush1.xpose.msra.mxu0 %v4286
  %4304 = vmatprep.subr.mxu0 0.0
  %4305 = vmatpush1.xpose.msra.mxu0 %v4288
  %4306 = vmatprep.subr.mxu0 0.0
  %4307 = vmatpush1.xpose.msra.mxu0 %v4290
  %4308 = vmatprep.subr.mxu0 0.0
  %4309 = vmatpush1.xpose.msra.mxu0 %v4292
  %4310 = vmatprep.subr.mxu0 0.0
  %4311 = vmatpush1.xpose.msra.mxu0 %v4294
  %4312 = vmatprep.subr.mxu0 0.0
  %4313 = vmatpush1.xpose.msra.mxu0 %v4296
  %4314 = vmatprep.subr.mxu0 0.0
  %4315 = vmatpush1.xpose.msra.mxu0 0.0
  %4316 = vmatprep.subr.mxu0 0.0
  %4317 = vmatpush1.xpose.msra.mxu0 0.0
  %4318 = vmatprep.subr.mxu0 0.0
  %4319 = vmatpush1.xpose.msra.mxu0 0.0
  %4320 = vmatprep.subr.mxu0 0.0
  %4321 = vmatpush1.xpose.msra.mxu0 0.0
  %4322 = vmatprep.subr.mxu0 0.0
  %4323 = vmatpush1.xpose.msra.mxu0 0.0
  %4324 = vmatprep.subr.mxu0 0.0
  %4325 = vmatpush1.xpose.msra.mxu0 0.0
  %4326 = vmatprep.subr.mxu0 0.0
  %4327 = vmatpush1.xpose.msra.mxu0 0.0
  %4328 = vmatprep.subr.mxu0 0.0
  %4329 = vmatpush1.xpose.msra.mxu0 0.0
  %4330 = vmatprep.subr.mxu0 0.0
  %4331 = vmatpush1.xpose.msra.mxu0 0.0
  %4332 = vmatprep.subr.mxu0 0.0
  %4333 = vmatpush1.xpose.msra.mxu0 0.0
  %4334 = vmatprep.subr.mxu0 0.0
  %4335 = vmatpush1.xpose.msra.mxu0 0.0
  %4336 = vmatprep.subr.mxu0 0.0
  %4337 = vmatpush1.xpose.msra.mxu0 0.0
  %4338 = vmatprep.subr.mxu0 0.0
  %4339 = vmatpush1.xpose.msra.mxu0 0.0
  %4340 = vmatprep.subr.mxu0 0.0
  %4341 = vmatpush1.xpose.msra.mxu0 0.0
  %4342 = vmatprep.subr.mxu0 0.0
  %4343 = vmatpush1.xpose.msra.mxu0 0.0
  %4344 = vmatprep.subr.mxu0 0.0
  %4345 = vmatpush1.xpose.msra.mxu0 0.0
  %4346 = vmatprep.subr.mxu0 0.0
  %4347 = vmatpush1.xpose.msra.mxu0 0.0
  %4348 = vmatprep.subr.mxu0 0.0
  %4349 = vmatpush1.xpose.msra.mxu0 0.0
  %4350 = vmatprep.subr.mxu0 0.0
  %4351 = vmatpush1.xpose.msra.mxu0 0.0
  %4352 = vmatprep.subr.mxu0 0.0
  %4353 = vmatpush1.xpose.msra.mxu0 0.0
  %4354 = vmatprep.subr.mxu0 0.0
  %4355 = vmatpush1.xpose.msra.mxu0 0.0
  %4356 = vmatprep.subr.mxu0 0.0
  %4357 = vmatpush1.xpose.msra.mxu0 0.0
  %4358 = vmatprep.subr.mxu0 0.0
  %4359 = vmatpush1.xpose.msra.mxu0 0.0
  %4360 = vmatprep.subr.mxu0 0.0
  %4361 = vmatpush1.xpose.msra.mxu0 0.0
  %4362 = vmatprep.mubr.f32.mxu0 0.0
  %4363 = vmatmul.mubr.f32.gmra.mrb[0].mxu0 %v4266
  %v4364 = vpop.f32.mrb[0].mxu0
  %v4365 = vadd.f32 0.0, %v4364
  %v4366 = vpop.f32.mrb[0].mxu0
  %4367 = vmatprep.mubr.f32.mxu0 0.0
  %4368 = vmatmul.mubr.f32.gmra.mrb[0].mxu0 %v4268
  %v4369 = vpop.f32.mrb[0].mxu0
  %v4370 = vadd.f32 0.0, %v4369
  %v4371 = vpop.f32.mrb[0].mxu0
  %4372 = vmatprep.mubr.f32.mxu0 0.0
  %4373 = vmatmul.mubr.f32.gmra.mrb[0].mxu0 %v4270
  %v4374 = vpop.f32.mrb[0].mxu0
  %v4375 = vadd.f32 0.0, %v4374
  %v4376 = vpop.f32.mrb[0].mxu0
  %4377 = vmatprep.mubr.f32.mxu0 0.0
  %4378 = vmatmul.mubr.f32.gmra.mrb[0].mxu0 %v4272
  %v4379 = vpop.f32.mrb[0].mxu0
  %v4380 = vadd.f32 0.0, %v4379
  %v4381 = vpop.f32.mrb[0].mxu0
  %4382 = vmatprep.mubr.f32.mxu0 0.0
  %4383 = vmatmul.mubr.f32.gmra.mrb[0].mxu0 %v4274
  %v4384 = vpop.f32.mrb[0].mxu0
  %v4385 = vadd.f32 0.0, %v4384
  %v4386 = vpop.f32.mrb[0].mxu0
  %4387 = vmatprep.mubr.f32.mxu0 0.0
  %4388 = vmatmul.mubr.f32.gmra.mrb[0].mxu0 %v4276
  %v4389 = vpop.f32.mrb[0].mxu0
  %v4390 = vadd.f32 0.0, %v4389
  %v4391 = vpop.f32.mrb[0].mxu0
  %4392 = vmatprep.mubr.f32.mxu0 0.0
  %4393 = vmatmul.mubr.f32.gmra.mrb[0].mxu0 %v4278
  %v4394 = vpop.f32.mrb[0].mxu0
  %v4395 = vadd.f32 0.0, %v4394
  %v4396 = vpop.f32.mrb[0].mxu0
  %4397 = vmatprep.mubr.f32.mxu0 0.0
  %4398 = vmatmul.mubr.f32.gmra.mrb[0].mxu0 %v4280
  %v4399 = vpop.f32.mrb[0].mxu0
  %v4400 = vadd.f32 0.0, %v4399
  %v4401 = vpop.f32.mrb[0].mxu0
  %4402 = vdwg.mxu0
  %4403 = vrot.lane.b32.xlu0 %v251, 120
  %v4404 = vpop.permute.xlu0 %4403
  %4405 = vrot.lane.b32.xlu0 %v256, 120
  %v4406 = vpop.permute.xlu0 %4405
  %4407 = vrot.lane.b32.xlu0 %v261, 120
  %v4408 = vpop.permute.xlu0 %4407
  %4409 = vrot.lane.b32.xlu0 %v266, 120
  %v4410 = vpop.permute.xlu0 %4409
  %4411 = vrot.lane.b32.xlu0 %v271, 120
  %v4412 = vpop.permute.xlu0 %4411
  %4413 = vrot.lane.b32.xlu0 %v276, 120
  %v4414 = vpop.permute.xlu0 %4413
  %4415 = vrot.lane.b32.xlu0 %v281, 120
  %v4416 = vpop.permute.xlu0 %4415
  %4417 = vrot.lane.b32.xlu0 %v286, 120
  %v4418 = vpop.permute.xlu0 %4417
  %4419 = vrot.lane.b32.xlu0 %v453, 120
  %v4420 = vpop.permute.xlu0 %4419
  %4421 = vrot.lane.b32.xlu0 %v458, 120
  %v4422 = vpop.permute.xlu0 %4421
  %4423 = vrot.lane.b32.xlu0 %v463, 120
  %v4424 = vpop.permute.xlu0 %4423
  %4425 = vrot.lane.b32.xlu0 %v468, 120
  %v4426 = vpop.permute.xlu0 %4425
  %4427 = vrot.lane.b32.xlu0 %v473, 120
  %v4428 = vpop.permute.xlu0 %4427
  %4429 = vrot.lane.b32.xlu0 %v478, 120
  %v4430 = vpop.permute.xlu0 %4429
  %4431 = vrot.lane.b32.xlu0 %v483, 120
  %v4432 = vpop.permute.xlu0 %4431
  %4433 = vrot.lane.b32.xlu0 %v488, 120
  %v4434 = vpop.permute.xlu0 %4433
  %v4435 = vsel %vm693, %v4404, 0
  %v4437 = vsel %vm693, %v4406, 0
  %v4439 = vsel %vm693, %v4408, 0
  %v4441 = vsel %vm693, %v4410, 0
  %v4443 = vsel %vm693, %v4412, 0
  %v4445 = vsel %vm693, %v4414, 0
  %v4447 = vsel %vm693, %v4416, 0
  %v4449 = vsel %vm693, %v4418, 0
  %v4451 = vsel %vm693, %v4420, 0
  %v4453 = vsel %vm693, %v4422, 0
  %v4455 = vsel %vm693, %v4424, 0
  %v4457 = vsel %vm693, %v4426, 0
  %v4459 = vsel %vm693, %v4428, 0
  %v4461 = vsel %vm693, %v4430, 0
  %v4463 = vsel %vm693, %v4432, 0
  %v4465 = vsel %vm693, %v4434, 0
  %4467 = vmatprep.subr.mxu0 0.0
  %4468 = vmatpush1.xpose.msra.mxu0 %v4451
  %4469 = vmatprep.subr.mxu0 0.0
  %4470 = vmatpush1.xpose.msra.mxu0 %v4453
  %4471 = vmatprep.subr.mxu0 0.0
  %4472 = vmatpush1.xpose.msra.mxu0 %v4455
  %4473 = vmatprep.subr.mxu0 0.0
  %4474 = vmatpush1.xpose.msra.mxu0 %v4457
  %4475 = vmatprep.subr.mxu0 0.0
  %4476 = vmatpush1.xpose.msra.mxu0 %v4459
  %4477 = vmatprep.subr.mxu0 0.0
  %4478 = vmatpush1.xpose.msra.mxu0 %v4461
  %4479 = vmatprep.subr.mxu0 0.0
  %4480 = vmatpush1.xpose.msra.mxu0 %v4463
  %4481 = vmatprep.subr.mxu0 0.0
  %4482 = vmatpush1.xpose.msra.mxu0 %v4465
  %4483 = vmatprep.subr.mxu0 0.0
  %4484 = vmatpush1.xpose.msra.mxu0 0.0
  %4485 = vmatprep.subr.mxu0 0.0
  %4486 = vmatpush1.xpose.msra.mxu0 0.0
  %4487 = vmatprep.subr.mxu0 0.0
  %4488 = vmatpush1.xpose.msra.mxu0 0.0
  %4489 = vmatprep.subr.mxu0 0.0
  %4490 = vmatpush1.xpose.msra.mxu0 0.0
  %4491 = vmatprep.subr.mxu0 0.0
  %4492 = vmatpush1.xpose.msra.mxu0 0.0
  %4493 = vmatprep.subr.mxu0 0.0
  %4494 = vmatpush1.xpose.msra.mxu0 0.0
  %4495 = vmatprep.subr.mxu0 0.0
  %4496 = vmatpush1.xpose.msra.mxu0 0.0
  %4497 = vmatprep.subr.mxu0 0.0
  %4498 = vmatpush1.xpose.msra.mxu0 0.0
  %4499 = vmatprep.subr.mxu0 0.0
  %4500 = vmatpush1.xpose.msra.mxu0 0.0
  %4501 = vmatprep.subr.mxu0 0.0
  %4502 = vmatpush1.xpose.msra.mxu0 0.0
  %4503 = vmatprep.subr.mxu0 0.0
  %4504 = vmatpush1.xpose.msra.mxu0 0.0
  %4505 = vmatprep.subr.mxu0 0.0
  %4506 = vmatpush1.xpose.msra.mxu0 0.0
  %4507 = vmatprep.subr.mxu0 0.0
  %4508 = vmatpush1.xpose.msra.mxu0 0.0
  %4509 = vmatprep.subr.mxu0 0.0
  %4510 = vmatpush1.xpose.msra.mxu0 0.0
  %4511 = vmatprep.subr.mxu0 0.0
  %4512 = vmatpush1.xpose.msra.mxu0 0.0
  %4513 = vmatprep.subr.mxu0 0.0
  %4514 = vmatpush1.xpose.msra.mxu0 0.0
  %4515 = vmatprep.subr.mxu0 0.0
  %4516 = vmatpush1.xpose.msra.mxu0 0.0
  %4517 = vmatprep.subr.mxu0 0.0
  %4518 = vmatpush1.xpose.msra.mxu0 0.0
  %4519 = vmatprep.subr.mxu0 0.0
  %4520 = vmatpush1.xpose.msra.mxu0 0.0
  %4521 = vmatprep.subr.mxu0 0.0
  %4522 = vmatpush1.xpose.msra.mxu0 0.0
  %4523 = vmatprep.subr.mxu0 0.0
  %4524 = vmatpush1.xpose.msra.mxu0 0.0
  %4525 = vmatprep.subr.mxu0 0.0
  %4526 = vmatpush1.xpose.msra.mxu0 0.0
  %4527 = vmatprep.subr.mxu0 0.0
  %4528 = vmatpush1.xpose.msra.mxu0 0.0
  %4529 = vmatprep.subr.mxu0 0.0
  %4530 = vmatpush1.xpose.msra.mxu0 0.0
  %4531 = vmatprep.mubr.f32.mxu0 0.0
  %4532 = vmatmul.mubr.f32.gmra.mrb[0].mxu0 %v4435
  %v4533 = vpop.f32.mrb[0].mxu0
  %v4534 = vadd.f32 0.0, %v4533
  %v4535 = vpop.f32.mrb[0].mxu0
  %4536 = vmatprep.mubr.f32.mxu0 0.0
  %4537 = vmatmul.mubr.f32.gmra.mrb[0].mxu0 %v4437
  %v4538 = vpop.f32.mrb[0].mxu0
  %v4539 = vadd.f32 0.0, %v4538
  %v4540 = vpop.f32.mrb[0].mxu0
  %4541 = vmatprep.mubr.f32.mxu0 0.0
  %4542 = vmatmul.mubr.f32.gmra.mrb[0].mxu0 %v4439
  %v4543 = vpop.f32.mrb[0].mxu0
  %v4544 = vadd.f32 0.0, %v4543
  %v4545 = vpop.f32.mrb[0].mxu0
  %4546 = vmatprep.mubr.f32.mxu0 0.0
  %4547 = vmatmul.mubr.f32.gmra.mrb[0].mxu0 %v4441
  %v4548 = vpop.f32.mrb[0].mxu0
  %v4549 = vadd.f32 0.0, %v4548
  %v4550 = vpop.f32.mrb[0].mxu0
  %4551 = vmatprep.mubr.f32.mxu0 0.0
  %4552 = vmatmul.mubr.f32.gmra.mrb[0].mxu0 %v4443
  %v4553 = vpop.f32.mrb[0].mxu0
  %v4554 = vadd.f32 0.0, %v4553
  %v4555 = vpop.f32.mrb[0].mxu0
  %4556 = vmatprep.mubr.f32.mxu0 0.0
  %4557 = vmatmul.mubr.f32.gmra.mrb[0].mxu0 %v4445
  %v4558 = vpop.f32.mrb[0].mxu0
  %v4559 = vadd.f32 0.0, %v4558
  %v4560 = vpop.f32.mrb[0].mxu0
  %4561 = vmatprep.mubr.f32.mxu0 0.0
  %4562 = vmatmul.mubr.f32.gmra.mrb[0].mxu0 %v4447
  %v4563 = vpop.f32.mrb[0].mxu0
  %v4564 = vadd.f32 0.0, %v4563
  %v4565 = vpop.f32.mrb[0].mxu0
  %4566 = vmatprep.mubr.f32.mxu0 0.0
  %4567 = vmatmul.mubr.f32.gmra.mrb[0].mxu0 %v4449
  %v4568 = vpop.f32.mrb[0].mxu0
  %v4569 = vadd.f32 0.0, %v4568
  %v4570 = vpop.f32.mrb[0].mxu0
  %4571 = vdwg.mxu0
  %v4572 = vmul.f32 %v4365, 0.70710677
  %v4573 = vmul.f32 %v4370, 0.70710677
  %v4574 = vmul.f32 %v4375, 0.70710677
  %v4575 = vmul.f32 %v4380, 0.70710677
  %v4576 = vmul.f32 %v4385, 0.70710677
  %v4577 = vmul.f32 %v4390, 0.70710677
  %v4578 = vmul.f32 %v4395, 0.70710677
  %v4579 = vmul.f32 %v4400, 0.70710677
  %v4580 = vmul.f32 %v4534, 0.70710677
  %v4581 = vmul.f32 %v4539, 0.70710677
  %v4582 = vmul.f32 %v4544, 0.70710677
  %v4583 = vmul.f32 %v4549, 0.70710677
  %v4584 = vmul.f32 %v4554, 0.70710677
  %v4585 = vmul.f32 %v4559, 0.70710677
  %v4586 = vmul.f32 %v4564, 0.70710677
  %v4587 = vmul.f32 %v4569, 0.70710677
  %v4588 = vsel %vm1016, %v4572, -inf
  %4589 = vmax.xlane.f32.xlu0 %v4588
  %v4590 = vpop.xlane.xlu0 %4589
  %v4591 = vsel %vm1016, %v4573, -inf
  %4592 = vmax.xlane.f32.xlu0 %v4591
  %v4593 = vpop.xlane.xlu0 %4592
  %v4594 = vsel %vm1016, %v4574, -inf
  %4595 = vmax.xlane.f32.xlu0 %v4594
  %v4596 = vpop.xlane.xlu0 %4595
  %v4597 = vsel %vm1016, %v4575, -inf
  %4598 = vmax.xlane.f32.xlu0 %v4597
  %v4599 = vpop.xlane.xlu0 %4598
  %v4600 = vsel %vm1016, %v4576, -inf
  %4601 = vmax.xlane.f32.xlu0 %v4600
  %v4602 = vpop.xlane.xlu0 %4601
  %v4603 = vsel %vm1016, %v4577, -inf
  %4604 = vmax.xlane.f32.xlu0 %v4603
  %v4605 = vpop.xlane.xlu0 %4604
  %v4606 = vsel %vm1016, %v4578, -inf
  %4607 = vmax.xlane.f32.xlu0 %v4606
  %v4608 = vpop.xlane.xlu0 %4607
  %v4609 = vsel %vm1016, %v4579, -inf
  %4610 = vmax.xlane.f32.xlu0 %v4609
  %v4611 = vpop.xlane.xlu0 %4610
  %v4612 = vsel %vm1016, %v4580, -inf
  %4613 = vmax.xlane.f32.xlu0 %v4612
  %v4614 = vpop.xlane.xlu0 %4613
  %v4615 = vsel %vm1016, %v4581, -inf
  %4616 = vmax.xlane.f32.xlu0 %v4615
  %v4617 = vpop.xlane.xlu0 %4616
  %v4618 = vsel %vm1016, %v4582, -inf
  %4619 = vmax.xlane.f32.xlu0 %v4618
  %v4620 = vpop.xlane.xlu0 %4619
  %v4621 = vsel %vm1016, %v4583, -inf
  %4622 = vmax.xlane.f32.xlu0 %v4621
  %v4623 = vpop.xlane.xlu0 %4622
  %v4624 = vsel %vm1016, %v4584, -inf
  %4625 = vmax.xlane.f32.xlu0 %v4624
  %v4626 = vpop.xlane.xlu0 %4625
  %v4627 = vsel %vm1016, %v4585, -inf
  %4628 = vmax.xlane.f32.xlu0 %v4627
  %v4629 = vpop.xlane.xlu0 %4628
  %v4630 = vsel %vm1016, %v4586, -inf
  %4631 = vmax.xlane.f32.xlu0 %v4630
  %v4632 = vpop.xlane.xlu0 %4631
  %v4633 = vsel %vm1016, %v4587, -inf
  %4634 = vmax.xlane.f32.xlu0 %v4633
  %v4635 = vpop.xlane.xlu0 %4634
  %v4636 = vsub.f32 %v4572, %v4590
  %v4637 = vsub.f32 %v4573, %v4593
  %v4638 = vsub.f32 %v4574, %v4596
  %v4639 = vsub.f32 %v4575, %v4599
  %v4640 = vsub.f32 %v4576, %v4602
  %v4641 = vsub.f32 %v4577, %v4605
  %v4642 = vsub.f32 %v4578, %v4608
  %v4643 = vsub.f32 %v4579, %v4611
  %v4644 = vsub.f32 %v4580, %v4614
  %v4645 = vsub.f32 %v4581, %v4617
  %v4646 = vsub.f32 %v4582, %v4620
  %v4647 = vsub.f32 %v4583, %v4623
  %v4648 = vsub.f32 %v4584, %v4626
  %v4649 = vsub.f32 %v4585, %v4629
  %v4650 = vsub.f32 %v4586, %v4632
  %v4651 = vsub.f32 %v4587, %v4635
  %v4652 = vmul.f32 %v4636, 1.442695
  %v4653 = vpow.pop %v4652
  %v4654 = vmul.f32 %v4637, 1.442695
  %v4655 = vpow.pop %v4654
  %v4656 = vmul.f32 %v4638, 1.442695
  %v4657 = vpow.pop %v4656
  %v4658 = vmul.f32 %v4639, 1.442695
  %v4659 = vpow.pop %v4658
  %v4660 = vmul.f32 %v4640, 1.442695
  %v4661 = vpow.pop %v4660
  %v4662 = vmul.f32 %v4641, 1.442695
  %v4663 = vpow.pop %v4662
  %v4664 = vmul.f32 %v4642, 1.442695
  %v4665 = vpow.pop %v4664
  %v4666 = vmul.f32 %v4643, 1.442695
  %v4667 = vpow.pop %v4666
  %v4668 = vmul.f32 %v4644, 1.442695
  %v4669 = vpow.pop %v4668
  %v4670 = vmul.f32 %v4645, 1.442695
  %v4671 = vpow.pop %v4670
  %v4672 = vmul.f32 %v4646, 1.442695
  %v4673 = vpow.pop %v4672
  %v4674 = vmul.f32 %v4647, 1.442695
  %v4675 = vpow.pop %v4674
  %v4676 = vmul.f32 %v4648, 1.442695
  %v4677 = vpow.pop %v4676
  %v4678 = vmul.f32 %v4649, 1.442695
  %v4679 = vpow.pop %v4678
  %v4680 = vmul.f32 %v4650, 1.442695
  %v4681 = vpow.pop %v4680
  %v4682 = vmul.f32 %v4651, 1.442695
  %v4683 = vpow.pop %v4682
  %v4684 = vsel %vm1016, %v4653, 0.0
  %4685 = vadd.xlane.f32.xlu0 %v4684
  %v4686 = vpop.xlane.xlu0 %4685
  %v4687 = vsel %vm1016, %v4655, 0.0
  %4688 = vadd.xlane.f32.xlu0 %v4687
  %v4689 = vpop.xlane.xlu0 %4688
  %v4690 = vsel %vm1016, %v4657, 0.0
  %4691 = vadd.xlane.f32.xlu0 %v4690
  %v4692 = vpop.xlane.xlu0 %4691
  %v4693 = vsel %vm1016, %v4659, 0.0
  %4694 = vadd.xlane.f32.xlu0 %v4693
  %v4695 = vpop.xlane.xlu0 %4694
  %v4696 = vsel %vm1016, %v4661, 0.0
  %4697 = vadd.xlane.f32.xlu0 %v4696
  %v4698 = vpop.xlane.xlu0 %4697
  %v4699 = vsel %vm1016, %v4663, 0.0
  %4700 = vadd.xlane.f32.xlu0 %v4699
  %v4701 = vpop.xlane.xlu0 %4700
  %v4702 = vsel %vm1016, %v4665, 0.0
  %4703 = vadd.xlane.f32.xlu0 %v4702
  %v4704 = vpop.xlane.xlu0 %4703
  %v4705 = vsel %vm1016, %v4667, 0.0
  %4706 = vadd.xlane.f32.xlu0 %v4705
  %v4707 = vpop.xlane.xlu0 %4706
  %v4708 = vsel %vm1016, %v4669, 0.0
  %4709 = vadd.xlane.f32.xlu0 %v4708
  %v4710 = vpop.xlane.xlu0 %4709
  %v4711 = vsel %vm1016, %v4671, 0.0
  %4712 = vadd.xlane.f32.xlu0 %v4711
  %v4713 = vpop.xlane.xlu0 %4712
  %v4714 = vsel %vm1016, %v4673, 0.0
  %4715 = vadd.xlane.f32.xlu0 %v4714
  %v4716 = vpop.xlane.xlu0 %4715
  %v4717 = vsel %vm1016, %v4675, 0.0
  %4718 = vadd.xlane.f32.xlu0 %v4717
  %v4719 = vpop.xlane.xlu0 %4718
  %v4720 = vsel %vm1016, %v4677, 0.0
  %4721 = vadd.xlane.f32.xlu0 %v4720
  %v4722 = vpop.xlane.xlu0 %4721
  %v4723 = vsel %vm1016, %v4679, 0.0
  %4724 = vadd.xlane.f32.xlu0 %v4723
  %v4725 = vpop.xlane.xlu0 %4724
  %v4726 = vsel %vm1016, %v4681, 0.0
  %4727 = vadd.xlane.f32.xlu0 %v4726
  %v4728 = vpop.xlane.xlu0 %4727
  %v4729 = vsel %vm1016, %v4683, 0.0
  %4730 = vadd.xlane.f32.xlu0 %v4729
  %v4731 = vpop.xlane.xlu0 %4730
  %v4732 = vrcp.pop %v4686
  %v4733 = vrcp.pop %v4689
  %v4734 = vrcp.pop %v4692
  %v4735 = vrcp.pop %v4695
  %v4736 = vrcp.pop %v4698
  %v4737 = vrcp.pop %v4701
  %v4738 = vrcp.pop %v4704
  %v4739 = vrcp.pop %v4707
  %v4740 = vrcp.pop %v4710
  %v4741 = vrcp.pop %v4713
  %v4742 = vrcp.pop %v4716
  %v4743 = vrcp.pop %v4719
  %v4744 = vrcp.pop %v4722
  %v4745 = vrcp.pop %v4725
  %v4746 = vrcp.pop %v4728
  %v4747 = vrcp.pop %v4731
  %v4748 = vmul.f32 %v4653, %v4732
  %v4749 = vmul.f32 %v4655, %v4733
  %v4750 = vmul.f32 %v4657, %v4734
  %v4751 = vmul.f32 %v4659, %v4735
  %v4752 = vmul.f32 %v4661, %v4736
  %v4753 = vmul.f32 %v4663, %v4737
  %v4754 = vmul.f32 %v4665, %v4738
  %v4755 = vmul.f32 %v4667, %v4739
  %v4756 = vmul.f32 %v4669, %v4740
  %v4757 = vmul.f32 %v4671, %v4741
  %v4758 = vmul.f32 %v4673, %v4742
  %v4759 = vmul.f32 %v4675, %v4743
  %v4760 = vmul.f32 %v4677, %v4744
  %v4761 = vmul.f32 %v4679, %v4745
  %v4762 = vmul.f32 %v4681, %v4746
  %v4763 = vmul.f32 %v4683, %v4747
  %4764 = vrot.lane.b32.xlu0 %v615, 120
  %v4765 = vpop.permute.xlu0 %4764
  %4766 = vrot.lane.b32.xlu0 %v620, 120
  %v4767 = vpop.permute.xlu0 %4766
  %4768 = vrot.lane.b32.xlu0 %v625, 120
  %v4769 = vpop.permute.xlu0 %4768
  %4770 = vrot.lane.b32.xlu0 %v630, 120
  %v4771 = vpop.permute.xlu0 %4770
  %4772 = vrot.lane.b32.xlu0 %v635, 120
  %v4773 = vpop.permute.xlu0 %4772
  %4774 = vrot.lane.b32.xlu0 %v640, 120
  %v4775 = vpop.permute.xlu0 %4774
  %4776 = vrot.lane.b32.xlu0 %v645, 120
  %v4777 = vpop.permute.xlu0 %4776
  %4778 = vrot.lane.b32.xlu0 %v650, 120
  %v4779 = vpop.permute.xlu0 %4778
  %v4789 = vsel %vm1016, %v4748, 0
  %v4792 = vsel %vm1016, %v4749, 0
  %v4795 = vsel %vm1016, %v4750, 0
  %v4798 = vsel %vm1016, %v4751, 0
  %v4801 = vsel %vm1016, %v4752, 0
  %v4804 = vsel %vm1016, %v4753, 0
  %v4807 = vsel %vm1016, %v4754, 0
  %v4810 = vsel %vm1016, %v4755, 0
  %4812 = vmatprep.subr.mxu0 0.0
  %4813 = vmatpush1.msra.mxu0 %v4765
  %4814 = vmatprep.subr.mxu0 0.0
  %4815 = vmatpush1.msra.mxu0 %v4767
  %4816 = vmatprep.subr.mxu0 0.0
  %4817 = vmatpush1.msra.mxu0 %v4769
  %4818 = vmatprep.subr.mxu0 0.0
  %4819 = vmatpush1.msra.mxu0 %v4771
  %4820 = vmatprep.subr.mxu0 0.0
  %4821 = vmatpush1.msra.mxu0 %v4773
  %4822 = vmatprep.subr.mxu0 0.0
  %4823 = vmatpush1.msra.mxu0 %v4775
  %4824 = vmatprep.subr.mxu0 0.0
  %4825 = vmatpush1.msra.mxu0 %v4777
  %4826 = vmatprep.subr.mxu0 0.0
  %4827 = vmatpush1.msra.mxu0 %v4779
  %4828 = vmatprep.subr.mxu0 0.0
  %4829 = vmatpush1.msra.mxu0 0.0
  %4830 = vmatprep.subr.mxu0 0.0
  %4831 = vmatpush1.msra.mxu0 0.0
  %4832 = vmatprep.subr.mxu0 0.0
  %4833 = vmatpush1.msra.mxu0 0.0
  %4834 = vmatprep.subr.mxu0 0.0
  %4835 = vmatpush1.msra.mxu0 0.0
  %4836 = vmatprep.subr.mxu0 0.0
  %4837 = vmatpush1.msra.mxu0 0.0
  %4838 = vmatprep.subr.mxu0 0.0
  %4839 = vmatpush1.msra.mxu0 0.0
  %4840 = vmatprep.subr.mxu0 0.0
  %4841 = vmatpush1.msra.mxu0 0.0
  %4842 = vmatprep.subr.mxu0 0.0
  %4843 = vmatpush1.msra.mxu0 0.0
  %4844 = vmatprep.subr.mxu0 0.0
  %4845 = vmatpush1.msra.mxu0 0.0
  %4846 = vmatprep.subr.mxu0 0.0
  %4847 = vmatpush1.msra.mxu0 0.0
  %4848 = vmatprep.subr.mxu0 0.0
  %4849 = vmatpush1.msra.mxu0 0.0
  %4850 = vmatprep.subr.mxu0 0.0
  %4851 = vmatpush1.msra.mxu0 0.0
  %4852 = vmatprep.subr.mxu0 0.0
  %4853 = vmatpush1.msra.mxu0 0.0
  %4854 = vmatprep.subr.mxu0 0.0
  %4855 = vmatpush1.msra.mxu0 0.0
  %4856 = vmatprep.subr.mxu0 0.0
  %4857 = vmatpush1.msra.mxu0 0.0
  %4858 = vmatprep.subr.mxu0 0.0
  %4859 = vmatpush1.msra.mxu0 0.0
  %4860 = vmatprep.subr.mxu0 0.0
  %4861 = vmatpush1.msra.mxu0 0.0
  %4862 = vmatprep.subr.mxu0 0.0
  %4863 = vmatpush1.msra.mxu0 0.0
  %4864 = vmatprep.subr.mxu0 0.0
  %4865 = vmatpush1.msra.mxu0 0.0
  %4866 = vmatprep.subr.mxu0 0.0
  %4867 = vmatpush1.msra.mxu0 0.0
  %4868 = vmatprep.subr.mxu0 0.0
  %4869 = vmatpush1.msra.mxu0 0.0
  %4870 = vmatprep.subr.mxu0 0.0
  %4871 = vmatpush1.msra.mxu0 0.0
  %4872 = vmatprep.subr.mxu0 0.0
  %4873 = vmatpush1.msra.mxu0 0.0
  %4874 = vmatprep.subr.mxu0 0.0
  %4875 = vmatpush1.msra.mxu0 0.0
  %4876 = vmatprep.mubr.f32.mxu0 0.0
  %4877 = vmatmul.mubr.f32.gmra.mrb[0].mxu0 %v4789
  %v4878 = vpop.f32.mrb[0].mxu0
  %v4879 = vadd.f32 0.0, %v4878
  %v4880 = vpop.f32.mrb[0].mxu0
  %4881 = vmatprep.mubr.f32.mxu0 0.0
  %4882 = vmatmul.mubr.f32.gmra.mrb[0].mxu0 %v4792
  %v4883 = vpop.f32.mrb[0].mxu0
  %v4884 = vadd.f32 0.0, %v4883
  %v4885 = vpop.f32.mrb[0].mxu0
  %4886 = vmatprep.mubr.f32.mxu0 0.0
  %4887 = vmatmul.mubr.f32.gmra.mrb[0].mxu0 %v4795
  %v4888 = vpop.f32.mrb[0].mxu0
  %v4889 = vadd.f32 0.0, %v4888
  %v4890 = vpop.f32.mrb[0].mxu0
  %4891 = vmatprep.mubr.f32.mxu0 0.0
  %4892 = vmatmul.mubr.f32.gmra.mrb[0].mxu0 %v4798
  %v4893 = vpop.f32.mrb[0].mxu0
  %v4894 = vadd.f32 0.0, %v4893
  %v4895 = vpop.f32.mrb[0].mxu0
  %4896 = vmatprep.mubr.f32.mxu0 0.0
  %4897 = vmatmul.mubr.f32.gmra.mrb[0].mxu0 %v4801
  %v4898 = vpop.f32.mrb[0].mxu0
  %v4899 = vadd.f32 0.0, %v4898
  %v4900 = vpop.f32.mrb[0].mxu0
  %4901 = vmatprep.mubr.f32.mxu0 0.0
  %4902 = vmatmul.mubr.f32.gmra.mrb[0].mxu0 %v4804
  %v4903 = vpop.f32.mrb[0].mxu0
  %v4904 = vadd.f32 0.0, %v4903
  %v4905 = vpop.f32.mrb[0].mxu0
  %4906 = vmatprep.mubr.f32.mxu0 0.0
  %4907 = vmatmul.mubr.f32.gmra.mrb[0].mxu0 %v4807
  %v4908 = vpop.f32.mrb[0].mxu0
  %v4909 = vadd.f32 0.0, %v4908
  %v4910 = vpop.f32.mrb[0].mxu0
  %4911 = vmatprep.mubr.f32.mxu0 0.0
  %4912 = vmatmul.mubr.f32.gmra.mrb[0].mxu0 %v4810
  %v4913 = vpop.f32.mrb[0].mxu0
  %v4914 = vadd.f32 0.0, %v4913
  %v4915 = vpop.f32.mrb[0].mxu0
  %4916 = vdwg.mxu0
  %4917 = vrot.lane.b32.xlu0 %v655, 120
  %v4918 = vpop.permute.xlu0 %4917
  %4919 = vrot.lane.b32.xlu0 %v660, 120
  %v4920 = vpop.permute.xlu0 %4919
  %4921 = vrot.lane.b32.xlu0 %v665, 120
  %v4922 = vpop.permute.xlu0 %4921
  %4923 = vrot.lane.b32.xlu0 %v670, 120
  %v4924 = vpop.permute.xlu0 %4923
  %4925 = vrot.lane.b32.xlu0 %v675, 120
  %v4926 = vpop.permute.xlu0 %4925
  %4927 = vrot.lane.b32.xlu0 %v680, 120
  %v4928 = vpop.permute.xlu0 %4927
  %4929 = vrot.lane.b32.xlu0 %v685, 120
  %v4930 = vpop.permute.xlu0 %4929
  %4931 = vrot.lane.b32.xlu0 %v690, 120
  %v4932 = vpop.permute.xlu0 %4931
  %v4942 = vsel %vm1016, %v4756, 0
  %v4945 = vsel %vm1016, %v4757, 0
  %v4948 = vsel %vm1016, %v4758, 0
  %v4951 = vsel %vm1016, %v4759, 0
  %v4954 = vsel %vm1016, %v4760, 0
  %v4957 = vsel %vm1016, %v4761, 0
  %v4960 = vsel %vm1016, %v4762, 0
  %v4963 = vsel %vm1016, %v4763, 0
  %4965 = vmatprep.subr.mxu0 0.0
  %4966 = vmatpush1.msra.mxu0 %v4918
  %4967 = vmatprep.subr.mxu0 0.0
  %4968 = vmatpush1.msra.mxu0 %v4920
  %4969 = vmatprep.subr.mxu0 0.0
  %4970 = vmatpush1.msra.mxu0 %v4922
  %4971 = vmatprep.subr.mxu0 0.0
  %4972 = vmatpush1.msra.mxu0 %v4924
  %4973 = vmatprep.subr.mxu0 0.0
  %4974 = vmatpush1.msra.mxu0 %v4926
  %4975 = vmatprep.subr.mxu0 0.0
  %4976 = vmatpush1.msra.mxu0 %v4928
  %4977 = vmatprep.subr.mxu0 0.0
  %4978 = vmatpush1.msra.mxu0 %v4930
  %4979 = vmatprep.subr.mxu0 0.0
  %4980 = vmatpush1.msra.mxu0 %v4932
  %4981 = vmatprep.subr.mxu0 0.0
  %4982 = vmatpush1.msra.mxu0 0.0
  %4983 = vmatprep.subr.mxu0 0.0
  %4984 = vmatpush1.msra.mxu0 0.0
  %4985 = vmatprep.subr.mxu0 0.0
  %4986 = vmatpush1.msra.mxu0 0.0
  %4987 = vmatprep.subr.mxu0 0.0
  %4988 = vmatpush1.msra.mxu0 0.0
  %4989 = vmatprep.subr.mxu0 0.0
  %4990 = vmatpush1.msra.mxu0 0.0
  %4991 = vmatprep.subr.mxu0 0.0
  %4992 = vmatpush1.msra.mxu0 0.0
  %4993 = vmatprep.subr.mxu0 0.0
  %4994 = vmatpush1.msra.mxu0 0.0
  %4995 = vmatprep.subr.mxu0 0.0
  %4996 = vmatpush1.msra.mxu0 0.0
  %4997 = vmatprep.subr.mxu0 0.0
  %4998 = vmatpush1.msra.mxu0 0.0
  %4999 = vmatprep.subr.mxu0 0.0
  %5000 = vmatpush1.msra.mxu0 0.0
  %5001 = vmatprep.subr.mxu0 0.0
  %5002 = vmatpush1.msra.mxu0 0.0
  %5003 = vmatprep.subr.mxu0 0.0
  %5004 = vmatpush1.msra.mxu0 0.0
  %5005 = vmatprep.subr.mxu0 0.0
  %5006 = vmatpush1.msra.mxu0 0.0
  %5007 = vmatprep.subr.mxu0 0.0
  %5008 = vmatpush1.msra.mxu0 0.0
  %5009 = vmatprep.subr.mxu0 0.0
  %5010 = vmatpush1.msra.mxu0 0.0
  %5011 = vmatprep.subr.mxu0 0.0
  %5012 = vmatpush1.msra.mxu0 0.0
  %5013 = vmatprep.subr.mxu0 0.0
  %5014 = vmatpush1.msra.mxu0 0.0
  %5015 = vmatprep.subr.mxu0 0.0
  %5016 = vmatpush1.msra.mxu0 0.0
  %5017 = vmatprep.subr.mxu0 0.0
  %5018 = vmatpush1.msra.mxu0 0.0
  %5019 = vmatprep.subr.mxu0 0.0
  %5020 = vmatpush1.msra.mxu0 0.0
  %5021 = vmatprep.subr.mxu0 0.0
  %5022 = vmatpush1.msra.mxu0 0.0
  %5023 = vmatprep.subr.mxu0 0.0
  %5024 = vmatpush1.msra.mxu0 0.0
  %5025 = vmatprep.subr.mxu0 0.0
  %5026 = vmatpush1.msra.mxu0 0.0
  %5027 = vmatprep.subr.mxu0 0.0
  %5028 = vmatpush1.msra.mxu0 0.0
  %5029 = vmatprep.mubr.f32.mxu0 0.0
  %5030 = vmatmul.mubr.f32.gmra.mrb[0].mxu0 %v4942
  %v5031 = vpop.f32.mrb[0].mxu0
  %v5032 = vadd.f32 0.0, %v5031
  %v5033 = vpop.f32.mrb[0].mxu0
  %5034 = vmatprep.mubr.f32.mxu0 0.0
  %5035 = vmatmul.mubr.f32.gmra.mrb[0].mxu0 %v4945
  %v5036 = vpop.f32.mrb[0].mxu0
  %v5037 = vadd.f32 0.0, %v5036
  %v5038 = vpop.f32.mrb[0].mxu0
  %5039 = vmatprep.mubr.f32.mxu0 0.0
  %5040 = vmatmul.mubr.f32.gmra.mrb[0].mxu0 %v4948
  %v5041 = vpop.f32.mrb[0].mxu0
  %v5042 = vadd.f32 0.0, %v5041
  %v5043 = vpop.f32.mrb[0].mxu0
  %5044 = vmatprep.mubr.f32.mxu0 0.0
  %5045 = vmatmul.mubr.f32.gmra.mrb[0].mxu0 %v4951
  %v5046 = vpop.f32.mrb[0].mxu0
  %v5047 = vadd.f32 0.0, %v5046
  %v5048 = vpop.f32.mrb[0].mxu0
  %5049 = vmatprep.mubr.f32.mxu0 0.0
  %5050 = vmatmul.mubr.f32.gmra.mrb[0].mxu0 %v4954
  %v5051 = vpop.f32.mrb[0].mxu0
  %v5052 = vadd.f32 0.0, %v5051
  %v5053 = vpop.f32.mrb[0].mxu0
  %5054 = vmatprep.mubr.f32.mxu0 0.0
  %5055 = vmatmul.mubr.f32.gmra.mrb[0].mxu0 %v4957
  %v5056 = vpop.f32.mrb[0].mxu0
  %v5057 = vadd.f32 0.0, %v5056
  %v5058 = vpop.f32.mrb[0].mxu0
  %5059 = vmatprep.mubr.f32.mxu0 0.0
  %5060 = vmatmul.mubr.f32.gmra.mrb[0].mxu0 %v4960
  %v5061 = vpop.f32.mrb[0].mxu0
  %v5062 = vadd.f32 0.0, %v5061
  %v5063 = vpop.f32.mrb[0].mxu0
  %5064 = vmatprep.mubr.f32.mxu0 0.0
  %5065 = vmatmul.mubr.f32.gmra.mrb[0].mxu0 %v4963
  %v5066 = vpop.f32.mrb[0].mxu0
  %v5067 = vadd.f32 0.0, %v5066
  %v5068 = vpop.f32.mrb[0].mxu0
  %5069 = vdwg.mxu0
  %5086 = vrot.lane.b32.xlu0 %v4879, 8
  %v5087 = vpop.permute.xlu0 %5086
  %5088 = vrot.lane.b32.xlu0 %v4884, 8
  %v5089 = vpop.permute.xlu0 %5088
  %5090 = vrot.lane.b32.xlu0 %v4889, 8
  %v5091 = vpop.permute.xlu0 %5090
  %5092 = vrot.lane.b32.xlu0 %v4894, 8
  %v5093 = vpop.permute.xlu0 %5092
  %5094 = vrot.lane.b32.xlu0 %v4899, 8
  %v5095 = vpop.permute.xlu0 %5094
  %5096 = vrot.lane.b32.xlu0 %v4904, 8
  %v5097 = vpop.permute.xlu0 %5096
  %5098 = vrot.lane.b32.xlu0 %v4909, 8
  %v5099 = vpop.permute.xlu0 %5098
  %5100 = vrot.lane.b32.xlu0 %v4914, 8
  %v5101 = vpop.permute.xlu0 %5100
  %5102 = vrot.lane.b32.xlu0 %v5032, 8
  %v5103 = vpop.permute.xlu0 %5102
  %5104 = vrot.lane.b32.xlu0 %v5037, 8
  %v5105 = vpop.permute.xlu0 %5104
  %5106 = vrot.lane.b32.xlu0 %v5042, 8
  %v5107 = vpop.permute.xlu0 %5106
  %5108 = vrot.lane.b32.xlu0 %v5047, 8
  %v5109 = vpop.permute.xlu0 %5108
  %5110 = vrot.lane.b32.xlu0 %v5052, 8
  %v5111 = vpop.permute.xlu0 %5110
  %5112 = vrot.lane.b32.xlu0 %v5057, 8
  %v5113 = vpop.permute.xlu0 %5112
  %5114 = vrot.lane.b32.xlu0 %v5062, 8
  %v5115 = vpop.permute.xlu0 %5114
  %5116 = vrot.lane.b32.xlu0 %v5067, 8
  %v5117 = vpop.permute.xlu0 %5116
  %vm5134 = vcmask 80960
  %5135 = vst.msk [vmem:[#allocation2] sm:$0xff] %vm5134, %v5087
  %5136 = vst.msk [vmem:[#allocation2 + $0x8] sm:$0xff] %vm5134, %v5089
  %5137 = vst.msk [vmem:[#allocation2 + $0x10] sm:$0xff] %vm5134, %v5091
  %5138 = vst.msk [vmem:[#allocation2 + $0x18] sm:$0xff] %vm5134, %v5093
  %5139 = vst.msk [vmem:[#allocation2 + $0x20] sm:$0xff] %vm5134, %v5095
  %5140 = vst.msk [vmem:[#allocation2 + $0x28] sm:$0xff] %vm5134, %v5097
  %5141 = vst.msk [vmem:[#allocation2 + $0x30] sm:$0xff] %vm5134, %v5099
  %5142 = vst.msk [vmem:[#allocation2 + $0x38] sm:$0xff] %vm5134, %v5101
  %5143 = vst.msk [vmem:[#allocation2 + $0x40] sm:$0xff] %vm5134, %v5103
  %5144 = vst.msk [vmem:[#allocation2 + $0x48] sm:$0xff] %vm5134, %v5105
  %5145 = vst.msk [vmem:[#allocation2 + $0x50] sm:$0xff] %vm5134, %v5107
  %5146 = vst.msk [vmem:[#allocation2 + $0x58] sm:$0xff] %vm5134, %v5109
  %5147 = vst.msk [vmem:[#allocation2 + $0x60] sm:$0xff] %vm5134, %v5111
  %5148 = vst.msk [vmem:[#allocation2 + $0x68] sm:$0xff] %vm5134, %v5113
  %5149 = vst.msk [vmem:[#allocation2 + $0x70] sm:$0xff] %vm5134, %v5115
  %5150 = vst.msk [vmem:[#allocation2 + $0x78] sm:$0xff] %vm5134, %v5117
  %5151 = vrot.lane.b32.xlu0 %v211, 118
  %v5152 = vpop.permute.xlu0 %5151
  %5153 = vrot.lane.b32.xlu0 %v216, 118
  %v5154 = vpop.permute.xlu0 %5153
  %5155 = vrot.lane.b32.xlu0 %v221, 118
  %v5156 = vpop.permute.xlu0 %5155
  %5157 = vrot.lane.b32.xlu0 %v226, 118
  %v5158 = vpop.permute.xlu0 %5157
  %5159 = vrot.lane.b32.xlu0 %v231, 118
  %v5160 = vpop.permute.xlu0 %5159
  %5161 = vrot.lane.b32.xlu0 %v236, 118
  %v5162 = vpop.permute.xlu0 %5161
  %5163 = vrot.lane.b32.xlu0 %v241, 118
  %v5164 = vpop.permute.xlu0 %5163
  %5165 = vrot.lane.b32.xlu0 %v246, 118
  %v5166 = vpop.permute.xlu0 %5165
  %5167 = vrot.lane.b32.xlu0 %v413, 118
  %v5168 = vpop.permute.xlu0 %5167
  %5169 = vrot.lane.b32.xlu0 %v418, 118
  %v5170 = vpop.permute.xlu0 %5169
  %5171 = vrot.lane.b32.xlu0 %v423, 118
  %v5172 = vpop.permute.xlu0 %5171
  %5173 = vrot.lane.b32.xlu0 %v428, 118
  %v5174 = vpop.permute.xlu0 %5173
  %5175 = vrot.lane.b32.xlu0 %v433, 118
  %v5176 = vpop.permute.xlu0 %5175
  %5177 = vrot.lane.b32.xlu0 %v438, 118
  %v5178 = vpop.permute.xlu0 %5177
  %5179 = vrot.lane.b32.xlu0 %v443, 118
  %v5180 = vpop.permute.xlu0 %5179
  %5181 = vrot.lane.b32.xlu0 %v448, 118
  %v5182 = vpop.permute.xlu0 %5181
  %v5183 = vsel %vm693, %v5152, 0
  %v5185 = vsel %vm693, %v5154, 0
  %v5187 = vsel %vm693, %v5156, 0
  %v5189 = vsel %vm693, %v5158, 0
  %v5191 = vsel %vm693, %v5160, 0
  %v5193 = vsel %vm693, %v5162, 0
  %v5195 = vsel %vm693, %v5164, 0
  %v5197 = vsel %vm693, %v5166, 0
  %v5199 = vsel %vm693, %v5168, 0
  %v5201 = vsel %vm693, %v5170, 0
  %v5203 = vsel %vm693, %v5172, 0
  %v5205 = vsel %vm693, %v5174, 0
  %v5207 = vsel %vm693, %v5176, 0
  %v5209 = vsel %vm693, %v5178, 0
  %v5211 = vsel %vm693, %v5180, 0
  %v5213 = vsel %vm693, %v5182, 0
  %5215 = vmatprep.subr.mxu0 0.0
  %5216 = vmatpush1.xpose.msra.mxu0 %v5199
  %5217 = vmatprep.subr.mxu0 0.0
  %5218 = vmatpush1.xpose.msra.mxu0 %v5201
  %5219 = vmatprep.subr.mxu0 0.0
  %5220 = vmatpush1.xpose.msra.mxu0 %v5203
  %5221 = vmatprep.subr.mxu0 0.0
  %5222 = vmatpush1.xpose.msra.mxu0 %v5205
  %5223 = vmatprep.subr.mxu0 0.0
  %5224 = vmatpush1.xpose.msra.mxu0 %v5207
  %5225 = vmatprep.subr.mxu0 0.0
  %5226 = vmatpush1.xpose.msra.mxu0 %v5209
  %5227 = vmatprep.subr.mxu0 0.0
  %5228 = vmatpush1.xpose.msra.mxu0 %v5211
  %5229 = vmatprep.subr.mxu0 0.0
  %5230 = vmatpush1.xpose.msra.mxu0 %v5213
  %5231 = vmatprep.subr.mxu0 0.0
  %5232 = vmatpush1.xpose.msra.mxu0 0.0
  %5233 = vmatprep.subr.mxu0 0.0
  %5234 = vmatpush1.xpose.msra.mxu0 0.0
  %5235 = vmatprep.subr.mxu0 0.0
  %5236 = vmatpush1.xpose.msra.mxu0 0.0
  %5237 = vmatprep.subr.mxu0 0.0
  %5238 = vmatpush1.xpose.msra.mxu0 0.0
  %5239 = vmatprep.subr.mxu0 0.0
  %5240 = vmatpush1.xpose.msra.mxu0 0.0
  %5241 = vmatprep.subr.mxu0 0.0
  %5242 = vmatpush1.xpose.msra.mxu0 0.0
  %5243 = vmatprep.subr.mxu0 0.0
  %5244 = vmatpush1.xpose.msra.mxu0 0.0
  %5245 = vmatprep.subr.mxu0 0.0
  %5246 = vmatpush1.xpose.msra.mxu0 0.0
  %5247 = vmatprep.subr.mxu0 0.0
  %5248 = vmatpush1.xpose.msra.mxu0 0.0
  %5249 = vmatprep.subr.mxu0 0.0
  %5250 = vmatpush1.xpose.msra.mxu0 0.0
  %5251 = vmatprep.subr.mxu0 0.0
  %5252 = vmatpush1.xpose.msra.mxu0 0.0
  %5253 = vmatprep.subr.mxu0 0.0
  %5254 = vmatpush1.xpose.msra.mxu0 0.0
  %5255 = vmatprep.subr.mxu0 0.0
  %5256 = vmatpush1.xpose.msra.mxu0 0.0
  %5257 = vmatprep.subr.mxu0 0.0
  %5258 = vmatpush1.xpose.msra.mxu0 0.0
  %5259 = vmatprep.subr.mxu0 0.0
  %5260 = vmatpush1.xpose.msra.mxu0 0.0
  %5261 = vmatprep.subr.mxu0 0.0
  %5262 = vmatpush1.xpose.msra.mxu0 0.0
  %5263 = vmatprep.subr.mxu0 0.0
  %5264 = vmatpush1.xpose.msra.mxu0 0.0
  %5265 = vmatprep.subr.mxu0 0.0
  %5266 = vmatpush1.xpose.msra.mxu0 0.0
  %5267 = vmatprep.subr.mxu0 0.0
  %5268 = vmatpush1.xpose.msra.mxu0 0.0
  %5269 = vmatprep.subr.mxu0 0.0
  %5270 = vmatpush1.xpose.msra.mxu0 0.0
  %5271 = vmatprep.subr.mxu0 0.0
  %5272 = vmatpush1.xpose.msra.mxu0 0.0
  %5273 = vmatprep.subr.mxu0 0.0
  %5274 = vmatpush1.xpose.msra.mxu0 0.0
  %5275 = vmatprep.subr.mxu0 0.0
  %5276 = vmatpush1.xpose.msra.mxu0 0.0
  %5277 = vmatprep.subr.mxu0 0.0
  %5278 = vmatpush1.xpose.msra.mxu0 0.0
  %5279 = vmatprep.mubr.f32.mxu0 0.0
  %5280 = vmatmul.mubr.f32.gmra.mrb[0].mxu0 %v5183
  %v5281 = vpop.f32.mrb[0].mxu0
  %v5282 = vadd.f32 0.0, %v5281
  %v5283 = vpop.f32.mrb[0].mxu0
  %5284 = vmatprep.mubr.f32.mxu0 0.0
  %5285 = vmatmul.mubr.f32.gmra.mrb[0].mxu0 %v5185
  %v5286 = vpop.f32.mrb[0].mxu0
  %v5287 = vadd.f32 0.0, %v5286
  %v5288 = vpop.f32.mrb[0].mxu0
  %5289 = vmatprep.mubr.f32.mxu0 0.0
  %5290 = vmatmul.mubr.f32.gmra.mrb[0].mxu0 %v5187
  %v5291 = vpop.f32.mrb[0].mxu0
  %v5292 = vadd.f32 0.0, %v5291
  %v5293 = vpop.f32.mrb[0].mxu0
  %5294 = vmatprep.mubr.f32.mxu0 0.0
  %5295 = vmatmul.mubr.f32.gmra.mrb[0].mxu0 %v5189
  %v5296 = vpop.f32.mrb[0].mxu0
  %v5297 = vadd.f32 0.0, %v5296
  %v5298 = vpop.f32.mrb[0].mxu0
  %5299 = vmatprep.mubr.f32.mxu0 0.0
  %5300 = vmatmul.mubr.f32.gmra.mrb[0].mxu0 %v5191
  %v5301 = vpop.f32.mrb[0].mxu0
  %v5302 = vadd.f32 0.0, %v5301
  %v5303 = vpop.f32.mrb[0].mxu0
  %5304 = vmatprep.mubr.f32.mxu0 0.0
  %5305 = vmatmul.mubr.f32.gmra.mrb[0].mxu0 %v5193
  %v5306 = vpop.f32.mrb[0].mxu0
  %v5307 = vadd.f32 0.0, %v5306
  %v5308 = vpop.f32.mrb[0].mxu0
  %5309 = vmatprep.mubr.f32.mxu0 0.0
  %5310 = vmatmul.mubr.f32.gmra.mrb[0].mxu0 %v5195
  %v5311 = vpop.f32.mrb[0].mxu0
  %v5312 = vadd.f32 0.0, %v5311
  %v5313 = vpop.f32.mrb[0].mxu0
  %5314 = vmatprep.mubr.f32.mxu0 0.0
  %5315 = vmatmul.mubr.f32.gmra.mrb[0].mxu0 %v5197
  %v5316 = vpop.f32.mrb[0].mxu0
  %v5317 = vadd.f32 0.0, %v5316
  %v5318 = vpop.f32.mrb[0].mxu0
  %5319 = vdwg.mxu0
  %5320 = vrot.lane.b32.xlu0 %v251, 118
  %v5321 = vpop.permute.xlu0 %5320
  %5322 = vrot.lane.b32.xlu0 %v256, 118
  %v5323 = vpop.permute.xlu0 %5322
  %5324 = vrot.lane.b32.xlu0 %v261, 118
  %v5325 = vpop.permute.xlu0 %5324
  %5326 = vrot.lane.b32.xlu0 %v266, 118
  %v5327 = vpop.permute.xlu0 %5326
  %5328 = vrot.lane.b32.xlu0 %v271, 118
  %v5329 = vpop.permute.xlu0 %5328
  %5330 = vrot.lane.b32.xlu0 %v276, 118
  %v5331 = vpop.permute.xlu0 %5330
  %5332 = vrot.lane.b32.xlu0 %v281, 118
  %v5333 = vpop.permute.xlu0 %5332
  %5334 = vrot.lane.b32.xlu0 %v286, 118
  %v5335 = vpop.permute.xlu0 %5334
  %5336 = vrot.lane.b32.xlu0 %v453, 118
  %v5337 = vpop.permute.xlu0 %5336
  %5338 = vrot.lane.b32.xlu0 %v458, 118
  %v5339 = vpop.permute.xlu0 %5338
  %5340 = vrot.lane.b32.xlu0 %v463, 118
  %v5341 = vpop.permute.xlu0 %5340
  %5342 = vrot.lane.b32.xlu0 %v468, 118
  %v5343 = vpop.permute.xlu0 %5342
  %5344 = vrot.lane.b32.xlu0 %v473, 118
  %v5345 = vpop.permute.xlu0 %5344
  %5346 = vrot.lane.b32.xlu0 %v478, 118
  %v5347 = vpop.permute.xlu0 %5346
  %5348 = vrot.lane.b32.xlu0 %v483, 118
  %v5349 = vpop.permute.xlu0 %5348
  %5350 = vrot.lane.b32.xlu0 %v488, 118
  %v5351 = vpop.permute.xlu0 %5350
  %v5352 = vsel %vm693, %v5321, 0
  %v5354 = vsel %vm693, %v5323, 0
  %v5356 = vsel %vm693, %v5325, 0
  %v5358 = vsel %vm693, %v5327, 0
  %v5360 = vsel %vm693, %v5329, 0
  %v5362 = vsel %vm693, %v5331, 0
  %v5364 = vsel %vm693, %v5333, 0
  %v5366 = vsel %vm693, %v5335, 0
  %v5368 = vsel %vm693, %v5337, 0
  %v5370 = vsel %vm693, %v5339, 0
  %v5372 = vsel %vm693, %v5341, 0
  %v5374 = vsel %vm693, %v5343, 0
  %v5376 = vsel %vm693, %v5345, 0
  %v5378 = vsel %vm693, %v5347, 0
  %v5380 = vsel %vm693, %v5349, 0
  %v5382 = vsel %vm693, %v5351, 0
  %5384 = vmatprep.subr.mxu0 0.0
  %5385 = vmatpush1.xpose.msra.mxu0 %v5368
  %5386 = vmatprep.subr.mxu0 0.0
  %5387 = vmatpush1.xpose.msra.mxu0 %v5370
  %5388 = vmatprep.subr.mxu0 0.0
  %5389 = vmatpush1.xpose.msra.mxu0 %v5372
  %5390 = vmatprep.subr.mxu0 0.0
  %5391 = vmatpush1.xpose.msra.mxu0 %v5374
  %5392 = vmatprep.subr.mxu0 0.0
  %5393 = vmatpush1.xpose.msra.mxu0 %v5376
  %5394 = vmatprep.subr.mxu0 0.0
  %5395 = vmatpush1.xpose.msra.mxu0 %v5378
  %5396 = vmatprep.subr.mxu0 0.0
  %5397 = vmatpush1.xpose.msra.mxu0 %v5380
  %5398 = vmatprep.subr.mxu0 0.0
  %5399 = vmatpush1.xpose.msra.mxu0 %v5382
  %5400 = vmatprep.subr.mxu0 0.0
  %5401 = vmatpush1.xpose.msra.mxu0 0.0
  %5402 = vmatprep.subr.mxu0 0.0
  %5403 = vmatpush1.xpose.msra.mxu0 0.0
  %5404 = vmatprep.subr.mxu0 0.0
  %5405 = vmatpush1.xpose.msra.mxu0 0.0
  %5406 = vmatprep.subr.mxu0 0.0
  %5407 = vmatpush1.xpose.msra.mxu0 0.0
  %5408 = vmatprep.subr.mxu0 0.0
  %5409 = vmatpush1.xpose.msra.mxu0 0.0
  %5410 = vmatprep.subr.mxu0 0.0
  %5411 = vmatpush1.xpose.msra.mxu0 0.0
  %5412 = vmatprep.subr.mxu0 0.0
  %5413 = vmatpush1.xpose.msra.mxu0 0.0
  %5414 = vmatprep.subr.mxu0 0.0
  %5415 = vmatpush1.xpose.msra.mxu0 0.0
  %5416 = vmatprep.subr.mxu0 0.0
  %5417 = vmatpush1.xpose.msra.mxu0 0.0
  %5418 = vmatprep.subr.mxu0 0.0
  %5419 = vmatpush1.xpose.msra.mxu0 0.0
  %5420 = vmatprep.subr.mxu0 0.0
  %5421 = vmatpush1.xpose.msra.mxu0 0.0
  %5422 = vmatprep.subr.mxu0 0.0
  %5423 = vmatpush1.xpose.msra.mxu0 0.0
  %5424 = vmatprep.subr.mxu0 0.0
  %5425 = vmatpush1.xpose.msra.mxu0 0.0
  %5426 = vmatprep.subr.mxu0 0.0
  %5427 = vmatpush1.xpose.msra.mxu0 0.0
  %5428 = vmatprep.subr.mxu0 0.0
  %5429 = vmatpush1.xpose.msra.mxu0 0.0
  %5430 = vmatprep.subr.mxu0 0.0
  %5431 = vmatpush1.xpose.msra.mxu0 0.0
  %5432 = vmatprep.subr.mxu0 0.0
  %5433 = vmatpush1.xpose.msra.mxu0 0.0
  %5434 = vmatprep.subr.mxu0 0.0
  %5435 = vmatpush1.xpose.msra.mxu0 0.0
  %5436 = vmatprep.subr.mxu0 0.0
  %5437 = vmatpush1.xpose.msra.mxu0 0.0
  %5438 = vmatprep.subr.mxu0 0.0
  %5439 = vmatpush1.xpose.msra.mxu0 0.0
  %5440 = vmatprep.subr.mxu0 0.0
  %5441 = vmatpush1.xpose.msra.mxu0 0.0
  %5442 = vmatprep.subr.mxu0 0.0
  %5443 = vmatpush1.xpose.msra.mxu0 0.0
  %5444 = vmatprep.subr.mxu0 0.0
  %5445 = vmatpush1.xpose.msra.mxu0 0.0
  %5446 = vmatprep.subr.mxu0 0.0
  %5447 = vmatpush1.xpose.msra.mxu0 0.0
  %5448 = vmatprep.mubr.f32.mxu0 0.0
  %5449 = vmatmul.mubr.f32.gmra.mrb[0].mxu0 %v5352
  %v5450 = vpop.f32.mrb[0].mxu0
  %v5451 = vadd.f32 0.0, %v5450
  %v5452 = vpop.f32.mrb[0].mxu0
  %5453 = vmatprep.mubr.f32.mxu0 0.0
  %5454 = vmatmul.mubr.f32.gmra.mrb[0].mxu0 %v5354
  %v5455 = vpop.f32.mrb[0].mxu0
  %v5456 = vadd.f32 0.0, %v5455
  %v5457 = vpop.f32.mrb[0].mxu0
  %5458 = vmatprep.mubr.f32.mxu0 0.0
  %5459 = vmatmul.mubr.f32.gmra.mrb[0].mxu0 %v5356
  %v5460 = vpop.f32.mrb[0].mxu0
  %v5461 = vadd.f32 0.0, %v5460
  %v5462 = vpop.f32.mrb[0].mxu0
  %5463 = vmatprep.mubr.f32.mxu0 0.0
  %5464 = vmatmul.mubr.f32.gmra.mrb[0].mxu0 %v5358
  %v5465 = vpop.f32.mrb[0].mxu0
  %v5466 = vadd.f32 0.0, %v5465
  %v5467 = vpop.f32.mrb[0].mxu0
  %5468 = vmatprep.mubr.f32.mxu0 0.0
  %5469 = vmatmul.mubr.f32.gmra.mrb[0].mxu0 %v5360
  %v5470 = vpop.f32.mrb[0].mxu0
  %v5471 = vadd.f32 0.0, %v5470
  %v5472 = vpop.f32.mrb[0].mxu0
  %5473 = vmatprep.mubr.f32.mxu0 0.0
  %5474 = vmatmul.mubr.f32.gmra.mrb[0].mxu0 %v5362
  %v5475 = vpop.f32.mrb[0].mxu0
  %v5476 = vadd.f32 0.0, %v5475
  %v5477 = vpop.f32.mrb[0].mxu0
  %5478 = vmatprep.mubr.f32.mxu0 0.0
  %5479 = vmatmul.mubr.f32.gmra.mrb[0].mxu0 %v5364
  %v5480 = vpop.f32.mrb[0].mxu0
  %v5481 = vadd.f32 0.0, %v5480
  %v5482 = vpop.f32.mrb[0].mxu0
  %5483 = vmatprep.mubr.f32.mxu0 0.0
  %5484 = vmatmul.mubr.f32.gmra.mrb[0].mxu0 %v5366
  %v5485 = vpop.f32.mrb[0].mxu0
  %v5486 = vadd.f32 0.0, %v5485
  %v5487 = vpop.f32.mrb[0].mxu0
  %5488 = vdwg.mxu0
  %v5489 = vmul.f32 %v5282, 0.70710677
  %v5490 = vmul.f32 %v5287, 0.70710677
  %v5491 = vmul.f32 %v5292, 0.70710677
  %v5492 = vmul.f32 %v5297, 0.70710677
  %v5493 = vmul.f32 %v5302, 0.70710677
  %v5494 = vmul.f32 %v5307, 0.70710677
  %v5495 = vmul.f32 %v5312, 0.70710677
  %v5496 = vmul.f32 %v5317, 0.70710677
  %v5497 = vmul.f32 %v5451, 0.70710677
  %v5498 = vmul.f32 %v5456, 0.70710677
  %v5499 = vmul.f32 %v5461, 0.70710677
  %v5500 = vmul.f32 %v5466, 0.70710677
  %v5501 = vmul.f32 %v5471, 0.70710677
  %v5502 = vmul.f32 %v5476, 0.70710677
  %v5503 = vmul.f32 %v5481, 0.70710677
  %v5504 = vmul.f32 %v5486, 0.70710677
  %v5505 = vsel %vm1016, %v5489, -inf
  %5506 = vmax.xlane.f32.xlu0 %v5505
  %v5507 = vpop.xlane.xlu0 %5506
  %v5508 = vsel %vm1016, %v5490, -inf
  %5509 = vmax.xlane.f32.xlu0 %v5508
  %v5510 = vpop.xlane.xlu0 %5509
  %v5511 = vsel %vm1016, %v5491, -inf
  %5512 = vmax.xlane.f32.xlu0 %v5511
  %v5513 = vpop.xlane.xlu0 %5512
  %v5514 = vsel %vm1016, %v5492, -inf
  %5515 = vmax.xlane.f32.xlu0 %v5514
  %v5516 = vpop.xlane.xlu0 %5515
  %v5517 = vsel %vm1016, %v5493, -inf
  %5518 = vmax.xlane.f32.xlu0 %v5517
  %v5519 = vpop.xlane.xlu0 %5518
  %v5520 = vsel %vm1016, %v5494, -inf
  %5521 = vmax.xlane.f32.xlu0 %v5520
  %v5522 = vpop.xlane.xlu0 %5521
  %v5523 = vsel %vm1016, %v5495, -inf
  %5524 = vmax.xlane.f32.xlu0 %v5523
  %v5525 = vpop.xlane.xlu0 %5524
  %v5526 = vsel %vm1016, %v5496, -inf
  %5527 = vmax.xlane.f32.xlu0 %v5526
  %v5528 = vpop.xlane.xlu0 %5527
  %v5529 = vsel %vm1016, %v5497, -inf
  %5530 = vmax.xlane.f32.xlu0 %v5529
  %v5531 = vpop.xlane.xlu0 %5530
  %v5532 = vsel %vm1016, %v5498, -inf
  %5533 = vmax.xlane.f32.xlu0 %v5532
  %v5534 = vpop.xlane.xlu0 %5533
  %v5535 = vsel %vm1016, %v5499, -inf
  %5536 = vmax.xlane.f32.xlu0 %v5535
  %v5537 = vpop.xlane.xlu0 %5536
  %v5538 = vsel %vm1016, %v5500, -inf
  %5539 = vmax.xlane.f32.xlu0 %v5538
  %v5540 = vpop.xlane.xlu0 %5539
  %v5541 = vsel %vm1016, %v5501, -inf
  %5542 = vmax.xlane.f32.xlu0 %v5541
  %v5543 = vpop.xlane.xlu0 %5542
  %v5544 = vsel %vm1016, %v5502, -inf
  %5545 = vmax.xlane.f32.xlu0 %v5544
  %v5546 = vpop.xlane.xlu0 %5545
  %v5547 = vsel %vm1016, %v5503, -inf
  %5548 = vmax.xlane.f32.xlu0 %v5547
  %v5549 = vpop.xlane.xlu0 %5548
  %v5550 = vsel %vm1016, %v5504, -inf
  %5551 = vmax.xlane.f32.xlu0 %v5550
  %v5552 = vpop.xlane.xlu0 %5551
  %v5553 = vsub.f32 %v5489, %v5507
  %v5554 = vsub.f32 %v5490, %v5510
  %v5555 = vsub.f32 %v5491, %v5513
  %v5556 = vsub.f32 %v5492, %v5516
  %v5557 = vsub.f32 %v5493, %v5519
  %v5558 = vsub.f32 %v5494, %v5522
  %v5559 = vsub.f32 %v5495, %v5525
  %v5560 = vsub.f32 %v5496, %v5528
  %v5561 = vsub.f32 %v5497, %v5531
  %v5562 = vsub.f32 %v5498, %v5534
  %v5563 = vsub.f32 %v5499, %v5537
  %v5564 = vsub.f32 %v5500, %v5540
  %v5565 = vsub.f32 %v5501, %v5543
  %v5566 = vsub.f32 %v5502, %v5546
  %v5567 = vsub.f32 %v5503, %v5549
  %v5568 = vsub.f32 %v5504, %v5552
  %v5569 = vmul.f32 %v5553, 1.442695
  %v5570 = vpow.pop %v5569
  %v5571 = vmul.f32 %v5554, 1.442695
  %v5572 = vpow.pop %v5571
  %v5573 = vmul.f32 %v5555, 1.442695
  %v5574 = vpow.pop %v5573
  %v5575 = vmul.f32 %v5556, 1.442695
  %v5576 = vpow.pop %v5575
  %v5577 = vmul.f32 %v5557, 1.442695
  %v5578 = vpow.pop %v5577
  %v5579 = vmul.f32 %v5558, 1.442695
  %v5580 = vpow.pop %v5579
  %v5581 = vmul.f32 %v5559, 1.442695
  %v5582 = vpow.pop %v5581
  %v5583 = vmul.f32 %v5560, 1.442695
  %v5584 = vpow.pop %v5583
  %v5585 = vmul.f32 %v5561, 1.442695
  %v5586 = vpow.pop %v5585
  %v5587 = vmul.f32 %v5562, 1.442695
  %v5588 = vpow.pop %v5587
  %v5589 = vmul.f32 %v5563, 1.442695
  %v5590 = vpow.pop %v5589
  %v5591 = vmul.f32 %v5564, 1.442695
  %v5592 = vpow.pop %v5591
  %v5593 = vmul.f32 %v5565, 1.442695
  %v5594 = vpow.pop %v5593
  %v5595 = vmul.f32 %v5566, 1.442695
  %v5596 = vpow.pop %v5595
  %v5597 = vmul.f32 %v5567, 1.442695
  %v5598 = vpow.pop %v5597
  %v5599 = vmul.f32 %v5568, 1.442695
  %v5600 = vpow.pop %v5599
  %v5601 = vsel %vm1016, %v5570, 0.0
  %5602 = vadd.xlane.f32.xlu0 %v5601
  %v5603 = vpop.xlane.xlu0 %5602
  %v5604 = vsel %vm1016, %v5572, 0.0
  %5605 = vadd.xlane.f32.xlu0 %v5604
  %v5606 = vpop.xlane.xlu0 %5605
  %v5607 = vsel %vm1016, %v5574, 0.0
  %5608 = vadd.xlane.f32.xlu0 %v5607
  %v5609 = vpop.xlane.xlu0 %5608
  %v5610 = vsel %vm1016, %v5576, 0.0
  %5611 = vadd.xlane.f32.xlu0 %v5610
  %v5612 = vpop.xlane.xlu0 %5611
  %v5613 = vsel %vm1016, %v5578, 0.0
  %5614 = vadd.xlane.f32.xlu0 %v5613
  %v5615 = vpop.xlane.xlu0 %5614
  %v5616 = vsel %vm1016, %v5580, 0.0
  %5617 = vadd.xlane.f32.xlu0 %v5616
  %v5618 = vpop.xlane.xlu0 %5617
  %v5619 = vsel %vm1016, %v5582, 0.0
  %5620 = vadd.xlane.f32.xlu0 %v5619
  %v5621 = vpop.xlane.xlu0 %5620
  %v5622 = vsel %vm1016, %v5584, 0.0
  %5623 = vadd.xlane.f32.xlu0 %v5622
  %v5624 = vpop.xlane.xlu0 %5623
  %v5625 = vsel %vm1016, %v5586, 0.0
  %5626 = vadd.xlane.f32.xlu0 %v5625
  %v5627 = vpop.xlane.xlu0 %5626
  %v5628 = vsel %vm1016, %v5588, 0.0
  %5629 = vadd.xlane.f32.xlu0 %v5628
  %v5630 = vpop.xlane.xlu0 %5629
  %v5631 = vsel %vm1016, %v5590, 0.0
  %5632 = vadd.xlane.f32.xlu0 %v5631
  %v5633 = vpop.xlane.xlu0 %5632
  %v5634 = vsel %vm1016, %v5592, 0.0
  %5635 = vadd.xlane.f32.xlu0 %v5634
  %v5636 = vpop.xlane.xlu0 %5635
  %v5637 = vsel %vm1016, %v5594, 0.0
  %5638 = vadd.xlane.f32.xlu0 %v5637
  %v5639 = vpop.xlane.xlu0 %5638
  %v5640 = vsel %vm1016, %v5596, 0.0
  %5641 = vadd.xlane.f32.xlu0 %v5640
  %v5642 = vpop.xlane.xlu0 %5641
  %v5643 = vsel %vm1016, %v5598, 0.0
  %5644 = vadd.xlane.f32.xlu0 %v5643
  %v5645 = vpop.xlane.xlu0 %5644
  %v5646 = vsel %vm1016, %v5600, 0.0
  %5647 = vadd.xlane.f32.xlu0 %v5646
  %v5648 = vpop.xlane.xlu0 %5647
  %v5649 = vrcp.pop %v5603
  %v5650 = vrcp.pop %v5606
  %v5651 = vrcp.pop %v5609
  %v5652 = vrcp.pop %v5612
  %v5653 = vrcp.pop %v5615
  %v5654 = vrcp.pop %v5618
  %v5655 = vrcp.pop %v5621
  %v5656 = vrcp.pop %v5624
  %v5657 = vrcp.pop %v5627
  %v5658 = vrcp.pop %v5630
  %v5659 = vrcp.pop %v5633
  %v5660 = vrcp.pop %v5636
  %v5661 = vrcp.pop %v5639
  %v5662 = vrcp.pop %v5642
  %v5663 = vrcp.pop %v5645
  %v5664 = vrcp.pop %v5648
  %v5665 = vmul.f32 %v5570, %v5649
  %v5666 = vmul.f32 %v5572, %v5650
  %v5667 = vmul.f32 %v5574, %v5651
  %v5668 = vmul.f32 %v5576, %v5652
  %v5669 = vmul.f32 %v5578, %v5653
  %v5670 = vmul.f32 %v5580, %v5654
  %v5671 = vmul.f32 %v5582, %v5655
  %v5672 = vmul.f32 %v5584, %v5656
  %v5673 = vmul.f32 %v5586, %v5657
  %v5674 = vmul.f32 %v5588, %v5658
  %v5675 = vmul.f32 %v5590, %v5659
  %v5676 = vmul.f32 %v5592, %v5660
  %v5677 = vmul.f32 %v5594, %v5661
  %v5678 = vmul.f32 %v5596, %v5662
  %v5679 = vmul.f32 %v5598, %v5663
  %v5680 = vmul.f32 %v5600, %v5664
  %5681 = vrot.lane.b32.xlu0 %v615, 118
  %v5682 = vpop.permute.xlu0 %5681
  %5683 = vrot.lane.b32.xlu0 %v620, 118
  %v5684 = vpop.permute.xlu0 %5683
  %5685 = vrot.lane.b32.xlu0 %v625, 118
  %v5686 = vpop.permute.xlu0 %5685
  %5687 = vrot.lane.b32.xlu0 %v630, 118
  %v5688 = vpop.permute.xlu0 %5687
  %5689 = vrot.lane.b32.xlu0 %v635, 118
  %v5690 = vpop.permute.xlu0 %5689
  %5691 = vrot.lane.b32.xlu0 %v640, 118
  %v5692 = vpop.permute.xlu0 %5691
  %5693 = vrot.lane.b32.xlu0 %v645, 118
  %v5694 = vpop.permute.xlu0 %5693
  %5695 = vrot.lane.b32.xlu0 %v650, 118
  %v5696 = vpop.permute.xlu0 %5695
  %v5706 = vsel %vm1016, %v5665, 0
  %v5709 = vsel %vm1016, %v5666, 0
  %v5712 = vsel %vm1016, %v5667, 0
  %v5715 = vsel %vm1016, %v5668, 0
  %v5718 = vsel %vm1016, %v5669, 0
  %v5721 = vsel %vm1016, %v5670, 0
  %v5724 = vsel %vm1016, %v5671, 0
  %v5727 = vsel %vm1016, %v5672, 0
  %5729 = vmatprep.subr.mxu0 0.0
  %5730 = vmatpush1.msra.mxu0 %v5682
  %5731 = vmatprep.subr.mxu0 0.0
  %5732 = vmatpush1.msra.mxu0 %v5684
  %5733 = vmatprep.subr.mxu0 0.0
  %5734 = vmatpush1.msra.mxu0 %v5686
  %5735 = vmatprep.subr.mxu0 0.0
  %5736 = vmatpush1.msra.mxu0 %v5688
  %5737 = vmatprep.subr.mxu0 0.0
  %5738 = vmatpush1.msra.mxu0 %v5690
  %5739 = vmatprep.subr.mxu0 0.0
  %5740 = vmatpush1.msra.mxu0 %v5692
  %5741 = vmatprep.subr.mxu0 0.0
  %5742 = vmatpush1.msra.mxu0 %v5694
  %5743 = vmatprep.subr.mxu0 0.0
  %5744 = vmatpush1.msra.mxu0 %v5696
  %5745 = vmatprep.subr.mxu0 0.0
  %5746 = vmatpush1.msra.mxu0 0.0
  %5747 = vmatprep.subr.mxu0 0.0
  %5748 = vmatpush1.msra.mxu0 0.0
  %5749 = vmatprep.subr.mxu0 0.0
  %5750 = vmatpush1.msra.mxu0 0.0
  %5751 = vmatprep.subr.mxu0 0.0
  %5752 = vmatpush1.msra.mxu0 0.0
  %5753 = vmatprep.subr.mxu0 0.0
  %5754 = vmatpush1.msra.mxu0 0.0
  %5755 = vmatprep.subr.mxu0 0.0
  %5756 = vmatpush1.msra.mxu0 0.0
  %5757 = vmatprep.subr.mxu0 0.0
  %5758 = vmatpush1.msra.mxu0 0.0
  %5759 = vmatprep.subr.mxu0 0.0
  %5760 = vmatpush1.msra.mxu0 0.0
  %5761 = vmatprep.subr.mxu0 0.0
  %5762 = vmatpush1.msra.mxu0 0.0
  %5763 = vmatprep.subr.mxu0 0.0
  %5764 = vmatpush1.msra.mxu0 0.0
  %5765 = vmatprep.subr.mxu0 0.0
  %5766 = vmatpush1.msra.mxu0 0.0
  %5767 = vmatprep.subr.mxu0 0.0
  %5768 = vmatpush1.msra.mxu0 0.0
  %5769 = vmatprep.subr.mxu0 0.0
  %5770 = vmatpush1.msra.mxu0 0.0
  %5771 = vmatprep.subr.mxu0 0.0
  %5772 = vmatpush1.msra.mxu0 0.0
  %5773 = vmatprep.subr.mxu0 0.0
  %5774 = vmatpush1.msra.mxu0 0.0
  %5775 = vmatprep.subr.mxu0 0.0
  %5776 = vmatpush1.msra.mxu0 0.0
  %5777 = vmatprep.subr.mxu0 0.0
  %5778 = vmatpush1.msra.mxu0 0.0
  %5779 = vmatprep.subr.mxu0 0.0
  %5780 = vmatpush1.msra.mxu0 0.0
  %5781 = vmatprep.subr.mxu0 0.0
  %5782 = vmatpush1.msra.mxu0 0.0
  %5783 = vmatprep.subr.mxu0 0.0
  %5784 = vmatpush1.msra.mxu0 0.0
  %5785 = vmatprep.subr.mxu0 0.0
  %5786 = vmatpush1.msra.mxu0 0.0
  %5787 = vmatprep.subr.mxu0 0.0
  %5788 = vmatpush1.msra.mxu0 0.0
  %5789 = vmatprep.subr.mxu0 0.0
  %5790 = vmatpush1.msra.mxu0 0.0
  %5791 = vmatprep.subr.mxu0 0.0
  %5792 = vmatpush1.msra.mxu0 0.0
  %5793 = vmatprep.mubr.f32.mxu0 0.0
  %5794 = vmatmul.mubr.f32.gmra.mrb[0].mxu0 %v5706
  %v5795 = vpop.f32.mrb[0].mxu0
  %v5796 = vadd.f32 0.0, %v5795
  %v5797 = vpop.f32.mrb[0].mxu0
  %5798 = vmatprep.mubr.f32.mxu0 0.0
  %5799 = vmatmul.mubr.f32.gmra.mrb[0].mxu0 %v5709
  %v5800 = vpop.f32.mrb[0].mxu0
  %v5801 = vadd.f32 0.0, %v5800
  %v5802 = vpop.f32.mrb[0].mxu0
  %5803 = vmatprep.mubr.f32.mxu0 0.0
  %5804 = vmatmul.mubr.f32.gmra.mrb[0].mxu0 %v5712
  %v5805 = vpop.f32.mrb[0].mxu0
  %v5806 = vadd.f32 0.0, %v5805
  %v5807 = vpop.f32.mrb[0].mxu0
  %5808 = vmatprep.mubr.f32.mxu0 0.0
  %5809 = vmatmul.mubr.f32.gmra.mrb[0].mxu0 %v5715
  %v5810 = vpop.f32.mrb[0].mxu0
  %v5811 = vadd.f32 0.0, %v5810
  %v5812 = vpop.f32.mrb[0].mxu0
  %5813 = vmatprep.mubr.f32.mxu0 0.0
  %5814 = vmatmul.mubr.f32.gmra.mrb[0].mxu0 %v5718
  %v5815 = vpop.f32.mrb[0].mxu0
  %v5816 = vadd.f32 0.0, %v5815
  %v5817 = vpop.f32.mrb[0].mxu0
  %5818 = vmatprep.mubr.f32.mxu0 0.0
  %5819 = vmatmul.mubr.f32.gmra.mrb[0].mxu0 %v5721
  %v5820 = vpop.f32.mrb[0].mxu0
  %v5821 = vadd.f32 0.0, %v5820
  %v5822 = vpop.f32.mrb[0].mxu0
  %5823 = vmatprep.mubr.f32.mxu0 0.0
  %5824 = vmatmul.mubr.f32.gmra.mrb[0].mxu0 %v5724
  %v5825 = vpop.f32.mrb[0].mxu0
  %v5826 = vadd.f32 0.0, %v5825
  %v5827 = vpop.f32.mrb[0].mxu0
  %5828 = vmatprep.mubr.f32.mxu0 0.0
  %5829 = vmatmul.mubr.f32.gmra.mrb[0].mxu0 %v5727
  %v5830 = vpop.f32.mrb[0].mxu0
  %v5831 = vadd.f32 0.0, %v5830
  %v5832 = vpop.f32.mrb[0].mxu0
  %5833 = vdwg.mxu0
  %5834 = vrot.lane.b32.xlu0 %v655, 118
  %v5835 = vpop.permute.xlu0 %5834
  %5836 = vrot.lane.b32.xlu0 %v660, 118
  %v5837 = vpop.permute.xlu0 %5836
  %5838 = vrot.lane.b32.xlu0 %v665, 118
  %v5839 = vpop.permute.xlu0 %5838
  %5840 = vrot.lane.b32.xlu0 %v670, 118
  %v5841 = vpop.permute.xlu0 %5840
  %5842 = vrot.lane.b32.xlu0 %v675, 118
  %v5843 = vpop.permute.xlu0 %5842
  %5844 = vrot.lane.b32.xlu0 %v680, 118
  %v5845 = vpop.permute.xlu0 %5844
  %5846 = vrot.lane.b32.xlu0 %v685, 118
  %v5847 = vpop.permute.xlu0 %5846
  %5848 = vrot.lane.b32.xlu0 %v690, 118
  %v5849 = vpop.permute.xlu0 %5848
  %v5859 = vsel %vm1016, %v5673, 0
  %v5862 = vsel %vm1016, %v5674, 0
  %v5865 = vsel %vm1016, %v5675, 0
  %v5868 = vsel %vm1016, %v5676, 0
  %v5871 = vsel %vm1016, %v5677, 0
  %v5874 = vsel %vm1016, %v5678, 0
  %v5877 = vsel %vm1016, %v5679, 0
  %v5880 = vsel %vm1016, %v5680, 0
  %5882 = vmatprep.subr.mxu0 0.0
  %5883 = vmatpush1.msra.mxu0 %v5835
  %5884 = vmatprep.subr.mxu0 0.0
  %5885 = vmatpush1.msra.mxu0 %v5837
  %5886 = vmatprep.subr.mxu0 0.0
  %5887 = vmatpush1.msra.mxu0 %v5839
  %5888 = vmatprep.subr.mxu0 0.0
  %5889 = vmatpush1.msra.mxu0 %v5841
  %5890 = vmatprep.subr.mxu0 0.0
  %5891 = vmatpush1.msra.mxu0 %v5843
  %5892 = vmatprep.subr.mxu0 0.0
  %5893 = vmatpush1.msra.mxu0 %v5845
  %5894 = vmatprep.subr.mxu0 0.0
  %5895 = vmatpush1.msra.mxu0 %v5847
  %5896 = vmatprep.subr.mxu0 0.0
  %5897 = vmatpush1.msra.mxu0 %v5849
  %5898 = vmatprep.subr.mxu0 0.0
  %5899 = vmatpush1.msra.mxu0 0.0
  %5900 = vmatprep.subr.mxu0 0.0
  %5901 = vmatpush1.msra.mxu0 0.0
  %5902 = vmatprep.subr.mxu0 0.0
  %5903 = vmatpush1.msra.mxu0 0.0
  %5904 = vmatprep.subr.mxu0 0.0
  %5905 = vmatpush1.msra.mxu0 0.0
  %5906 = vmatprep.subr.mxu0 0.0
  %5907 = vmatpush1.msra.mxu0 0.0
  %5908 = vmatprep.subr.mxu0 0.0
  %5909 = vmatpush1.msra.mxu0 0.0
  %5910 = vmatprep.subr.mxu0 0.0
  %5911 = vmatpush1.msra.mxu0 0.0
  %5912 = vmatprep.subr.mxu0 0.0
  %5913 = vmatpush1.msra.mxu0 0.0
  %5914 = vmatprep.subr.mxu0 0.0
  %5915 = vmatpush1.msra.mxu0 0.0
  %5916 = vmatprep.subr.mxu0 0.0
  %5917 = vmatpush1.msra.mxu0 0.0
  %5918 = vmatprep.subr.mxu0 0.0
  %5919 = vmatpush1.msra.mxu0 0.0
  %5920 = vmatprep.subr.mxu0 0.0
  %5921 = vmatpush1.msra.mxu0 0.0
  %5922 = vmatprep.subr.mxu0 0.0
  %5923 = vmatpush1.msra.mxu0 0.0
  %5924 = vmatprep.subr.mxu0 0.0
  %5925 = vmatpush1.msra.mxu0 0.0
  %5926 = vmatprep.subr.mxu0 0.0
  %5927 = vmatpush1.msra.mxu0 0.0
  %5928 = vmatprep.subr.mxu0 0.0
  %5929 = vmatpush1.msra.mxu0 0.0
  %5930 = vmatprep.subr.mxu0 0.0
  %5931 = vmatpush1.msra.mxu0 0.0
  %5932 = vmatprep.subr.mxu0 0.0
  %5933 = vmatpush1.msra.mxu0 0.0
  %5934 = vmatprep.subr.mxu0 0.0
  %5935 = vmatpush1.msra.mxu0 0.0
  %5936 = vmatprep.subr.mxu0 0.0
  %5937 = vmatpush1.msra.mxu0 0.0
  %5938 = vmatprep.subr.mxu0 0.0
  %5939 = vmatpush1.msra.mxu0 0.0
  %5940 = vmatprep.subr.mxu0 0.0
  %5941 = vmatpush1.msra.mxu0 0.0
  %5942 = vmatprep.subr.mxu0 0.0
  %5943 = vmatpush1.msra.mxu0 0.0
  %5944 = vmatprep.subr.mxu0 0.0
  %5945 = vmatpush1.msra.mxu0 0.0
  %5946 = vmatprep.mubr.f32.mxu0 0.0
  %5947 = vmatmul.mubr.f32.gmra.mrb[0].mxu0 %v5859
  %v5948 = vpop.f32.mrb[0].mxu0
  %v5949 = vadd.f32 0.0, %v5948
  %v5950 = vpop.f32.mrb[0].mxu0
  %5951 = vmatprep.mubr.f32.mxu0 0.0
  %5952 = vmatmul.mubr.f32.gmra.mrb[0].mxu0 %v5862
  %v5953 = vpop.f32.mrb[0].mxu0
  %v5954 = vadd.f32 0.0, %v5953
  %v5955 = vpop.f32.mrb[0].mxu0
  %5956 = vmatprep.mubr.f32.mxu0 0.0
  %5957 = vmatmul.mubr.f32.gmra.mrb[0].mxu0 %v5865
  %v5958 = vpop.f32.mrb[0].mxu0
  %v5959 = vadd.f32 0.0, %v5958
  %v5960 = vpop.f32.mrb[0].mxu0
  %5961 = vmatprep.mubr.f32.mxu0 0.0
  %5962 = vmatmul.mubr.f32.gmra.mrb[0].mxu0 %v5868
  %v5963 = vpop.f32.mrb[0].mxu0
  %v5964 = vadd.f32 0.0, %v5963
  %v5965 = vpop.f32.mrb[0].mxu0
  %5966 = vmatprep.mubr.f32.mxu0 0.0
  %5967 = vmatmul.mubr.f32.gmra.mrb[0].mxu0 %v5871
  %v5968 = vpop.f32.mrb[0].mxu0
  %v5969 = vadd.f32 0.0, %v5968
  %v5970 = vpop.f32.mrb[0].mxu0
  %5971 = vmatprep.mubr.f32.mxu0 0.0
  %5972 = vmatmul.mubr.f32.gmra.mrb[0].mxu0 %v5874
  %v5973 = vpop.f32.mrb[0].mxu0
  %v5974 = vadd.f32 0.0, %v5973
  %v5975 = vpop.f32.mrb[0].mxu0
  %5976 = vmatprep.mubr.f32.mxu0 0.0
  %5977 = vmatmul.mubr.f32.gmra.mrb[0].mxu0 %v5877
  %v5978 = vpop.f32.mrb[0].mxu0
  %v5979 = vadd.f32 0.0, %v5978
  %v5980 = vpop.f32.mrb[0].mxu0
  %5981 = vmatprep.mubr.f32.mxu0 0.0
  %5982 = vmatmul.mubr.f32.gmra.mrb[0].mxu0 %v5880
  %v5983 = vpop.f32.mrb[0].mxu0
  %v5984 = vadd.f32 0.0, %v5983
  %v5985 = vpop.f32.mrb[0].mxu0
  %5986 = vdwg.mxu0
  %6003 = vrot.lane.b32.xlu0 %v5796, 10
  %v6004 = vpop.permute.xlu0 %6003
  %6005 = vrot.lane.b32.xlu0 %v5801, 10
  %v6006 = vpop.permute.xlu0 %6005
  %6007 = vrot.lane.b32.xlu0 %v5806, 10
  %v6008 = vpop.permute.xlu0 %6007
  %6009 = vrot.lane.b32.xlu0 %v5811, 10
  %v6010 = vpop.permute.xlu0 %6009
  %6011 = vrot.lane.b32.xlu0 %v5816, 10
  %v6012 = vpop.permute.xlu0 %6011
  %6013 = vrot.lane.b32.xlu0 %v5821, 10
  %v6014 = vpop.permute.xlu0 %6013
  %6015 = vrot.lane.b32.xlu0 %v5826, 10
  %v6016 = vpop.permute.xlu0 %6015
  %6017 = vrot.lane.b32.xlu0 %v5831, 10
  %v6018 = vpop.permute.xlu0 %6017
  %6019 = vrot.lane.b32.xlu0 %v5949, 10
  %v6020 = vpop.permute.xlu0 %6019
  %6021 = vrot.lane.b32.xlu0 %v5954, 10
  %v6022 = vpop.permute.xlu0 %6021
  %6023 = vrot.lane.b32.xlu0 %v5959, 10
  %v6024 = vpop.permute.xlu0 %6023
  %6025 = vrot.lane.b32.xlu0 %v5964, 10
  %v6026 = vpop.permute.xlu0 %6025
  %6027 = vrot.lane.b32.xlu0 %v5969, 10
  %v6028 = vpop.permute.xlu0 %6027
  %6029 = vrot.lane.b32.xlu0 %v5974, 10
  %v6030 = vpop.permute.xlu0 %6029
  %6031 = vrot.lane.b32.xlu0 %v5979, 10
  %v6032 = vpop.permute.xlu0 %6031
  %6033 = vrot.lane.b32.xlu0 %v5984, 10
  %v6034 = vpop.permute.xlu0 %6033
  %vm6051 = vcmask 97360
  %6052 = vst.msk [vmem:[#allocation2] sm:$0xff] %vm6051, %v6004
  %6053 = vst.msk [vmem:[#allocation2 + $0x8] sm:$0xff] %vm6051, %v6006
  %6054 = vst.msk [vmem:[#allocation2 + $0x10] sm:$0xff] %vm6051, %v6008
  %6055 = vst.msk [vmem:[#allocation2 + $0x18] sm:$0xff] %vm6051, %v6010
  %6056 = vst.msk [vmem:[#allocation2 + $0x20] sm:$0xff] %vm6051, %v6012
  %6057 = vst.msk [vmem:[#allocation2 + $0x28] sm:$0xff] %vm6051, %v6014
  %6058 = vst.msk [vmem:[#allocation2 + $0x30] sm:$0xff] %vm6051, %v6016
  %6059 = vst.msk [vmem:[#allocation2 + $0x38] sm:$0xff] %vm6051, %v6018
  %6060 = vst.msk [vmem:[#allocation2 + $0x40] sm:$0xff] %vm6051, %v6020
  %6061 = vst.msk [vmem:[#allocation2 + $0x48] sm:$0xff] %vm6051, %v6022
  %6062 = vst.msk [vmem:[#allocation2 + $0x50] sm:$0xff] %vm6051, %v6024
  %6063 = vst.msk [vmem:[#allocation2 + $0x58] sm:$0xff] %vm6051, %v6026
  %6064 = vst.msk [vmem:[#allocation2 + $0x60] sm:$0xff] %vm6051, %v6028
  %6065 = vst.msk [vmem:[#allocation2 + $0x68] sm:$0xff] %vm6051, %v6030
  %6066 = vst.msk [vmem:[#allocation2 + $0x70] sm:$0xff] %vm6051, %v6032
  %6067 = vst.msk [vmem:[#allocation2 + $0x78] sm:$0xff] %vm6051, %v6034
  %6068 = vrot.lane.b32.xlu0 %v211, 116
  %v6069 = vpop.permute.xlu0 %6068
  %6070 = vrot.lane.b32.xlu0 %v216, 116
  %v6071 = vpop.permute.xlu0 %6070
  %6072 = vrot.lane.b32.xlu0 %v221, 116
  %v6073 = vpop.permute.xlu0 %6072
  %6074 = vrot.lane.b32.xlu0 %v226, 116
  %v6075 = vpop.permute.xlu0 %6074
  %6076 = vrot.lane.b32.xlu0 %v231, 116
  %v6077 = vpop.permute.xlu0 %6076
  %6078 = vrot.lane.b32.xlu0 %v236, 116
  %v6079 = vpop.permute.xlu0 %6078
  %6080 = vrot.lane.b32.xlu0 %v241, 116
  %v6081 = vpop.permute.xlu0 %6080
  %6082 = vrot.lane.b32.xlu0 %v246, 116
  %v6083 = vpop.permute.xlu0 %6082
  %6084 = vrot.lane.b32.xlu0 %v413, 116
  %v6085 = vpop.permute.xlu0 %6084
  %6086 = vrot.lane.b32.xlu0 %v418, 116
  %v6087 = vpop.permute.xlu0 %6086
  %6088 = vrot.lane.b32.xlu0 %v423, 116
  %v6089 = vpop.permute.xlu0 %6088
  %6090 = vrot.lane.b32.xlu0 %v428, 116
  %v6091 = vpop.permute.xlu0 %6090
  %6092 = vrot.lane.b32.xlu0 %v433, 116
  %v6093 = vpop.permute.xlu0 %6092
  %6094 = vrot.lane.b32.xlu0 %v438, 116
  %v6095 = vpop.permute.xlu0 %6094
  %6096 = vrot.lane.b32.xlu0 %v443, 116
  %v6097 = vpop.permute.xlu0 %6096
  %6098 = vrot.lane.b32.xlu0 %v448, 116
  %v6099 = vpop.permute.xlu0 %6098
  %v6100 = vsel %vm693, %v6069, 0
  %v6102 = vsel %vm693, %v6071, 0
  %v6104 = vsel %vm693, %v6073, 0
  %v6106 = vsel %vm693, %v6075, 0
  %v6108 = vsel %vm693, %v6077, 0
  %v6110 = vsel %vm693, %v6079, 0
  %v6112 = vsel %vm693, %v6081, 0
  %v6114 = vsel %vm693, %v6083, 0
  %v6116 = vsel %vm693, %v6085, 0
  %v6118 = vsel %vm693, %v6087, 0
  %v6120 = vsel %vm693, %v6089, 0
  %v6122 = vsel %vm693, %v6091, 0
  %v6124 = vsel %vm693, %v6093, 0
  %v6126 = vsel %vm693, %v6095, 0
  %v6128 = vsel %vm693, %v6097, 0
  %v6130 = vsel %vm693, %v6099, 0
  %6132 = vmatprep.subr.mxu0 0.0
  %6133 = vmatpush1.xpose.msra.mxu0 %v6116
  %6134 = vmatprep.subr.mxu0 0.0
  %6135 = vmatpush1.xpose.msra.mxu0 %v6118
  %6136 = vmatprep.subr.mxu0 0.0
  %6137 = vmatpush1.xpose.msra.mxu0 %v6120
  %6138 = vmatprep.subr.mxu0 0.0
  %6139 = vmatpush1.xpose.msra.mxu0 %v6122
  %6140 = vmatprep.subr.mxu0 0.0
  %6141 = vmatpush1.xpose.msra.mxu0 %v6124
  %6142 = vmatprep.subr.mxu0 0.0
  %6143 = vmatpush1.xpose.msra.mxu0 %v6126
  %6144 = vmatprep.subr.mxu0 0.0
  %6145 = vmatpush1.xpose.msra.mxu0 %v6128
  %6146 = vmatprep.subr.mxu0 0.0
  %6147 = vmatpush1.xpose.msra.mxu0 %v6130
  %6148 = vmatprep.subr.mxu0 0.0
  %6149 = vmatpush1.xpose.msra.mxu0 0.0
  %6150 = vmatprep.subr.mxu0 0.0
  %6151 = vmatpush1.xpose.msra.mxu0 0.0
  %6152 = vmatprep.subr.mxu0 0.0
  %6153 = vmatpush1.xpose.msra.mxu0 0.0
  %6154 = vmatprep.subr.mxu0 0.0
  %6155 = vmatpush1.xpose.msra.mxu0 0.0
  %6156 = vmatprep.subr.mxu0 0.0
  %6157 = vmatpush1.xpose.msra.mxu0 0.0
  %6158 = vmatprep.subr.mxu0 0.0
  %6159 = vmatpush1.xpose.msra.mxu0 0.0
  %6160 = vmatprep.subr.mxu0 0.0
  %6161 = vmatpush1.xpose.msra.mxu0 0.0
  %6162 = vmatprep.subr.mxu0 0.0
  %6163 = vmatpush1.xpose.msra.mxu0 0.0
  %6164 = vmatprep.subr.mxu0 0.0
  %6165 = vmatpush1.xpose.msra.mxu0 0.0
  %6166 = vmatprep.subr.mxu0 0.0
  %6167 = vmatpush1.xpose.msra.mxu0 0.0
  %6168 = vmatprep.subr.mxu0 0.0
  %6169 = vmatpush1.xpose.msra.mxu0 0.0
  %6170 = vmatprep.subr.mxu0 0.0
  %6171 = vmatpush1.xpose.msra.mxu0 0.0
  %6172 = vmatprep.subr.mxu0 0.0
  %6173 = vmatpush1.xpose.msra.mxu0 0.0
  %6174 = vmatprep.subr.mxu0 0.0
  %6175 = vmatpush1.xpose.msra.mxu0 0.0
  %6176 = vmatprep.subr.mxu0 0.0
  %6177 = vmatpush1.xpose.msra.mxu0 0.0
  %6178 = vmatprep.subr.mxu0 0.0
  %6179 = vmatpush1.xpose.msra.mxu0 0.0
  %6180 = vmatprep.subr.mxu0 0.0
  %6181 = vmatpush1.xpose.msra.mxu0 0.0
  %6182 = vmatprep.subr.mxu0 0.0
  %6183 = vmatpush1.xpose.msra.mxu0 0.0
  %6184 = vmatprep.subr.mxu0 0.0
  %6185 = vmatpush1.xpose.msra.mxu0 0.0
  %6186 = vmatprep.subr.mxu0 0.0
  %6187 = vmatpush1.xpose.msra.mxu0 0.0
  %6188 = vmatprep.subr.mxu0 0.0
  %6189 = vmatpush1.xpose.msra.mxu0 0.0
  %6190 = vmatprep.subr.mxu0 0.0
  %6191 = vmatpush1.xpose.msra.mxu0 0.0
  %6192 = vmatprep.subr.mxu0 0.0
  %6193 = vmatpush1.xpose.msra.mxu0 0.0
  %6194 = vmatprep.subr.mxu0 0.0
  %6195 = vmatpush1.xpose.msra.mxu0 0.0
  %6196 = vmatprep.mubr.f32.mxu0 0.0
  %6197 = vmatmul.mubr.f32.gmra.mrb[0].mxu0 %v6100
  %v6198 = vpop.f32.mrb[0].mxu0
  %v6199 = vadd.f32 0.0, %v6198
  %v6200 = vpop.f32.mrb[0].mxu0
  %6201 = vmatprep.mubr.f32.mxu0 0.0
  %6202 = vmatmul.mubr.f32.gmra.mrb[0].mxu0 %v6102
  %v6203 = vpop.f32.mrb[0].mxu0
  %v6204 = vadd.f32 0.0, %v6203
  %v6205 = vpop.f32.mrb[0].mxu0
  %6206 = vmatprep.mubr.f32.mxu0 0.0
  %6207 = vmatmul.mubr.f32.gmra.mrb[0].mxu0 %v6104
  %v6208 = vpop.f32.mrb[0].mxu0
  %v6209 = vadd.f32 0.0, %v6208
  %v6210 = vpop.f32.mrb[0].mxu0
  %6211 = vmatprep.mubr.f32.mxu0 0.0
  %6212 = vmatmul.mubr.f32.gmra.mrb[0].mxu0 %v6106
  %v6213 = vpop.f32.mrb[0].mxu0
  %v6214 = vadd.f32 0.0, %v6213
  %v6215 = vpop.f32.mrb[0].mxu0
  %6216 = vmatprep.mubr.f32.mxu0 0.0
  %6217 = vmatmul.mubr.f32.gmra.mrb[0].mxu0 %v6108
  %v6218 = vpop.f32.mrb[0].mxu0
  %v6219 = vadd.f32 0.0, %v6218
  %v6220 = vpop.f32.mrb[0].mxu0
  %6221 = vmatprep.mubr.f32.mxu0 0.0
  %6222 = vmatmul.mubr.f32.gmra.mrb[0].mxu0 %v6110
  %v6223 = vpop.f32.mrb[0].mxu0
  %v6224 = vadd.f32 0.0, %v6223
  %v6225 = vpop.f32.mrb[0].mxu0
  %6226 = vmatprep.mubr.f32.mxu0 0.0
  %6227 = vmatmul.mubr.f32.gmra.mrb[0].mxu0 %v6112
  %v6228 = vpop.f32.mrb[0].mxu0
  %v6229 = vadd.f32 0.0, %v6228
  %v6230 = vpop.f32.mrb[0].mxu0
  %6231 = vmatprep.mubr.f32.mxu0 0.0
  %6232 = vmatmul.mubr.f32.gmra.mrb[0].mxu0 %v6114
  %v6233 = vpop.f32.mrb[0].mxu0
  %v6234 = vadd.f32 0.0, %v6233
  %v6235 = vpop.f32.mrb[0].mxu0
  %6236 = vdwg.mxu0
  %6237 = vrot.lane.b32.xlu0 %v251, 116
  %v6238 = vpop.permute.xlu0 %6237
  %6239 = vrot.lane.b32.xlu0 %v256, 116
  %v6240 = vpop.permute.xlu0 %6239
  %6241 = vrot.lane.b32.xlu0 %v261, 116
  %v6242 = vpop.permute.xlu0 %6241
  %6243 = vrot.lane.b32.xlu0 %v266, 116
  %v6244 = vpop.permute.xlu0 %6243
  %6245 = vrot.lane.b32.xlu0 %v271, 116
  %v6246 = vpop.permute.xlu0 %6245
  %6247 = vrot.lane.b32.xlu0 %v276, 116
  %v6248 = vpop.permute.xlu0 %6247
  %6249 = vrot.lane.b32.xlu0 %v281, 116
  %v6250 = vpop.permute.xlu0 %6249
  %6251 = vrot.lane.b32.xlu0 %v286, 116
  %v6252 = vpop.permute.xlu0 %6251
  %6253 = vrot.lane.b32.xlu0 %v453, 116
  %v6254 = vpop.permute.xlu0 %6253
  %6255 = vrot.lane.b32.xlu0 %v458, 116
  %v6256 = vpop.permute.xlu0 %6255
  %6257 = vrot.lane.b32.xlu0 %v463, 116
  %v6258 = vpop.permute.xlu0 %6257
  %6259 = vrot.lane.b32.xlu0 %v468, 116
  %v6260 = vpop.permute.xlu0 %6259
  %6261 = vrot.lane.b32.xlu0 %v473, 116
  %v6262 = vpop.permute.xlu0 %6261
  %6263 = vrot.lane.b32.xlu0 %v478, 116
  %v6264 = vpop.permute.xlu0 %6263
  %6265 = vrot.lane.b32.xlu0 %v483, 116
  %v6266 = vpop.permute.xlu0 %6265
  %6267 = vrot.lane.b32.xlu0 %v488, 116
  %v6268 = vpop.permute.xlu0 %6267
  %v6269 = vsel %vm693, %v6238, 0
  %v6271 = vsel %vm693, %v6240, 0
  %v6273 = vsel %vm693, %v6242, 0
  %v6275 = vsel %vm693, %v6244, 0
  %v6277 = vsel %vm693, %v6246, 0
  %v6279 = vsel %vm693, %v6248, 0
  %v6281 = vsel %vm693, %v6250, 0
  %v6283 = vsel %vm693, %v6252, 0
  %v6285 = vsel %vm693, %v6254, 0
  %v6287 = vsel %vm693, %v6256, 0
  %v6289 = vsel %vm693, %v6258, 0
  %v6291 = vsel %vm693, %v6260, 0
  %v6293 = vsel %vm693, %v6262, 0
  %v6295 = vsel %vm693, %v6264, 0
  %v6297 = vsel %vm693, %v6266, 0
  %v6299 = vsel %vm693, %v6268, 0
  %6301 = vmatprep.subr.mxu0 0.0
  %6302 = vmatpush1.xpose.msra.mxu0 %v6285
  %6303 = vmatprep.subr.mxu0 0.0
  %6304 = vmatpush1.xpose.msra.mxu0 %v6287
  %6305 = vmatprep.subr.mxu0 0.0
  %6306 = vmatpush1.xpose.msra.mxu0 %v6289
  %6307 = vmatprep.subr.mxu0 0.0
  %6308 = vmatpush1.xpose.msra.mxu0 %v6291
  %6309 = vmatprep.subr.mxu0 0.0
  %6310 = vmatpush1.xpose.msra.mxu0 %v6293
  %6311 = vmatprep.subr.mxu0 0.0
  %6312 = vmatpush1.xpose.msra.mxu0 %v6295
  %6313 = vmatprep.subr.mxu0 0.0
  %6314 = vmatpush1.xpose.msra.mxu0 %v6297
  %6315 = vmatprep.subr.mxu0 0.0
  %6316 = vmatpush1.xpose.msra.mxu0 %v6299
  %6317 = vmatprep.subr.mxu0 0.0
  %6318 = vmatpush1.xpose.msra.mxu0 0.0
  %6319 = vmatprep.subr.mxu0 0.0
  %6320 = vmatpush1.xpose.msra.mxu0 0.0
  %6321 = vmatprep.subr.mxu0 0.0
  %6322 = vmatpush1.xpose.msra.mxu0 0.0
  %6323 = vmatprep.subr.mxu0 0.0
  %6324 = vmatpush1.xpose.msra.mxu0 0.0
  %6325 = vmatprep.subr.mxu0 0.0
  %6326 = vmatpush1.xpose.msra.mxu0 0.0
  %6327 = vmatprep.subr.mxu0 0.0
  %6328 = vmatpush1.xpose.msra.mxu0 0.0
  %6329 = vmatprep.subr.mxu0 0.0
  %6330 = vmatpush1.xpose.msra.mxu0 0.0
  %6331 = vmatprep.subr.mxu0 0.0
  %6332 = vmatpush1.xpose.msra.mxu0 0.0
  %6333 = vmatprep.subr.mxu0 0.0
  %6334 = vmatpush1.xpose.msra.mxu0 0.0
  %6335 = vmatprep.subr.mxu0 0.0
  %6336 = vmatpush1.xpose.msra.mxu0 0.0
  %6337 = vmatprep.subr.mxu0 0.0
  %6338 = vmatpush1.xpose.msra.mxu0 0.0
  %6339 = vmatprep.subr.mxu0 0.0
  %6340 = vmatpush1.xpose.msra.mxu0 0.0
  %6341 = vmatprep.subr.mxu0 0.0
  %6342 = vmatpush1.xpose.msra.mxu0 0.0
  %6343 = vmatprep.subr.mxu0 0.0
  %6344 = vmatpush1.xpose.msra.mxu0 0.0
  %6345 = vmatprep.subr.mxu0 0.0
  %6346 = vmatpush1.xpose.msra.mxu0 0.0
  %6347 = vmatprep.subr.mxu0 0.0
  %6348 = vmatpush1.xpose.msra.mxu0 0.0
  %6349 = vmatprep.subr.mxu0 0.0
  %6350 = vmatpush1.xpose.msra.mxu0 0.0
  %6351 = vmatprep.subr.mxu0 0.0
  %6352 = vmatpush1.xpose.msra.mxu0 0.0
  %6353 = vmatprep.subr.mxu0 0.0
  %6354 = vmatpush1.xpose.msra.mxu0 0.0
  %6355 = vmatprep.subr.mxu0 0.0
  %6356 = vmatpush1.xpose.msra.mxu0 0.0
  %6357 = vmatprep.subr.mxu0 0.0
  %6358 = vmatpush1.xpose.msra.mxu0 0.0
  %6359 = vmatprep.subr.mxu0 0.0
  %6360 = vmatpush1.xpose.msra.mxu0 0.0
  %6361 = vmatprep.subr.mxu0 0.0
  %6362 = vmatpush1.xpose.msra.mxu0 0.0
  %6363 = vmatprep.subr.mxu0 0.0
  %6364 = vmatpush1.xpose.msra.mxu0 0.0
  %6365 = vmatprep.mubr.f32.mxu0 0.0
  %6366 = vmatmul.mubr.f32.gmra.mrb[0].mxu0 %v6269
  %v6367 = vpop.f32.mrb[0].mxu0
  %v6368 = vadd.f32 0.0, %v6367
  %v6369 = vpop.f32.mrb[0].mxu0
  %6370 = vmatprep.mubr.f32.mxu0 0.0
  %6371 = vmatmul.mubr.f32.gmra.mrb[0].mxu0 %v6271
  %v6372 = vpop.f32.mrb[0].mxu0
  %v6373 = vadd.f32 0.0, %v6372
  %v6374 = vpop.f32.mrb[0].mxu0
  %6375 = vmatprep.mubr.f32.mxu0 0.0
  %6376 = vmatmul.mubr.f32.gmra.mrb[0].mxu0 %v6273
  %v6377 = vpop.f32.mrb[0].mxu0
  %v6378 = vadd.f32 0.0, %v6377
  %v6379 = vpop.f32.mrb[0].mxu0
  %6380 = vmatprep.mubr.f32.mxu0 0.0
  %6381 = vmatmul.mubr.f32.gmra.mrb[0].mxu0 %v6275
  %v6382 = vpop.f32.mrb[0].mxu0
  %v6383 = vadd.f32 0.0, %v6382
  %v6384 = vpop.f32.mrb[0].mxu0
  %6385 = vmatprep.mubr.f32.mxu0 0.0
  %6386 = vmatmul.mubr.f32.gmra.mrb[0].mxu0 %v6277
  %v6387 = vpop.f32.mrb[0].mxu0
  %v6388 = vadd.f32 0.0, %v6387
  %v6389 = vpop.f32.mrb[0].mxu0
  %6390 = vmatprep.mubr.f32.mxu0 0.0
  %6391 = vmatmul.mubr.f32.gmra.mrb[0].mxu0 %v6279
  %v6392 = vpop.f32.mrb[0].mxu0
  %v6393 = vadd.f32 0.0, %v6392
  %v6394 = vpop.f32.mrb[0].mxu0
  %6395 = vmatprep.mubr.f32.mxu0 0.0
  %6396 = vmatmul.mubr.f32.gmra.mrb[0].mxu0 %v6281
  %v6397 = vpop.f32.mrb[0].mxu0
  %v6398 = vadd.f32 0.0, %v6397
  %v6399 = vpop.f32.mrb[0].mxu0
  %6400 = vmatprep.mubr.f32.mxu0 0.0
  %6401 = vmatmul.mubr.f32.gmra.mrb[0].mxu0 %v6283
  %v6402 = vpop.f32.mrb[0].mxu0
  %v6403 = vadd.f32 0.0, %v6402
  %v6404 = vpop.f32.mrb[0].mxu0
  %6405 = vdwg.mxu0
  %v6406 = vmul.f32 %v6199, 0.70710677
  %v6407 = vmul.f32 %v6204, 0.70710677
  %v6408 = vmul.f32 %v6209, 0.70710677
  %v6409 = vmul.f32 %v6214, 0.70710677
  %v6410 = vmul.f32 %v6219, 0.70710677
  %v6411 = vmul.f32 %v6224, 0.70710677
  %v6412 = vmul.f32 %v6229, 0.70710677
  %v6413 = vmul.f32 %v6234, 0.70710677
  %v6414 = vmul.f32 %v6368, 0.70710677
  %v6415 = vmul.f32 %v6373, 0.70710677
  %v6416 = vmul.f32 %v6378, 0.70710677
  %v6417 = vmul.f32 %v6383, 0.70710677
  %v6418 = vmul.f32 %v6388, 0.70710677
  %v6419 = vmul.f32 %v6393, 0.70710677
  %v6420 = vmul.f32 %v6398, 0.70710677
  %v6421 = vmul.f32 %v6403, 0.70710677
  %v6422 = vsel %vm1016, %v6406, -inf
  %6423 = vmax.xlane.f32.xlu0 %v6422
  %v6424 = vpop.xlane.xlu0 %6423
  %v6425 = vsel %vm1016, %v6407, -inf
  %6426 = vmax.xlane.f32.xlu0 %v6425
  %v6427 = vpop.xlane.xlu0 %6426
  %v6428 = vsel %vm1016, %v6408, -inf
  %6429 = vmax.xlane.f32.xlu0 %v6428
  %v6430 = vpop.xlane.xlu0 %6429
  %v6431 = vsel %vm1016, %v6409, -inf
  %6432 = vmax.xlane.f32.xlu0 %v6431
  %v6433 = vpop.xlane.xlu0 %6432
  %v6434 = vsel %vm1016, %v6410, -inf
  %6435 = vmax.xlane.f32.xlu0 %v6434
  %v6436 = vpop.xlane.xlu0 %6435
  %v6437 = vsel %vm1016, %v6411, -inf
  %6438 = vmax.xlane.f32.xlu0 %v6437
  %v6439 = vpop.xlane.xlu0 %6438
  %v6440 = vsel %vm1016, %v6412, -inf
  %6441 = vmax.xlane.f32.xlu0 %v6440
  %v6442 = vpop.xlane.xlu0 %6441
  %v6443 = vsel %vm1016, %v6413, -inf
  %6444 = vmax.xlane.f32.xlu0 %v6443
  %v6445 = vpop.xlane.xlu0 %6444
  %v6446 = vsel %vm1016, %v6414, -inf
  %6447 = vmax.xlane.f32.xlu0 %v6446
  %v6448 = vpop.xlane.xlu0 %6447
  %v6449 = vsel %vm1016, %v6415, -inf
  %6450 = vmax.xlane.f32.xlu0 %v6449
  %v6451 = vpop.xlane.xlu0 %6450
  %v6452 = vsel %vm1016, %v6416, -inf
  %6453 = vmax.xlane.f32.xlu0 %v6452
  %v6454 = vpop.xlane.xlu0 %6453
  %v6455 = vsel %vm1016, %v6417, -inf
  %6456 = vmax.xlane.f32.xlu0 %v6455
  %v6457 = vpop.xlane.xlu0 %6456
  %v6458 = vsel %vm1016, %v6418, -inf
  %6459 = vmax.xlane.f32.xlu0 %v6458
  %v6460 = vpop.xlane.xlu0 %6459
  %v6461 = vsel %vm1016, %v6419, -inf
  %6462 = vmax.xlane.f32.xlu0 %v6461
  %v6463 = vpop.xlane.xlu0 %6462
  %v6464 = vsel %vm1016, %v6420, -inf
  %6465 = vmax.xlane.f32.xlu0 %v6464
  %v6466 = vpop.xlane.xlu0 %6465
  %v6467 = vsel %vm1016, %v6421, -inf
  %6468 = vmax.xlane.f32.xlu0 %v6467
  %v6469 = vpop.xlane.xlu0 %6468
  %v6470 = vsub.f32 %v6406, %v6424
  %v6471 = vsub.f32 %v6407, %v6427
  %v6472 = vsub.f32 %v6408, %v6430
  %v6473 = vsub.f32 %v6409, %v6433
  %v6474 = vsub.f32 %v6410, %v6436
  %v6475 = vsub.f32 %v6411, %v6439
  %v6476 = vsub.f32 %v6412, %v6442
  %v6477 = vsub.f32 %v6413, %v6445
  %v6478 = vsub.f32 %v6414, %v6448
  %v6479 = vsub.f32 %v6415, %v6451
  %v6480 = vsub.f32 %v6416, %v6454
  %v6481 = vsub.f32 %v6417, %v6457
  %v6482 = vsub.f32 %v6418, %v6460
  %v6483 = vsub.f32 %v6419, %v6463
  %v6484 = vsub.f32 %v6420, %v6466
  %v6485 = vsub.f32 %v6421, %v6469
  %v6486 = vmul.f32 %v6470, 1.442695
  %v6487 = vpow.pop %v6486
  %v6488 = vmul.f32 %v6471, 1.442695
  %v6489 = vpow.pop %v6488
  %v6490 = vmul.f32 %v6472, 1.442695
  %v6491 = vpow.pop %v6490
  %v6492 = vmul.f32 %v6473, 1.442695
  %v6493 = vpow.pop %v6492
  %v6494 = vmul.f32 %v6474, 1.442695
  %v6495 = vpow.pop %v6494
  %v6496 = vmul.f32 %v6475, 1.442695
  %v6497 = vpow.pop %v6496
  %v6498 = vmul.f32 %v6476, 1.442695
  %v6499 = vpow.pop %v6498
  %v6500 = vmul.f32 %v6477, 1.442695
  %v6501 = vpow.pop %v6500
  %v6502 = vmul.f32 %v6478, 1.442695
  %v6503 = vpow.pop %v6502
  %v6504 = vmul.f32 %v6479, 1.442695
  %v6505 = vpow.pop %v6504
  %v6506 = vmul.f32 %v6480, 1.442695
  %v6507 = vpow.pop %v6506
  %v6508 = vmul.f32 %v6481, 1.442695
  %v6509 = vpow.pop %v6508
  %v6510 = vmul.f32 %v6482, 1.442695
  %v6511 = vpow.pop %v6510
  %v6512 = vmul.f32 %v6483, 1.442695
  %v6513 = vpow.pop %v6512
  %v6514 = vmul.f32 %v6484, 1.442695
  %v6515 = vpow.pop %v6514
  %v6516 = vmul.f32 %v6485, 1.442695
  %v6517 = vpow.pop %v6516
  %v6518 = vsel %vm1016, %v6487, 0.0
  %6519 = vadd.xlane.f32.xlu0 %v6518
  %v6520 = vpop.xlane.xlu0 %6519
  %v6521 = vsel %vm1016, %v6489, 0.0
  %6522 = vadd.xlane.f32.xlu0 %v6521
  %v6523 = vpop.xlane.xlu0 %6522
  %v6524 = vsel %vm1016, %v6491, 0.0
  %6525 = vadd.xlane.f32.xlu0 %v6524
  %v6526 = vpop.xlane.xlu0 %6525
  %v6527 = vsel %vm1016, %v6493, 0.0
  %6528 = vadd.xlane.f32.xlu0 %v6527
  %v6529 = vpop.xlane.xlu0 %6528
  %v6530 = vsel %vm1016, %v6495, 0.0
  %6531 = vadd.xlane.f32.xlu0 %v6530
  %v6532 = vpop.xlane.xlu0 %6531
  %v6533 = vsel %vm1016, %v6497, 0.0
  %6534 = vadd.xlane.f32.xlu0 %v6533
  %v6535 = vpop.xlane.xlu0 %6534
  %v6536 = vsel %vm1016, %v6499, 0.0
  %6537 = vadd.xlane.f32.xlu0 %v6536
  %v6538 = vpop.xlane.xlu0 %6537
  %v6539 = vsel %vm1016, %v6501, 0.0
  %6540 = vadd.xlane.f32.xlu0 %v6539
  %v6541 = vpop.xlane.xlu0 %6540
  %v6542 = vsel %vm1016, %v6503, 0.0
  %6543 = vadd.xlane.f32.xlu0 %v6542
  %v6544 = vpop.xlane.xlu0 %6543
  %v6545 = vsel %vm1016, %v6505, 0.0
  %6546 = vadd.xlane.f32.xlu0 %v6545
  %v6547 = vpop.xlane.xlu0 %6546
  %v6548 = vsel %vm1016, %v6507, 0.0
  %6549 = vadd.xlane.f32.xlu0 %v6548
  %v6550 = vpop.xlane.xlu0 %6549
  %v6551 = vsel %vm1016, %v6509, 0.0
  %6552 = vadd.xlane.f32.xlu0 %v6551
  %v6553 = vpop.xlane.xlu0 %6552
  %v6554 = vsel %vm1016, %v6511, 0.0
  %6555 = vadd.xlane.f32.xlu0 %v6554
  %v6556 = vpop.xlane.xlu0 %6555
  %v6557 = vsel %vm1016, %v6513, 0.0
  %6558 = vadd.xlane.f32.xlu0 %v6557
  %v6559 = vpop.xlane.xlu0 %6558
  %v6560 = vsel %vm1016, %v6515, 0.0
  %6561 = vadd.xlane.f32.xlu0 %v6560
  %v6562 = vpop.xlane.xlu0 %6561
  %v6563 = vsel %vm1016, %v6517, 0.0
  %6564 = vadd.xlane.f32.xlu0 %v6563
  %v6565 = vpop.xlane.xlu0 %6564
  %v6566 = vrcp.pop %v6520
  %v6567 = vrcp.pop %v6523
  %v6568 = vrcp.pop %v6526
  %v6569 = vrcp.pop %v6529
  %v6570 = vrcp.pop %v6532
  %v6571 = vrcp.pop %v6535
  %v6572 = vrcp.pop %v6538
  %v6573 = vrcp.pop %v6541
  %v6574 = vrcp.pop %v6544
  %v6575 = vrcp.pop %v6547
  %v6576 = vrcp.pop %v6550
  %v6577 = vrcp.pop %v6553
  %v6578 = vrcp.pop %v6556
  %v6579 = vrcp.pop %v6559
  %v6580 = vrcp.pop %v6562
  %v6581 = vrcp.pop %v6565
  %v6582 = vmul.f32 %v6487, %v6566
  %v6583 = vmul.f32 %v6489, %v6567
  %v6584 = vmul.f32 %v6491, %v6568
  %v6585 = vmul.f32 %v6493, %v6569
  %v6586 = vmul.f32 %v6495, %v6570
  %v6587 = vmul.f32 %v6497, %v6571
  %v6588 = vmul.f32 %v6499, %v6572
  %v6589 = vmul.f32 %v6501, %v6573
  %v6590 = vmul.f32 %v6503, %v6574
  %v6591 = vmul.f32 %v6505, %v6575
  %v6592 = vmul.f32 %v6507, %v6576
  %v6593 = vmul.f32 %v6509, %v6577
  %v6594 = vmul.f32 %v6511, %v6578
  %v6595 = vmul.f32 %v6513, %v6579
  %v6596 = vmul.f32 %v6515, %v6580
  %v6597 = vmul.f32 %v6517, %v6581
  %6598 = vrot.lane.b32.xlu0 %v615, 116
  %v6599 = vpop.permute.xlu0 %6598
  %6600 = vrot.lane.b32.xlu0 %v620, 116
  %v6601 = vpop.permute.xlu0 %6600
  %6602 = vrot.lane.b32.xlu0 %v625, 116
  %v6603 = vpop.permute.xlu0 %6602
  %6604 = vrot.lane.b32.xlu0 %v630, 116
  %v6605 = vpop.permute.xlu0 %6604
  %6606 = vrot.lane.b32.xlu0 %v635, 116
  %v6607 = vpop.permute.xlu0 %6606
  %6608 = vrot.lane.b32.xlu0 %v640, 116
  %v6609 = vpop.permute.xlu0 %6608
  %6610 = vrot.lane.b32.xlu0 %v645, 116
  %v6611 = vpop.permute.xlu0 %6610
  %6612 = vrot.lane.b32.xlu0 %v650, 116
  %v6613 = vpop.permute.xlu0 %6612
  %v6623 = vsel %vm1016, %v6582, 0
  %v6626 = vsel %vm1016, %v6583, 0
  %v6629 = vsel %vm1016, %v6584, 0
  %v6632 = vsel %vm1016, %v6585, 0
  %v6635 = vsel %vm1016, %v6586, 0
  %v6638 = vsel %vm1016, %v6587, 0
  %v6641 = vsel %vm1016, %v6588, 0
  %v6644 = vsel %vm1016, %v6589, 0
  %6646 = vmatprep.subr.mxu0 0.0
  %6647 = vmatpush1.msra.mxu0 %v6599
  %6648 = vmatprep.subr.mxu0 0.0
  %6649 = vmatpush1.msra.mxu0 %v6601
  %6650 = vmatprep.subr.mxu0 0.0
  %6651 = vmatpush1.msra.mxu0 %v6603
  %6652 = vmatprep.subr.mxu0 0.0
  %6653 = vmatpush1.msra.mxu0 %v6605
  %6654 = vmatprep.subr.mxu0 0.0
  %6655 = vmatpush1.msra.mxu0 %v6607
  %6656 = vmatprep.subr.mxu0 0.0
  %6657 = vmatpush1.msra.mxu0 %v6609
  %6658 = vmatprep.subr.mxu0 0.0
  %6659 = vmatpush1.msra.mxu0 %v6611
  %6660 = vmatprep.subr.mxu0 0.0
  %6661 = vmatpush1.msra.mxu0 %v6613
  %6662 = vmatprep.subr.mxu0 0.0
  %6663 = vmatpush1.msra.mxu0 0.0
  %6664 = vmatprep.subr.mxu0 0.0
  %6665 = vmatpush1.msra.mxu0 0.0
  %6666 = vmatprep.subr.mxu0 0.0
  %6667 = vmatpush1.msra.mxu0 0.0
  %6668 = vmatprep.subr.mxu0 0.0
  %6669 = vmatpush1.msra.mxu0 0.0
  %6670 = vmatprep.subr.mxu0 0.0
  %6671 = vmatpush1.msra.mxu0 0.0
  %6672 = vmatprep.subr.mxu0 0.0
  %6673 = vmatpush1.msra.mxu0 0.0
  %6674 = vmatprep.subr.mxu0 0.0
  %6675 = vmatpush1.msra.mxu0 0.0
  %6676 = vmatprep.subr.mxu0 0.0
  %6677 = vmatpush1.msra.mxu0 0.0
  %6678 = vmatprep.subr.mxu0 0.0
  %6679 = vmatpush1.msra.mxu0 0.0
  %6680 = vmatprep.subr.mxu0 0.0
  %6681 = vmatpush1.msra.mxu0 0.0
  %6682 = vmatprep.subr.mxu0 0.0
  %6683 = vmatpush1.msra.mxu0 0.0
  %6684 = vmatprep.subr.mxu0 0.0
  %6685 = vmatpush1.msra.mxu0 0.0
  %6686 = vmatprep.subr.mxu0 0.0
  %6687 = vmatpush1.msra.mxu0 0.0
  %6688 = vmatprep.subr.mxu0 0.0
  %6689 = vmatpush1.msra.mxu0 0.0
  %6690 = vmatprep.subr.mxu0 0.0
  %6691 = vmatpush1.msra.mxu0 0.0
  %6692 = vmatprep.subr.mxu0 0.0
  %6693 = vmatpush1.msra.mxu0 0.0
  %6694 = vmatprep.subr.mxu0 0.0
  %6695 = vmatpush1.msra.mxu0 0.0
  %6696 = vmatprep.subr.mxu0 0.0
  %6697 = vmatpush1.msra.mxu0 0.0
  %6698 = vmatprep.subr.mxu0 0.0
  %6699 = vmatpush1.msra.mxu0 0.0
  %6700 = vmatprep.subr.mxu0 0.0
  %6701 = vmatpush1.msra.mxu0 0.0
  %6702 = vmatprep.subr.mxu0 0.0
  %6703 = vmatpush1.msra.mxu0 0.0
  %6704 = vmatprep.subr.mxu0 0.0
  %6705 = vmatpush1.msra.mxu0 0.0
  %6706 = vmatprep.subr.mxu0 0.0
  %6707 = vmatpush1.msra.mxu0 0.0
  %6708 = vmatprep.subr.mxu0 0.0
  %6709 = vmatpush1.msra.mxu0 0.0
  %6710 = vmatprep.mubr.f32.mxu0 0.0
  %6711 = vmatmul.mubr.f32.gmra.mrb[0].mxu0 %v6623
  %v6712 = vpop.f32.mrb[0].mxu0
  %v6713 = vadd.f32 0.0, %v6712
  %v6714 = vpop.f32.mrb[0].mxu0
  %6715 = vmatprep.mubr.f32.mxu0 0.0
  %6716 = vmatmul.mubr.f32.gmra.mrb[0].mxu0 %v6626
  %v6717 = vpop.f32.mrb[0].mxu0
  %v6718 = vadd.f32 0.0, %v6717
  %v6719 = vpop.f32.mrb[0].mxu0
  %6720 = vmatprep.mubr.f32.mxu0 0.0
  %6721 = vmatmul.mubr.f32.gmra.mrb[0].mxu0 %v6629
  %v6722 = vpop.f32.mrb[0].mxu0
  %v6723 = vadd.f32 0.0, %v6722
  %v6724 = vpop.f32.mrb[0].mxu0
  %6725 = vmatprep.mubr.f32.mxu0 0.0
  %6726 = vmatmul.mubr.f32.gmra.mrb[0].mxu0 %v6632
  %v6727 = vpop.f32.mrb[0].mxu0
  %v6728 = vadd.f32 0.0, %v6727
  %v6729 = vpop.f32.mrb[0].mxu0
  %6730 = vmatprep.mubr.f32.mxu0 0.0
  %6731 = vmatmul.mubr.f32.gmra.mrb[0].mxu0 %v6635
  %v6732 = vpop.f32.mrb[0].mxu0
  %v6733 = vadd.f32 0.0, %v6732
  %v6734 = vpop.f32.mrb[0].mxu0
  %6735 = vmatprep.mubr.f32.mxu0 0.0
  %6736 = vmatmul.mubr.f32.gmra.mrb[0].mxu0 %v6638
  %v6737 = vpop.f32.mrb[0].mxu0
  %v6738 = vadd.f32 0.0, %v6737
  %v6739 = vpop.f32.mrb[0].mxu0
  %6740 = vmatprep.mubr.f32.mxu0 0.0
  %6741 = vmatmul.mubr.f32.gmra.mrb[0].mxu0 %v6641
  %v6742 = vpop.f32.mrb[0].mxu0
  %v6743 = vadd.f32 0.0, %v6742
  %v6744 = vpop.f32.mrb[0].mxu0
  %6745 = vmatprep.mubr.f32.mxu0 0.0
  %6746 = vmatmul.mubr.f32.gmra.mrb[0].mxu0 %v6644
  %v6747 = vpop.f32.mrb[0].mxu0
  %v6748 = vadd.f32 0.0, %v6747
  %v6749 = vpop.f32.mrb[0].mxu0
  %6750 = vdwg.mxu0
  %6751 = vrot.lane.b32.xlu0 %v655, 116
  %v6752 = vpop.permute.xlu0 %6751
  %6753 = vrot.lane.b32.xlu0 %v660, 116
  %v6754 = vpop.permute.xlu0 %6753
  %6755 = vrot.lane.b32.xlu0 %v665, 116
  %v6756 = vpop.permute.xlu0 %6755
  %6757 = vrot.lane.b32.xlu0 %v670, 116
  %v6758 = vpop.permute.xlu0 %6757
  %6759 = vrot.lane.b32.xlu0 %v675, 116
  %v6760 = vpop.permute.xlu0 %6759
  %6761 = vrot.lane.b32.xlu0 %v680, 116
  %v6762 = vpop.permute.xlu0 %6761
  %6763 = vrot.lane.b32.xlu0 %v685, 116
  %v6764 = vpop.permute.xlu0 %6763
  %6765 = vrot.lane.b32.xlu0 %v690, 116
  %v6766 = vpop.permute.xlu0 %6765
  %v6776 = vsel %vm1016, %v6590, 0
  %v6779 = vsel %vm1016, %v6591, 0
  %v6782 = vsel %vm1016, %v6592, 0
  %v6785 = vsel %vm1016, %v6593, 0
  %v6788 = vsel %vm1016, %v6594, 0
  %v6791 = vsel %vm1016, %v6595, 0
  %v6794 = vsel %vm1016, %v6596, 0
  %v6797 = vsel %vm1016, %v6597, 0
  %6799 = vmatprep.subr.mxu0 0.0
  %6800 = vmatpush1.msra.mxu0 %v6752
  %6801 = vmatprep.subr.mxu0 0.0
  %6802 = vmatpush1.msra.mxu0 %v6754
  %6803 = vmatprep.subr.mxu0 0.0
  %6804 = vmatpush1.msra.mxu0 %v6756
  %6805 = vmatprep.subr.mxu0 0.0
  %6806 = vmatpush1.msra.mxu0 %v6758
  %6807 = vmatprep.subr.mxu0 0.0
  %6808 = vmatpush1.msra.mxu0 %v6760
  %6809 = vmatprep.subr.mxu0 0.0
  %6810 = vmatpush1.msra.mxu0 %v6762
  %6811 = vmatprep.subr.mxu0 0.0
  %6812 = vmatpush1.msra.mxu0 %v6764
  %6813 = vmatprep.subr.mxu0 0.0
  %6814 = vmatpush1.msra.mxu0 %v6766
  %6815 = vmatprep.subr.mxu0 0.0
  %6816 = vmatpush1.msra.mxu0 0.0
  %6817 = vmatprep.subr.mxu0 0.0
  %6818 = vmatpush1.msra.mxu0 0.0
  %6819 = vmatprep.subr.mxu0 0.0
  %6820 = vmatpush1.msra.mxu0 0.0
  %6821 = vmatprep.subr.mxu0 0.0
  %6822 = vmatpush1.msra.mxu0 0.0
  %6823 = vmatprep.subr.mxu0 0.0
  %6824 = vmatpush1.msra.mxu0 0.0
  %6825 = vmatprep.subr.mxu0 0.0
  %6826 = vmatpush1.msra.mxu0 0.0
  %6827 = vmatprep.subr.mxu0 0.0
  %6828 = vmatpush1.msra.mxu0 0.0
  %6829 = vmatprep.subr.mxu0 0.0
  %6830 = vmatpush1.msra.mxu0 0.0
  %6831 = vmatprep.subr.mxu0 0.0
  %6832 = vmatpush1.msra.mxu0 0.0
  %6833 = vmatprep.subr.mxu0 0.0
  %6834 = vmatpush1.msra.mxu0 0.0
  %6835 = vmatprep.subr.mxu0 0.0
  %6836 = vmatpush1.msra.mxu0 0.0
  %6837 = vmatprep.subr.mxu0 0.0
  %6838 = vmatpush1.msra.mxu0 0.0
  %6839 = vmatprep.subr.mxu0 0.0
  %6840 = vmatpush1.msra.mxu0 0.0
  %6841 = vmatprep.subr.mxu0 0.0
  %6842 = vmatpush1.msra.mxu0 0.0
  %6843 = vmatprep.subr.mxu0 0.0
  %6844 = vmatpush1.msra.mxu0 0.0
  %6845 = vmatprep.subr.mxu0 0.0
  %6846 = vmatpush1.msra.mxu0 0.0
  %6847 = vmatprep.subr.mxu0 0.0
  %6848 = vmatpush1.msra.mxu0 0.0
  %6849 = vmatprep.subr.mxu0 0.0
  %6850 = vmatpush1.msra.mxu0 0.0
  %6851 = vmatprep.subr.mxu0 0.0
  %6852 = vmatpush1.msra.mxu0 0.0
  %6853 = vmatprep.subr.mxu0 0.0
  %6854 = vmatpush1.msra.mxu0 0.0
  %6855 = vmatprep.subr.mxu0 0.0
  %6856 = vmatpush1.msra.mxu0 0.0
  %6857 = vmatprep.subr.mxu0 0.0
  %6858 = vmatpush1.msra.mxu0 0.0
  %6859 = vmatprep.subr.mxu0 0.0
  %6860 = vmatpush1.msra.mxu0 0.0
  %6861 = vmatprep.subr.mxu0 0.0
  %6862 = vmatpush1.msra.mxu0 0.0
  %6863 = vmatprep.mubr.f32.mxu0 0.0
  %6864 = vmatmul.mubr.f32.gmra.mrb[0].mxu0 %v6776
  %v6865 = vpop.f32.mrb[0].mxu0
  %v6866 = vadd.f32 0.0, %v6865
  %v6867 = vpop.f32.mrb[0].mxu0
  %6868 = vmatprep.mubr.f32.mxu0 0.0
  %6869 = vmatmul.mubr.f32.gmra.mrb[0].mxu0 %v6779
  %v6870 = vpop.f32.mrb[0].mxu0
  %v6871 = vadd.f32 0.0, %v6870
  %v6872 = vpop.f32.mrb[0].mxu0
  %6873 = vmatprep.mubr.f32.mxu0 0.0
  %6874 = vmatmul.mubr.f32.gmra.mrb[0].mxu0 %v6782
  %v6875 = vpop.f32.mrb[0].mxu0
  %v6876 = vadd.f32 0.0, %v6875
  %v6877 = vpop.f32.mrb[0].mxu0
  %6878 = vmatprep.mubr.f32.mxu0 0.0
  %6879 = vmatmul.mubr.f32.gmra.mrb[0].mxu0 %v6785
  %v6880 = vpop.f32.mrb[0].mxu0
  %v6881 = vadd.f32 0.0, %v6880
  %v6882 = vpop.f32.mrb[0].mxu0
  %6883 = vmatprep.mubr.f32.mxu0 0.0
  %6884 = vmatmul.mubr.f32.gmra.mrb[0].mxu0 %v6788
  %v6885 = vpop.f32.mrb[0].mxu0
  %v6886 = vadd.f32 0.0, %v6885
  %v6887 = vpop.f32.mrb[0].mxu0
  %6888 = vmatprep.mubr.f32.mxu0 0.0
  %6889 = vmatmul.mubr.f32.gmra.mrb[0].mxu0 %v6791
  %v6890 = vpop.f32.mrb[0].mxu0
  %v6891 = vadd.f32 0.0, %v6890
  %v6892 = vpop.f32.mrb[0].mxu0
  %6893 = vmatprep.mubr.f32.mxu0 0.0
  %6894 = vmatmul.mubr.f32.gmra.mrb[0].mxu0 %v6794
  %v6895 = vpop.f32.mrb[0].mxu0
  %v6896 = vadd.f32 0.0, %v6895
  %v6897 = vpop.f32.mrb[0].mxu0
  %6898 = vmatprep.mubr.f32.mxu0 0.0
  %6899 = vmatmul.mubr.f32.gmra.mrb[0].mxu0 %v6797
  %v6900 = vpop.f32.mrb[0].mxu0
  %v6901 = vadd.f32 0.0, %v6900
  %v6902 = vpop.f32.mrb[0].mxu0
  %6903 = vdwg.mxu0
  %6920 = vrot.lane.b32.xlu0 %v6713, 12
  %v6921 = vpop.permute.xlu0 %6920
  %6922 = vrot.lane.b32.xlu0 %v6718, 12
  %v6923 = vpop.permute.xlu0 %6922
  %6924 = vrot.lane.b32.xlu0 %v6723, 12
  %v6925 = vpop.permute.xlu0 %6924
  %6926 = vrot.lane.b32.xlu0 %v6728, 12
  %v6927 = vpop.permute.xlu0 %6926
  %6928 = vrot.lane.b32.xlu0 %v6733, 12
  %v6929 = vpop.permute.xlu0 %6928
  %6930 = vrot.lane.b32.xlu0 %v6738, 12
  %v6931 = vpop.permute.xlu0 %6930
  %6932 = vrot.lane.b32.xlu0 %v6743, 12
  %v6933 = vpop.permute.xlu0 %6932
  %6934 = vrot.lane.b32.xlu0 %v6748, 12
  %v6935 = vpop.permute.xlu0 %6934
  %6936 = vrot.lane.b32.xlu0 %v6866, 12
  %v6937 = vpop.permute.xlu0 %6936
  %6938 = vrot.lane.b32.xlu0 %v6871, 12
  %v6939 = vpop.permute.xlu0 %6938
  %6940 = vrot.lane.b32.xlu0 %v6876, 12
  %v6941 = vpop.permute.xlu0 %6940
  %6942 = vrot.lane.b32.xlu0 %v6881, 12
  %v6943 = vpop.permute.xlu0 %6942
  %6944 = vrot.lane.b32.xlu0 %v6886, 12
  %v6945 = vpop.permute.xlu0 %6944
  %6946 = vrot.lane.b32.xlu0 %v6891, 12
  %v6947 = vpop.permute.xlu0 %6946
  %6948 = vrot.lane.b32.xlu0 %v6896, 12
  %v6949 = vpop.permute.xlu0 %6948
  %6950 = vrot.lane.b32.xlu0 %v6901, 12
  %v6951 = vpop.permute.xlu0 %6950
  %vm6968 = vcmask 113760
  %6969 = vst.msk [vmem:[#allocation2] sm:$0xff] %vm6968, %v6921
  %6970 = vst.msk [vmem:[#allocation2 + $0x8] sm:$0xff] %vm6968, %v6923
  %6971 = vst.msk [vmem:[#allocation2 + $0x10] sm:$0xff] %vm6968, %v6925
  %6972 = vst.msk [vmem:[#allocation2 + $0x18] sm:$0xff] %vm6968, %v6927
  %6973 = vst.msk [vmem:[#allocation2 + $0x20] sm:$0xff] %vm6968, %v6929
  %6974 = vst.msk [vmem:[#allocation2 + $0x28] sm:$0xff] %vm6968, %v6931
  %6975 = vst.msk [vmem:[#allocation2 + $0x30] sm:$0xff] %vm6968, %v6933
  %6976 = vst.msk [vmem:[#allocation2 + $0x38] sm:$0xff] %vm6968, %v6935
  %6977 = vst.msk [vmem:[#allocation2 + $0x40] sm:$0xff] %vm6968, %v6937
  %6978 = vst.msk [vmem:[#allocation2 + $0x48] sm:$0xff] %vm6968, %v6939
  %6979 = vst.msk [vmem:[#allocation2 + $0x50] sm:$0xff] %vm6968, %v6941
  %6980 = vst.msk [vmem:[#allocation2 + $0x58] sm:$0xff] %vm6968, %v6943
  %6981 = vst.msk [vmem:[#allocation2 + $0x60] sm:$0xff] %vm6968, %v6945
  %6982 = vst.msk [vmem:[#allocation2 + $0x68] sm:$0xff] %vm6968, %v6947
  %6983 = vst.msk [vmem:[#allocation2 + $0x70] sm:$0xff] %vm6968, %v6949
  %6984 = vst.msk [vmem:[#allocation2 + $0x78] sm:$0xff] %vm6968, %v6951
  %6985 = vrot.lane.b32.xlu0 %v211, 114
  %v6986 = vpop.permute.xlu0 %6985
  %6987 = vrot.lane.b32.xlu0 %v216, 114
  %v6988 = vpop.permute.xlu0 %6987
  %6989 = vrot.lane.b32.xlu0 %v221, 114
  %v6990 = vpop.permute.xlu0 %6989
  %6991 = vrot.lane.b32.xlu0 %v226, 114
  %v6992 = vpop.permute.xlu0 %6991
  %6993 = vrot.lane.b32.xlu0 %v231, 114
  %v6994 = vpop.permute.xlu0 %6993
  %6995 = vrot.lane.b32.xlu0 %v236, 114
  %v6996 = vpop.permute.xlu0 %6995
  %6997 = vrot.lane.b32.xlu0 %v241, 114
  %v6998 = vpop.permute.xlu0 %6997
  %6999 = vrot.lane.b32.xlu0 %v246, 114
  %v7000 = vpop.permute.xlu0 %6999
  %7001 = vrot.lane.b32.xlu0 %v413, 114
  %v7002 = vpop.permute.xlu0 %7001
  %7003 = vrot.lane.b32.xlu0 %v418, 114
  %v7004 = vpop.permute.xlu0 %7003
  %7005 = vrot.lane.b32.xlu0 %v423, 114
  %v7006 = vpop.permute.xlu0 %7005
  %7007 = vrot.lane.b32.xlu0 %v428, 114
  %v7008 = vpop.permute.xlu0 %7007
  %7009 = vrot.lane.b32.xlu0 %v433, 114
  %v7010 = vpop.permute.xlu0 %7009
  %7011 = vrot.lane.b32.xlu0 %v438, 114
  %v7012 = vpop.permute.xlu0 %7011
  %7013 = vrot.lane.b32.xlu0 %v443, 114
  %v7014 = vpop.permute.xlu0 %7013
  %7015 = vrot.lane.b32.xlu0 %v448, 114
  %v7016 = vpop.permute.xlu0 %7015
  %v7017 = vsel %vm693, %v6986, 0
  %v7019 = vsel %vm693, %v6988, 0
  %v7021 = vsel %vm693, %v6990, 0
  %v7023 = vsel %vm693, %v6992, 0
  %v7025 = vsel %vm693, %v6994, 0
  %v7027 = vsel %vm693, %v6996, 0
  %v7029 = vsel %vm693, %v6998, 0
  %v7031 = vsel %vm693, %v7000, 0
  %v7033 = vsel %vm693, %v7002, 0
  %v7035 = vsel %vm693, %v7004, 0
  %v7037 = vsel %vm693, %v7006, 0
  %v7039 = vsel %vm693, %v7008, 0
  %v7041 = vsel %vm693, %v7010, 0
  %v7043 = vsel %vm693, %v7012, 0
  %v7045 = vsel %vm693, %v7014, 0
  %v7047 = vsel %vm693, %v7016, 0
  %7049 = vmatprep.subr.mxu0 0.0
  %7050 = vmatpush1.xpose.msra.mxu0 %v7033
  %7051 = vmatprep.subr.mxu0 0.0
  %7052 = vmatpush1.xpose.msra.mxu0 %v7035
  %7053 = vmatprep.subr.mxu0 0.0
  %7054 = vmatpush1.xpose.msra.mxu0 %v7037
  %7055 = vmatprep.subr.mxu0 0.0
  %7056 = vmatpush1.xpose.msra.mxu0 %v7039
  %7057 = vmatprep.subr.mxu0 0.0
  %7058 = vmatpush1.xpose.msra.mxu0 %v7041
  %7059 = vmatprep.subr.mxu0 0.0
  %7060 = vmatpush1.xpose.msra.mxu0 %v7043
  %7061 = vmatprep.subr.mxu0 0.0
  %7062 = vmatpush1.xpose.msra.mxu0 %v7045
  %7063 = vmatprep.subr.mxu0 0.0
  %7064 = vmatpush1.xpose.msra.mxu0 %v7047
  %7065 = vmatprep.subr.mxu0 0.0
  %7066 = vmatpush1.xpose.msra.mxu0 0.0
  %7067 = vmatprep.subr.mxu0 0.0
  %7068 = vmatpush1.xpose.msra.mxu0 0.0
  %7069 = vmatprep.subr.mxu0 0.0
  %7070 = vmatpush1.xpose.msra.mxu0 0.0
  %7071 = vmatprep.subr.mxu0 0.0
  %7072 = vmatpush1.xpose.msra.mxu0 0.0
  %7073 = vmatprep.subr.mxu0 0.0
  %7074 = vmatpush1.xpose.msra.mxu0 0.0
  %7075 = vmatprep.subr.mxu0 0.0
  %7076 = vmatpush1.xpose.msra.mxu0 0.0
  %7077 = vmatprep.subr.mxu0 0.0
  %7078 = vmatpush1.xpose.msra.mxu0 0.0
  %7079 = vmatprep.subr.mxu0 0.0
  %7080 = vmatpush1.xpose.msra.mxu0 0.0
  %7081 = vmatprep.subr.mxu0 0.0
  %7082 = vmatpush1.xpose.msra.mxu0 0.0
  %7083 = vmatprep.subr.mxu0 0.0
  %7084 = vmatpush1.xpose.msra.mxu0 0.0
  %7085 = vmatprep.subr.mxu0 0.0
  %7086 = vmatpush1.xpose.msra.mxu0 0.0
  %7087 = vmatprep.subr.mxu0 0.0
  %7088 = vmatpush1.xpose.msra.mxu0 0.0
  %7089 = vmatprep.subr.mxu0 0.0
  %7090 = vmatpush1.xpose.msra.mxu0 0.0
  %7091 = vmatprep.subr.mxu0 0.0
  %7092 = vmatpush1.xpose.msra.mxu0 0.0
  %7093 = vmatprep.subr.mxu0 0.0
  %7094 = vmatpush1.xpose.msra.mxu0 0.0
  %7095 = vmatprep.subr.mxu0 0.0
  %7096 = vmatpush1.xpose.msra.mxu0 0.0
  %7097 = vmatprep.subr.mxu0 0.0
  %7098 = vmatpush1.xpose.msra.mxu0 0.0
  %7099 = vmatprep.subr.mxu0 0.0
  %7100 = vmatpush1.xpose.msra.mxu0 0.0
  %7101 = vmatprep.subr.mxu0 0.0
  %7102 = vmatpush1.xpose.msra.mxu0 0.0
  %7103 = vmatprep.subr.mxu0 0.0
  %7104 = vmatpush1.xpose.msra.mxu0 0.0
  %7105 = vmatprep.subr.mxu0 0.0
  %7106 = vmatpush1.xpose.msra.mxu0 0.0
  %7107 = vmatprep.subr.mxu0 0.0
  %7108 = vmatpush1.xpose.msra.mxu0 0.0
  %7109 = vmatprep.subr.mxu0 0.0
  %7110 = vmatpush1.xpose.msra.mxu0 0.0
  %7111 = vmatprep.subr.mxu0 0.0
  %7112 = vmatpush1.xpose.msra.mxu0 0.0
  %7113 = vmatprep.mubr.f32.mxu0 0.0
  %7114 = vmatmul.mubr.f32.gmra.mrb[0].mxu0 %v7017
  %v7115 = vpop.f32.mrb[0].mxu0
  %v7116 = vadd.f32 0.0, %v7115
  %v7117 = vpop.f32.mrb[0].mxu0
  %7118 = vmatprep.mubr.f32.mxu0 0.0
  %7119 = vmatmul.mubr.f32.gmra.mrb[0].mxu0 %v7019
  %v7120 = vpop.f32.mrb[0].mxu0
  %v7121 = vadd.f32 0.0, %v7120
  %v7122 = vpop.f32.mrb[0].mxu0
  %7123 = vmatprep.mubr.f32.mxu0 0.0
  %7124 = vmatmul.mubr.f32.gmra.mrb[0].mxu0 %v7021
  %v7125 = vpop.f32.mrb[0].mxu0
  %v7126 = vadd.f32 0.0, %v7125
  %v7127 = vpop.f32.mrb[0].mxu0
  %7128 = vmatprep.mubr.f32.mxu0 0.0
  %7129 = vmatmul.mubr.f32.gmra.mrb[0].mxu0 %v7023
  %v7130 = vpop.f32.mrb[0].mxu0
  %v7131 = vadd.f32 0.0, %v7130
  %v7132 = vpop.f32.mrb[0].mxu0
  %7133 = vmatprep.mubr.f32.mxu0 0.0
  %7134 = vmatmul.mubr.f32.gmra.mrb[0].mxu0 %v7025
  %v7135 = vpop.f32.mrb[0].mxu0
  %v7136 = vadd.f32 0.0, %v7135
  %v7137 = vpop.f32.mrb[0].mxu0
  %7138 = vmatprep.mubr.f32.mxu0 0.0
  %7139 = vmatmul.mubr.f32.gmra.mrb[0].mxu0 %v7027
  %v7140 = vpop.f32.mrb[0].mxu0
  %v7141 = vadd.f32 0.0, %v7140
  %v7142 = vpop.f32.mrb[0].mxu0
  %7143 = vmatprep.mubr.f32.mxu0 0.0
  %7144 = vmatmul.mubr.f32.gmra.mrb[0].mxu0 %v7029
  %v7145 = vpop.f32.mrb[0].mxu0
  %v7146 = vadd.f32 0.0, %v7145
  %v7147 = vpop.f32.mrb[0].mxu0
  %7148 = vmatprep.mubr.f32.mxu0 0.0
  %7149 = vmatmul.mubr.f32.gmra.mrb[0].mxu0 %v7031
  %v7150 = vpop.f32.mrb[0].mxu0
  %v7151 = vadd.f32 0.0, %v7150
  %v7152 = vpop.f32.mrb[0].mxu0
  %7153 = vdwg.mxu0
  %7154 = vrot.lane.b32.xlu0 %v251, 114
  %v7155 = vpop.permute.xlu0 %7154
  %7156 = vrot.lane.b32.xlu0 %v256, 114
  %v7157 = vpop.permute.xlu0 %7156
  %7158 = vrot.lane.b32.xlu0 %v261, 114
  %v7159 = vpop.permute.xlu0 %7158
  %7160 = vrot.lane.b32.xlu0 %v266, 114
  %v7161 = vpop.permute.xlu0 %7160
  %7162 = vrot.lane.b32.xlu0 %v271, 114
  %v7163 = vpop.permute.xlu0 %7162
  %7164 = vrot.lane.b32.xlu0 %v276, 114
  %v7165 = vpop.permute.xlu0 %7164
  %7166 = vrot.lane.b32.xlu0 %v281, 114
  %v7167 = vpop.permute.xlu0 %7166
  %7168 = vrot.lane.b32.xlu0 %v286, 114
  %v7169 = vpop.permute.xlu0 %7168
  %7170 = vrot.lane.b32.xlu0 %v453, 114
  %v7171 = vpop.permute.xlu0 %7170
  %7172 = vrot.lane.b32.xlu0 %v458, 114
  %v7173 = vpop.permute.xlu0 %7172
  %7174 = vrot.lane.b32.xlu0 %v463, 114
  %v7175 = vpop.permute.xlu0 %7174
  %7176 = vrot.lane.b32.xlu0 %v468, 114
  %v7177 = vpop.permute.xlu0 %7176
  %7178 = vrot.lane.b32.xlu0 %v473, 114
  %v7179 = vpop.permute.xlu0 %7178
  %7180 = vrot.lane.b32.xlu0 %v478, 114
  %v7181 = vpop.permute.xlu0 %7180
  %7182 = vrot.lane.b32.xlu0 %v483, 114
  %v7183 = vpop.permute.xlu0 %7182
  %7184 = vrot.lane.b32.xlu0 %v488, 114
  %v7185 = vpop.permute.xlu0 %7184
  %v7186 = vsel %vm693, %v7155, 0
  %v7188 = vsel %vm693, %v7157, 0
  %v7190 = vsel %vm693, %v7159, 0
  %v7192 = vsel %vm693, %v7161, 0
  %v7194 = vsel %vm693, %v7163, 0
  %v7196 = vsel %vm693, %v7165, 0
  %v7198 = vsel %vm693, %v7167, 0
  %v7200 = vsel %vm693, %v7169, 0
  %v7202 = vsel %vm693, %v7171, 0
  %v7204 = vsel %vm693, %v7173, 0
  %v7206 = vsel %vm693, %v7175, 0
  %v7208 = vsel %vm693, %v7177, 0
  %v7210 = vsel %vm693, %v7179, 0
  %v7212 = vsel %vm693, %v7181, 0
  %v7214 = vsel %vm693, %v7183, 0
  %v7216 = vsel %vm693, %v7185, 0
  %7218 = vmatprep.subr.mxu0 0.0
  %7219 = vmatpush1.xpose.msra.mxu0 %v7202
  %7220 = vmatprep.subr.mxu0 0.0
  %7221 = vmatpush1.xpose.msra.mxu0 %v7204
  %7222 = vmatprep.subr.mxu0 0.0
  %7223 = vmatpush1.xpose.msra.mxu0 %v7206
  %7224 = vmatprep.subr.mxu0 0.0
  %7225 = vmatpush1.xpose.msra.mxu0 %v7208
  %7226 = vmatprep.subr.mxu0 0.0
  %7227 = vmatpush1.xpose.msra.mxu0 %v7210
  %7228 = vmatprep.subr.mxu0 0.0
  %7229 = vmatpush1.xpose.msra.mxu0 %v7212
  %7230 = vmatprep.subr.mxu0 0.0
  %7231 = vmatpush1.xpose.msra.mxu0 %v7214
  %7232 = vmatprep.subr.mxu0 0.0
  %7233 = vmatpush1.xpose.msra.mxu0 %v7216
  %7234 = vmatprep.subr.mxu0 0.0
  %7235 = vmatpush1.xpose.msra.mxu0 0.0
  %7236 = vmatprep.subr.mxu0 0.0
  %7237 = vmatpush1.xpose.msra.mxu0 0.0
  %7238 = vmatprep.subr.mxu0 0.0
  %7239 = vmatpush1.xpose.msra.mxu0 0.0
  %7240 = vmatprep.subr.mxu0 0.0
  %7241 = vmatpush1.xpose.msra.mxu0 0.0
  %7242 = vmatprep.subr.mxu0 0.0
  %7243 = vmatpush1.xpose.msra.mxu0 0.0
  %7244 = vmatprep.subr.mxu0 0.0
  %7245 = vmatpush1.xpose.msra.mxu0 0.0
  %7246 = vmatprep.subr.mxu0 0.0
  %7247 = vmatpush1.xpose.msra.mxu0 0.0
  %7248 = vmatprep.subr.mxu0 0.0
  %7249 = vmatpush1.xpose.msra.mxu0 0.0
  %7250 = vmatprep.subr.mxu0 0.0
  %7251 = vmatpush1.xpose.msra.mxu0 0.0
  %7252 = vmatprep.subr.mxu0 0.0
  %7253 = vmatpush1.xpose.msra.mxu0 0.0
  %7254 = vmatprep.subr.mxu0 0.0
  %7255 = vmatpush1.xpose.msra.mxu0 0.0
  %7256 = vmatprep.subr.mxu0 0.0
  %7257 = vmatpush1.xpose.msra.mxu0 0.0
  %7258 = vmatprep.subr.mxu0 0.0
  %7259 = vmatpush1.xpose.msra.mxu0 0.0
  %7260 = vmatprep.subr.mxu0 0.0
  %7261 = vmatpush1.xpose.msra.mxu0 0.0
  %7262 = vmatprep.subr.mxu0 0.0
  %7263 = vmatpush1.xpose.msra.mxu0 0.0
  %7264 = vmatprep.subr.mxu0 0.0
  %7265 = vmatpush1.xpose.msra.mxu0 0.0
  %7266 = vmatprep.subr.mxu0 0.0
  %7267 = vmatpush1.xpose.msra.mxu0 0.0
  %7268 = vmatprep.subr.mxu0 0.0
  %7269 = vmatpush1.xpose.msra.mxu0 0.0
  %7270 = vmatprep.subr.mxu0 0.0
  %7271 = vmatpush1.xpose.msra.mxu0 0.0
  %7272 = vmatprep.subr.mxu0 0.0
  %7273 = vmatpush1.xpose.msra.mxu0 0.0
  %7274 = vmatprep.subr.mxu0 0.0
  %7275 = vmatpush1.xpose.msra.mxu0 0.0
  %7276 = vmatprep.subr.mxu0 0.0
  %7277 = vmatpush1.xpose.msra.mxu0 0.0
  %7278 = vmatprep.subr.mxu0 0.0
  %7279 = vmatpush1.xpose.msra.mxu0 0.0
  %7280 = vmatprep.subr.mxu0 0.0
  %7281 = vmatpush1.xpose.msra.mxu0 0.0
  %7282 = vmatprep.mubr.f32.mxu0 0.0
  %7283 = vmatmul.mubr.f32.gmra.mrb[0].mxu0 %v7186
  %v7284 = vpop.f32.mrb[0].mxu0
  %v7285 = vadd.f32 0.0, %v7284
  %v7286 = vpop.f32.mrb[0].mxu0
  %7287 = vmatprep.mubr.f32.mxu0 0.0
  %7288 = vmatmul.mubr.f32.gmra.mrb[0].mxu0 %v7188
  %v7289 = vpop.f32.mrb[0].mxu0
  %v7290 = vadd.f32 0.0, %v7289
  %v7291 = vpop.f32.mrb[0].mxu0
  %7292 = vmatprep.mubr.f32.mxu0 0.0
  %7293 = vmatmul.mubr.f32.gmra.mrb[0].mxu0 %v7190
  %v7294 = vpop.f32.mrb[0].mxu0
  %v7295 = vadd.f32 0.0, %v7294
  %v7296 = vpop.f32.mrb[0].mxu0
  %7297 = vmatprep.mubr.f32.mxu0 0.0
  %7298 = vmatmul.mubr.f32.gmra.mrb[0].mxu0 %v7192
  %v7299 = vpop.f32.mrb[0].mxu0
  %v7300 = vadd.f32 0.0, %v7299
  %v7301 = vpop.f32.mrb[0].mxu0
  %7302 = vmatprep.mubr.f32.mxu0 0.0
  %7303 = vmatmul.mubr.f32.gmra.mrb[0].mxu0 %v7194
  %v7304 = vpop.f32.mrb[0].mxu0
  %v7305 = vadd.f32 0.0, %v7304
  %v7306 = vpop.f32.mrb[0].mxu0
  %7307 = vmatprep.mubr.f32.mxu0 0.0
  %7308 = vmatmul.mubr.f32.gmra.mrb[0].mxu0 %v7196
  %v7309 = vpop.f32.mrb[0].mxu0
  %v7310 = vadd.f32 0.0, %v7309
  %v7311 = vpop.f32.mrb[0].mxu0
  %7312 = vmatprep.mubr.f32.mxu0 0.0
  %7313 = vmatmul.mubr.f32.gmra.mrb[0].mxu0 %v7198
  %v7314 = vpop.f32.mrb[0].mxu0
  %v7315 = vadd.f32 0.0, %v7314
  %v7316 = vpop.f32.mrb[0].mxu0
  %7317 = vmatprep.mubr.f32.mxu0 0.0
  %7318 = vmatmul.mubr.f32.gmra.mrb[0].mxu0 %v7200
  %v7319 = vpop.f32.mrb[0].mxu0
  %v7320 = vadd.f32 0.0, %v7319
  %v7321 = vpop.f32.mrb[0].mxu0
  %7322 = vdwg.mxu0
  %v7323 = vmul.f32 %v7116, 0.70710677
  %v7324 = vmul.f32 %v7121, 0.70710677
  %v7325 = vmul.f32 %v7126, 0.70710677
  %v7326 = vmul.f32 %v7131, 0.70710677
  %v7327 = vmul.f32 %v7136, 0.70710677
  %v7328 = vmul.f32 %v7141, 0.70710677
  %v7329 = vmul.f32 %v7146, 0.70710677
  %v7330 = vmul.f32 %v7151, 0.70710677
  %v7331 = vmul.f32 %v7285, 0.70710677
  %v7332 = vmul.f32 %v7290, 0.70710677
  %v7333 = vmul.f32 %v7295, 0.70710677
  %v7334 = vmul.f32 %v7300, 0.70710677
  %v7335 = vmul.f32 %v7305, 0.70710677
  %v7336 = vmul.f32 %v7310, 0.70710677
  %v7337 = vmul.f32 %v7315, 0.70710677
  %v7338 = vmul.f32 %v7320, 0.70710677
  %v7339 = vsel %vm1016, %v7323, -inf
  %7340 = vmax.xlane.f32.xlu0 %v7339
  %v7341 = vpop.xlane.xlu0 %7340
  %v7342 = vsel %vm1016, %v7324, -inf
  %7343 = vmax.xlane.f32.xlu0 %v7342
  %v7344 = vpop.xlane.xlu0 %7343
  %v7345 = vsel %vm1016, %v7325, -inf
  %7346 = vmax.xlane.f32.xlu0 %v7345
  %v7347 = vpop.xlane.xlu0 %7346
  %v7348 = vsel %vm1016, %v7326, -inf
  %7349 = vmax.xlane.f32.xlu0 %v7348
  %v7350 = vpop.xlane.xlu0 %7349
  %v7351 = vsel %vm1016, %v7327, -inf
  %7352 = vmax.xlane.f32.xlu0 %v7351
  %v7353 = vpop.xlane.xlu0 %7352
  %v7354 = vsel %vm1016, %v7328, -inf
  %7355 = vmax.xlane.f32.xlu0 %v7354
  %v7356 = vpop.xlane.xlu0 %7355
  %v7357 = vsel %vm1016, %v7329, -inf
  %7358 = vmax.xlane.f32.xlu0 %v7357
  %v7359 = vpop.xlane.xlu0 %7358
  %v7360 = vsel %vm1016, %v7330, -inf
  %7361 = vmax.xlane.f32.xlu0 %v7360
  %v7362 = vpop.xlane.xlu0 %7361
  %v7363 = vsel %vm1016, %v7331, -inf
  %7364 = vmax.xlane.f32.xlu0 %v7363
  %v7365 = vpop.xlane.xlu0 %7364
  %v7366 = vsel %vm1016, %v7332, -inf
  %7367 = vmax.xlane.f32.xlu0 %v7366
  %v7368 = vpop.xlane.xlu0 %7367
  %v7369 = vsel %vm1016, %v7333, -inf
  %7370 = vmax.xlane.f32.xlu0 %v7369
  %v7371 = vpop.xlane.xlu0 %7370
  %v7372 = vsel %vm1016, %v7334, -inf
  %7373 = vmax.xlane.f32.xlu0 %v7372
  %v7374 = vpop.xlane.xlu0 %7373
  %v7375 = vsel %vm1016, %v7335, -inf
  %7376 = vmax.xlane.f32.xlu0 %v7375
  %v7377 = vpop.xlane.xlu0 %7376
  %v7378 = vsel %vm1016, %v7336, -inf
  %7379 = vmax.xlane.f32.xlu0 %v7378
  %v7380 = vpop.xlane.xlu0 %7379
  %v7381 = vsel %vm1016, %v7337, -inf
  %7382 = vmax.xlane.f32.xlu0 %v7381
  %v7383 = vpop.xlane.xlu0 %7382
  %v7384 = vsel %vm1016, %v7338, -inf
  %7385 = vmax.xlane.f32.xlu0 %v7384
  %v7386 = vpop.xlane.xlu0 %7385
  %v7387 = vsub.f32 %v7323, %v7341
  %v7388 = vsub.f32 %v7324, %v7344
  %v7389 = vsub.f32 %v7325, %v7347
  %v7390 = vsub.f32 %v7326, %v7350
  %v7391 = vsub.f32 %v7327, %v7353
  %v7392 = vsub.f32 %v7328, %v7356
  %v7393 = vsub.f32 %v7329, %v7359
  %v7394 = vsub.f32 %v7330, %v7362
  %v7395 = vsub.f32 %v7331, %v7365
  %v7396 = vsub.f32 %v7332, %v7368
  %v7397 = vsub.f32 %v7333, %v7371
  %v7398 = vsub.f32 %v7334, %v7374
  %v7399 = vsub.f32 %v7335, %v7377
  %v7400 = vsub.f32 %v7336, %v7380
  %v7401 = vsub.f32 %v7337, %v7383
  %v7402 = vsub.f32 %v7338, %v7386
  %v7403 = vmul.f32 %v7387, 1.442695
  %v7404 = vpow.pop %v7403
  %v7405 = vmul.f32 %v7388, 1.442695
  %v7406 = vpow.pop %v7405
  %v7407 = vmul.f32 %v7389, 1.442695
  %v7408 = vpow.pop %v7407
  %v7409 = vmul.f32 %v7390, 1.442695
  %v7410 = vpow.pop %v7409
  %v7411 = vmul.f32 %v7391, 1.442695
  %v7412 = vpow.pop %v7411
  %v7413 = vmul.f32 %v7392, 1.442695
  %v7414 = vpow.pop %v7413
  %v7415 = vmul.f32 %v7393, 1.442695
  %v7416 = vpow.pop %v7415
  %v7417 = vmul.f32 %v7394, 1.442695
  %v7418 = vpow.pop %v7417
  %v7419 = vmul.f32 %v7395, 1.442695
  %v7420 = vpow.pop %v7419
  %v7421 = vmul.f32 %v7396, 1.442695
  %v7422 = vpow.pop %v7421
  %v7423 = vmul.f32 %v7397, 1.442695
  %v7424 = vpow.pop %v7423
  %v7425 = vmul.f32 %v7398, 1.442695
  %v7426 = vpow.pop %v7425
  %v7427 = vmul.f32 %v7399, 1.442695
  %v7428 = vpow.pop %v7427
  %v7429 = vmul.f32 %v7400, 1.442695
  %v7430 = vpow.pop %v7429
  %v7431 = vmul.f32 %v7401, 1.442695
  %v7432 = vpow.pop %v7431
  %v7433 = vmul.f32 %v7402, 1.442695
  %v7434 = vpow.pop %v7433
  %v7435 = vsel %vm1016, %v7404, 0.0
  %7436 = vadd.xlane.f32.xlu0 %v7435
  %v7437 = vpop.xlane.xlu0 %7436
  %v7438 = vsel %vm1016, %v7406, 0.0
  %7439 = vadd.xlane.f32.xlu0 %v7438
  %v7440 = vpop.xlane.xlu0 %7439
  %v7441 = vsel %vm1016, %v7408, 0.0
  %7442 = vadd.xlane.f32.xlu0 %v7441
  %v7443 = vpop.xlane.xlu0 %7442
  %v7444 = vsel %vm1016, %v7410, 0.0
  %7445 = vadd.xlane.f32.xlu0 %v7444
  %v7446 = vpop.xlane.xlu0 %7445
  %v7447 = vsel %vm1016, %v7412, 0.0
  %7448 = vadd.xlane.f32.xlu0 %v7447
  %v7449 = vpop.xlane.xlu0 %7448
  %v7450 = vsel %vm1016, %v7414, 0.0
  %7451 = vadd.xlane.f32.xlu0 %v7450
  %v7452 = vpop.xlane.xlu0 %7451
  %v7453 = vsel %vm1016, %v7416, 0.0
  %7454 = vadd.xlane.f32.xlu0 %v7453
  %v7455 = vpop.xlane.xlu0 %7454
  %v7456 = vsel %vm1016, %v7418, 0.0
  %7457 = vadd.xlane.f32.xlu0 %v7456
  %v7458 = vpop.xlane.xlu0 %7457
  %v7459 = vsel %vm1016, %v7420, 0.0
  %7460 = vadd.xlane.f32.xlu0 %v7459
  %v7461 = vpop.xlane.xlu0 %7460
  %v7462 = vsel %vm1016, %v7422, 0.0
  %7463 = vadd.xlane.f32.xlu0 %v7462
  %v7464 = vpop.xlane.xlu0 %7463
  %v7465 = vsel %vm1016, %v7424, 0.0
  %7466 = vadd.xlane.f32.xlu0 %v7465
  %v7467 = vpop.xlane.xlu0 %7466
  %v7468 = vsel %vm1016, %v7426, 0.0
  %7469 = vadd.xlane.f32.xlu0 %v7468
  %v7470 = vpop.xlane.xlu0 %7469
  %v7471 = vsel %vm1016, %v7428, 0.0
  %7472 = vadd.xlane.f32.xlu0 %v7471
  %v7473 = vpop.xlane.xlu0 %7472
  %v7474 = vsel %vm1016, %v7430, 0.0
  %7475 = vadd.xlane.f32.xlu0 %v7474
  %v7476 = vpop.xlane.xlu0 %7475
  %v7477 = vsel %vm1016, %v7432, 0.0
  %7478 = vadd.xlane.f32.xlu0 %v7477
  %v7479 = vpop.xlane.xlu0 %7478
  %v7480 = vsel %vm1016, %v7434, 0.0
  %7481 = vadd.xlane.f32.xlu0 %v7480
  %v7482 = vpop.xlane.xlu0 %7481
  %v7483 = vrcp.pop %v7437
  %v7484 = vrcp.pop %v7440
  %v7485 = vrcp.pop %v7443
  %v7486 = vrcp.pop %v7446
  %v7487 = vrcp.pop %v7449
  %v7488 = vrcp.pop %v7452
  %v7489 = vrcp.pop %v7455
  %v7490 = vrcp.pop %v7458
  %v7491 = vrcp.pop %v7461
  %v7492 = vrcp.pop %v7464
  %v7493 = vrcp.pop %v7467
  %v7494 = vrcp.pop %v7470
  %v7495 = vrcp.pop %v7473
  %v7496 = vrcp.pop %v7476
  %v7497 = vrcp.pop %v7479
  %v7498 = vrcp.pop %v7482
  %v7499 = vmul.f32 %v7404, %v7483
  %v7500 = vmul.f32 %v7406, %v7484
  %v7501 = vmul.f32 %v7408, %v7485
  %v7502 = vmul.f32 %v7410, %v7486
  %v7503 = vmul.f32 %v7412, %v7487
  %v7504 = vmul.f32 %v7414, %v7488
  %v7505 = vmul.f32 %v7416, %v7489
  %v7506 = vmul.f32 %v7418, %v7490
  %v7507 = vmul.f32 %v7420, %v7491
  %v7508 = vmul.f32 %v7422, %v7492
  %v7509 = vmul.f32 %v7424, %v7493
  %v7510 = vmul.f32 %v7426, %v7494
  %v7511 = vmul.f32 %v7428, %v7495
  %v7512 = vmul.f32 %v7430, %v7496
  %v7513 = vmul.f32 %v7432, %v7497
  %v7514 = vmul.f32 %v7434, %v7498
  %7515 = vrot.lane.b32.xlu0 %v615, 114
  %v7516 = vpop.permute.xlu0 %7515
  %7517 = vrot.lane.b32.xlu0 %v620, 114
  %v7518 = vpop.permute.xlu0 %7517
  %7519 = vrot.lane.b32.xlu0 %v625, 114
  %v7520 = vpop.permute.xlu0 %7519
  %7521 = vrot.lane.b32.xlu0 %v630, 114
  %v7522 = vpop.permute.xlu0 %7521
  %7523 = vrot.lane.b32.xlu0 %v635, 114
  %v7524 = vpop.permute.xlu0 %7523
  %7525 = vrot.lane.b32.xlu0 %v640, 114
  %v7526 = vpop.permute.xlu0 %7525
  %7527 = vrot.lane.b32.xlu0 %v645, 114
  %v7528 = vpop.permute.xlu0 %7527
  %7529 = vrot.lane.b32.xlu0 %v650, 114
  %v7530 = vpop.permute.xlu0 %7529
  %v7540 = vsel %vm1016, %v7499, 0
  %v7543 = vsel %vm1016, %v7500, 0
  %v7546 = vsel %vm1016, %v7501, 0
  %v7549 = vsel %vm1016, %v7502, 0
  %v7552 = vsel %vm1016, %v7503, 0
  %v7555 = vsel %vm1016, %v7504, 0
  %v7558 = vsel %vm1016, %v7505, 0
  %v7561 = vsel %vm1016, %v7506, 0
  %7563 = vmatprep.subr.mxu0 0.0
  %7564 = vmatpush1.msra.mxu0 %v7516
  %7565 = vmatprep.subr.mxu0 0.0
  %7566 = vmatpush1.msra.mxu0 %v7518
  %7567 = vmatprep.subr.mxu0 0.0
  %7568 = vmatpush1.msra.mxu0 %v7520
  %7569 = vmatprep.subr.mxu0 0.0
  %7570 = vmatpush1.msra.mxu0 %v7522
  %7571 = vmatprep.subr.mxu0 0.0
  %7572 = vmatpush1.msra.mxu0 %v7524
  %7573 = vmatprep.subr.mxu0 0.0
  %7574 = vmatpush1.msra.mxu0 %v7526
  %7575 = vmatprep.subr.mxu0 0.0
  %7576 = vmatpush1.msra.mxu0 %v7528
  %7577 = vmatprep.subr.mxu0 0.0
  %7578 = vmatpush1.msra.mxu0 %v7530
  %7579 = vmatprep.subr.mxu0 0.0
  %7580 = vmatpush1.msra.mxu0 0.0
  %7581 = vmatprep.subr.mxu0 0.0
  %7582 = vmatpush1.msra.mxu0 0.0
  %7583 = vmatprep.subr.mxu0 0.0
  %7584 = vmatpush1.msra.mxu0 0.0
  %7585 = vmatprep.subr.mxu0 0.0
  %7586 = vmatpush1.msra.mxu0 0.0
  %7587 = vmatprep.subr.mxu0 0.0
  %7588 = vmatpush1.msra.mxu0 0.0
  %7589 = vmatprep.subr.mxu0 0.0
  %7590 = vmatpush1.msra.mxu0 0.0
  %7591 = vmatprep.subr.mxu0 0.0
  %7592 = vmatpush1.msra.mxu0 0.0
  %7593 = vmatprep.subr.mxu0 0.0
  %7594 = vmatpush1.msra.mxu0 0.0
  %7595 = vmatprep.subr.mxu0 0.0
  %7596 = vmatpush1.msra.mxu0 0.0
  %7597 = vmatprep.subr.mxu0 0.0
  %7598 = vmatpush1.msra.mxu0 0.0
  %7599 = vmatprep.subr.mxu0 0.0
  %7600 = vmatpush1.msra.mxu0 0.0
  %7601 = vmatprep.subr.mxu0 0.0
  %7602 = vmatpush1.msra.mxu0 0.0
  %7603 = vmatprep.subr.mxu0 0.0
  %7604 = vmatpush1.msra.mxu0 0.0
  %7605 = vmatprep.subr.mxu0 0.0
  %7606 = vmatpush1.msra.mxu0 0.0
  %7607 = vmatprep.subr.mxu0 0.0
  %7608 = vmatpush1.msra.mxu0 0.0
  %7609 = vmatprep.subr.mxu0 0.0
  %7610 = vmatpush1.msra.mxu0 0.0
  %7611 = vmatprep.subr.mxu0 0.0
  %7612 = vmatpush1.msra.mxu0 0.0
  %7613 = vmatprep.subr.mxu0 0.0
  %7614 = vmatpush1.msra.mxu0 0.0
  %7615 = vmatprep.subr.mxu0 0.0
  %7616 = vmatpush1.msra.mxu0 0.0
  %7617 = vmatprep.subr.mxu0 0.0
  %7618 = vmatpush1.msra.mxu0 0.0
  %7619 = vmatprep.subr.mxu0 0.0
  %7620 = vmatpush1.msra.mxu0 0.0
  %7621 = vmatprep.subr.mxu0 0.0
  %7622 = vmatpush1.msra.mxu0 0.0
  %7623 = vmatprep.subr.mxu0 0.0
  %7624 = vmatpush1.msra.mxu0 0.0
  %7625 = vmatprep.subr.mxu0 0.0
  %7626 = vmatpush1.msra.mxu0 0.0
  %7627 = vmatprep.mubr.f32.mxu0 0.0
  %7628 = vmatmul.mubr.f32.gmra.mrb[0].mxu0 %v7540
  %v7629 = vpop.f32.mrb[0].mxu0
  %v7630 = vadd.f32 0.0, %v7629
  %v7631 = vpop.f32.mrb[0].mxu0
  %7632 = vmatprep.mubr.f32.mxu0 0.0
  %7633 = vmatmul.mubr.f32.gmra.mrb[0].mxu0 %v7543
  %v7634 = vpop.f32.mrb[0].mxu0
  %v7635 = vadd.f32 0.0, %v7634
  %v7636 = vpop.f32.mrb[0].mxu0
  %7637 = vmatprep.mubr.f32.mxu0 0.0
  %7638 = vmatmul.mubr.f32.gmra.mrb[0].mxu0 %v7546
  %v7639 = vpop.f32.mrb[0].mxu0
  %v7640 = vadd.f32 0.0, %v7639
  %v7641 = vpop.f32.mrb[0].mxu0
  %7642 = vmatprep.mubr.f32.mxu0 0.0
  %7643 = vmatmul.mubr.f32.gmra.mrb[0].mxu0 %v7549
  %v7644 = vpop.f32.mrb[0].mxu0
  %v7645 = vadd.f32 0.0, %v7644
  %v7646 = vpop.f32.mrb[0].mxu0
  %7647 = vmatprep.mubr.f32.mxu0 0.0
  %7648 = vmatmul.mubr.f32.gmra.mrb[0].mxu0 %v7552
  %v7649 = vpop.f32.mrb[0].mxu0
  %v7650 = vadd.f32 0.0, %v7649
  %v7651 = vpop.f32.mrb[0].mxu0
  %7652 = vmatprep.mubr.f32.mxu0 0.0
  %7653 = vmatmul.mubr.f32.gmra.mrb[0].mxu0 %v7555
  %v7654 = vpop.f32.mrb[0].mxu0
  %v7655 = vadd.f32 0.0, %v7654
  %v7656 = vpop.f32.mrb[0].mxu0
  %7657 = vmatprep.mubr.f32.mxu0 0.0
  %7658 = vmatmul.mubr.f32.gmra.mrb[0].mxu0 %v7558
  %v7659 = vpop.f32.mrb[0].mxu0
  %v7660 = vadd.f32 0.0, %v7659
  %v7661 = vpop.f32.mrb[0].mxu0
  %7662 = vmatprep.mubr.f32.mxu0 0.0
  %7663 = vmatmul.mubr.f32.gmra.mrb[0].mxu0 %v7561
  %v7664 = vpop.f32.mrb[0].mxu0
  %v7665 = vadd.f32 0.0, %v7664
  %v7666 = vpop.f32.mrb[0].mxu0
  %7667 = vdwg.mxu0
  %7668 = vrot.lane.b32.xlu0 %v655, 114
  %v7669 = vpop.permute.xlu0 %7668
  %7670 = vrot.lane.b32.xlu0 %v660, 114
  %v7671 = vpop.permute.xlu0 %7670
  %7672 = vrot.lane.b32.xlu0 %v665, 114
  %v7673 = vpop.permute.xlu0 %7672
  %7674 = vrot.lane.b32.xlu0 %v670, 114
  %v7675 = vpop.permute.xlu0 %7674
  %7676 = vrot.lane.b32.xlu0 %v675, 114
  %v7677 = vpop.permute.xlu0 %7676
  %7678 = vrot.lane.b32.xlu0 %v680, 114
  %v7679 = vpop.permute.xlu0 %7678
  %7680 = vrot.lane.b32.xlu0 %v685, 114
  %v7681 = vpop.permute.xlu0 %7680
  %7682 = vrot.lane.b32.xlu0 %v690, 114
  %v7683 = vpop.permute.xlu0 %7682
  %v7693 = vsel %vm1016, %v7507, 0
  %v7696 = vsel %vm1016, %v7508, 0
  %v7699 = vsel %vm1016, %v7509, 0
  %v7702 = vsel %vm1016, %v7510, 0
  %v7705 = vsel %vm1016, %v7511, 0
  %v7708 = vsel %vm1016, %v7512, 0
  %v7711 = vsel %vm1016, %v7513, 0
  %v7714 = vsel %vm1016, %v7514, 0
  %7716 = vmatprep.subr.mxu0 0.0
  %7717 = vmatpush1.msra.mxu0 %v7669
  %7718 = vmatprep.subr.mxu0 0.0
  %7719 = vmatpush1.msra.mxu0 %v7671
  %7720 = vmatprep.subr.mxu0 0.0
  %7721 = vmatpush1.msra.mxu0 %v7673
  %7722 = vmatprep.subr.mxu0 0.0
  %7723 = vmatpush1.msra.mxu0 %v7675
  %7724 = vmatprep.subr.mxu0 0.0
  %7725 = vmatpush1.msra.mxu0 %v7677
  %7726 = vmatprep.subr.mxu0 0.0
  %7727 = vmatpush1.msra.mxu0 %v7679
  %7728 = vmatprep.subr.mxu0 0.0
  %7729 = vmatpush1.msra.mxu0 %v7681
  %7730 = vmatprep.subr.mxu0 0.0
  %7731 = vmatpush1.msra.mxu0 %v7683
  %7732 = vmatprep.subr.mxu0 0.0
  %7733 = vmatpush1.msra.mxu0 0.0
  %7734 = vmatprep.subr.mxu0 0.0
  %7735 = vmatpush1.msra.mxu0 0.0
  %7736 = vmatprep.subr.mxu0 0.0
  %7737 = vmatpush1.msra.mxu0 0.0
  %7738 = vmatprep.subr.mxu0 0.0
  %7739 = vmatpush1.msra.mxu0 0.0
  %7740 = vmatprep.subr.mxu0 0.0
  %7741 = vmatpush1.msra.mxu0 0.0
  %7742 = vmatprep.subr.mxu0 0.0
  %7743 = vmatpush1.msra.mxu0 0.0
  %7744 = vmatprep.subr.mxu0 0.0
  %7745 = vmatpush1.msra.mxu0 0.0
  %7746 = vmatprep.subr.mxu0 0.0
  %7747 = vmatpush1.msra.mxu0 0.0
  %7748 = vmatprep.subr.mxu0 0.0
  %7749 = vmatpush1.msra.mxu0 0.0
  %7750 = vmatprep.subr.mxu0 0.0
  %7751 = vmatpush1.msra.mxu0 0.0
  %7752 = vmatprep.subr.mxu0 0.0
  %7753 = vmatpush1.msra.mxu0 0.0
  %7754 = vmatprep.subr.mxu0 0.0
  %7755 = vmatpush1.msra.mxu0 0.0
  %7756 = vmatprep.subr.mxu0 0.0
  %7757 = vmatpush1.msra.mxu0 0.0
  %7758 = vmatprep.subr.mxu0 0.0
  %7759 = vmatpush1.msra.mxu0 0.0
  %7760 = vmatprep.subr.mxu0 0.0
  %7761 = vmatpush1.msra.mxu0 0.0
  %7762 = vmatprep.subr.mxu0 0.0
  %7763 = vmatpush1.msra.mxu0 0.0
  %7764 = vmatprep.subr.mxu0 0.0
  %7765 = vmatpush1.msra.mxu0 0.0
  %7766 = vmatprep.subr.mxu0 0.0
  %7767 = vmatpush1.msra.mxu0 0.0
  %7768 = vmatprep.subr.mxu0 0.0
  %7769 = vmatpush1.msra.mxu0 0.0
  %7770 = vmatprep.subr.mxu0 0.0
  %7771 = vmatpush1.msra.mxu0 0.0
  %7772 = vmatprep.subr.mxu0 0.0
  %7773 = vmatpush1.msra.mxu0 0.0
  %7774 = vmatprep.subr.mxu0 0.0
  %7775 = vmatpush1.msra.mxu0 0.0
  %7776 = vmatprep.subr.mxu0 0.0
  %7777 = vmatpush1.msra.mxu0 0.0
  %7778 = vmatprep.subr.mxu0 0.0
  %7779 = vmatpush1.msra.mxu0 0.0
  %7780 = vmatprep.mubr.f32.mxu0 0.0
  %7781 = vmatmul.mubr.f32.gmra.mrb[0].mxu0 %v7693
  %v7782 = vpop.f32.mrb[0].mxu0
  %v7783 = vadd.f32 0.0, %v7782
  %v7784 = vpop.f32.mrb[0].mxu0
  %7785 = vmatprep.mubr.f32.mxu0 0.0
  %7786 = vmatmul.mubr.f32.gmra.mrb[0].mxu0 %v7696
  %v7787 = vpop.f32.mrb[0].mxu0
  %v7788 = vadd.f32 0.0, %v7787
  %v7789 = vpop.f32.mrb[0].mxu0
  %7790 = vmatprep.mubr.f32.mxu0 0.0
  %7791 = vmatmul.mubr.f32.gmra.mrb[0].mxu0 %v7699
  %v7792 = vpop.f32.mrb[0].mxu0
  %v7793 = vadd.f32 0.0, %v7792
  %v7794 = vpop.f32.mrb[0].mxu0
  %7795 = vmatprep.mubr.f32.mxu0 0.0
  %7796 = vmatmul.mubr.f32.gmra.mrb[0].mxu0 %v7702
  %v7797 = vpop.f32.mrb[0].mxu0
  %v7798 = vadd.f32 0.0, %v7797
  %v7799 = vpop.f32.mrb[0].mxu0
  %7800 = vmatprep.mubr.f32.mxu0 0.0
  %7801 = vmatmul.mubr.f32.gmra.mrb[0].mxu0 %v7705
  %v7802 = vpop.f32.mrb[0].mxu0
  %v7803 = vadd.f32 0.0, %v7802
  %v7804 = vpop.f32.mrb[0].mxu0
  %7805 = vmatprep.mubr.f32.mxu0 0.0
  %7806 = vmatmul.mubr.f32.gmra.mrb[0].mxu0 %v7708
  %v7807 = vpop.f32.mrb[0].mxu0
  %v7808 = vadd.f32 0.0, %v7807
  %v7809 = vpop.f32.mrb[0].mxu0
  %7810 = vmatprep.mubr.f32.mxu0 0.0
  %7811 = vmatmul.mubr.f32.gmra.mrb[0].mxu0 %v7711
  %v7812 = vpop.f32.mrb[0].mxu0
  %v7813 = vadd.f32 0.0, %v7812
  %v7814 = vpop.f32.mrb[0].mxu0
  %7815 = vmatprep.mubr.f32.mxu0 0.0
  %7816 = vmatmul.mubr.f32.gmra.mrb[0].mxu0 %v7714
  %v7817 = vpop.f32.mrb[0].mxu0
  %v7818 = vadd.f32 0.0, %v7817
  %v7819 = vpop.f32.mrb[0].mxu0
  %7820 = vdwg.mxu0
  %7837 = vrot.lane.b32.xlu0 %v7630, 14
  %v7838 = vpop.permute.xlu0 %7837
  %7839 = vrot.lane.b32.xlu0 %v7635, 14
  %v7840 = vpop.permute.xlu0 %7839
  %7841 = vrot.lane.b32.xlu0 %v7640, 14
  %v7842 = vpop.permute.xlu0 %7841
  %7843 = vrot.lane.b32.xlu0 %v7645, 14
  %v7844 = vpop.permute.xlu0 %7843
  %7845 = vrot.lane.b32.xlu0 %v7650, 14
  %v7846 = vpop.permute.xlu0 %7845
  %7847 = vrot.lane.b32.xlu0 %v7655, 14
  %v7848 = vpop.permute.xlu0 %7847
  %7849 = vrot.lane.b32.xlu0 %v7660, 14
  %v7850 = vpop.permute.xlu0 %7849
  %7851 = vrot.lane.b32.xlu0 %v7665, 14
  %v7852 = vpop.permute.xlu0 %7851
  %7853 = vrot.lane.b32.xlu0 %v7783, 14
  %v7854 = vpop.permute.xlu0 %7853
  %7855 = vrot.lane.b32.xlu0 %v7788, 14
  %v7856 = vpop.permute.xlu0 %7855
  %7857 = vrot.lane.b32.xlu0 %v7793, 14
  %v7858 = vpop.permute.xlu0 %7857
  %7859 = vrot.lane.b32.xlu0 %v7798, 14
  %v7860 = vpop.permute.xlu0 %7859
  %7861 = vrot.lane.b32.xlu0 %v7803, 14
  %v7862 = vpop.permute.xlu0 %7861
  %7863 = vrot.lane.b32.xlu0 %v7808, 14
  %v7864 = vpop.permute.xlu0 %7863
  %7865 = vrot.lane.b32.xlu0 %v7813, 14
  %v7866 = vpop.permute.xlu0 %7865
  %7867 = vrot.lane.b32.xlu0 %v7818, 14
  %v7868 = vpop.permute.xlu0 %7867
  %vm7885 = vcmask 130160
  %7886 = vst.msk [vmem:[#allocation2] sm:$0xff] %vm7885, %v7838
  %7887 = vst.msk [vmem:[#allocation2 + $0x8] sm:$0xff] %vm7885, %v7840
  %7888 = vst.msk [vmem:[#allocation2 + $0x10] sm:$0xff] %vm7885, %v7842
  %7889 = vst.msk [vmem:[#allocation2 + $0x18] sm:$0xff] %vm7885, %v7844
  %7890 = vst.msk [vmem:[#allocation2 + $0x20] sm:$0xff] %vm7885, %v7846
  %7891 = vst.msk [vmem:[#allocation2 + $0x28] sm:$0xff] %vm7885, %v7848
  %7892 = vst.msk [vmem:[#allocation2 + $0x30] sm:$0xff] %vm7885, %v7850
  %7893 = vst.msk [vmem:[#allocation2 + $0x38] sm:$0xff] %vm7885, %v7852
  %7894 = vst.msk [vmem:[#allocation2 + $0x40] sm:$0xff] %vm7885, %v7854
  %7895 = vst.msk [vmem:[#allocation2 + $0x48] sm:$0xff] %vm7885, %v7856
  %7896 = vst.msk [vmem:[#allocation2 + $0x50] sm:$0xff] %vm7885, %v7858
  %7897 = vst.msk [vmem:[#allocation2 + $0x58] sm:$0xff] %vm7885, %v7860
  %7898 = vst.msk [vmem:[#allocation2 + $0x60] sm:$0xff] %vm7885, %v7862
  %7899 = vst.msk [vmem:[#allocation2 + $0x68] sm:$0xff] %vm7885, %v7864
  %7900 = vst.msk [vmem:[#allocation2 + $0x70] sm:$0xff] %vm7885, %v7866
  %7901 = vst.msk [vmem:[#allocation2 + $0x78] sm:$0xff] %vm7885, %v7868
  %v7902 = vld [vmem:[#allocation2] sm:$0xff]
  %v7903 = vld [vmem:[#allocation2 + $0x8] sm:$0xff]
  %v7904 = vld [vmem:[#allocation2 + $0x10] sm:$0xff]
  %v7905 = vld [vmem:[#allocation2 + $0x18] sm:$0xff]
  %v7906 = vld [vmem:[#allocation2 + $0x20] sm:$0xff]
  %v7907 = vld [vmem:[#allocation2 + $0x28] sm:$0xff]
  %v7908 = vld [vmem:[#allocation2 + $0x30] sm:$0xff]
  %v7909 = vld [vmem:[#allocation2 + $0x38] sm:$0xff]
  %v7910 = vld [vmem:[#allocation2 + $0x40] sm:$0xff]
  %v7911 = vld [vmem:[#allocation2 + $0x48] sm:$0xff]
  %v7912 = vld [vmem:[#allocation2 + $0x50] sm:$0xff]
  %v7913 = vld [vmem:[#allocation2 + $0x58] sm:$0xff]
  %v7914 = vld [vmem:[#allocation2 + $0x60] sm:$0xff]
  %v7915 = vld [vmem:[#allocation2 + $0x68] sm:$0xff]
  %v7916 = vld [vmem:[#allocation2 + $0x70] sm:$0xff]
  %v7917 = vld [vmem:[#allocation2 + $0x78] sm:$0xff]
  %v7918 = vld [vmem:[%s9] sm:$0xff]
  %v7919 = vld [vmem:[%s9 + $0x8] sm:$0xff]
  %v7920 = vld [vmem:[%s10] sm:$0x1]
  %v7922 = vlaneseq
  %v7923 = vshrl.u32 %v7922, 7
  %v7924 = vsub.s32 0, %v7923
  %v7925 = vrot.slane %v7920, %v7924
  %v7928 = vsel %vm95, %v7902, 0
  %v7931 = vsel %vm95, %v7903, 0
  %v7934 = vsel %vm95, %v7904, 0
  %v7937 = vsel %vm95, %v7905, 0
  %v7940 = vsel %vm95, %v7906, 0
  %v7943 = vsel %vm95, %v7907, 0
  %v7946 = vsel %vm95, %v7908, 0
  %v7949 = vsel %vm95, %v7909, 0
  %v7952 = vsel %vm95, %v7910, 0
  %v7955 = vsel %vm95, %v7911, 0
  %v7958 = vsel %vm95, %v7912, 0
  %v7961 = vsel %vm95, %v7913, 0
  %v7964 = vsel %vm95, %v7914, 0
  %v7967 = vsel %vm95, %v7915, 0
  %v7970 = vsel %vm95, %v7916, 0
  %v7973 = vsel %vm95, %v7917, 0
  %7975 = vmatprep.subr.mxu0 0.0
  %7976 = vmatpush1.msra.mxu0 %v7918
  %7977 = vmatprep.subr.mxu0 0.0
  %7978 = vmatpush1.msra.mxu0 %v7919
  %7979 = vmatprep.subr.mxu0 0.0
  %7980 = vmatpush1.msra.mxu0 0.0
  %7981 = vmatprep.subr.mxu0 0.0
  %7982 = vmatpush1.msra.mxu0 0.0
  %7983 = vmatprep.subr.mxu0 0.0
  %7984 = vmatpush1.msra.mxu0 0.0
  %7985 = vmatprep.subr.mxu0 0.0
  %7986 = vmatpush1.msra.mxu0 0.0
  %7987 = vmatprep.subr.mxu0 0.0
  %7988 = vmatpush1.msra.mxu0 0.0
  %7989 = vmatprep.subr.mxu0 0.0
  %7990 = vmatpush1.msra.mxu0 0.0
  %7991 = vmatprep.subr.mxu0 0.0
  %7992 = vmatpush1.msra.mxu0 0.0
  %7993 = vmatprep.subr.mxu0 0.0
  %7994 = vmatpush1.msra.mxu0 0.0
  %7995 = vmatprep.subr.mxu0 0.0
  %7996 = vmatpush1.msra.mxu0 0.0
  %7997 = vmatprep.subr.mxu0 0.0
  %7998 = vmatpush1.msra.mxu0 0.0
  %7999 = vmatprep.subr.mxu0 0.0
  %8000 = vmatpush1.msra.mxu0 0.0
  %8001 = vmatprep.subr.mxu0 0.0
  %8002 = vmatpush1.msra.mxu0 0.0
  %8003 = vmatprep.subr.mxu0 0.0
  %8004 = vmatpush1.msra.mxu0 0.0
  %8005 = vmatprep.subr.mxu0 0.0
  %8006 = vmatpush1.msra.mxu0 0.0
  %8007 = vmatprep.subr.mxu0 0.0
  %8008 = vmatpush1.msra.mxu0 0.0
  %8009 = vmatprep.subr.mxu0 0.0
  %8010 = vmatpush1.msra.mxu0 0.0
  %8011 = vmatprep.subr.mxu0 0.0
  %8012 = vmatpush1.msra.mxu0 0.0
  %8013 = vmatprep.subr.mxu0 0.0
  %8014 = vmatpush1.msra.mxu0 0.0
  %8015 = vmatprep.subr.mxu0 0.0
  %8016 = vmatpush1.msra.mxu0 0.0
  %8017 = vmatprep.subr.mxu0 0.0
  %8018 = vmatpush1.msra.mxu0 0.0
  %8019 = vmatprep.subr.mxu0 0.0
  %8020 = vmatpush1.msra.mxu0 0.0
  %8021 = vmatprep.subr.mxu0 0.0
  %8022 = vmatpush1.msra.mxu0 0.0
  %8023 = vmatprep.subr.mxu0 0.0
  %8024 = vmatpush1.msra.mxu0 0.0
  %8025 = vmatprep.subr.mxu0 0.0
  %8026 = vmatpush1.msra.mxu0 0.0
  %8027 = vmatprep.subr.mxu0 0.0
  %8028 = vmatpush1.msra.mxu0 0.0
  %8029 = vmatprep.subr.mxu0 0.0
  %8030 = vmatpush1.msra.mxu0 0.0
  %8031 = vmatprep.subr.mxu0 0.0
  %8032 = vmatpush1.msra.mxu0 0.0
  %8033 = vmatprep.subr.mxu0 0.0
  %8034 = vmatpush1.msra.mxu0 0.0
  %8035 = vmatprep.subr.mxu0 0.0
  %8036 = vmatpush1.msra.mxu0 0.0
  %8037 = vmatprep.subr.mxu0 0.0
  %8038 = vmatpush1.msra.mxu0 0.0
  %8039 = vmatprep.mubr.f32.mxu0 0.0
  %8040 = vmatmul.mubr.f32.gmra.mrb[0].mxu0 %v7928
  %v8041 = vpop.f32.mrb[0].mxu0
  %v8042 = vadd.f32 %v7925, %v8041
  %v8043 = vpop.f32.mrb[0].mxu0
  %8044 = vmatprep.mubr.f32.mxu0 0.0
  %8045 = vmatmul.mubr.f32.gmra.mrb[0].mxu0 %v7931
  %v8046 = vpop.f32.mrb[0].mxu0
  %v8047 = vadd.f32 %v7925, %v8046
  %v8048 = vpop.f32.mrb[0].mxu0
  %8049 = vmatprep.mubr.f32.mxu0 0.0
  %8050 = vmatmul.mubr.f32.gmra.mrb[0].mxu0 %v7934
  %v8051 = vpop.f32.mrb[0].mxu0
  %v8052 = vadd.f32 %v7925, %v8051
  %v8053 = vpop.f32.mrb[0].mxu0
  %8054 = vmatprep.mubr.f32.mxu0 0.0
  %8055 = vmatmul.mubr.f32.gmra.mrb[0].mxu0 %v7937
  %v8056 = vpop.f32.mrb[0].mxu0
  %v8057 = vadd.f32 %v7925, %v8056
  %v8058 = vpop.f32.mrb[0].mxu0
  %8059 = vmatprep.mubr.f32.mxu0 0.0
  %8060 = vmatmul.mubr.f32.gmra.mrb[0].mxu0 %v7940
  %v8061 = vpop.f32.mrb[0].mxu0
  %v8062 = vadd.f32 %v7925, %v8061
  %v8063 = vpop.f32.mrb[0].mxu0
  %8064 = vmatprep.mubr.f32.mxu0 0.0
  %8065 = vmatmul.mubr.f32.gmra.mrb[0].mxu0 %v7943
  %v8066 = vpop.f32.mrb[0].mxu0
  %v8067 = vadd.f32 %v7925, %v8066
  %v8068 = vpop.f32.mrb[0].mxu0
  %8069 = vmatprep.mubr.f32.mxu0 0.0
  %8070 = vmatmul.mubr.f32.gmra.mrb[0].mxu0 %v7946
  %v8071 = vpop.f32.mrb[0].mxu0
  %v8072 = vadd.f32 %v7925, %v8071
  %v8073 = vpop.f32.mrb[0].mxu0
  %8074 = vmatprep.mubr.f32.mxu0 0.0
  %8075 = vmatmul.mubr.f32.gmra.mrb[0].mxu0 %v7949
  %v8076 = vpop.f32.mrb[0].mxu0
  %v8077 = vadd.f32 %v7925, %v8076
  %v8078 = vpop.f32.mrb[0].mxu0
  %8079 = vmatprep.mubr.f32.mxu0 0.0
  %8080 = vmatmul.mubr.f32.gmra.mrb[0].mxu0 %v7952
  %v8081 = vpop.f32.mrb[0].mxu0
  %v8082 = vadd.f32 %v7925, %v8081
  %v8083 = vpop.f32.mrb[0].mxu0
  %8084 = vmatprep.mubr.f32.mxu0 0.0
  %8085 = vmatmul.mubr.f32.gmra.mrb[0].mxu0 %v7955
  %v8086 = vpop.f32.mrb[0].mxu0
  %v8087 = vadd.f32 %v7925, %v8086
  %v8088 = vpop.f32.mrb[0].mxu0
  %8089 = vmatprep.mubr.f32.mxu0 0.0
  %8090 = vmatmul.mubr.f32.gmra.mrb[0].mxu0 %v7958
  %v8091 = vpop.f32.mrb[0].mxu0
  %v8092 = vadd.f32 %v7925, %v8091
  %v8093 = vpop.f32.mrb[0].mxu0
  %8094 = vmatprep.mubr.f32.mxu0 0.0
  %8095 = vmatmul.mubr.f32.gmra.mrb[0].mxu0 %v7961
  %v8096 = vpop.f32.mrb[0].mxu0
  %v8097 = vadd.f32 %v7925, %v8096
  %v8098 = vpop.f32.mrb[0].mxu0
  %8099 = vmatprep.mubr.f32.mxu0 0.0
  %8100 = vmatmul.mubr.f32.gmra.mrb[0].mxu0 %v7964
  %v8101 = vpop.f32.mrb[0].mxu0
  %v8102 = vadd.f32 %v7925, %v8101
  %v8103 = vpop.f32.mrb[0].mxu0
  %8104 = vmatprep.mubr.f32.mxu0 0.0
  %8105 = vmatmul.mubr.f32.gmra.mrb[0].mxu0 %v7967
  %v8106 = vpop.f32.mrb[0].mxu0
  %v8107 = vadd.f32 %v7925, %v8106
  %v8108 = vpop.f32.mrb[0].mxu0
  %8109 = vmatprep.mubr.f32.mxu0 0.0
  %8110 = vmatmul.mubr.f32.gmra.mrb[0].mxu0 %v7970
  %v8111 = vpop.f32.mrb[0].mxu0
  %v8112 = vadd.f32 %v7925, %v8111
  %v8113 = vpop.f32.mrb[0].mxu0
  %8114 = vmatprep.mubr.f32.mxu0 0.0
  %8115 = vmatmul.mubr.f32.gmra.mrb[0].mxu0 %v7973
  %v8116 = vpop.f32.mrb[0].mxu0
  %v8117 = vadd.f32 %v7925, %v8116
  %v8118 = vpop.f32.mrb[0].mxu0
  %8119 = vdwg.mxu0
  %8120 = vst.msk [vmem:[%s11] sm:$0xff] %vm95, %v8042
  %8121 = vst.msk [vmem:[%s11 + $0x8] sm:$0xff] %vm95, %v8047
  %8122 = vst.msk [vmem:[%s11 + $0x10] sm:$0xff] %vm95, %v8052
  %8123 = vst.msk [vmem:[%s11 + $0x18] sm:$0xff] %vm95, %v8057
  %8124 = vst.msk [vmem:[%s11 + $0x20] sm:$0xff] %vm95, %v8062
  %8125 = vst.msk [vmem:[%s11 + $0x28] sm:$0xff] %vm95, %v8067
  %8126 = vst.msk [vmem:[%s11 + $0x30] sm:$0xff] %vm95, %v8072
  %8127 = vst.msk [vmem:[%s11 + $0x38] sm:$0xff] %vm95, %v8077
  %8128 = vst.msk [vmem:[%s11 + $0x40] sm:$0xff] %vm95, %v8082
  %8129 = vst.msk [vmem:[%s11 + $0x48] sm:$0xff] %vm95, %v8087
  %8130 = vst.msk [vmem:[%s11 + $0x50] sm:$0xff] %vm95, %v8092
  %8131 = vst.msk [vmem:[%s11 + $0x58] sm:$0xff] %vm95, %v8097
  %8132 = vst.msk [vmem:[%s11 + $0x60] sm:$0xff] %vm95, %v8102
  %8133 = vst.msk [vmem:[%s11 + $0x68] sm:$0xff] %vm95, %v8107
  %8134 = vst.msk [vmem:[%s11 + $0x70] sm:$0xff] %vm95, %v8112
  %8135 = vst.msk [vmem:[%s11 + $0x78] sm:$0xff] %vm95, %v8117
  // Predicated region
  $region46: #{multi_head_attention.1} parent=0 // pred_check
    _
  $region47: #{multi_head_attention.1} parent=0 // pred_check_branch
    %8137 = sbr.rel (0) target = $region49
  $region48: #{multi_head_attention.1} parent=0 // pred_region
    _
  $region49: #{multi_head_attention.1} parent=0 // pred_fallthru
    _
  // Predicated region
  $region50: #{multi_head_attention.1} parent=0 // pred_check
    _
  $region51: #{multi_head_attention.1} parent=0 // pred_check_branch
    %8139 = sbr.rel (0) target = $region53
  $region52: #{multi_head_attention.1} parent=0 // pred_region
    _
  $region53: #{multi_head_attention.1} parent=0 // pred_fallthru
    _

</llo_original>
